<compile_context>
chip_gen: v7x
topology: tpu7x:2x2x1
jax: 0.10.0
libtpu: 0.0.40
codegen_flags: <defaults>
</compile_context>

<pallas_src>
import jax
import jax.numpy as jnp
from jax import lax
from jax.experimental import pallas as pl
from jax.experimental.pallas import tpu as pltpu

# ----------------------- scaled-down PN2DenseParams -------------------------
B = 2
N = 128                     # points per cloud
N1, K1, R1 = 32, 16, 0.4    # SA1: fps samples, max neighbors, radius
N2, K2, R2 = 8, 8, 0.8      # SA2
SA1_OUT, SA2_OUT, GSA_OUT = 32, 64, 128
FP1_OUT, LIN1, LIN2, FINAL = 32, 32, 32, 3
IN_DIM = 0                  # p.in_dim = 0  (anchor.x is None)
NEG = -1e30                 # finite "masked out" value (avoids -inf -> NaN)


# =========================== single fused Pallas kernel ======================
def fused_kernel(
        # ---- data (built by glue JAX from positions only) ----
        feat1_ref,   # (B*N1*K1, 3)      SA1 messages  pos_j - pos_i
        maskb1_ref,  # (B*N1, K1)        additive radius mask (0 or NEG)
        g2_ref,      # (B*N2*K2, B*N1)   block-diag one-hot gather of x1_j
        rel2_ref,    # (B*N2*K2, 3)      SA2 relative positions
        maskb2_ref,  # (B*N2, K2)
        pos2_ref,    # (B*N2, 3)
        wi3_ref,     # (B*N2, B)         FP3 "interpolation" (per-batch bcast)
        wi2_ref,     # (B*N1, B*N2)      FP2 kNN-interp weights (block-diag)
        wi1_ref,     # (B*N,  B*N1)      FP1 kNN-interp weights (block-diag)
        # ---- weights (first layer of sa2/gsa/fp3/fp2 pre-split) ----
        w10, b10, w11, b11, w12, b12,                       # sa1
        w20x, w20r, b20, w21, b21, w22, b22,                # sa2
        wg0x, wg0p, bg0, wg1, bg1, wg2, bg2,                # global sa
        w3i, w3s, b3, w31, b31,                             # fp3
        w2i, w2s, b2, w2l, b2l,                             # fp2
        wf0, bf0, wf1, bf1, wf2, bf2,                       # fp1
        wh0, bh0, wh1, bh1, wh2, bh2,                       # lin1/lin2/lin3
        out_ref):    # (B*N, FINAL)

    dot = lambda a, b: jnp.dot(a, b, preferred_element_type=jnp.float32)
    relu = lambda x: jnp.maximum(x, 0.0)

    # ---------------- SA1: PointConv MLP + masked max over K1 neighbors -----
    h = relu(dot(feat1_ref[...], w10[...]) + b10[...])
    h = relu(dot(h, w11[...]) + b11[...])
    h = dot(h, w12[...]) + b12[...]                          # (B*N1*K1, 32)
    h = h.reshape(B * N1, K1, SA1_OUT) + maskb1_ref[...][:, :, None]
    x1 = jnp.max(h, axis=1)                                  # (B*N1, 32)

    # ---------------- SA2: gather x1_j via matmul, split-weight first layer --
    xj = dot(g2_ref[...], x1)                                # (B*N2*K2, 32)
    h = relu(dot(xj, w20x[...]) + dot(rel2_ref[...], w20r[...]) + b20[...])
    h = relu(dot(h, w21[...]) + b21[...])
    h = dot(h, w22[...]) + b22[...]                          # (B*N2*K2, 64)
    h = h.reshape(B * N2, K2, SA2_OUT) + maskb2_ref[...][:, :, None]
    x2 = jnp.max(h, axis=1)                                  # (B*N2, 64)

    # ---------------- GlobalSA: MLP([x2, pos2]) + per-batch global max -------
    h = relu(dot(x2, wg0x[...]) + dot(pos2_ref[...], wg0p[...]) + bg0[...])
    h = relu(dot(h, wg1[...]) + bg1[...])
    h = dot(h, wg2[...]) + bg2[...]                          # (B*N2, 128)
    x3 = jnp.max(h.reshape(B, N2, GSA_OUT), axis=1)          # (B, 128)

    # ---------------- FP3: broadcast global feature, skip = x2 ---------------
    interp3 = dot(wi3_ref[...], x3)                          # (B*N2, 128)
    h = relu(dot(interp3, w3i[...]) + dot(x2, w3s[...]) + b3[...])
    fp3x = dot(h, w31[...]) + b31[...]                       # (B*N2, 64)

    # ---------------- FP2: kNN interp to N1, skip = x1 -----------------------
    interp2 = dot(wi2_ref[...], fp3x)                        # (B*N1, 64)
    h = relu(dot(interp2, w2i[...]) + dot(x1, w2s[...]) + b2[...])
    fp2x = dot(h, w2l[...]) + b2l[...]                       # (B*N1, 32)

    # ---------------- FP1: kNN interp to N, no skip (in_dim = 0) -------------
    interp1 = dot(wi1_ref[...], fp2x)                        # (B*N, 32)
    h = relu(dot(interp1, wf0[...]) + bf0[...])
    h = relu(dot(h, wf1[...]) + bf1[...])
    h = dot(h, wf2[...]) + bf2[...]                          # (B*N, 32)

    # ---------------- head: relu(lin1) -> relu(lin2) -> lin3 ------------------
    h = relu(dot(h, wh0[...]) + bh0[...])
    h = relu(dot(h, wh1[...]) + bh1[...])
    # TODO(synk): output last-dim=3 is not lane-dense; a transposed (3, B*N)
    #             layout would be, but this single 3 KB store is negligible.
    out_ref[...] = dot(h, wh2[...]) + bh2[...]               # (B*N, 3)


# =============================== JAX glue ====================================
def fps_single(pos, n_samples):
    """Farthest point sampling (deterministic start at index 0)."""
    Np = pos.shape[0]

    def body(i, carry):
        idx, dist, last_pt = carry
        d = jnp.sum((pos - last_pt) ** 2, axis=-1)
        dist = jnp.minimum(dist, d)
        nxt = jnp.argmax(dist).astype(jnp.int32)
        idx = idx.at[i].set(nxt)
        return idx, dist, pos[nxt]

    idx0 = jnp.zeros((n_samples,), jnp.int32)
    dist0 = jnp.full((Np,), jnp.inf, jnp.float32)
    idx, _, _ = lax.fori_loop(1, n_samples, body, (idx0, dist0, pos[0]))
    return idx


def knn_radius(pos_src, pos_centers, r, k):
    """K nearest neighbors of each center, masked by radius r."""
    d2 = jnp.sum((pos_centers[:, None, :] - pos_src[None, :, :]) ** 2, axis=-1)
    neg_d, idx = lax.top_k(-d2, k)
    mask = (-neg_d) <= r * r
    return idx, mask.astype(jnp.float32)


def knn_interp_weights(pos_target, pos_source, k):
    """Dense row-normalized 1/d^2 kNN interpolation matrix (PyG knn_interpolate)."""
    M = pos_target.shape[0]
    S = pos_source.shape[0]
    k = min(k, S)
    d2 = jnp.sum((pos_target[:, None, :] - pos_source[None, :, :]) ** 2, axis=-1)
    neg_d, idx = lax.top_k(-d2, k)
    w = 1.0 / jnp.maximum(-neg_d, 1e-16)
    w = w / jnp.sum(w, axis=-1, keepdims=True)
    W = jnp.zeros((M, S), jnp.float32).at[jnp.arange(M)[:, None], idx].add(w)
    return W


def gather_points(x, idx):          # x: (B,N,C), idx: (B,M) -> (B,M,C)
    return jnp.take_along_axis(x, idx[..., None], axis=1)


def gather_neighbors(x, idx):       # x: (B,N,C), idx: (B,M,K) -> (B,M,K,C)
    return jax.vmap(lambda xb, ib: xb[ib])(x, idx)


def block_diag(mats):
    """(B, M, S) per-batch matrices -> (B*M, B*S) block-diagonal matrix."""
    Bc, M, S = mats.shape
    out = jnp.zeros((Bc * M, Bc * S), mats.dtype)
    for b in range(Bc):                                 # static loop (B is tiny)
        out = out.at[b * M:(b + 1) * M, b * S:(b + 1) * S].set(mats[b])
    return out


# =============================== Parameters ==================================
def init_linear(key, fan_in, fan_out):
    k1, k2 = jax.random.split(key)
    lim = 1.0 / (fan_in ** 0.5)
    w = jax.random.uniform(k1, (fan_in, fan_out), jnp.float32, -lim, lim)
    b = jax.random.uniform(k2, (1, fan_out), jnp.float32, -lim, lim)
    return w, b


def init_mlp(key, dims):
    keys = jax.random.split(key, len(dims) - 1)
    return [init_linear(keys[i], dims[i], dims[i + 1]) for i in range(len(dims) - 1)]


def init_params(key):
    ks = jax.random.split(key, 7)
    return dict(
        sa1=init_mlp(ks[0], [3 + IN_DIM, 16, 16, SA1_OUT]),
        sa2=init_mlp(ks[1], [3 + SA1_OUT, 32, 32, SA2_OUT]),
        gsa=init_mlp(ks[2], [3 + SA2_OUT, 64, 128, GSA_OUT]),
        fp3=init_mlp(ks[3], [GSA_OUT + SA2_OUT, 64, SA2_OUT]),
        fp2=init_mlp(ks[4], [SA2_OUT + SA1_OUT, 32, SA1_OUT]),
        fp1=init_mlp(ks[5], [SA1_OUT + IN_DIM, 64, 32, FP1_OUT]),
        head=init_mlp(ks[6], [FP1_OUT, LIN1, LIN2, FINAL]),
    )


def flatten_params(p):
    """Flatten weights in the fused kernel's positional order; the first layer
    of sa2 / gsa / fp3 / fp2 is split so the kernel can avoid jnp.concatenate
    (two dots summed instead of concat-then-dot)."""
    flat = []
    for w, b in p["sa1"]:
        flat += [w, b]

    w0, b0 = p["sa2"][0]                       # input = [x_j (32), rel (3)]
    flat += [w0[:SA1_OUT], w0[SA1_OUT:], b0]
    for w, b in p["sa2"][1:]:
        flat += [w, b]

    w0, b0 = p["gsa"][0]                       # input = [x2 (64), pos2 (3)]
    flat += [w0[:SA2_OUT], w0[SA2_OUT:], b0]
    for w, b in p["gsa"][1:]:
        flat += [w, b]

    w0, b0 = p["fp3"][0]                       # input = [interp (128), skip x2 (64)]
    flat += [w0[:GSA_OUT], w0[GSA_OUT:], b0]
    for w, b in p["fp3"][1:]:
        flat += [w, b]

    w0, b0 = p["fp2"][0]                       # input = [interp (64), skip x1 (32)]
    flat += [w0[:SA2_OUT], w0[SA2_OUT:], b0]
    for w, b in p["fp2"][1:]:
        flat += [w, b]

    for w, b in p["fp1"]:
        flat += [w, b]
    for w, b in p["head"]:
        flat += [w, b]
    return flat


# =============================== Forward =====================================
def gc_goal_flow_net(pos, params):
    """pos: (B, N, 3).  anchor.x is None (in_dim=0), demo_emb is None."""
    # ---- SA1 sampling / grouping (glue) ----
    idx1 = jax.vmap(lambda p: fps_single(p, N1))(pos)
    pos1 = gather_points(pos, idx1)                                    # (B,N1,3)
    nidx1, nmask1 = jax.vmap(lambda s, c: knn_radius(s, c, R1, K1))(pos, pos1)
    rel1 = gather_neighbors(pos, nidx1) - pos1[:, :, None, :]          # (B,N1,K1,3)
    feat1 = rel1.reshape(B * N1 * K1, 3)
    maskb1 = jnp.where(nmask1 > 0.5, 0.0, NEG).reshape(B * N1, K1)

    # ---- SA2 sampling / grouping (glue) ----
    idx2 = jax.vmap(lambda p: fps_single(p, N2))(pos1)
    pos2 = gather_points(pos1, idx2)                                   # (B,N2,3)
    nidx2, nmask2 = jax.vmap(lambda s, c: knn_radius(s, c, R2, K2))(pos1, pos2)
    rel2 = (gather_neighbors(pos1, nidx2) - pos2[:, :, None, :]).reshape(B * N2 * K2, 3)
    maskb2 = jnp.where(nmask2 > 0.5, 0.0, NEG).reshape(B * N2, K2)

    # block-diagonal one-hot gather matrix: x1_j = G2 @ x1 (inside the kernel)
    rows = jnp.arange(B * N2 * K2)
    cols = (nidx2.reshape(B, N2 * K2) + jnp.arange(B)[:, None] * N1).reshape(-1)
    g2 = jnp.zeros((B * N2 * K2, B * N1), jnp.float32).at[rows, cols].set(1.0)

    # ---- FP interpolation matrices (block-diagonal, row-normalized 1/d^2) ----
    wi3 = block_diag(jnp.ones((B, N2, 1), jnp.float32))                # (B*N2, B)
    wi2 = block_diag(jax.vmap(lambda t, s: knn_interp_weights(t, s, 3))(pos1, pos2))
    wi1 = block_diag(jax.vmap(lambda t, s: knn_interp_weights(t, s, 3))(pos, pos1))

    pos2_flat = pos2.reshape(B * N2, 3)

    args = [feat1, maskb1, g2, rel2, maskb2, pos2_flat, wi3, wi2, wi1] \
        + flatten_params(params)

    # ---- one fused kernel: SA1 -> SA2 -> GSA -> FP3 -> FP2 -> FP1 -> head ----
    out = pl.pallas_call(
        fused_kernel,
        out_shape=jax.ShapeDtypeStruct((B * N, FINAL), jnp.float32),
        in_specs=[pl.BlockSpec(memory_space=pltpu.MemorySpace.VMEM)] * len(args),
        out_specs=pl.BlockSpec(memory_space=pltpu.MemorySpace.VMEM),
    )(*args)
    return out                                                         # (B*N, 3)


# =============================== main ========================================
if __name__ == "__main__":
    key = jax.random.PRNGKey(0)
    k_pos, k_par = jax.random.split(key)
    pos = jax.random.uniform(k_pos, (B, N, 3), jnp.float32)            # anchor.pos
    params = init_params(k_par)

    fwd = jax.jit(lambda p: gc_goal_flow_net(p, params))
    out = fwd(pos)
    jax.block_until_ready(out)
    assert out.shape == (B * N, FINAL)
    assert bool(jnp.all(jnp.isfinite(out)))
    print("KERNEL_OK")
</pallas_src>

<mosaic_0001>
module attributes {stable_mosaic.version = 11 : i64} {
  func.func private @main(%arg0: i32) attributes {dimension_semantics = [#tpu.dimension_semantics<core_parallel>], iteration_bounds = array<i64: 2>, tpu.core_type = #tpu.core_type<sc_scalar_subcore>, window_params = []} {
    return
  }
}

module attributes {stable_mosaic.version = 11 : i64} {
  func.func private @main(%arg0: i32) attributes {dimension_semantics = [#tpu.dimension_semantics<core_parallel>], iteration_bounds = array<i64: 2>, tpu.core_type = #tpu.core_type<sc_scalar_subcore>, window_params = []} {
    return
  }
}

module attributes {stable_mosaic.version = 11 : i64} {
  func.func @fused_kernel(%arg0: memref<1024x3xf32, #tpu.memory_space<vmem>>, %arg1: memref<64x16xf32, #tpu.memory_space<vmem>>, %arg2: memref<128x64xf32, #tpu.memory_space<vmem>>, %arg3: memref<128x3xf32, #tpu.memory_space<vmem>>, %arg4: memref<16x8xf32, #tpu.memory_space<vmem>>, %arg5: memref<16x3xf32, #tpu.memory_space<vmem>>, %arg6: memref<16x2xf32, #tpu.memory_space<vmem>>, %arg7: memref<64x16xf32, #tpu.memory_space<vmem>>, %arg8: memref<256x64xf32, #tpu.memory_space<vmem>>, %arg9: memref<3x16xf32, #tpu.memory_space<vmem>>, %arg10: memref<1x16xf32, #tpu.memory_space<vmem>>, %arg11: memref<16x16xf32, #tpu.memory_space<vmem>>, %arg12: memref<1x16xf32, #tpu.memory_space<vmem>>, %arg13: memref<16x32xf32, #tpu.memory_space<vmem>>, %arg14: memref<1x32xf32, #tpu.memory_space<vmem>>, %arg15: memref<32x32xf32, #tpu.memory_space<vmem>>, %arg16: memref<3x32xf32, #tpu.memory_space<vmem>>, %arg17: memref<1x32xf32, #tpu.memory_space<vmem>>, %arg18: memref<32x32xf32, #tpu.memory_space<vmem>>, %arg19: memref<1x32xf32, #tpu.memory_space<vmem>>, %arg20: memref<32x64xf32, #tpu.memory_space<vmem>>, %arg21: memref<1x64xf32, #tpu.memory_space<vmem>>, %arg22: memref<64x64xf32, #tpu.memory_space<vmem>>, %arg23: memref<3x64xf32, #tpu.memory_space<vmem>>, %arg24: memref<1x64xf32, #tpu.memory_space<vmem>>, %arg25: memref<64x128xf32, #tpu.memory_space<vmem>>, %arg26: memref<1x128xf32, #tpu.memory_space<vmem>>, %arg27: memref<128x128xf32, #tpu.memory_space<vmem>>, %arg28: memref<1x128xf32, #tpu.memory_space<vmem>>, %arg29: memref<128x64xf32, #tpu.memory_space<vmem>>, %arg30: memref<64x64xf32, #tpu.memory_space<vmem>>, %arg31: memref<1x64xf32, #tpu.memory_space<vmem>>, %arg32: memref<64x64xf32, #tpu.memory_space<vmem>>, %arg33: memref<1x64xf32, #tpu.memory_space<vmem>>, %arg34: memref<64x32xf32, #tpu.memory_space<vmem>>, %arg35: memref<32x32xf32, #tpu.memory_space<vmem>>, %arg36: memref<1x32xf32, #tpu.memory_space<vmem>>, %arg37: memref<32x32xf32, #tpu.memory_space<vmem>>, %arg38: memref<1x32xf32, #tpu.memory_space<vmem>>, %arg39: memref<32x64xf32, #tpu.memory_space<vmem>>, %arg40: memref<1x64xf32, #tpu.memory_space<vmem>>, %arg41: memref<64x32xf32, #tpu.memory_space<vmem>>, %arg42: memref<1x32xf32, #tpu.memory_space<vmem>>, %arg43: memref<32x32xf32, #tpu.memory_space<vmem>>, %arg44: memref<1x32xf32, #tpu.memory_space<vmem>>, %arg45: memref<32x32xf32, #tpu.memory_space<vmem>>, %arg46: memref<1x32xf32, #tpu.memory_space<vmem>>, %arg47: memref<32x32xf32, #tpu.memory_space<vmem>>, %arg48: memref<1x32xf32, #tpu.memory_space<vmem>>, %arg49: memref<32x3xf32, #tpu.memory_space<vmem>>, %arg50: memref<1x3xf32, #tpu.memory_space<vmem>>, %arg51: memref<256x3xf32, #tpu.memory_space<vmem>>) attributes {dimension_semantics = [], scalar_prefetch = 0 : i64, scratch_operands = 0 : i64, tpu.core_type = #tpu.core_type<tc>} {
    %c0 = arith.constant 0 : index
    %c0_0 = arith.constant 0 : index
    %0 = vector.load %arg0[%c0, %c0_0] : memref<1024x3xf32, #tpu.memory_space<vmem>>, vector<1024x3xf32>
    %c0_1 = arith.constant 0 : index
    %c0_2 = arith.constant 0 : index
    %1 = vector.load %arg9[%c0_1, %c0_2] : memref<3x16xf32, #tpu.memory_space<vmem>>, vector<3x16xf32>
    %cst = arith.constant dense<0.000000e+00> : vector<1024x16xf32>
    %2 = tpu.matmul %0, %1, %cst {dimension_numbers = #tpu.dot_dimension_numbers<[1], [0], [0], [1], [0, 0, 1, 1], [], []>} : vector<1024x3xf32>, vector<3x16xf32>, vector<1024x16xf32> -> vector<1024x16xf32>
    %c0_3 = arith.constant 0 : index
    %c0_4 = arith.constant 0 : index
    %3 = vector.load %arg10[%c0_3, %c0_4] : memref<1x16xf32, #tpu.memory_space<vmem>>, vector<1x16xf32>
    %4 = vector.broadcast %3 : vector<1x16xf32> to vector<1024x16xf32>
    %5 = arith.addf %2, %4 : vector<1024x16xf32>
    %cst_5 = arith.constant 0.000000e+00 : f32
    %6 = vector.broadcast %cst_5 : f32 to vector<1024x16xf32>
    %7 = arith.maximumf %5, %6 : vector<1024x16xf32>
    %c0_6 = arith.constant 0 : index
    %c0_7 = arith.constant 0 : index
    %8 = vector.load %arg11[%c0_6, %c0_7] : memref<16x16xf32, #tpu.memory_space<vmem>>, vector<16x16xf32>
    %cst_8 = arith.constant dense<0.000000e+00> : vector<1024x16xf32>
    %9 = tpu.matmul %7, %8, %cst_8 {dimension_numbers = #tpu.dot_dimension_numbers<[1], [0], [0], [1], [0, 0, 1, 1], [], []>} : vector<1024x16xf32>, vector<16x16xf32>, vector<1024x16xf32> -> vector<1024x16xf32>
    %c0_9 = arith.constant 0 : index
    %c0_10 = arith.constant 0 : index
    %10 = vector.load %arg12[%c0_9, %c0_10] : memref<1x16xf32, #tpu.memory_space<vmem>>, vector<1x16xf32>
    %11 = vector.broadcast %10 : vector<1x16xf32> to vector<1024x16xf32>
    %12 = arith.addf %9, %11 : vector<1024x16xf32>
    %cst_11 = arith.constant 0.000000e+00 : f32
    %13 = vector.broadcast %cst_11 : f32 to vector<1024x16xf32>
    %14 = arith.maximumf %12, %13 : vector<1024x16xf32>
    %c0_12 = arith.constant 0 : index
    %c0_13 = arith.constant 0 : index
    %15 = vector.load %arg13[%c0_12, %c0_13] : memref<16x32xf32, #tpu.memory_space<vmem>>, vector<16x32xf32>
    %cst_14 = arith.constant dense<0.000000e+00> : vector<1024x32xf32>
    %16 = tpu.matmul %14, %15, %cst_14 {dimension_numbers = #tpu.dot_dimension_numbers<[1], [0], [0], [1], [0, 0, 1, 1], [], []>} : vector<1024x16xf32>, vector<16x32xf32>, vector<1024x32xf32> -> vector<1024x32xf32>
    %c0_15 = arith.constant 0 : index
    %c0_16 = arith.constant 0 : index
    %17 = vector.load %arg14[%c0_15, %c0_16] : memref<1x32xf32, #tpu.memory_space<vmem>>, vector<1x32xf32>
    %18 = vector.broadcast %17 : vector<1x32xf32> to vector<1024x32xf32>
    %19 = arith.addf %16, %18 : vector<1024x32xf32>
    %20 = vector.shape_cast %19 : vector<1024x32xf32> to vector<64x16x32xf32>
    %c0_17 = arith.constant 0 : index
    %c0_18 = arith.constant 0 : index
    %21 = vector.load %arg1[%c0_17, %c0_18] : memref<64x16xf32, #tpu.memory_space<vmem>>, vector<64x16xf32>
    %22 = vector.shape_cast %21 : vector<64x16xf32> to vector<64x16xf32>
    %23 = vector.shape_cast %22 : vector<64x16xf32> to vector<64x16x1xf32>
    %24 = vector.broadcast %23 : vector<64x16x1xf32> to vector<64x16x32xf32>
    %25 = arith.addf %20, %24 : vector<64x16x32xf32>
    %cst_19 = arith.constant dense<0xFF800000> : vector<64x32xf32>
    %26 = vector.multi_reduction <maximumf>, %25, %cst_19 [1] : vector<64x16x32xf32> to vector<64x32xf32>
    %c0_20 = arith.constant 0 : index
    %c0_21 = arith.constant 0 : index
    %27 = vector.load %arg2[%c0_20, %c0_21] : memref<128x64xf32, #tpu.memory_space<vmem>>, vector<128x64xf32>
    %cst_22 = arith.constant dense<0.000000e+00> : vector<128x32xf32>
    %28 = tpu.matmul %27, %26, %cst_22 {dimension_numbers = #tpu.dot_dimension_numbers<[1], [0], [0], [1], [0, 0, 1, 1], [], []>} : vector<128x64xf32>, vector<64x32xf32>, vector<128x32xf32> -> vector<128x32xf32>
    %c0_23 = arith.constant 0 : index
    %c0_24 = arith.constant 0 : index
    %29 = vector.load %arg15[%c0_23, %c0_24] : memref<32x32xf32, #tpu.memory_space<vmem>>, vector<32x32xf32>
    %cst_25 = arith.constant dense<0.000000e+00> : vector<128x32xf32>
    %30 = tpu.matmul %28, %29, %cst_25 {dimension_numbers = #tpu.dot_dimension_numbers<[1], [0], [0], [1], [0, 0, 1, 1], [], []>} : vector<128x32xf32>, vector<32x32xf32>, vector<128x32xf32> -> vector<128x32xf32>
    %c0_26 = arith.constant 0 : index
    %c0_27 = arith.constant 0 : index
    %31 = vector.load %arg3[%c0_26, %c0_27] : memref<128x3xf32, #tpu.memory_space<vmem>>, vector<128x3xf32>
    %c0_28 = arith.constant 0 : index
    %c0_29 = arith.constant 0 : index
    %32 = vector.load %arg16[%c0_28, %c0_29] : memref<3x32xf32, #tpu.memory_space<vmem>>, vector<3x32xf32>
    %cst_30 = arith.constant dense<0.000000e+00> : vector<128x32xf32>
    %33 = tpu.matmul %31, %32, %cst_30 {dimension_numbers = #tpu.dot_dimension_numbers<[1], [0], [0], [1], [0, 0, 1, 1], [], []>} : vector<128x3xf32>, vector<3x32xf32>, vector<128x32xf32> -> vector<128x32xf32>
    %34 = arith.addf %30, %33 : vector<128x32xf32>
    %c0_31 = arith.constant 0 : index
    %c0_32 = arith.constant 0 : index
    %35 = vector.load %arg17[%c0_31, %c0_32] : memref<1x32xf32, #tpu.memory_space<vmem>>, vector<1x32xf32>
    %36 = vector.broadcast %35 : vector<1x32xf32> to vector<128x32xf32>
    %37 = arith.addf %34, %36 : vector<128x32xf32>
    %cst_33 = arith.constant 0.000000e+00 : f32
    %38 = vector.broadcast %cst_33 : f32 to vector<128x32xf32>
    %39 = arith.maximumf %37, %38 : vector<128x32xf32>
    %c0_34 = arith.constant 0 : index
    %c0_35 = arith.constant 0 : index
    %40 = vector.load %arg18[%c0_34, %c0_35] : memref<32x32xf32, #tpu.memory_space<vmem>>, vector<32x32xf32>
    %cst_36 = arith.constant dense<0.000000e+00> : vector<128x32xf32>
    %41 = tpu.matmul %39, %40, %cst_36 {dimension_numbers = #tpu.dot_dimension_numbers<[1], [0], [0], [1], [0, 0, 1, 1], [], []>} : vector<128x32xf32>, vector<32x32xf32>, vector<128x32xf32> -> vector<128x32xf32>
    %c0_37 = arith.constant 0 : index
    %c0_38 = arith.constant 0 : index
    %42 = vector.load %arg19[%c0_37, %c0_38] : memref<1x32xf32, #tpu.memory_space<vmem>>, vector<1x32xf32>
    %43 = vector.broadcast %42 : vector<1x32xf32> to vector<128x32xf32>
    %44 = arith.addf %41, %43 : vector<128x32xf32>
    %cst_39 = arith.constant 0.000000e+00 : f32
    %45 = vector.broadcast %cst_39 : f32 to vector<128x32xf32>
    %46 = arith.maximumf %44, %45 : vector<128x32xf32>
    %c0_40 = arith.constant 0 : index
    %c0_41 = arith.constant 0 : index
    %47 = vector.load %arg20[%c0_40, %c0_41] : memref<32x64xf32, #tpu.memory_space<vmem>>, vector<32x64xf32>
    %cst_42 = arith.constant dense<0.000000e+00> : vector<128x64xf32>
    %48 = tpu.matmul %46, %47, %cst_42 {dimension_numbers = #tpu.dot_dimension_numbers<[1], [0], [0], [1], [0, 0, 1, 1], [], []>} : vector<128x32xf32>, vector<32x64xf32>, vector<128x64xf32> -> vector<128x64xf32>
    %c0_43 = arith.constant 0 : index
    %c0_44 = arith.constant 0 : index
    %49 = vector.load %arg21[%c0_43, %c0_44] : memref<1x64xf32, #tpu.memory_space<vmem>>, vector<1x64xf32>
    %50 = vector.broadcast %49 : vector<1x64xf32> to vector<128x64xf32>
    %51 = arith.addf %48, %50 : vector<128x64xf32>
    %52 = vector.shape_cast %51 : vector<128x64xf32> to vector<16x8x64xf32>
    %c0_45 = arith.constant 0 : index
    %c0_46 = arith.constant 0 : index
    %53 = vector.load %arg4[%c0_45, %c0_46] : memref<16x8xf32, #tpu.memory_space<vmem>>, vector<16x8xf32>
    %54 = vector.shape_cast %53 : vector<16x8xf32> to vector<16x8xf32>
    %55 = vector.shape_cast %54 : vector<16x8xf32> to vector<16x8x1xf32>
    %56 = vector.broadcast %55 : vector<16x8x1xf32> to vector<16x8x64xf32>
    %57 = arith.addf %52, %56 : vector<16x8x64xf32>
    %cst_47 = arith.constant dense<0xFF800000> : vector<16x64xf32>
    %58 = vector.multi_reduction <maximumf>, %57, %cst_47 [1] : vector<16x8x64xf32> to vector<16x64xf32>
    %c0_48 = arith.constant 0 : index
    %c0_49 = arith.constant 0 : index
    %59 = vector.load %arg22[%c0_48, %c0_49] : memref<64x64xf32, #tpu.memory_space<vmem>>, vector<64x64xf32>
    %cst_50 = arith.constant dense<0.000000e+00> : vector<16x64xf32>
    %60 = tpu.matmul %58, %59, %cst_50 {dimension_numbers = #tpu.dot_dimension_numbers<[1], [0], [0], [1], [0, 0, 1, 1], [], []>} : vector<16x64xf32>, vector<64x64xf32>, vector<16x64xf32> -> vector<16x64xf32>
    %c0_51 = arith.constant 0 : index
    %c0_52 = arith.constant 0 : index
    %61 = vector.load %arg5[%c0_51, %c0_52] : memref<16x3xf32, #tpu.memory_space<vmem>>, vector<16x3xf32>
    %c0_53 = arith.constant 0 : index
    %c0_54 = arith.constant 0 : index
    %62 = vector.load %arg23[%c0_53, %c0_54] : memref<3x64xf32, #tpu.memory_space<vmem>>, vector<3x64xf32>
    %cst_55 = arith.constant dense<0.000000e+00> : vector<16x64xf32>
    %63 = tpu.matmul %61, %62, %cst_55 {dimension_numbers = #tpu.dot_dimension_numbers<[1], [0], [0], [1], [0, 0, 1, 1], [], []>} : vector<16x3xf32>, vector<3x64xf32>, vector<16x64xf32> -> vector<16x64xf32>
    %64 = arith.addf %60, %63 : vector<16x64xf32>
    %c0_56 = arith.constant 0 : index
    %c0_57 = arith.constant 0 : index
    %65 = vector.load %arg24[%c0_56, %c0_57] : memref<1x64xf32, #tpu.memory_space<vmem>>, vector<1x64xf32>
    %66 = vector.broadcast %65 : vector<1x64xf32> to vector<16x64xf32>
    %67 = arith.addf %64, %66 : vector<16x64xf32>
    %cst_58 = arith.constant 0.000000e+00 : f32
    %68 = vector.broadcast %cst_58 : f32 to vector<16x64xf32>
    %69 = arith.maximumf %67, %68 : vector<16x64xf32>
    %c0_59 = arith.constant 0 : index
    %c0_60 = arith.constant 0 : index
    %70 = vector.load %arg25[%c0_59, %c0_60] : memref<64x128xf32, #tpu.memory_space<vmem>>, vector<64x128xf32>
    %cst_61 = arith.constant dense<0.000000e+00> : vector<16x128xf32>
    %71 = tpu.matmul %69, %70, %cst_61 {dimension_numbers = #tpu.dot_dimension_numbers<[1], [0], [0], [1], [0, 0, 1, 1], [], []>} : vector<16x64xf32>, vector<64x128xf32>, vector<16x128xf32> -> vector<16x128xf32>
    %c0_62 = arith.constant 0 : index
    %c0_63 = arith.constant 0 : index
    %72 = vector.load %arg26[%c0_62, %c0_63] : memref<1x128xf32, #tpu.memory_space<vmem>>, vector<1x128xf32>
    %73 = vector.broadcast %72 : vector<1x128xf32> to vector<16x128xf32>
    %74 = arith.addf %71, %73 : vector<16x128xf32>
    %cst_64 = arith.constant 0.000000e+00 : f32
    %75 = vector.broadcast %cst_64 : f32 to vector<16x128xf32>
    %76 = arith.maximumf %74, %75 : vector<16x128xf32>
    %c0_65 = arith.constant 0 : index
    %c0_66 = arith.constant 0 : index
    %77 = vector.load %arg27[%c0_65, %c0_66] : memref<128x128xf32, #tpu.memory_space<vmem>>, vector<128x128xf32>
    %cst_67 = arith.constant dense<0.000000e+00> : vector<16x128xf32>
    %78 = tpu.matmul %76, %77, %cst_67 {dimension_numbers = #tpu.dot_dimension_numbers<[1], [0], [0], [1], [0, 0, 1, 1], [], []>} : vector<16x128xf32>, vector<128x128xf32>, vector<16x128xf32> -> vector<16x128xf32>
    %c0_68 = arith.constant 0 : index
    %c0_69 = arith.constant 0 : index
    %79 = vector.load %arg28[%c0_68, %c0_69] : memref<1x128xf32, #tpu.memory_space<vmem>>, vector<1x128xf32>
    %80 = vector.broadcast %79 : vector<1x128xf32> to vector<16x128xf32>
    %81 = arith.addf %78, %80 : vector<16x128xf32>
    %82 = vector.shape_cast %81 : vector<16x128xf32> to vector<2x8x128xf32>
    %cst_70 = arith.constant dense<0xFF800000> : vector<2x128xf32>
    %83 = vector.multi_reduction <maximumf>, %82, %cst_70 [1] : vector<2x8x128xf32> to vector<2x128xf32>
    %c0_71 = arith.constant 0 : index
    %c0_72 = arith.constant 0 : index
    %84 = vector.load %arg6[%c0_71, %c0_72] : memref<16x2xf32, #tpu.memory_space<vmem>>, vector<16x2xf32>
    %cst_73 = arith.constant dense<0.000000e+00> : vector<16x128xf32>
    %85 = tpu.matmul %84, %83, %cst_73 {dimension_numbers = #tpu.dot_dimension_numbers<[1], [0], [0], [1], [0, 0, 1, 1], [], []>} : vector<16x2xf32>, vector<2x128xf32>, vector<16x128xf32> -> vector<16x128xf32>
    %c0_74 = arith.constant 0 : index
    %c0_75 = arith.constant 0 : index
    %86 = vector.load %arg29[%c0_74, %c0_75] : memref<128x64xf32, #tpu.memory_space<vmem>>, vector<128x64xf32>
    %cst_76 = arith.constant dense<0.000000e+00> : vector<16x64xf32>
    %87 = tpu.matmul %85, %86, %cst_76 {dimension_numbers = #tpu.dot_dimension_numbers<[1], [0], [0], [1], [0, 0, 1, 1], [], []>} : vector<16x128xf32>, vector<128x64xf32>, vector<16x64xf32> -> vector<16x64xf32>
    %c0_77 = arith.constant 0 : index
    %c0_78 = arith.constant 0 : index
    %88 = vector.load %arg30[%c0_77, %c0_78] : memref<64x64xf32, #tpu.memory_space<vmem>>, vector<64x64xf32>
    %cst_79 = arith.constant dense<0.000000e+00> : vector<16x64xf32>
    %89 = tpu.matmul %58, %88, %cst_79 {dimension_numbers = #tpu.dot_dimension_numbers<[1], [0], [0], [1], [0, 0, 1, 1], [], []>} : vector<16x64xf32>, vector<64x64xf32>, vector<16x64xf32> -> vector<16x64xf32>
    %90 = arith.addf %87, %89 : vector<16x64xf32>
    %c0_80 = arith.constant 0 : index
    %c0_81 = arith.constant 0 : index
    %91 = vector.load %arg31[%c0_80, %c0_81] : memref<1x64xf32, #tpu.memory_space<vmem>>, vector<1x64xf32>
    %92 = vector.broadcast %91 : vector<1x64xf32> to vector<16x64xf32>
    %93 = arith.addf %90, %92 : vector<16x64xf32>
    %cst_82 = arith.constant 0.000000e+00 : f32
    %94 = vector.broadcast %cst_82 : f32 to vector<16x64xf32>
    %95 = arith.maximumf %93, %94 : vector<16x64xf32>
    %c0_83 = arith.constant 0 : index
    %c0_84 = arith.constant 0 : index
    %96 = vector.load %arg32[%c0_83, %c0_84] : memref<64x64xf32, #tpu.memory_space<vmem>>, vector<64x64xf32>
    %cst_85 = arith.constant dense<0.000000e+00> : vector<16x64xf32>
    %97 = tpu.matmul %95, %96, %cst_85 {dimension_numbers = #tpu.dot_dimension_numbers<[1], [0], [0], [1], [0, 0, 1, 1], [], []>} : vector<16x64xf32>, vector<64x64xf32>, vector<16x64xf32> -> vector<16x64xf32>
    %c0_86 = arith.constant 0 : index
    %c0_87 = arith.constant 0 : index
    %98 = vector.load %arg33[%c0_86, %c0_87] : memref<1x64xf32, #tpu.memory_space<vmem>>, vector<1x64xf32>
    %99 = vector.broadcast %98 : vector<1x64xf32> to vector<16x64xf32>
    %100 = arith.addf %97, %99 : vector<16x64xf32>
    %c0_88 = arith.constant 0 : index
    %c0_89 = arith.constant 0 : index
    %101 = vector.load %arg7[%c0_88, %c0_89] : memref<64x16xf32, #tpu.memory_space<vmem>>, vector<64x16xf32>
    %cst_90 = arith.constant dense<0.000000e+00> : vector<64x64xf32>
    %102 = tpu.matmul %101, %100, %cst_90 {dimension_numbers = #tpu.dot_dimension_numbers<[1], [0], [0], [1], [0, 0, 1, 1], [], []>} : vector<64x16xf32>, vector<16x64xf32>, vector<64x64xf32> -> vector<64x64xf32>
    %c0_91 = arith.constant 0 : index
    %c0_92 = arith.constant 0 : index
    %103 = vector.load %arg34[%c0_91, %c0_92] : memref<64x32xf32, #tpu.memory_space<vmem>>, vector<64x32xf32>
    %cst_93 = arith.constant dense<0.000000e+00> : vector<64x32xf32>
    %104 = tpu.matmul %102, %103, %cst_93 {dimension_numbers = #tpu.dot_dimension_numbers<[1], [0], [0], [1], [0, 0, 1, 1], [], []>} : vector<64x64xf32>, vector<64x32xf32>, vector<64x32xf32> -> vector<64x32xf32>
    %c0_94 = arith.constant 0 : index
    %c0_95 = arith.constant 0 : index
    %105 = vector.load %arg35[%c0_94, %c0_95] : memref<32x32xf32, #tpu.memory_space<vmem>>, vector<32x32xf32>
    %cst_96 = arith.constant dense<0.000000e+00> : vector<64x32xf32>
    %106 = tpu.matmul %26, %105, %cst_96 {dimension_numbers = #tpu.dot_dimension_numbers<[1], [0], [0], [1], [0, 0, 1, 1], [], []>} : vector<64x32xf32>, vector<32x32xf32>, vector<64x32xf32> -> vector<64x32xf32>
    %107 = arith.addf %104, %106 : vector<64x32xf32>
    %c0_97 = arith.constant 0 : index
    %c0_98 = arith.constant 0 : index
    %108 = vector.load %arg36[%c0_97, %c0_98] : memref<1x32xf32, #tpu.memory_space<vmem>>, vector<1x32xf32>
    %109 = vector.broadcast %108 : vector<1x32xf32> to vector<64x32xf32>
    %110 = arith.addf %107, %109 : vector<64x32xf32>
    %cst_99 = arith.constant 0.000000e+00 : f32
    %111 = vector.broadcast %cst_99 : f32 to vector<64x32xf32>
    %112 = arith.maximumf %110, %111 : vector<64x32xf32>
    %c0_100 = arith.constant 0 : index
    %c0_101 = arith.constant 0 : index
    %113 = vector.load %arg37[%c0_100, %c0_101] : memref<32x32xf32, #tpu.memory_space<vmem>>, vector<32x32xf32>
    %cst_102 = arith.constant dense<0.000000e+00> : vector<64x32xf32>
    %114 = tpu.matmul %112, %113, %cst_102 {dimension_numbers = #tpu.dot_dimension_numbers<[1], [0], [0], [1], [0, 0, 1, 1], [], []>} : vector<64x32xf32>, vector<32x32xf32>, vector<64x32xf32> -> vector<64x32xf32>
    %c0_103 = arith.constant 0 : index
    %c0_104 = arith.constant 0 : index
    %115 = vector.load %arg38[%c0_103, %c0_104] : memref<1x32xf32, #tpu.memory_space<vmem>>, vector<1x32xf32>
    %116 = vector.broadcast %115 : vector<1x32xf32> to vector<64x32xf32>
    %117 = arith.addf %114, %116 : vector<64x32xf32>
    %c0_105 = arith.constant 0 : index
    %c0_106 = arith.constant 0 : index
    %118 = vector.load %arg8[%c0_105, %c0_106] : memref<256x64xf32, #tpu.memory_space<vmem>>, vector<256x64xf32>
    %cst_107 = arith.constant dense<0.000000e+00> : vector<256x32xf32>
    %119 = tpu.matmul %118, %117, %cst_107 {dimension_numbers = #tpu.dot_dimension_numbers<[1], [0], [0], [1], [0, 0, 1, 1], [], []>} : vector<256x64xf32>, vector<64x32xf32>, vector<256x32xf32> -> vector<256x32xf32>
    %c0_108 = arith.constant 0 : index
    %c0_109 = arith.constant 0 : index
    %120 = vector.load %arg39[%c0_108, %c0_109] : memref<32x64xf32, #tpu.memory_space<vmem>>, vector<32x64xf32>
    %cst_110 = arith.constant dense<0.000000e+00> : vector<256x64xf32>
    %121 = tpu.matmul %119, %120, %cst_110 {dimension_numbers = #tpu.dot_dimension_numbers<[1], [0], [0], [1], [0, 0, 1, 1], [], []>} : vector<256x32xf32>, vector<32x64xf32>, vector<256x64xf32> -> vector<256x64xf32>
    %c0_111 = arith.constant 0 : index
    %c0_112 = arith.constant 0 : index
    %122 = vector.load %arg40[%c0_111, %c0_112] : memref<1x64xf32, #tpu.memory_space<vmem>>, vector<1x64xf32>
    %123 = vector.broadcast %122 : vector<1x64xf32> to vector<256x64xf32>
    %124 = arith.addf %121, %123 : vector<256x64xf32>
    %cst_113 = arith.constant 0.000000e+00 : f32
    %125 = vector.broadcast %cst_113 : f32 to vector<256x64xf32>
    %126 = arith.maximumf %124, %125 : vector<256x64xf32>
    %c0_114 = arith.constant 0 : index
    %c0_115 = arith.constant 0 : index
    %127 = vector.load %arg41[%c0_114, %c0_115] : memref<64x32xf32, #tpu.memory_space<vmem>>, vector<64x32xf32>
    %cst_116 = arith.constant dense<0.000000e+00> : vector<256x32xf32>
    %128 = tpu.matmul %126, %127, %cst_116 {dimension_numbers = #tpu.dot_dimension_numbers<[1], [0], [0], [1], [0, 0, 1, 1], [], []>} : vector<256x64xf32>, vector<64x32xf32>, vector<256x32xf32> -> vector<256x32xf32>
    %c0_117 = arith.constant 0 : index
    %c0_118 = arith.constant 0 : index
    %129 = vector.load %arg42[%c0_117, %c0_118] : memref<1x32xf32, #tpu.memory_space<vmem>>, vector<1x32xf32>
    %130 = vector.broadcast %129 : vector<1x32xf32> to vector<256x32xf32>
    %131 = arith.addf %128, %130 : vector<256x32xf32>
    %cst_119 = arith.constant 0.000000e+00 : f32
    %132 = vector.broadcast %cst_119 : f32 to vector<256x32xf32>
    %133 = arith.maximumf %131, %132 : vector<256x32xf32>
    %c0_120 = arith.constant 0 : index
    %c0_121 = arith.constant 0 : index
    %134 = vector.load %arg43[%c0_120, %c0_121] : memref<32x32xf32, #tpu.memory_space<vmem>>, vector<32x32xf32>
    %cst_122 = arith.constant dense<0.000000e+00> : vector<256x32xf32>
    %135 = tpu.matmul %133, %134, %cst_122 {dimension_numbers = #tpu.dot_dimension_numbers<[1], [0], [0], [1], [0, 0, 1, 1], [], []>} : vector<256x32xf32>, vector<32x32xf32>, vector<256x32xf32> -> vector<256x32xf32>
    %c0_123 = arith.constant 0 : index
    %c0_124 = arith.constant 0 : index
    %136 = vector.load %arg44[%c0_123, %c0_124] : memref<1x32xf32, #tpu.memory_space<vmem>>, vector<1x32xf32>
    %137 = vector.broadcast %136 : vector<1x32xf32> to vector<256x32xf32>
    %138 = arith.addf %135, %137 : vector<256x32xf32>
    %c0_125 = arith.constant 0 : index
    %c0_126 = arith.constant 0 : index
    %139 = vector.load %arg45[%c0_125, %c0_126] : memref<32x32xf32, #tpu.memory_space<vmem>>, vector<32x32xf32>
    %cst_127 = arith.constant dense<0.000000e+00> : vector<256x32xf32>
    %140 = tpu.matmul %138, %139, %cst_127 {dimension_numbers = #tpu.dot_dimension_numbers<[1], [0], [0], [1], [0, 0, 1, 1], [], []>} : vector<256x32xf32>, vector<32x32xf32>, vector<256x32xf32> -> vector<256x32xf32>
    %c0_128 = arith.constant 0 : index
    %c0_129 = arith.constant 0 : index
    %141 = vector.load %arg46[%c0_128, %c0_129] : memref<1x32xf32, #tpu.memory_space<vmem>>, vector<1x32xf32>
    %142 = vector.broadcast %141 : vector<1x32xf32> to vector<256x32xf32>
    %143 = arith.addf %140, %142 : vector<256x32xf32>
    %cst_130 = arith.constant 0.000000e+00 : f32
    %144 = vector.broadcast %cst_130 : f32 to vector<256x32xf32>
    %145 = arith.maximumf %143, %144 : vector<256x32xf32>
    %c0_131 = arith.constant 0 : index
    %c0_132 = arith.constant 0 : index
    %146 = vector.load %arg47[%c0_131, %c0_132] : memref<32x32xf32, #tpu.memory_space<vmem>>, vector<32x32xf32>
    %cst_133 = arith.constant dense<0.000000e+00> : vector<256x32xf32>
    %147 = tpu.matmul %145, %146, %cst_133 {dimension_numbers = #tpu.dot_dimension_numbers<[1], [0], [0], [1], [0, 0, 1, 1], [], []>} : vector<256x32xf32>, vector<32x32xf32>, vector<256x32xf32> -> vector<256x32xf32>
    %c0_134 = arith.constant 0 : index
    %c0_135 = arith.constant 0 : index
    %148 = vector.load %arg48[%c0_134, %c0_135] : memref<1x32xf32, #tpu.memory_space<vmem>>, vector<1x32xf32>
    %149 = vector.broadcast %148 : vector<1x32xf32> to vector<256x32xf32>
    %150 = arith.addf %147, %149 : vector<256x32xf32>
    %cst_136 = arith.constant 0.000000e+00 : f32
    %151 = vector.broadcast %cst_136 : f32 to vector<256x32xf32>
    %152 = arith.maximumf %150, %151 : vector<256x32xf32>
    %c0_137 = arith.constant 0 : index
    %c0_138 = arith.constant 0 : index
    %153 = vector.load %arg49[%c0_137, %c0_138] : memref<32x3xf32, #tpu.memory_space<vmem>>, vector<32x3xf32>
    %cst_139 = arith.constant dense<0.000000e+00> : vector<256x3xf32>
    %154 = tpu.matmul %152, %153, %cst_139 {dimension_numbers = #tpu.dot_dimension_numbers<[1], [0], [0], [1], [0, 0, 1, 1], [], []>} : vector<256x32xf32>, vector<32x3xf32>, vector<256x3xf32> -> vector<256x3xf32>
    %c0_140 = arith.constant 0 : index
    %c0_141 = arith.constant 0 : index
    %155 = vector.load %arg50[%c0_140, %c0_141] : memref<1x3xf32, #tpu.memory_space<vmem>>, vector<1x3xf32>
    %156 = vector.broadcast %155 : vector<1x3xf32> to vector<256x3xf32>
    %157 = arith.addf %154, %156 : vector<256x3xf32>
    %c0_142 = arith.constant 0 : index
    %c0_143 = arith.constant 0 : index
    %158 = vector.load %arg51[%c0_142, %c0_143] : memref<256x3xf32, #tpu.memory_space<vmem>>, vector<256x3xf32>
    tpu.vector_store %arg51[%c0_142, %c0_143], %157 {strides = array<i32>} : memref<256x3xf32, #tpu.memory_space<vmem>>, vector<256x3xf32>,
    return
  }
}

</mosaic_0001>

<llo_original>
// kernel: custom-call.18
$region0: #{custom-call.18}
  %s0 = inlined_call_operand.vmem [shape: f32[2,128], index: 0, kind: output, shape index: {}]

// kernel: custom-call.19
$region0: #{custom-call.19}
  %s0 = inlined_call_operand.vmem [shape: f32[2,32], index: 0, kind: output, shape index: {}]

// kernel: neg.8
$region0: #{neg.8}
  #allocation0 [shape = 's32[1]{0}', space=sflag, size = 0x4, scoped, tag = 'scoped memory for neg.8']
  %s0 = inlined_call_operand.vmem [shape: f32[2,32,128], index: 0, kind: input, shape index: {}]
  %s1 = inlined_call_operand.vmem [shape: f32[2,32,128], index: 1, kind: output, shape index: {}]
  %v2 = vld [vmem:[%s0] sm:$0xff]
  %3 = xla_tuple %v2
  %4 = xla_tuple %3
  %v5 = vxor.u32 %v2, 2147483648
  %6 = xla_tuple %v5
  %7 = vst [vmem:[%s1] sm:$0xff] %v5
  %s8 = scalar_lea.vmem %s0, 32
  %v9 = vld [vmem:[%s8] sm:$0xff]
  %10 = xla_tuple %v9
  %11 = xla_tuple %10
  %v12 = vxor.u32 %v9, 2147483648
  %13 = xla_tuple %v12
  %s14 = scalar_lea.vmem %s1, 32
  %15 = vst [vmem:[%s14] sm:$0xff] %v12
  %s16 = scalar_lea.vmem %s0, 8
  %v17 = vld [vmem:[%s16] sm:$0xff]
  %18 = xla_tuple %v17
  %19 = xla_tuple %18
  %v20 = vxor.u32 %v17, 2147483648
  %21 = xla_tuple %v20
  %s22 = scalar_lea.vmem %s1, 8
  %23 = vst [vmem:[%s22] sm:$0xff] %v20
  %s24 = scalar_lea.vmem %s0, 40
  %v25 = vld [vmem:[%s24] sm:$0xff]
  %26 = xla_tuple %v25
  %27 = xla_tuple %26
  %v28 = vxor.u32 %v25, 2147483648
  %29 = xla_tuple %v28
  %s30 = scalar_lea.vmem %s1, 40
  %31 = vst [vmem:[%s30] sm:$0xff] %v28
  %s32 = scalar_lea.vmem %s0, 16
  %v33 = vld [vmem:[%s32] sm:$0xff]
  %34 = xla_tuple %v33
  %35 = xla_tuple %34
  %v36 = vxor.u32 %v33, 2147483648
  %37 = xla_tuple %v36
  %s38 = scalar_lea.vmem %s1, 16
  %39 = vst [vmem:[%s38] sm:$0xff] %v36
  %s40 = scalar_lea.vmem %s0, 48
  %v41 = vld [vmem:[%s40] sm:$0xff]
  %42 = xla_tuple %v41
  %43 = xla_tuple %42
  %v44 = vxor.u32 %v41, 2147483648
  %45 = xla_tuple %v44
  %s46 = scalar_lea.vmem %s1, 48
  %47 = vst [vmem:[%s46] sm:$0xff] %v44
  %s48 = scalar_lea.vmem %s0, 24
  %v49 = vld [vmem:[%s48] sm:$0xff]
  %50 = xla_tuple %v49
  %51 = xla_tuple %50
  %v52 = vxor.u32 %v49, 2147483648
  %53 = xla_tuple %v52
  %s54 = scalar_lea.vmem %s1, 24
  %55 = vst [vmem:[%s54] sm:$0xff] %v52
  %s56 = scalar_lea.vmem %s0, 56
  %v57 = vld [vmem:[%s56] sm:$0xff]
  %58 = xla_tuple %v57
  %59 = xla_tuple %58
  %v60 = vxor.u32 %v57, 2147483648
  %61 = xla_tuple %v60
  %s62 = scalar_lea.vmem %s1, 56
  %63 = vst [vmem:[%s62] sm:$0xff] %v60

// kernel: neg.10
$region0: #{neg.10}
  #allocation0 [shape = 's32[1]{0}', space=sflag, size = 0x4, scoped, tag = 'scoped memory for neg.10']
  %s0 = inlined_call_operand.vmem [shape: f32[2,8,32], index: 0, kind: input, shape index: {}]
  %s1 = inlined_call_operand.vmem [shape: f32[2,8,32], index: 1, kind: output, shape index: {}]
  %v2 = vld [vmem:[%s0] sm:$0xff]
  %3 = xla_tuple %v2
  %4 = xla_tuple %3
  %v5 = vxor.u32 %v2, 2147483648
  %6 = xla_tuple %v5
  %7 = vst [vmem:[%s1] sm:$0xff] %v5
  %s8 = scalar_lea.vmem %s0, 8
  %v9 = vld [vmem:[%s8] sm:$0xff]
  %10 = xla_tuple %v9
  %11 = xla_tuple %10
  %v12 = vxor.u32 %v9, 2147483648
  %13 = xla_tuple %v12
  %s14 = scalar_lea.vmem %s1, 8
  %15 = vst [vmem:[%s14] sm:$0xff] %v12

// kernel: neg.12
$region0: #{neg.12}
  #allocation0 [shape = 's32[1]{0}', space=sflag, size = 0x4, scoped, tag = 'scoped memory for neg.12']
  %s0 = inlined_call_operand.vmem [shape: f32[2,32,8], index: 0, kind: input, shape index: {}]
  %s1 = inlined_call_operand.vmem [shape: f32[2,32,8], index: 1, kind: output, shape index: {}]
  %v2 = vld [vmem:[%s0] sm:$0xff]
  %3 = xla_tuple %v2
  %4 = xla_tuple %3
  %v5 = vxor.u32 %v2, 2147483648
  %6 = xla_tuple %v5
  %7 = vst [vmem:[%s1] sm:$0xff] %v5
  %s8 = scalar_lea.vmem %s0, 8
  %v9 = vld [vmem:[%s8] sm:$0xff]
  %10 = xla_tuple %v9
  %11 = xla_tuple %10
  %v12 = vxor.u32 %v9, 2147483648
  %13 = xla_tuple %v12
  %s14 = scalar_lea.vmem %s1, 8
  %15 = vst [vmem:[%s14] sm:$0xff] %v12

// kernel: neg.14
$region0: #{neg.14}
  #allocation0 [shape = 's32[1]{0}', space=sflag, size = 0x4, scoped, tag = 'scoped memory for neg.14']
  %s0 = inlined_call_operand.vmem [shape: f32[2,128,32], index: 0, kind: input, shape index: {}]
  %s1 = inlined_call_operand.vmem [shape: f32[2,128,32], index: 1, kind: output, shape index: {}]
  %v2 = vld [vmem:[%s0] sm:$0xff]
  %3 = xla_tuple %v2
  %4 = xla_tuple %3
  %v5 = vxor.u32 %v2, 2147483648
  %6 = xla_tuple %v5
  %7 = vst [vmem:[%s1] sm:$0xff] %v5
  %s8 = scalar_lea.vmem %s0, 32
  %v9 = vld [vmem:[%s8] sm:$0xff]
  %10 = xla_tuple %v9
  %11 = xla_tuple %10
  %v12 = vxor.u32 %v9, 2147483648
  %13 = xla_tuple %v12
  %s14 = scalar_lea.vmem %s1, 32
  %15 = vst [vmem:[%s14] sm:$0xff] %v12
  %s16 = scalar_lea.vmem %s0, 8
  %v17 = vld [vmem:[%s16] sm:$0xff]
  %18 = xla_tuple %v17
  %19 = xla_tuple %18
  %v20 = vxor.u32 %v17, 2147483648
  %21 = xla_tuple %v20
  %s22 = scalar_lea.vmem %s1, 8
  %23 = vst [vmem:[%s22] sm:$0xff] %v20
  %s24 = scalar_lea.vmem %s0, 40
  %v25 = vld [vmem:[%s24] sm:$0xff]
  %26 = xla_tuple %v25
  %27 = xla_tuple %26
  %v28 = vxor.u32 %v25, 2147483648
  %29 = xla_tuple %v28
  %s30 = scalar_lea.vmem %s1, 40
  %31 = vst [vmem:[%s30] sm:$0xff] %v28
  %s32 = scalar_lea.vmem %s0, 16
  %v33 = vld [vmem:[%s32] sm:$0xff]
  %34 = xla_tuple %v33
  %35 = xla_tuple %34
  %v36 = vxor.u32 %v33, 2147483648
  %37 = xla_tuple %v36
  %s38 = scalar_lea.vmem %s1, 16
  %39 = vst [vmem:[%s38] sm:$0xff] %v36
  %s40 = scalar_lea.vmem %s0, 48
  %v41 = vld [vmem:[%s40] sm:$0xff]
  %42 = xla_tuple %v41
  %43 = xla_tuple %42
  %v44 = vxor.u32 %v41, 2147483648
  %45 = xla_tuple %v44
  %s46 = scalar_lea.vmem %s1, 48
  %47 = vst [vmem:[%s46] sm:$0xff] %v44
  %s48 = scalar_lea.vmem %s0, 24
  %v49 = vld [vmem:[%s48] sm:$0xff]
  %50 = xla_tuple %v49
  %51 = xla_tuple %50
  %v52 = vxor.u32 %v49, 2147483648
  %53 = xla_tuple %v52
  %s54 = scalar_lea.vmem %s1, 24
  %55 = vst [vmem:[%s54] sm:$0xff] %v52
  %s56 = scalar_lea.vmem %s0, 56
  %v57 = vld [vmem:[%s56] sm:$0xff]
  %58 = xla_tuple %v57
  %59 = xla_tuple %58
  %v60 = vxor.u32 %v57, 2147483648
  %61 = xla_tuple %v60
  %s62 = scalar_lea.vmem %s1, 56
  %63 = vst [vmem:[%s62] sm:$0xff] %v60

// kernel: _lambda_.1
$region0: #{_lambda_.1}
  #allocation0 [shape = 'u32[]', space=smem, size = 0x4, offset = 0x4, fixed_abs, tag = 'smem constant byte address 0x4 - core index']
  #allocation1 [shape = 'u32[144,128]{1,0:T(1,128)}', space=vmem, size = 0x12000, scoped, tag = 'internal scratch']
  %s0 = inlined_call_operand.smem [shape: u32[52], index: -1, kind: input, shape index: {}]
  %s1 = sld [smem:[%s0]]
  %s2 = scalar_lea.smem %s0, 1
  %s3 = sld [smem:[%s2]]
  %s4 = scalar_lea.smem %s0, 2
  %s5 = sld [smem:[%s4]]
  %s6 = scalar_lea.smem %s0, 3
  %s7 = sld [smem:[%s6]]
  %s8 = scalar_lea.smem %s0, 4
  %s9 = sld [smem:[%s8]]
  %s10 = scalar_lea.smem %s0, 5
  %s11 = sld [smem:[%s10]]
  %s12 = scalar_lea.smem %s0, 6
  %s13 = sld [smem:[%s12]]
  %s14 = scalar_lea.smem %s0, 7
  %s15 = sld [smem:[%s14]]
  %s16 = scalar_lea.smem %s0, 8
  %s17 = sld [smem:[%s16]]
  %s18 = scalar_lea.smem %s0, 9
  %s19 = sld [smem:[%s18]]
  %s20 = scalar_lea.smem %s0, 10
  %s21 = sld [smem:[%s20]]
  %s22 = scalar_lea.smem %s0, 11
  %s23 = sld [smem:[%s22]]
  %s24 = scalar_lea.smem %s0, 12
  %s25 = sld [smem:[%s24]]
  %s26 = scalar_lea.smem %s0, 13
  %s27 = sld [smem:[%s26]]
  %s28 = scalar_lea.smem %s0, 14
  %s29 = sld [smem:[%s28]]
  %s30 = scalar_lea.smem %s0, 15
  %s31 = sld [smem:[%s30]]
  %s32 = scalar_lea.smem %s0, 16
  %s33 = sld [smem:[%s32]]
  %s34 = scalar_lea.smem %s0, 17
  %s35 = sld [smem:[%s34]]
  %s36 = scalar_lea.smem %s0, 18
  %s37 = sld [smem:[%s36]]
  %s38 = scalar_lea.smem %s0, 19
  %s39 = sld [smem:[%s38]]
  %s40 = scalar_lea.smem %s0, 20
  %s41 = sld [smem:[%s40]]
  %s42 = scalar_lea.smem %s0, 21
  %s43 = sld [smem:[%s42]]
  %s44 = scalar_lea.smem %s0, 22
  %s45 = sld [smem:[%s44]]
  %s46 = scalar_lea.smem %s0, 23
  %s47 = sld [smem:[%s46]]
  %s48 = scalar_lea.smem %s0, 24
  %s49 = sld [smem:[%s48]]
  %s50 = scalar_lea.smem %s0, 25
  %s51 = sld [smem:[%s50]]
  %s52 = scalar_lea.smem %s0, 26
  %s53 = sld [smem:[%s52]]
  %s54 = scalar_lea.smem %s0, 27
  %s55 = sld [smem:[%s54]]
  %s56 = scalar_lea.smem %s0, 28
  %s57 = sld [smem:[%s56]]
  %s58 = scalar_lea.smem %s0, 29
  %s59 = sld [smem:[%s58]]
  %s60 = scalar_lea.smem %s0, 30
  %s61 = sld [smem:[%s60]]
  %s62 = scalar_lea.smem %s0, 31
  %s63 = sld [smem:[%s62]]
  %s64 = scalar_lea.smem %s0, 32
  %s65 = sld [smem:[%s64]]
  %s66 = scalar_lea.smem %s0, 33
  %s67 = sld [smem:[%s66]]
  %s68 = scalar_lea.smem %s0, 34
  %s69 = sld [smem:[%s68]]
  %s70 = scalar_lea.smem %s0, 35
  %s71 = sld [smem:[%s70]]
  %s72 = scalar_lea.smem %s0, 36
  %s73 = sld [smem:[%s72]]
  %s74 = scalar_lea.smem %s0, 37
  %s75 = sld [smem:[%s74]]
  %s76 = scalar_lea.smem %s0, 38
  %s77 = sld [smem:[%s76]]
  %s78 = scalar_lea.smem %s0, 39
  %s79 = sld [smem:[%s78]]
  %s80 = scalar_lea.smem %s0, 40
  %s81 = sld [smem:[%s80]]
  %s82 = scalar_lea.smem %s0, 41
  %s83 = sld [smem:[%s82]]
  %s84 = scalar_lea.smem %s0, 42
  %s85 = sld [smem:[%s84]]
  %s86 = scalar_lea.smem %s0, 43
  %s87 = sld [smem:[%s86]]
  %s88 = scalar_lea.smem %s0, 44
  %s89 = sld [smem:[%s88]]
  %s90 = scalar_lea.smem %s0, 45
  %s91 = sld [smem:[%s90]]
  %s92 = scalar_lea.smem %s0, 46
  %s93 = sld [smem:[%s92]]
  %s94 = scalar_lea.smem %s0, 47
  %s95 = sld [smem:[%s94]]
  %s96 = scalar_lea.smem %s0, 48
  %s97 = sld [smem:[%s96]]
  %s98 = scalar_lea.smem %s0, 49
  %s99 = sld [smem:[%s98]]
  %s100 = scalar_lea.smem %s0, 50
  %s101 = sld [smem:[%s100]]
  %s102 = scalar_lea.smem %s0, 51
  %s103 = sld [smem:[%s102]]
  %s104 = sld [smem:[#allocation0]]
  $region386: #{_lambda_.1} parent=0
    _
  %s106 = ssub.s32 1, %s104
  %s107 = scalar_select 0, %s106, %s104
  $region1: #{_lambda_.1} parent=0
    #allocation2 [shape = 'u8[65536]{0}', space=vmem, size = 0x10000, scoped, tag = 'input window, operand 3, single buffered']
    #allocation3 [shape = 's32[1]{0}', space=sflag, size = 0x4, scoped, tag = 'scoped memory for _lambda_.1']
    #allocation4 [shape = 'u8[8192]{0}', space=vmem, size = 0x2000, scoped, tag = 'input window, operand 4, single buffered']
    #allocation5 [shape = 's32[1]{0}', space=sflag, size = 0x4, scoped, tag = 'scoped memory for _lambda_.1']
    #allocation6 [shape = 'u8[8192]{0}', space=vmem, size = 0x2000, scoped, tag = 'input window, operand 5, single buffered']
    #allocation7 [shape = 'u8[8192]{0}', space=vmem, size = 0x2000, scoped, tag = 'input window, operand 6, single buffered']
    #allocation8 [shape = 's32[1]{0}', space=sflag, size = 0x4, scoped, tag = 'scoped memory for _lambda_.1']
    #allocation9 [shape = 'u8[32768]{0}', space=vmem, size = 0x8000, scoped, tag = 'input window, operand 7, single buffered']
    #allocation10 [shape = 'u8[8192]{0}', space=vmem, size = 0x2000, scoped, tag = 'input window, operand 11, single buffered']
    #allocation11 [shape = 's32[1]{0}', space=sflag, size = 0x4, scoped, tag = 'scoped memory for _lambda_.1']
    #allocation12 [shape = 'u8[8192]{0}', space=vmem, size = 0x2000, scoped, tag = 'input window, operand 13, single buffered']
    #allocation13 [shape = 'u8[512]{0}', space=vmem, size = 0x400, scoped, tag = 'input window, operand 14, single buffered']
    #allocation14 [shape = 's32[1]{0}', space=sflag, size = 0x4, scoped, tag = 'scoped memory for _lambda_.1']
    #allocation15 [shape = 'u8[16384]{0}', space=vmem, size = 0x4000, scoped, tag = 'input window, operand 15, single buffered']
    #allocation16 [shape = 'u8[512]{0}', space=vmem, size = 0x400, scoped, tag = 'input window, operand 17, single buffered']
    #allocation17 [shape = 's32[1]{0}', space=sflag, size = 0x4, scoped, tag = 'scoped memory for _lambda_.1']
    #allocation18 [shape = 'u8[16384]{0}', space=vmem, size = 0x4000, scoped, tag = 'input window, operand 18, single buffered']
    #allocation19 [shape = 'u8[512]{0}', space=vmem, size = 0x400, scoped, tag = 'input window, operand 19, single buffered']
    #allocation20 [shape = 's32[1]{0}', space=sflag, size = 0x4, scoped, tag = 'scoped memory for _lambda_.1']
    #allocation21 [shape = 'u8[16384]{0}', space=vmem, size = 0x4000, scoped, tag = 'input window, operand 20, single buffered']
    #allocation22 [shape = 'u8[512]{0}', space=vmem, size = 0x400, scoped, tag = 'input window, operand 21, single buffered']
    #allocation23 [shape = 's32[1]{0}', space=sflag, size = 0x4, scoped, tag = 'scoped memory for _lambda_.1']
    #allocation24 [shape = 'u8[32768]{0}', space=vmem, size = 0x8000, scoped, tag = 'input window, operand 22, single buffered']
    #allocation25 [shape = 'u8[2048]{0}', space=vmem, size = 0x800, scoped, tag = 'input window, operand 23, single buffered']
    #allocation26 [shape = 's32[1]{0}', space=sflag, size = 0x4, scoped, tag = 'scoped memory for _lambda_.1']
    #allocation27 [shape = 'u8[512]{0}', space=vmem, size = 0x400, scoped, tag = 'input window, operand 24, single buffered']
    #allocation28 [shape = 'u8[32768]{0}', space=vmem, size = 0x8000, scoped, tag = 'input window, operand 25, single buffered']
    #allocation29 [shape = 's32[1]{0}', space=sflag, size = 0x4, scoped, tag = 'scoped memory for _lambda_.1']
    #allocation30 [shape = 'u8[512]{0}', space=vmem, size = 0x400, scoped, tag = 'input window, operand 26, single buffered']
    #allocation31 [shape = 'u8[65536]{0}', space=vmem, size = 0x10000, scoped, tag = 'input window, operand 27, single buffered']
    #allocation32 [shape = 's32[1]{0}', space=sflag, size = 0x4, scoped, tag = 'scoped memory for _lambda_.1']
    #allocation33 [shape = 'u8[512]{0}', space=vmem, size = 0x400, scoped, tag = 'input window, operand 28, single buffered']
    #allocation34 [shape = 'u8[65536]{0}', space=vmem, size = 0x10000, scoped, tag = 'input window, operand 29, single buffered']
    #allocation35 [shape = 's32[1]{0}', space=sflag, size = 0x4, scoped, tag = 'scoped memory for _lambda_.1']
    #allocation36 [shape = 'u8[32768]{0}', space=vmem, size = 0x8000, scoped, tag = 'input window, operand 30, single buffered']
    #allocation37 [shape = 'u8[512]{0}', space=vmem, size = 0x400, scoped, tag = 'input window, operand 31, single buffered']
    #allocation38 [shape = 's32[1]{0}', space=sflag, size = 0x4, scoped, tag = 'scoped memory for _lambda_.1']
    #allocation39 [shape = 'u8[32768]{0}', space=vmem, size = 0x8000, scoped, tag = 'input window, operand 32, single buffered']
    #allocation40 [shape = 'u8[512]{0}', space=vmem, size = 0x400, scoped, tag = 'input window, operand 33, single buffered']
    #allocation41 [shape = 's32[1]{0}', space=sflag, size = 0x4, scoped, tag = 'scoped memory for _lambda_.1']
    #allocation42 [shape = 'u8[32768]{0}', space=vmem, size = 0x8000, scoped, tag = 'input window, operand 34, single buffered']
    #allocation43 [shape = 'u8[16384]{0}', space=vmem, size = 0x4000, scoped, tag = 'input window, operand 35, single buffered']
    #allocation44 [shape = 's32[1]{0}', space=sflag, size = 0x4, scoped, tag = 'scoped memory for _lambda_.1']
    #allocation45 [shape = 'u8[512]{0}', space=vmem, size = 0x400, scoped, tag = 'input window, operand 36, single buffered']
    #allocation46 [shape = 'u8[16384]{0}', space=vmem, size = 0x4000, scoped, tag = 'input window, operand 37, single buffered']
    #allocation47 [shape = 's32[1]{0}', space=sflag, size = 0x4, scoped, tag = 'scoped memory for _lambda_.1']
    #allocation48 [shape = 'u8[512]{0}', space=vmem, size = 0x400, scoped, tag = 'input window, operand 38, single buffered']
    #allocation49 [shape = 'u8[16384]{0}', space=vmem, size = 0x4000, scoped, tag = 'input window, operand 39, single buffered']
    #allocation50 [shape = 's32[1]{0}', space=sflag, size = 0x4, scoped, tag = 'scoped memory for _lambda_.1']
    #allocation51 [shape = 'u8[512]{0}', space=vmem, size = 0x400, scoped, tag = 'input window, operand 40, single buffered']
    #allocation52 [shape = 'u8[32768]{0}', space=vmem, size = 0x8000, scoped, tag = 'input window, operand 41, single buffered']
    #allocation53 [shape = 's32[1]{0}', space=sflag, size = 0x4, scoped, tag = 'scoped memory for _lambda_.1']
    #allocation54 [shape = 'u8[512]{0}', space=vmem, size = 0x400, scoped, tag = 'input window, operand 42, single buffered']
    #allocation55 [shape = 'u8[16384]{0}', space=vmem, size = 0x4000, scoped, tag = 'input window, operand 43, single buffered']
    #allocation56 [shape = 's32[1]{0}', space=sflag, size = 0x4, scoped, tag = 'scoped memory for _lambda_.1']
    #allocation57 [shape = 'u8[512]{0}', space=vmem, size = 0x400, scoped, tag = 'input window, operand 44, single buffered']
    #allocation58 [shape = 'u8[16384]{0}', space=vmem, size = 0x4000, scoped, tag = 'input window, operand 45, single buffered']
    #allocation59 [shape = 's32[1]{0}', space=sflag, size = 0x4, scoped, tag = 'scoped memory for _lambda_.1']
    #allocation60 [shape = 'u8[512]{0}', space=vmem, size = 0x400, scoped, tag = 'input window, operand 46, single buffered']
    #allocation61 [shape = 'u8[16384]{0}', space=vmem, size = 0x4000, scoped, tag = 'input window, operand 47, single buffered']
    #allocation62 [shape = 's32[1]{0}', space=sflag, size = 0x4, scoped, tag = 'scoped memory for _lambda_.1']
    #allocation63 [shape = 'u8[512]{0}', space=vmem, size = 0x400, scoped, tag = 'input window, operand 48, single buffered']
    #allocation64 [shape = 'u8[16384]{0}', space=vmem, size = 0x4000, scoped, tag = 'input window, operand 49, single buffered']
    #allocation65 [shape = 's32[1]{0}', space=sflag, size = 0x4, scoped, tag = 'scoped memory for _lambda_.1']
    #allocation66 [shape = 'u8[512]{0}', space=vmem, size = 0x400, scoped, tag = 'input window, operand 50, single buffered']
    %108 = vsyncpa [#allocation3], 0
    %109 = vsyncpa [#allocation5], 0
    %110 = vsyncpa [#allocation8], 0
    %111 = vsyncpa [#allocation11], 0
    %112 = vsyncpa [#allocation14], 0
    %113 = vsyncpa [#allocation17], 0
    %114 = vsyncpa [#allocation20], 0
    %115 = vsyncpa [#allocation23], 0
    %116 = vsyncpa [#allocation26], 0
    %117 = vsyncpa [#allocation29], 0
    %118 = vsyncpa [#allocation32], 0
    %119 = vsyncpa [#allocation35], 0
    %120 = vsyncpa [#allocation38], 0
    %121 = vsyncpa [#allocation41], 0
    %122 = vsyncpa [#allocation44], 0
    %123 = vsyncpa [#allocation47], 0
    %124 = vsyncpa [#allocation50], 0
    %125 = vsyncpa [#allocation53], 0
    %126 = vsyncpa [#allocation56], 0
    %127 = vsyncpa [#allocation59], 0
    %128 = vsyncpa [#allocation62], 0
    %129 = vsyncpa [#allocation65], 0
    // Predicated region
    $region2: #{_lambda_.1} parent=1 // pred_check
      _
    $region3: #{_lambda_.1} parent=1 // pred_check_branch
      %131 = sbr.rel (0) target = $region5
    $region4: #{_lambda_.1} parent=1 // pred_region
      _
    $region5: #{_lambda_.1} parent=1 // pred_fallthru
      _
    // Predicated region
    $region6: #{_lambda_.1} parent=1 // pred_check
      _
    $region7: #{_lambda_.1} parent=1 // pred_check_branch
      %133 = sbr.rel (0) target = $region9
    $region8: #{_lambda_.1} parent=1 // pred_region
      _
    $region9: #{_lambda_.1} parent=1 // pred_fallthru
      _
    // Predicated region
    $region10: #{_lambda_.1} parent=1 // pred_check
      _
    $region11: #{_lambda_.1} parent=1 // pred_check_branch
      %135 = sbr.rel (0) target = $region13
    $region12: #{_lambda_.1} parent=1 // pred_region
      _
    $region13: #{_lambda_.1} parent=1 // pred_fallthru
      _
    // Predicated region
    $region14: #{_lambda_.1} parent=1 // pred_check
      _
    $region15: #{_lambda_.1} parent=1 // pred_check_branch
      %137 = sbr.rel (0) target = $region17
    $region16: #{_lambda_.1} parent=1 // pred_region
      %s139 = ssub.s32 2048, 2048
      %140 = vsyncadd [#allocation3], %s139
      %s141 = sshll.u32 [#allocation2], 4
      %s142 = int_to_ptr.vmem [resolvable:$true] %s141
      %147 = dma.hbm_to_vmem [thread:$0]  %s7, 2048, %s142, [#allocation3], 128, 128, 8
    $region17: #{_lambda_.1} parent=1 // pred_fallthru
      _
    // Predicated region
    $region18: #{_lambda_.1} parent=1 // pred_check
      _
    $region19: #{_lambda_.1} parent=1 // pred_check_branch
      %149 = sbr.rel (0) target = $region21
    $region20: #{_lambda_.1} parent=1 // pred_region
      %s151 = ssub.s32 256, 256
      %152 = vsyncadd [#allocation5], %s151
      %s153 = sshll.u32 [#allocation4], 4
      %s154 = int_to_ptr.vmem [resolvable:$true] %s153
      %159 = dma.hbm_to_vmem [thread:$0]  %s9, 256, %s154, [#allocation5], 128, 128, 8
    $region21: #{_lambda_.1} parent=1 // pred_fallthru
      _
    // Predicated region
    $region22: #{_lambda_.1} parent=1 // pred_check
      _
    $region23: #{_lambda_.1} parent=1 // pred_check_branch
      %161 = sbr.rel (0) target = $region25
    $region24: #{_lambda_.1} parent=1 // pred_region
      %s163 = ssub.s32 256, 256
      %164 = vsyncadd [#allocation5], %s163
      %s165 = sshll.u32 [#allocation6], 4
      %s166 = int_to_ptr.vmem [resolvable:$true] %s165
      %171 = dma.hbm_to_vmem [thread:$0]  %s11, 256, %s166, [#allocation5], 128, 128, 8
    $region25: #{_lambda_.1} parent=1 // pred_fallthru
      _
    // Predicated region
    $region26: #{_lambda_.1} parent=1 // pred_check
      _
    $region27: #{_lambda_.1} parent=1 // pred_check_branch
      %173 = sbr.rel (0) target = $region29
    $region28: #{_lambda_.1} parent=1 // pred_region
      %s175 = ssub.s32 256, 256
      %176 = vsyncadd [#allocation8], %s175
      %s177 = sshll.u32 [#allocation7], 4
      %s178 = int_to_ptr.vmem [resolvable:$true] %s177
      %183 = dma.hbm_to_vmem [thread:$0]  %s13, 256, %s178, [#allocation8], 128, 128, 8
    $region29: #{_lambda_.1} parent=1 // pred_fallthru
      _
    // Predicated region
    $region30: #{_lambda_.1} parent=1 // pred_check
      _
    $region31: #{_lambda_.1} parent=1 // pred_check_branch
      %185 = sbr.rel (0) target = $region33
    $region32: #{_lambda_.1} parent=1 // pred_region
      %s187 = ssub.s32 1024, 1024
      %188 = vsyncadd [#allocation8], %s187
      %s189 = sshll.u32 [#allocation9], 4
      %s190 = int_to_ptr.vmem [resolvable:$true] %s189
      %195 = dma.hbm_to_vmem [thread:$0]  %s15, 1024, %s190, [#allocation8], 128, 128, 8
    $region33: #{_lambda_.1} parent=1 // pred_fallthru
      _
    // Predicated region
    $region34: #{_lambda_.1} parent=1 // pred_check
      _
    $region35: #{_lambda_.1} parent=1 // pred_check_branch
      %197 = sbr.rel (0) target = $region37
    $region36: #{_lambda_.1} parent=1 // pred_region
      _
    $region37: #{_lambda_.1} parent=1 // pred_fallthru
      _
    // Predicated region
    $region38: #{_lambda_.1} parent=1 // pred_check
      _
    $region39: #{_lambda_.1} parent=1 // pred_check_branch
      %199 = sbr.rel (0) target = $region41
    $region40: #{_lambda_.1} parent=1 // pred_region
      _
    $region41: #{_lambda_.1} parent=1 // pred_fallthru
      _
    // Predicated region
    $region42: #{_lambda_.1} parent=1 // pred_check
      _
    $region43: #{_lambda_.1} parent=1 // pred_check_branch
      %201 = sbr.rel (0) target = $region45
    $region44: #{_lambda_.1} parent=1 // pred_region
      _
    $region45: #{_lambda_.1} parent=1 // pred_fallthru
      _
    // Predicated region
    $region46: #{_lambda_.1} parent=1 // pred_check
      _
    $region47: #{_lambda_.1} parent=1 // pred_check_branch
      %203 = sbr.rel (0) target = $region49
    $region48: #{_lambda_.1} parent=1 // pred_region
      %s205 = ssub.s32 256, 256
      %206 = vsyncadd [#allocation11], %s205
      %s207 = sshll.u32 [#allocation10], 4
      %s208 = int_to_ptr.vmem [resolvable:$true] %s207
      %213 = dma.hbm_to_vmem [thread:$0]  %s23, 256, %s208, [#allocation11], 128, 128, 8
    $region49: #{_lambda_.1} parent=1 // pred_fallthru
      _
    // Predicated region
    $region50: #{_lambda_.1} parent=1 // pred_check
      _
    $region51: #{_lambda_.1} parent=1 // pred_check_branch
      %215 = sbr.rel (0) target = $region53
    $region52: #{_lambda_.1} parent=1 // pred_region
      _
    $region53: #{_lambda_.1} parent=1 // pred_fallthru
      _
    // Predicated region
    $region54: #{_lambda_.1} parent=1 // pred_check
      _
    $region55: #{_lambda_.1} parent=1 // pred_check_branch
      %217 = sbr.rel (0) target = $region57
    $region56: #{_lambda_.1} parent=1 // pred_region
      %s219 = ssub.s32 256, 256
      %220 = vsyncadd [#allocation11], %s219
      %s221 = sshll.u32 [#allocation12], 4
      %s222 = int_to_ptr.vmem [resolvable:$true] %s221
      %227 = dma.hbm_to_vmem [thread:$0]  %s27, 256, %s222, [#allocation11], 128, 128, 8
    $region57: #{_lambda_.1} parent=1 // pred_fallthru
      _
    // Predicated region
    $region58: #{_lambda_.1} parent=1 // pred_check
      _
    $region59: #{_lambda_.1} parent=1 // pred_check_branch
      %229 = sbr.rel (0) target = $region61
    $region60: #{_lambda_.1} parent=1 // pred_region
      %s231 = ssub.s32 16, 16
      %232 = vsyncadd [#allocation14], %s231
      %s234 = sshll.u32 [#allocation13], 4
      %s235 = int_to_ptr.vmem [resolvable:$true] %s234
      %237 = dma.hbm_to_vmem [thread:$0]  %s29, 16, %s235, [#allocation14]
    $region61: #{_lambda_.1} parent=1 // pred_fallthru
      _
    // Predicated region
    $region62: #{_lambda_.1} parent=1 // pred_check
      _
    $region63: #{_lambda_.1} parent=1 // pred_check_branch
      %239 = sbr.rel (0) target = $region65
    $region64: #{_lambda_.1} parent=1 // pred_region
      %s241 = ssub.s32 512, 512
      %242 = vsyncadd [#allocation14], %s241
      %s243 = sshll.u32 [#allocation15], 4
      %s244 = int_to_ptr.vmem [resolvable:$true] %s243
      %249 = dma.hbm_to_vmem [thread:$0]  %s31, 512, %s244, [#allocation14], 128, 128, 8
    $region65: #{_lambda_.1} parent=1 // pred_fallthru
      _
    // Predicated region
    $region66: #{_lambda_.1} parent=1 // pred_check
      _
    $region67: #{_lambda_.1} parent=1 // pred_check_branch
      %251 = sbr.rel (0) target = $region69
    $region68: #{_lambda_.1} parent=1 // pred_region
      _
    $region69: #{_lambda_.1} parent=1 // pred_fallthru
      _
    // Predicated region
    $region70: #{_lambda_.1} parent=1 // pred_check
      _
    $region71: #{_lambda_.1} parent=1 // pred_check_branch
      %253 = sbr.rel (0) target = $region73
    $region72: #{_lambda_.1} parent=1 // pred_region
      %s255 = ssub.s32 16, 16
      %256 = vsyncadd [#allocation17], %s255
      %s258 = sshll.u32 [#allocation16], 4
      %s259 = int_to_ptr.vmem [resolvable:$true] %s258
      %261 = dma.hbm_to_vmem [thread:$0]  %s35, 16, %s259, [#allocation17]
    $region73: #{_lambda_.1} parent=1 // pred_fallthru
      _
    // Predicated region
    $region74: #{_lambda_.1} parent=1 // pred_check
      _
    $region75: #{_lambda_.1} parent=1 // pred_check_branch
      %263 = sbr.rel (0) target = $region77
    $region76: #{_lambda_.1} parent=1 // pred_region
      %s265 = ssub.s32 512, 512
      %266 = vsyncadd [#allocation17], %s265
      %s267 = sshll.u32 [#allocation18], 4
      %s268 = int_to_ptr.vmem [resolvable:$true] %s267
      %273 = dma.hbm_to_vmem [thread:$0]  %s37, 512, %s268, [#allocation17], 128, 128, 8
    $region77: #{_lambda_.1} parent=1 // pred_fallthru
      _
    // Predicated region
    $region78: #{_lambda_.1} parent=1 // pred_check
      _
    $region79: #{_lambda_.1} parent=1 // pred_check_branch
      %275 = sbr.rel (0) target = $region81
    $region80: #{_lambda_.1} parent=1 // pred_region
      %s277 = ssub.s32 16, 16
      %278 = vsyncadd [#allocation20], %s277
      %s280 = sshll.u32 [#allocation19], 4
      %s281 = int_to_ptr.vmem [resolvable:$true] %s280
      %283 = dma.hbm_to_vmem [thread:$0]  %s39, 16, %s281, [#allocation20]
    $region81: #{_lambda_.1} parent=1 // pred_fallthru
      _
    // Predicated region
    $region82: #{_lambda_.1} parent=1 // pred_check
      _
    $region83: #{_lambda_.1} parent=1 // pred_check_branch
      %285 = sbr.rel (0) target = $region85
    $region84: #{_lambda_.1} parent=1 // pred_region
      %s287 = ssub.s32 512, 512
      %288 = vsyncadd [#allocation20], %s287
      %s289 = sshll.u32 [#allocation21], 4
      %s290 = int_to_ptr.vmem [resolvable:$true] %s289
      %295 = dma.hbm_to_vmem [thread:$0]  %s41, 512, %s290, [#allocation20], 128, 128, 8
    $region85: #{_lambda_.1} parent=1 // pred_fallthru
      _
    // Predicated region
    $region86: #{_lambda_.1} parent=1 // pred_check
      _
    $region87: #{_lambda_.1} parent=1 // pred_check_branch
      %297 = sbr.rel (0) target = $region89
    $region88: #{_lambda_.1} parent=1 // pred_region
      %s299 = ssub.s32 16, 16
      %300 = vsyncadd [#allocation23], %s299
      %s302 = sshll.u32 [#allocation22], 4
      %s303 = int_to_ptr.vmem [resolvable:$true] %s302
      %305 = dma.hbm_to_vmem [thread:$0]  %s43, 16, %s303, [#allocation23]
    $region89: #{_lambda_.1} parent=1 // pred_fallthru
      _
    // Predicated region
    $region90: #{_lambda_.1} parent=1 // pred_check
      _
    $region91: #{_lambda_.1} parent=1 // pred_check_branch
      %307 = sbr.rel (0) target = $region93
    $region92: #{_lambda_.1} parent=1 // pred_region
      %s309 = ssub.s32 1024, 1024
      %310 = vsyncadd [#allocation23], %s309
      %s311 = sshll.u32 [#allocation24], 4
      %s312 = int_to_ptr.vmem [resolvable:$true] %s311
      %317 = dma.hbm_to_vmem [thread:$0]  %s45, 1024, %s312, [#allocation23], 128, 128, 8
    $region93: #{_lambda_.1} parent=1 // pred_fallthru
      _
    // Predicated region
    $region94: #{_lambda_.1} parent=1 // pred_check
      _
    $region95: #{_lambda_.1} parent=1 // pred_check_branch
      %319 = sbr.rel (0) target = $region97
    $region96: #{_lambda_.1} parent=1 // pred_region
      %s321 = ssub.s32 64, 64
      %322 = vsyncadd [#allocation26], %s321
      %s324 = sshll.u32 [#allocation25], 4
      %s325 = int_to_ptr.vmem [resolvable:$true] %s324
      %327 = dma.hbm_to_vmem [thread:$0]  %s47, 64, %s325, [#allocation26]
    $region97: #{_lambda_.1} parent=1 // pred_fallthru
      _
    // Predicated region
    $region98: #{_lambda_.1} parent=1 // pred_check
      _
    $region99: #{_lambda_.1} parent=1 // pred_check_branch
      %329 = sbr.rel (0) target = $region101
    $region100: #{_lambda_.1} parent=1 // pred_region
      %s331 = ssub.s32 16, 16
      %332 = vsyncadd [#allocation26], %s331
      %s334 = sshll.u32 [#allocation27], 4
      %s335 = int_to_ptr.vmem [resolvable:$true] %s334
      %337 = dma.hbm_to_vmem [thread:$0]  %s49, 16, %s335, [#allocation26]
    $region101: #{_lambda_.1} parent=1 // pred_fallthru
      _
    // Predicated region
    $region102: #{_lambda_.1} parent=1 // pred_check
      _
    $region103: #{_lambda_.1} parent=1 // pred_check_branch
      %339 = sbr.rel (0) target = $region105
    $region104: #{_lambda_.1} parent=1 // pred_region
      %s341 = ssub.s32 1024, 1024
      %342 = vsyncadd [#allocation29], %s341
      %s343 = sshll.u32 [#allocation28], 4
      %s344 = int_to_ptr.vmem [resolvable:$true] %s343
      %349 = dma.hbm_to_vmem [thread:$0]  %s51, 1024, %s344, [#allocation29], 128, 128, 8
    $region105: #{_lambda_.1} parent=1 // pred_fallthru
      _
    // Predicated region
    $region106: #{_lambda_.1} parent=1 // pred_check
      _
    $region107: #{_lambda_.1} parent=1 // pred_check_branch
      %351 = sbr.rel (0) target = $region109
    $region108: #{_lambda_.1} parent=1 // pred_region
      %s353 = ssub.s32 16, 16
      %354 = vsyncadd [#allocation29], %s353
      %s356 = sshll.u32 [#allocation30], 4
      %s357 = int_to_ptr.vmem [resolvable:$true] %s356
      %359 = dma.hbm_to_vmem [thread:$0]  %s53, 16, %s357, [#allocation29]
    $region109: #{_lambda_.1} parent=1 // pred_fallthru
      _
    // Predicated region
    $region110: #{_lambda_.1} parent=1 // pred_check
      _
    $region111: #{_lambda_.1} parent=1 // pred_check_branch
      %361 = sbr.rel (0) target = $region113
    $region112: #{_lambda_.1} parent=1 // pred_region
      %s363 = ssub.s32 2048, 2048
      %364 = vsyncadd [#allocation32], %s363
      %s365 = sshll.u32 [#allocation31], 4
      %s366 = int_to_ptr.vmem [resolvable:$true] %s365
      %371 = dma.hbm_to_vmem [thread:$0]  %s55, 2048, %s366, [#allocation32], 128, 128, 8
    $region113: #{_lambda_.1} parent=1 // pred_fallthru
      _
    // Predicated region
    $region114: #{_lambda_.1} parent=1 // pred_check
      _
    $region115: #{_lambda_.1} parent=1 // pred_check_branch
      %373 = sbr.rel (0) target = $region117
    $region116: #{_lambda_.1} parent=1 // pred_region
      %s375 = ssub.s32 16, 16
      %376 = vsyncadd [#allocation32], %s375
      %s378 = sshll.u32 [#allocation33], 4
      %s379 = int_to_ptr.vmem [resolvable:$true] %s378
      %381 = dma.hbm_to_vmem [thread:$0]  %s57, 16, %s379, [#allocation32]
    $region117: #{_lambda_.1} parent=1 // pred_fallthru
      _
    // Predicated region
    $region118: #{_lambda_.1} parent=1 // pred_check
      _
    $region119: #{_lambda_.1} parent=1 // pred_check_branch
      %383 = sbr.rel (0) target = $region121
    $region120: #{_lambda_.1} parent=1 // pred_region
      %s385 = ssub.s32 2048, 2048
      %386 = vsyncadd [#allocation35], %s385
      %s387 = sshll.u32 [#allocation34], 4
      %s388 = int_to_ptr.vmem [resolvable:$true] %s387
      %393 = dma.hbm_to_vmem [thread:$0]  %s59, 2048, %s388, [#allocation35], 128, 128, 8
    $region121: #{_lambda_.1} parent=1 // pred_fallthru
      _
    // Predicated region
    $region122: #{_lambda_.1} parent=1 // pred_check
      _
    $region123: #{_lambda_.1} parent=1 // pred_check_branch
      %395 = sbr.rel (0) target = $region125
    $region124: #{_lambda_.1} parent=1 // pred_region
      %s397 = ssub.s32 1024, 1024
      %398 = vsyncadd [#allocation35], %s397
      %s399 = sshll.u32 [#allocation36], 4
      %s400 = int_to_ptr.vmem [resolvable:$true] %s399
      %405 = dma.hbm_to_vmem [thread:$0]  %s61, 1024, %s400, [#allocation35], 128, 128, 8
    $region125: #{_lambda_.1} parent=1 // pred_fallthru
      _
    // Predicated region
    $region126: #{_lambda_.1} parent=1 // pred_check
      _
    $region127: #{_lambda_.1} parent=1 // pred_check_branch
      %407 = sbr.rel (0) target = $region129
    $region128: #{_lambda_.1} parent=1 // pred_region
      %s409 = ssub.s32 16, 16
      %410 = vsyncadd [#allocation38], %s409
      %s412 = sshll.u32 [#allocation37], 4
      %s413 = int_to_ptr.vmem [resolvable:$true] %s412
      %415 = dma.hbm_to_vmem [thread:$0]  %s63, 16, %s413, [#allocation38]
    $region129: #{_lambda_.1} parent=1 // pred_fallthru
      _
    // Predicated region
    $region130: #{_lambda_.1} parent=1 // pred_check
      _
    $region131: #{_lambda_.1} parent=1 // pred_check_branch
      %417 = sbr.rel (0) target = $region133
    $region132: #{_lambda_.1} parent=1 // pred_region
      %s419 = ssub.s32 1024, 1024
      %420 = vsyncadd [#allocation38], %s419
      %s421 = sshll.u32 [#allocation39], 4
      %s422 = int_to_ptr.vmem [resolvable:$true] %s421
      %427 = dma.hbm_to_vmem [thread:$0]  %s65, 1024, %s422, [#allocation38], 128, 128, 8
    $region133: #{_lambda_.1} parent=1 // pred_fallthru
      _
    // Predicated region
    $region134: #{_lambda_.1} parent=1 // pred_check
      _
    $region135: #{_lambda_.1} parent=1 // pred_check_branch
      %429 = sbr.rel (0) target = $region137
    $region136: #{_lambda_.1} parent=1 // pred_region
      %s431 = ssub.s32 16, 16
      %432 = vsyncadd [#allocation41], %s431
      %s434 = sshll.u32 [#allocation40], 4
      %s435 = int_to_ptr.vmem [resolvable:$true] %s434
      %437 = dma.hbm_to_vmem [thread:$0]  %s67, 16, %s435, [#allocation41]
    $region137: #{_lambda_.1} parent=1 // pred_fallthru
      _
    // Predicated region
    $region138: #{_lambda_.1} parent=1 // pred_check
      _
    $region139: #{_lambda_.1} parent=1 // pred_check_branch
      %439 = sbr.rel (0) target = $region141
    $region140: #{_lambda_.1} parent=1 // pred_region
      %s441 = ssub.s32 1024, 1024
      %442 = vsyncadd [#allocation41], %s441
      %s443 = sshll.u32 [#allocation42], 4
      %s444 = int_to_ptr.vmem [resolvable:$true] %s443
      %449 = dma.hbm_to_vmem [thread:$0]  %s69, 1024, %s444, [#allocation41], 128, 128, 8
    $region141: #{_lambda_.1} parent=1 // pred_fallthru
      _
    // Predicated region
    $region142: #{_lambda_.1} parent=1 // pred_check
      _
    $region143: #{_lambda_.1} parent=1 // pred_check_branch
      %451 = sbr.rel (0) target = $region145
    $region144: #{_lambda_.1} parent=1 // pred_region
      %s453 = ssub.s32 512, 512
      %454 = vsyncadd [#allocation44], %s453
      %s455 = sshll.u32 [#allocation43], 4
      %s456 = int_to_ptr.vmem [resolvable:$true] %s455
      %461 = dma.hbm_to_vmem [thread:$0]  %s71, 512, %s456, [#allocation44], 128, 128, 8
    $region145: #{_lambda_.1} parent=1 // pred_fallthru
      _
    // Predicated region
    $region146: #{_lambda_.1} parent=1 // pred_check
      _
    $region147: #{_lambda_.1} parent=1 // pred_check_branch
      %463 = sbr.rel (0) target = $region149
    $region148: #{_lambda_.1} parent=1 // pred_region
      %s465 = ssub.s32 16, 16
      %466 = vsyncadd [#allocation44], %s465
      %s468 = sshll.u32 [#allocation45], 4
      %s469 = int_to_ptr.vmem [resolvable:$true] %s468
      %471 = dma.hbm_to_vmem [thread:$0]  %s73, 16, %s469, [#allocation44]
    $region149: #{_lambda_.1} parent=1 // pred_fallthru
      _
    // Predicated region
    $region150: #{_lambda_.1} parent=1 // pred_check
      _
    $region151: #{_lambda_.1} parent=1 // pred_check_branch
      %473 = sbr.rel (0) target = $region153
    $region152: #{_lambda_.1} parent=1 // pred_region
      %s475 = ssub.s32 512, 512
      %476 = vsyncadd [#allocation47], %s475
      %s477 = sshll.u32 [#allocation46], 4
      %s478 = int_to_ptr.vmem [resolvable:$true] %s477
      %483 = dma.hbm_to_vmem [thread:$0]  %s75, 512, %s478, [#allocation47], 128, 128, 8
    $region153: #{_lambda_.1} parent=1 // pred_fallthru
      _
    // Predicated region
    $region154: #{_lambda_.1} parent=1 // pred_check
      _
    $region155: #{_lambda_.1} parent=1 // pred_check_branch
      %485 = sbr.rel (0) target = $region157
    $region156: #{_lambda_.1} parent=1 // pred_region
      %s487 = ssub.s32 16, 16
      %488 = vsyncadd [#allocation47], %s487
      %s490 = sshll.u32 [#allocation48], 4
      %s491 = int_to_ptr.vmem [resolvable:$true] %s490
      %493 = dma.hbm_to_vmem [thread:$0]  %s77, 16, %s491, [#allocation47]
    $region157: #{_lambda_.1} parent=1 // pred_fallthru
      _
    // Predicated region
    $region158: #{_lambda_.1} parent=1 // pred_check
      _
    $region159: #{_lambda_.1} parent=1 // pred_check_branch
      %495 = sbr.rel (0) target = $region161
    $region160: #{_lambda_.1} parent=1 // pred_region
      %s497 = ssub.s32 512, 512
      %498 = vsyncadd [#allocation50], %s497
      %s499 = sshll.u32 [#allocation49], 4
      %s500 = int_to_ptr.vmem [resolvable:$true] %s499
      %505 = dma.hbm_to_vmem [thread:$0]  %s79, 512, %s500, [#allocation50], 128, 128, 8
    $region161: #{_lambda_.1} parent=1 // pred_fallthru
      _
    // Predicated region
    $region162: #{_lambda_.1} parent=1 // pred_check
      _
    $region163: #{_lambda_.1} parent=1 // pred_check_branch
      %507 = sbr.rel (0) target = $region165
    $region164: #{_lambda_.1} parent=1 // pred_region
      %s509 = ssub.s32 16, 16
      %510 = vsyncadd [#allocation50], %s509
      %s512 = sshll.u32 [#allocation51], 4
      %s513 = int_to_ptr.vmem [resolvable:$true] %s512
      %515 = dma.hbm_to_vmem [thread:$0]  %s81, 16, %s513, [#allocation50]
    $region165: #{_lambda_.1} parent=1 // pred_fallthru
      _
    // Predicated region
    $region166: #{_lambda_.1} parent=1 // pred_check
      _
    $region167: #{_lambda_.1} parent=1 // pred_check_branch
      %517 = sbr.rel (0) target = $region169
    $region168: #{_lambda_.1} parent=1 // pred_region
      %s519 = ssub.s32 1024, 1024
      %520 = vsyncadd [#allocation53], %s519
      %s521 = sshll.u32 [#allocation52], 4
      %s522 = int_to_ptr.vmem [resolvable:$true] %s521
      %527 = dma.hbm_to_vmem [thread:$0]  %s83, 1024, %s522, [#allocation53], 128, 128, 8
    $region169: #{_lambda_.1} parent=1 // pred_fallthru
      _
    // Predicated region
    $region170: #{_lambda_.1} parent=1 // pred_check
      _
    $region171: #{_lambda_.1} parent=1 // pred_check_branch
      %529 = sbr.rel (0) target = $region173
    $region172: #{_lambda_.1} parent=1 // pred_region
      %s531 = ssub.s32 16, 16
      %532 = vsyncadd [#allocation53], %s531
      %s534 = sshll.u32 [#allocation54], 4
      %s535 = int_to_ptr.vmem [resolvable:$true] %s534
      %537 = dma.hbm_to_vmem [thread:$0]  %s85, 16, %s535, [#allocation53]
    $region173: #{_lambda_.1} parent=1 // pred_fallthru
      _
    // Predicated region
    $region174: #{_lambda_.1} parent=1 // pred_check
      _
    $region175: #{_lambda_.1} parent=1 // pred_check_branch
      %539 = sbr.rel (0) target = $region177
    $region176: #{_lambda_.1} parent=1 // pred_region
      %s541 = ssub.s32 512, 512
      %542 = vsyncadd [#allocation56], %s541
      %s543 = sshll.u32 [#allocation55], 4
      %s544 = int_to_ptr.vmem [resolvable:$true] %s543
      %549 = dma.hbm_to_vmem [thread:$0]  %s87, 512, %s544, [#allocation56], 128, 128, 8
    $region177: #{_lambda_.1} parent=1 // pred_fallthru
      _
    // Predicated region
    $region178: #{_lambda_.1} parent=1 // pred_check
      _
    $region179: #{_lambda_.1} parent=1 // pred_check_branch
      %551 = sbr.rel (0) target = $region181
    $region180: #{_lambda_.1} parent=1 // pred_region
      %s553 = ssub.s32 16, 16
      %554 = vsyncadd [#allocation56], %s553
      %s556 = sshll.u32 [#allocation57], 4
      %s557 = int_to_ptr.vmem [resolvable:$true] %s556
      %559 = dma.hbm_to_vmem [thread:$0]  %s89, 16, %s557, [#allocation56]
    $region181: #{_lambda_.1} parent=1 // pred_fallthru
      _
    // Predicated region
    $region182: #{_lambda_.1} parent=1 // pred_check
      _
    $region183: #{_lambda_.1} parent=1 // pred_check_branch
      %561 = sbr.rel (0) target = $region185
    $region184: #{_lambda_.1} parent=1 // pred_region
      %s563 = ssub.s32 512, 512
      %564 = vsyncadd [#allocation59], %s563
      %s565 = sshll.u32 [#allocation58], 4
      %s566 = int_to_ptr.vmem [resolvable:$true] %s565
      %571 = dma.hbm_to_vmem [thread:$0]  %s91, 512, %s566, [#allocation59], 128, 128, 8
    $region185: #{_lambda_.1} parent=1 // pred_fallthru
      _
    // Predicated region
    $region186: #{_lambda_.1} parent=1 // pred_check
      _
    $region187: #{_lambda_.1} parent=1 // pred_check_branch
      %573 = sbr.rel (0) target = $region189
    $region188: #{_lambda_.1} parent=1 // pred_region
      %s575 = ssub.s32 16, 16
      %576 = vsyncadd [#allocation59], %s575
      %s578 = sshll.u32 [#allocation60], 4
      %s579 = int_to_ptr.vmem [resolvable:$true] %s578
      %581 = dma.hbm_to_vmem [thread:$0]  %s93, 16, %s579, [#allocation59]
    $region189: #{_lambda_.1} parent=1 // pred_fallthru
      _
    // Predicated region
    $region190: #{_lambda_.1} parent=1 // pred_check
      _
    $region191: #{_lambda_.1} parent=1 // pred_check_branch
      %583 = sbr.rel (0) target = $region193
    $region192: #{_lambda_.1} parent=1 // pred_region
      %s585 = ssub.s32 512, 512
      %586 = vsyncadd [#allocation62], %s585
      %s587 = sshll.u32 [#allocation61], 4
      %s588 = int_to_ptr.vmem [resolvable:$true] %s587
      %593 = dma.hbm_to_vmem [thread:$0]  %s95, 512, %s588, [#allocation62], 128, 128, 8
    $region193: #{_lambda_.1} parent=1 // pred_fallthru
      _
    // Predicated region
    $region194: #{_lambda_.1} parent=1 // pred_check
      _
    $region195: #{_lambda_.1} parent=1 // pred_check_branch
      %595 = sbr.rel (0) target = $region197
    $region196: #{_lambda_.1} parent=1 // pred_region
      %s597 = ssub.s32 16, 16
      %598 = vsyncadd [#allocation62], %s597
      %s600 = sshll.u32 [#allocation63], 4
      %s601 = int_to_ptr.vmem [resolvable:$true] %s600
      %603 = dma.hbm_to_vmem [thread:$0]  %s97, 16, %s601, [#allocation62]
    $region197: #{_lambda_.1} parent=1 // pred_fallthru
      _
    // Predicated region
    $region198: #{_lambda_.1} parent=1 // pred_check
      _
    $region199: #{_lambda_.1} parent=1 // pred_check_branch
      %605 = sbr.rel (0) target = $region201
    $region200: #{_lambda_.1} parent=1 // pred_region
      %s607 = ssub.s32 512, 512
      %608 = vsyncadd [#allocation65], %s607
      %s609 = sshll.u32 [#allocation64], 4
      %s610 = int_to_ptr.vmem [resolvable:$true] %s609
      %615 = dma.hbm_to_vmem [thread:$0]  %s99, 512, %s610, [#allocation65], 128, 128, 8
    $region201: #{_lambda_.1} parent=1 // pred_fallthru
      _
    // Predicated region
    $region202: #{_lambda_.1} parent=1 // pred_check
      _
    $region203: #{_lambda_.1} parent=1 // pred_check_branch
      %617 = sbr.rel (0) target = $region205
    $region204: #{_lambda_.1} parent=1 // pred_region
      %s619 = ssub.s32 16, 16
      %620 = vsyncadd [#allocation65], %s619
      %s622 = sshll.u32 [#allocation66], 4
      %s623 = int_to_ptr.vmem [resolvable:$true] %s622
      %625 = dma.hbm_to_vmem [thread:$0]  %s101, 16, %s623, [#allocation65]
    $region205: #{_lambda_.1} parent=1 // pred_fallthru
      _
    // Predicated region
    $region206: #{_lambda_.1} parent=1 // pred_check
      _
    $region207: #{_lambda_.1} parent=1 // pred_check_branch
      %627 = sbr.rel (0) target = $region209
    $region208: #{_lambda_.1} parent=1 // pred_region
      %628 = dma.done [#allocation3], 2048
    $region209: #{_lambda_.1} parent=1 // pred_fallthru
      _
    // Predicated region
    $region210: #{_lambda_.1} parent=1 // pred_check
      _
    $region211: #{_lambda_.1} parent=1 // pred_check_branch
      %630 = sbr.rel (0) target = $region213
    $region212: #{_lambda_.1} parent=1 // pred_region
      %631 = dma.done [#allocation5], 256
    $region213: #{_lambda_.1} parent=1 // pred_fallthru
      _
    // Predicated region
    $region214: #{_lambda_.1} parent=1 // pred_check
      _
    $region215: #{_lambda_.1} parent=1 // pred_check_branch
      %633 = sbr.rel (0) target = $region217
    $region216: #{_lambda_.1} parent=1 // pred_region
      %634 = dma.done [#allocation5], 256
    $region217: #{_lambda_.1} parent=1 // pred_fallthru
      _
    // Predicated region
    $region218: #{_lambda_.1} parent=1 // pred_check
      _
    $region219: #{_lambda_.1} parent=1 // pred_check_branch
      %636 = sbr.rel (0) target = $region221
    $region220: #{_lambda_.1} parent=1 // pred_region
      %637 = dma.done [#allocation8], 256
    $region221: #{_lambda_.1} parent=1 // pred_fallthru
      _
    // Predicated region
    $region222: #{_lambda_.1} parent=1 // pred_check
      _
    $region223: #{_lambda_.1} parent=1 // pred_check_branch
      %639 = sbr.rel (0) target = $region225
    $region224: #{_lambda_.1} parent=1 // pred_region
      %640 = dma.done [#allocation8], 1024
    $region225: #{_lambda_.1} parent=1 // pred_fallthru
      _
    // Predicated region
    $region226: #{_lambda_.1} parent=1 // pred_check
      _
    $region227: #{_lambda_.1} parent=1 // pred_check_branch
      %642 = sbr.rel (0) target = $region229
    $region228: #{_lambda_.1} parent=1 // pred_region
      %643 = dma.done [#allocation11], 256
    $region229: #{_lambda_.1} parent=1 // pred_fallthru
      _
    // Predicated region
    $region230: #{_lambda_.1} parent=1 // pred_check
      _
    $region231: #{_lambda_.1} parent=1 // pred_check_branch
      %645 = sbr.rel (0) target = $region233
    $region232: #{_lambda_.1} parent=1 // pred_region
      %646 = dma.done [#allocation11], 256
    $region233: #{_lambda_.1} parent=1 // pred_fallthru
      _
    // Predicated region
    $region234: #{_lambda_.1} parent=1 // pred_check
      _
    $region235: #{_lambda_.1} parent=1 // pred_check_branch
      %648 = sbr.rel (0) target = $region237
    $region236: #{_lambda_.1} parent=1 // pred_region
      %649 = dma.done [#allocation14], 16
    $region237: #{_lambda_.1} parent=1 // pred_fallthru
      _
    // Predicated region
    $region238: #{_lambda_.1} parent=1 // pred_check
      _
    $region239: #{_lambda_.1} parent=1 // pred_check_branch
      %651 = sbr.rel (0) target = $region241
    $region240: #{_lambda_.1} parent=1 // pred_region
      %652 = dma.done [#allocation14], 512
    $region241: #{_lambda_.1} parent=1 // pred_fallthru
      _
    // Predicated region
    $region242: #{_lambda_.1} parent=1 // pred_check
      _
    $region243: #{_lambda_.1} parent=1 // pred_check_branch
      %654 = sbr.rel (0) target = $region245
    $region244: #{_lambda_.1} parent=1 // pred_region
      %655 = dma.done [#allocation17], 16
    $region245: #{_lambda_.1} parent=1 // pred_fallthru
      _
    // Predicated region
    $region246: #{_lambda_.1} parent=1 // pred_check
      _
    $region247: #{_lambda_.1} parent=1 // pred_check_branch
      %657 = sbr.rel (0) target = $region249
    $region248: #{_lambda_.1} parent=1 // pred_region
      %658 = dma.done [#allocation17], 512
    $region249: #{_lambda_.1} parent=1 // pred_fallthru
      _
    // Predicated region
    $region250: #{_lambda_.1} parent=1 // pred_check
      _
    $region251: #{_lambda_.1} parent=1 // pred_check_branch
      %660 = sbr.rel (0) target = $region253
    $region252: #{_lambda_.1} parent=1 // pred_region
      %661 = dma.done [#allocation20], 16
    $region253: #{_lambda_.1} parent=1 // pred_fallthru
      _
    // Predicated region
    $region254: #{_lambda_.1} parent=1 // pred_check
      _
    $region255: #{_lambda_.1} parent=1 // pred_check_branch
      %663 = sbr.rel (0) target = $region257
    $region256: #{_lambda_.1} parent=1 // pred_region
      %664 = dma.done [#allocation20], 512
    $region257: #{_lambda_.1} parent=1 // pred_fallthru
      _
    // Predicated region
    $region258: #{_lambda_.1} parent=1 // pred_check
      _
    $region259: #{_lambda_.1} parent=1 // pred_check_branch
      %666 = sbr.rel (0) target = $region261
    $region260: #{_lambda_.1} parent=1 // pred_region
      %667 = dma.done [#allocation23], 16
    $region261: #{_lambda_.1} parent=1 // pred_fallthru
      _
    // Predicated region
    $region262: #{_lambda_.1} parent=1 // pred_check
      _
    $region263: #{_lambda_.1} parent=1 // pred_check_branch
      %669 = sbr.rel (0) target = $region265
    $region264: #{_lambda_.1} parent=1 // pred_region
      %670 = dma.done [#allocation23], 1024
    $region265: #{_lambda_.1} parent=1 // pred_fallthru
      _
    // Predicated region
    $region266: #{_lambda_.1} parent=1 // pred_check
      _
    $region267: #{_lambda_.1} parent=1 // pred_check_branch
      %672 = sbr.rel (0) target = $region269
    $region268: #{_lambda_.1} parent=1 // pred_region
      %673 = dma.done [#allocation26], 64
    $region269: #{_lambda_.1} parent=1 // pred_fallthru
      _
    // Predicated region
    $region270: #{_lambda_.1} parent=1 // pred_check
      _
    $region271: #{_lambda_.1} parent=1 // pred_check_branch
      %675 = sbr.rel (0) target = $region273
    $region272: #{_lambda_.1} parent=1 // pred_region
      %676 = dma.done [#allocation26], 16
    $region273: #{_lambda_.1} parent=1 // pred_fallthru
      _
    // Predicated region
    $region274: #{_lambda_.1} parent=1 // pred_check
      _
    $region275: #{_lambda_.1} parent=1 // pred_check_branch
      %678 = sbr.rel (0) target = $region277
    $region276: #{_lambda_.1} parent=1 // pred_region
      %679 = dma.done [#allocation29], 1024
    $region277: #{_lambda_.1} parent=1 // pred_fallthru
      _
    // Predicated region
    $region278: #{_lambda_.1} parent=1 // pred_check
      _
    $region279: #{_lambda_.1} parent=1 // pred_check_branch
      %681 = sbr.rel (0) target = $region281
    $region280: #{_lambda_.1} parent=1 // pred_region
      %682 = dma.done [#allocation29], 16
    $region281: #{_lambda_.1} parent=1 // pred_fallthru
      _
    // Predicated region
    $region282: #{_lambda_.1} parent=1 // pred_check
      _
    $region283: #{_lambda_.1} parent=1 // pred_check_branch
      %684 = sbr.rel (0) target = $region285
    $region284: #{_lambda_.1} parent=1 // pred_region
      %685 = dma.done [#allocation32], 2048
    $region285: #{_lambda_.1} parent=1 // pred_fallthru
      _
    // Predicated region
    $region286: #{_lambda_.1} parent=1 // pred_check
      _
    $region287: #{_lambda_.1} parent=1 // pred_check_branch
      %687 = sbr.rel (0) target = $region289
    $region288: #{_lambda_.1} parent=1 // pred_region
      %688 = dma.done [#allocation32], 16
    $region289: #{_lambda_.1} parent=1 // pred_fallthru
      _
    // Predicated region
    $region290: #{_lambda_.1} parent=1 // pred_check
      _
    $region291: #{_lambda_.1} parent=1 // pred_check_branch
      %690 = sbr.rel (0) target = $region293
    $region292: #{_lambda_.1} parent=1 // pred_region
      %691 = dma.done [#allocation35], 2048
    $region293: #{_lambda_.1} parent=1 // pred_fallthru
      _
    // Predicated region
    $region294: #{_lambda_.1} parent=1 // pred_check
      _
    $region295: #{_lambda_.1} parent=1 // pred_check_branch
      %693 = sbr.rel (0) target = $region297
    $region296: #{_lambda_.1} parent=1 // pred_region
      %694 = dma.done [#allocation35], 1024
    $region297: #{_lambda_.1} parent=1 // pred_fallthru
      _
    // Predicated region
    $region298: #{_lambda_.1} parent=1 // pred_check
      _
    $region299: #{_lambda_.1} parent=1 // pred_check_branch
      %696 = sbr.rel (0) target = $region301
    $region300: #{_lambda_.1} parent=1 // pred_region
      %697 = dma.done [#allocation38], 16
    $region301: #{_lambda_.1} parent=1 // pred_fallthru
      _
    // Predicated region
    $region302: #{_lambda_.1} parent=1 // pred_check
      _
    $region303: #{_lambda_.1} parent=1 // pred_check_branch
      %699 = sbr.rel (0) target = $region305
    $region304: #{_lambda_.1} parent=1 // pred_region
      %700 = dma.done [#allocation38], 1024
    $region305: #{_lambda_.1} parent=1 // pred_fallthru
      _
    // Predicated region
    $region306: #{_lambda_.1} parent=1 // pred_check
      _
    $region307: #{_lambda_.1} parent=1 // pred_check_branch
      %702 = sbr.rel (0) target = $region309
    $region308: #{_lambda_.1} parent=1 // pred_region
      %703 = dma.done [#allocation41], 16
    $region309: #{_lambda_.1} parent=1 // pred_fallthru
      _
    // Predicated region
    $region310: #{_lambda_.1} parent=1 // pred_check
      _
    $region311: #{_lambda_.1} parent=1 // pred_check_branch
      %705 = sbr.rel (0) target = $region313
    $region312: #{_lambda_.1} parent=1 // pred_region
      %706 = dma.done [#allocation41], 1024
    $region313: #{_lambda_.1} parent=1 // pred_fallthru
      _
    // Predicated region
    $region314: #{_lambda_.1} parent=1 // pred_check
      _
    $region315: #{_lambda_.1} parent=1 // pred_check_branch
      %708 = sbr.rel (0) target = $region317
    $region316: #{_lambda_.1} parent=1 // pred_region
      %709 = dma.done [#allocation44], 512
    $region317: #{_lambda_.1} parent=1 // pred_fallthru
      _
    // Predicated region
    $region318: #{_lambda_.1} parent=1 // pred_check
      _
    $region319: #{_lambda_.1} parent=1 // pred_check_branch
      %711 = sbr.rel (0) target = $region321
    $region320: #{_lambda_.1} parent=1 // pred_region
      %712 = dma.done [#allocation44], 16
    $region321: #{_lambda_.1} parent=1 // pred_fallthru
      _
    // Predicated region
    $region322: #{_lambda_.1} parent=1 // pred_check
      _
    $region323: #{_lambda_.1} parent=1 // pred_check_branch
      %714 = sbr.rel (0) target = $region325
    $region324: #{_lambda_.1} parent=1 // pred_region
      %715 = dma.done [#allocation47], 512
    $region325: #{_lambda_.1} parent=1 // pred_fallthru
      _
    // Predicated region
    $region326: #{_lambda_.1} parent=1 // pred_check
      _
    $region327: #{_lambda_.1} parent=1 // pred_check_branch
      %717 = sbr.rel (0) target = $region329
    $region328: #{_lambda_.1} parent=1 // pred_region
      %718 = dma.done [#allocation47], 16
    $region329: #{_lambda_.1} parent=1 // pred_fallthru
      _
    // Predicated region
    $region330: #{_lambda_.1} parent=1 // pred_check
      _
    $region331: #{_lambda_.1} parent=1 // pred_check_branch
      %720 = sbr.rel (0) target = $region333
    $region332: #{_lambda_.1} parent=1 // pred_region
      %721 = dma.done [#allocation50], 512
    $region333: #{_lambda_.1} parent=1 // pred_fallthru
      _
    // Predicated region
    $region334: #{_lambda_.1} parent=1 // pred_check
      _
    $region335: #{_lambda_.1} parent=1 // pred_check_branch
      %723 = sbr.rel (0) target = $region337
    $region336: #{_lambda_.1} parent=1 // pred_region
      %724 = dma.done [#allocation50], 16
    $region337: #{_lambda_.1} parent=1 // pred_fallthru
      _
    // Predicated region
    $region338: #{_lambda_.1} parent=1 // pred_check
      _
    $region339: #{_lambda_.1} parent=1 // pred_check_branch
      %726 = sbr.rel (0) target = $region341
    $region340: #{_lambda_.1} parent=1 // pred_region
      %727 = dma.done [#allocation53], 1024
    $region341: #{_lambda_.1} parent=1 // pred_fallthru
      _
    // Predicated region
    $region342: #{_lambda_.1} parent=1 // pred_check
      _
    $region343: #{_lambda_.1} parent=1 // pred_check_branch
      %729 = sbr.rel (0) target = $region345
    $region344: #{_lambda_.1} parent=1 // pred_region
      %730 = dma.done [#allocation53], 16
    $region345: #{_lambda_.1} parent=1 // pred_fallthru
      _
    // Predicated region
    $region346: #{_lambda_.1} parent=1 // pred_check
      _
    $region347: #{_lambda_.1} parent=1 // pred_check_branch
      %732 = sbr.rel (0) target = $region349
    $region348: #{_lambda_.1} parent=1 // pred_region
      %733 = dma.done [#allocation56], 512
    $region349: #{_lambda_.1} parent=1 // pred_fallthru
      _
    // Predicated region
    $region350: #{_lambda_.1} parent=1 // pred_check
      _
    $region351: #{_lambda_.1} parent=1 // pred_check_branch
      %735 = sbr.rel (0) target = $region353
    $region352: #{_lambda_.1} parent=1 // pred_region
      %736 = dma.done [#allocation56], 16
    $region353: #{_lambda_.1} parent=1 // pred_fallthru
      _
    // Predicated region
    $region354: #{_lambda_.1} parent=1 // pred_check
      _
    $region355: #{_lambda_.1} parent=1 // pred_check_branch
      %738 = sbr.rel (0) target = $region357
    $region356: #{_lambda_.1} parent=1 // pred_region
      %739 = dma.done [#allocation59], 512
    $region357: #{_lambda_.1} parent=1 // pred_fallthru
      _
    // Predicated region
    $region358: #{_lambda_.1} parent=1 // pred_check
      _
    $region359: #{_lambda_.1} parent=1 // pred_check_branch
      %741 = sbr.rel (0) target = $region361
    $region360: #{_lambda_.1} parent=1 // pred_region
      %742 = dma.done [#allocation59], 16
    $region361: #{_lambda_.1} parent=1 // pred_fallthru
      _
    // Predicated region
    $region362: #{_lambda_.1} parent=1 // pred_check
      _
    $region363: #{_lambda_.1} parent=1 // pred_check_branch
      %744 = sbr.rel (0) target = $region365
    $region364: #{_lambda_.1} parent=1 // pred_region
      %745 = dma.done [#allocation62], 512
    $region365: #{_lambda_.1} parent=1 // pred_fallthru
      _
    // Predicated region
    $region366: #{_lambda_.1} parent=1 // pred_check
      _
    $region367: #{_lambda_.1} parent=1 // pred_check_branch
      %747 = sbr.rel (0) target = $region369
    $region368: #{_lambda_.1} parent=1 // pred_region
      %748 = dma.done [#allocation62], 16
    $region369: #{_lambda_.1} parent=1 // pred_fallthru
      _
    // Predicated region
    $region370: #{_lambda_.1} parent=1 // pred_check
      _
    $region371: #{_lambda_.1} parent=1 // pred_check_branch
      %750 = sbr.rel (0) target = $region373
    $region372: #{_lambda_.1} parent=1 // pred_region
      %751 = dma.done [#allocation65], 512
    $region373: #{_lambda_.1} parent=1 // pred_fallthru
      _
    // Predicated region
    $region374: #{_lambda_.1} parent=1 // pred_check
      _
    $region375: #{_lambda_.1} parent=1 // pred_check_branch
      %753 = sbr.rel (0) target = $region377
    $region376: #{_lambda_.1} parent=1 // pred_region
      %754 = dma.done [#allocation65], 16
    $region377: #{_lambda_.1} parent=1 // pred_fallthru
      _
    %v755 = vld [vmem:[%s1] sm:$0xff]
    %v756 = vld [vmem:[%s1 + $0x8] sm:$0xff]
    %v757 = vld [vmem:[%s1 + $0x10] sm:$0xff]
    %v758 = vld [vmem:[%s1 + $0x18] sm:$0xff]
    %v759 = vld [vmem:[%s1 + $0x20] sm:$0xff]
    %v760 = vld [vmem:[%s1 + $0x28] sm:$0xff]
    %v761 = vld [vmem:[%s1 + $0x30] sm:$0xff]
    %v762 = vld [vmem:[%s1 + $0x38] sm:$0xff]
    %v763 = vld [vmem:[%s1 + $0x40] sm:$0xff]
    %v764 = vld [vmem:[%s1 + $0x48] sm:$0xff]
    %v765 = vld [vmem:[%s1 + $0x50] sm:$0xff]
    %v766 = vld [vmem:[%s1 + $0x58] sm:$0xff]
    %v767 = vld [vmem:[%s1 + $0x60] sm:$0xff]
    %v768 = vld [vmem:[%s1 + $0x68] sm:$0xff]
    %v769 = vld [vmem:[%s1 + $0x70] sm:$0xff]
    %v770 = vld [vmem:[%s1 + $0x78] sm:$0xff]
    %v771 = vld [vmem:[%s1 + $0x80] sm:$0xff]
    %v772 = vld [vmem:[%s1 + $0x88] sm:$0xff]
    %v773 = vld [vmem:[%s1 + $0x90] sm:$0xff]
    %v774 = vld [vmem:[%s1 + $0x98] sm:$0xff]
    %v775 = vld [vmem:[%s1 + $0xa0] sm:$0xff]
    %v776 = vld [vmem:[%s1 + $0xa8] sm:$0xff]
    %v777 = vld [vmem:[%s1 + $0xb0] sm:$0xff]
    %v778 = vld [vmem:[%s1 + $0xb8] sm:$0xff]
    %v779 = vld [vmem:[%s1 + $0xc0] sm:$0xff]
    %v780 = vld [vmem:[%s1 + $0xc8] sm:$0xff]
    %v781 = vld [vmem:[%s1 + $0xd0] sm:$0xff]
    %v782 = vld [vmem:[%s1 + $0xd8] sm:$0xff]
    %v783 = vld [vmem:[%s1 + $0xe0] sm:$0xff]
    %v784 = vld [vmem:[%s1 + $0xe8] sm:$0xff]
    %v785 = vld [vmem:[%s1 + $0xf0] sm:$0xff]
    %v786 = vld [vmem:[%s1 + $0xf8] sm:$0xff]
    %v787 = vld [vmem:[%s1 + $0x100] sm:$0xff]
    %v788 = vld [vmem:[%s1 + $0x108] sm:$0xff]
    %v789 = vld [vmem:[%s1 + $0x110] sm:$0xff]
    %v790 = vld [vmem:[%s1 + $0x118] sm:$0xff]
    %v791 = vld [vmem:[%s1 + $0x120] sm:$0xff]
    %v792 = vld [vmem:[%s1 + $0x128] sm:$0xff]
    %v793 = vld [vmem:[%s1 + $0x130] sm:$0xff]
    %v794 = vld [vmem:[%s1 + $0x138] sm:$0xff]
    %v795 = vld [vmem:[%s1 + $0x140] sm:$0xff]
    %v796 = vld [vmem:[%s1 + $0x148] sm:$0xff]
    %v797 = vld [vmem:[%s1 + $0x150] sm:$0xff]
    %v798 = vld [vmem:[%s1 + $0x158] sm:$0xff]
    %v799 = vld [vmem:[%s1 + $0x160] sm:$0xff]
    %v800 = vld [vmem:[%s1 + $0x168] sm:$0xff]
    %v801 = vld [vmem:[%s1 + $0x170] sm:$0xff]
    %v802 = vld [vmem:[%s1 + $0x178] sm:$0xff]
    %v803 = vld [vmem:[%s1 + $0x180] sm:$0xff]
    %v804 = vld [vmem:[%s1 + $0x188] sm:$0xff]
    %v805 = vld [vmem:[%s1 + $0x190] sm:$0xff]
    %v806 = vld [vmem:[%s1 + $0x198] sm:$0xff]
    %v807 = vld [vmem:[%s1 + $0x1a0] sm:$0xff]
    %v808 = vld [vmem:[%s1 + $0x1a8] sm:$0xff]
    %v809 = vld [vmem:[%s1 + $0x1b0] sm:$0xff]
    %v810 = vld [vmem:[%s1 + $0x1b8] sm:$0xff]
    %v811 = vld [vmem:[%s1 + $0x1c0] sm:$0xff]
    %v812 = vld [vmem:[%s1 + $0x1c8] sm:$0xff]
    %v813 = vld [vmem:[%s1 + $0x1d0] sm:$0xff]
    %v814 = vld [vmem:[%s1 + $0x1d8] sm:$0xff]
    %v815 = vld [vmem:[%s1 + $0x1e0] sm:$0xff]
    %v816 = vld [vmem:[%s1 + $0x1e8] sm:$0xff]
    %v817 = vld [vmem:[%s1 + $0x1f0] sm:$0xff]
    %v818 = vld [vmem:[%s1 + $0x1f8] sm:$0xff]
    %v819 = vld [vmem:[%s1 + $0x200] sm:$0xff]
    %v820 = vld [vmem:[%s1 + $0x208] sm:$0xff]
    %v821 = vld [vmem:[%s1 + $0x210] sm:$0xff]
    %v822 = vld [vmem:[%s1 + $0x218] sm:$0xff]
    %v823 = vld [vmem:[%s1 + $0x220] sm:$0xff]
    %v824 = vld [vmem:[%s1 + $0x228] sm:$0xff]
    %v825 = vld [vmem:[%s1 + $0x230] sm:$0xff]
    %v826 = vld [vmem:[%s1 + $0x238] sm:$0xff]
    %v827 = vld [vmem:[%s1 + $0x240] sm:$0xff]
    %v828 = vld [vmem:[%s1 + $0x248] sm:$0xff]
    %v829 = vld [vmem:[%s1 + $0x250] sm:$0xff]
    %v830 = vld [vmem:[%s1 + $0x258] sm:$0xff]
    %v831 = vld [vmem:[%s1 + $0x260] sm:$0xff]
    %v832 = vld [vmem:[%s1 + $0x268] sm:$0xff]
    %v833 = vld [vmem:[%s1 + $0x270] sm:$0xff]
    %v834 = vld [vmem:[%s1 + $0x278] sm:$0xff]
    %v835 = vld [vmem:[%s1 + $0x280] sm:$0xff]
    %v836 = vld [vmem:[%s1 + $0x288] sm:$0xff]
    %v837 = vld [vmem:[%s1 + $0x290] sm:$0xff]
    %v838 = vld [vmem:[%s1 + $0x298] sm:$0xff]
    %v839 = vld [vmem:[%s1 + $0x2a0] sm:$0xff]
    %v840 = vld [vmem:[%s1 + $0x2a8] sm:$0xff]
    %v841 = vld [vmem:[%s1 + $0x2b0] sm:$0xff]
    %v842 = vld [vmem:[%s1 + $0x2b8] sm:$0xff]
    %v843 = vld [vmem:[%s1 + $0x2c0] sm:$0xff]
    %v844 = vld [vmem:[%s1 + $0x2c8] sm:$0xff]
    %v845 = vld [vmem:[%s1 + $0x2d0] sm:$0xff]
    %v846 = vld [vmem:[%s1 + $0x2d8] sm:$0xff]
    %v847 = vld [vmem:[%s1 + $0x2e0] sm:$0xff]
    %v848 = vld [vmem:[%s1 + $0x2e8] sm:$0xff]
    %v849 = vld [vmem:[%s1 + $0x2f0] sm:$0xff]
    %v850 = vld [vmem:[%s1 + $0x2f8] sm:$0xff]
    %v851 = vld [vmem:[%s1 + $0x300] sm:$0xff]
    %v852 = vld [vmem:[%s1 + $0x308] sm:$0xff]
    %v853 = vld [vmem:[%s1 + $0x310] sm:$0xff]
    %v854 = vld [vmem:[%s1 + $0x318] sm:$0xff]
    %v855 = vld [vmem:[%s1 + $0x320] sm:$0xff]
    %v856 = vld [vmem:[%s1 + $0x328] sm:$0xff]
    %v857 = vld [vmem:[%s1 + $0x330] sm:$0xff]
    %v858 = vld [vmem:[%s1 + $0x338] sm:$0xff]
    %v859 = vld [vmem:[%s1 + $0x340] sm:$0xff]
    %v860 = vld [vmem:[%s1 + $0x348] sm:$0xff]
    %v861 = vld [vmem:[%s1 + $0x350] sm:$0xff]
    %v862 = vld [vmem:[%s1 + $0x358] sm:$0xff]
    %v863 = vld [vmem:[%s1 + $0x360] sm:$0xff]
    %v864 = vld [vmem:[%s1 + $0x368] sm:$0xff]
    %v865 = vld [vmem:[%s1 + $0x370] sm:$0xff]
    %v866 = vld [vmem:[%s1 + $0x378] sm:$0xff]
    %v867 = vld [vmem:[%s1 + $0x380] sm:$0xff]
    %v868 = vld [vmem:[%s1 + $0x388] sm:$0xff]
    %v869 = vld [vmem:[%s1 + $0x390] sm:$0xff]
    %v870 = vld [vmem:[%s1 + $0x398] sm:$0xff]
    %v871 = vld [vmem:[%s1 + $0x3a0] sm:$0xff]
    %v872 = vld [vmem:[%s1 + $0x3a8] sm:$0xff]
    %v873 = vld [vmem:[%s1 + $0x3b0] sm:$0xff]
    %v874 = vld [vmem:[%s1 + $0x3b8] sm:$0xff]
    %v875 = vld [vmem:[%s1 + $0x3c0] sm:$0xff]
    %v876 = vld [vmem:[%s1 + $0x3c8] sm:$0xff]
    %v877 = vld [vmem:[%s1 + $0x3d0] sm:$0xff]
    %v878 = vld [vmem:[%s1 + $0x3d8] sm:$0xff]
    %v879 = vld [vmem:[%s1 + $0x3e0] sm:$0xff]
    %v880 = vld [vmem:[%s1 + $0x3e8] sm:$0xff]
    %v881 = vld [vmem:[%s1 + $0x3f0] sm:$0xff]
    %v882 = vld [vmem:[%s1 + $0x3f8] sm:$0xff]
    %v883 = vld [vmem:[%s19] sm:$0x7]
    %v884 = vld [vmem:[%s21] sm:$0x1]
    %v886 = vlaneseq
    %v887 = vshrl.u32 %v886, 7
    %v888 = vsub.s32 0, %v887
    %v889 = vrot.slane %v884, %v888
    %vm891 = vcmask 23552
    %v893 = vsel %vm891, %v755, 0
    %v896 = vsel %vm891, %v756, 0
    %v899 = vsel %vm891, %v757, 0
    %v902 = vsel %vm891, %v758, 0
    %v905 = vsel %vm891, %v759, 0
    %v908 = vsel %vm891, %v760, 0
    %v911 = vsel %vm891, %v761, 0
    %v914 = vsel %vm891, %v762, 0
    %v917 = vsel %vm891, %v763, 0
    %v920 = vsel %vm891, %v764, 0
    %v923 = vsel %vm891, %v765, 0
    %v926 = vsel %vm891, %v766, 0
    %v929 = vsel %vm891, %v767, 0
    %v932 = vsel %vm891, %v768, 0
    %v935 = vsel %vm891, %v769, 0
    %v938 = vsel %vm891, %v770, 0
    %v941 = vsel %vm891, %v771, 0
    %v944 = vsel %vm891, %v772, 0
    %v947 = vsel %vm891, %v773, 0
    %v950 = vsel %vm891, %v774, 0
    %v953 = vsel %vm891, %v775, 0
    %v956 = vsel %vm891, %v776, 0
    %v959 = vsel %vm891, %v777, 0
    %v962 = vsel %vm891, %v778, 0
    %v965 = vsel %vm891, %v779, 0
    %v968 = vsel %vm891, %v780, 0
    %v971 = vsel %vm891, %v781, 0
    %v974 = vsel %vm891, %v782, 0
    %v977 = vsel %vm891, %v783, 0
    %v980 = vsel %vm891, %v784, 0
    %v983 = vsel %vm891, %v785, 0
    %v986 = vsel %vm891, %v786, 0
    %v989 = vsel %vm891, %v787, 0
    %v992 = vsel %vm891, %v788, 0
    %v995 = vsel %vm891, %v789, 0
    %v998 = vsel %vm891, %v790, 0
    %v1001 = vsel %vm891, %v791, 0
    %v1004 = vsel %vm891, %v792, 0
    %v1007 = vsel %vm891, %v793, 0
    %v1010 = vsel %vm891, %v794, 0
    %v1013 = vsel %vm891, %v795, 0
    %v1016 = vsel %vm891, %v796, 0
    %v1019 = vsel %vm891, %v797, 0
    %v1022 = vsel %vm891, %v798, 0
    %v1025 = vsel %vm891, %v799, 0
    %v1028 = vsel %vm891, %v800, 0
    %v1031 = vsel %vm891, %v801, 0
    %v1034 = vsel %vm891, %v802, 0
    %v1037 = vsel %vm891, %v803, 0
    %v1040 = vsel %vm891, %v804, 0
    %v1043 = vsel %vm891, %v805, 0
    %v1046 = vsel %vm891, %v806, 0
    %v1049 = vsel %vm891, %v807, 0
    %v1052 = vsel %vm891, %v808, 0
    %v1055 = vsel %vm891, %v809, 0
    %v1058 = vsel %vm891, %v810, 0
    %v1061 = vsel %vm891, %v811, 0
    %v1064 = vsel %vm891, %v812, 0
    %v1067 = vsel %vm891, %v813, 0
    %v1070 = vsel %vm891, %v814, 0
    %v1073 = vsel %vm891, %v815, 0
    %v1076 = vsel %vm891, %v816, 0
    %v1079 = vsel %vm891, %v817, 0
    %v1082 = vsel %vm891, %v818, 0
    %v1085 = vsel %vm891, %v819, 0
    %v1088 = vsel %vm891, %v820, 0
    %v1091 = vsel %vm891, %v821, 0
    %v1094 = vsel %vm891, %v822, 0
    %v1097 = vsel %vm891, %v823, 0
    %v1100 = vsel %vm891, %v824, 0
    %v1103 = vsel %vm891, %v825, 0
    %v1106 = vsel %vm891, %v826, 0
    %v1109 = vsel %vm891, %v827, 0
    %v1112 = vsel %vm891, %v828, 0
    %v1115 = vsel %vm891, %v829, 0
    %v1118 = vsel %vm891, %v830, 0
    %v1121 = vsel %vm891, %v831, 0
    %v1124 = vsel %vm891, %v832, 0
    %v1127 = vsel %vm891, %v833, 0
    %v1130 = vsel %vm891, %v834, 0
    %v1133 = vsel %vm891, %v835, 0
    %v1136 = vsel %vm891, %v836, 0
    %v1139 = vsel %vm891, %v837, 0
    %v1142 = vsel %vm891, %v838, 0
    %v1145 = vsel %vm891, %v839, 0
    %v1148 = vsel %vm891, %v840, 0
    %v1151 = vsel %vm891, %v841, 0
    %v1154 = vsel %vm891, %v842, 0
    %v1157 = vsel %vm891, %v843, 0
    %v1160 = vsel %vm891, %v844, 0
    %v1163 = vsel %vm891, %v845, 0
    %v1166 = vsel %vm891, %v846, 0
    %v1169 = vsel %vm891, %v847, 0
    %v1172 = vsel %vm891, %v848, 0
    %v1175 = vsel %vm891, %v849, 0
    %v1178 = vsel %vm891, %v850, 0
    %v1181 = vsel %vm891, %v851, 0
    %v1184 = vsel %vm891, %v852, 0
    %v1187 = vsel %vm891, %v853, 0
    %v1190 = vsel %vm891, %v854, 0
    %v1193 = vsel %vm891, %v855, 0
    %v1196 = vsel %vm891, %v856, 0
    %v1199 = vsel %vm891, %v857, 0
    %v1202 = vsel %vm891, %v858, 0
    %v1205 = vsel %vm891, %v859, 0
    %v1208 = vsel %vm891, %v860, 0
    %v1211 = vsel %vm891, %v861, 0
    %v1214 = vsel %vm891, %v862, 0
    %v1217 = vsel %vm891, %v863, 0
    %v1220 = vsel %vm891, %v864, 0
    %v1223 = vsel %vm891, %v865, 0
    %v1226 = vsel %vm891, %v866, 0
    %v1229 = vsel %vm891, %v867, 0
    %v1232 = vsel %vm891, %v868, 0
    %v1235 = vsel %vm891, %v869, 0
    %v1238 = vsel %vm891, %v870, 0
    %v1241 = vsel %vm891, %v871, 0
    %v1244 = vsel %vm891, %v872, 0
    %v1247 = vsel %vm891, %v873, 0
    %v1250 = vsel %vm891, %v874, 0
    %v1253 = vsel %vm891, %v875, 0
    %v1256 = vsel %vm891, %v876, 0
    %v1259 = vsel %vm891, %v877, 0
    %v1262 = vsel %vm891, %v878, 0
    %v1265 = vsel %vm891, %v879, 0
    %v1268 = vsel %vm891, %v880, 0
    %v1271 = vsel %vm891, %v881, 0
    %v1274 = vsel %vm891, %v882, 0
    %vm1276 = vcmask 1042432
    %v1278 = vsel %vm1276, %v883, 0
    %1280 = vmatprep.subr.mxu0 0.0
    %1281 = vmatpush1.msra.mxu0 %v1278
    %1282 = vmatprep.subr.mxu0 0.0
    %1283 = vmatpush1.msra.mxu0 0.0
    %1284 = vmatprep.subr.mxu0 0.0
    %1285 = vmatpush1.msra.mxu0 0.0
    %1286 = vmatprep.subr.mxu0 0.0
    %1287 = vmatpush1.msra.mxu0 0.0
    %1288 = vmatprep.subr.mxu0 0.0
    %1289 = vmatpush1.msra.mxu0 0.0
    %1290 = vmatprep.subr.mxu0 0.0
    %1291 = vmatpush1.msra.mxu0 0.0
    %1292 = vmatprep.subr.mxu0 0.0
    %1293 = vmatpush1.msra.mxu0 0.0
    %1294 = vmatprep.subr.mxu0 0.0
    %1295 = vmatpush1.msra.mxu0 0.0
    %1296 = vmatprep.subr.mxu0 0.0
    %1297 = vmatpush1.msra.mxu0 0.0
    %1298 = vmatprep.subr.mxu0 0.0
    %1299 = vmatpush1.msra.mxu0 0.0
    %1300 = vmatprep.subr.mxu0 0.0
    %1301 = vmatpush1.msra.mxu0 0.0
    %1302 = vmatprep.subr.mxu0 0.0
    %1303 = vmatpush1.msra.mxu0 0.0
    %1304 = vmatprep.subr.mxu0 0.0
    %1305 = vmatpush1.msra.mxu0 0.0
    %1306 = vmatprep.subr.mxu0 0.0
    %1307 = vmatpush1.msra.mxu0 0.0
    %1308 = vmatprep.subr.mxu0 0.0
    %1309 = vmatpush1.msra.mxu0 0.0
    %1310 = vmatprep.subr.mxu0 0.0
    %1311 = vmatpush1.msra.mxu0 0.0
    %1312 = vmatprep.subr.mxu0 0.0
    %1313 = vmatpush1.msra.mxu0 0.0
    %1314 = vmatprep.subr.mxu0 0.0
    %1315 = vmatpush1.msra.mxu0 0.0
    %1316 = vmatprep.subr.mxu0 0.0
    %1317 = vmatpush1.msra.mxu0 0.0
    %1318 = vmatprep.subr.mxu0 0.0
    %1319 = vmatpush1.msra.mxu0 0.0
    %1320 = vmatprep.subr.mxu0 0.0
    %1321 = vmatpush1.msra.mxu0 0.0
    %1322 = vmatprep.subr.mxu0 0.0
    %1323 = vmatpush1.msra.mxu0 0.0
    %1324 = vmatprep.subr.mxu0 0.0
    %1325 = vmatpush1.msra.mxu0 0.0
    %1326 = vmatprep.subr.mxu0 0.0
    %1327 = vmatpush1.msra.mxu0 0.0
    %1328 = vmatprep.subr.mxu0 0.0
    %1329 = vmatpush1.msra.mxu0 0.0
    %1330 = vmatprep.subr.mxu0 0.0
    %1331 = vmatpush1.msra.mxu0 0.0
    %1332 = vmatprep.subr.mxu0 0.0
    %1333 = vmatpush1.msra.mxu0 0.0
    %1334 = vmatprep.subr.mxu0 0.0
    %1335 = vmatpush1.msra.mxu0 0.0
    %1336 = vmatprep.subr.mxu0 0.0
    %1337 = vmatpush1.msra.mxu0 0.0
    %1338 = vmatprep.subr.mxu0 0.0
    %1339 = vmatpush1.msra.mxu0 0.0
    %1340 = vmatprep.subr.mxu0 0.0
    %1341 = vmatpush1.msra.mxu0 0.0
    %1342 = vmatprep.subr.mxu0 0.0
    %1343 = vmatpush1.msra.mxu0 0.0
    %1344 = vmatprep.mubr.f32.mxu0 0.0
    %1345 = vmatmul.mubr.f32.gmra.mrb[0].mxu0 %v893
    %v1346 = vpop.f32.mrb[0].mxu0
    %v1347 = vadd.f32 %v889, %v1346
    %v1348 = vpop.f32.mrb[0].mxu0
    %1349 = vmatprep.mubr.f32.mxu0 0.0
    %1350 = vmatmul.mubr.f32.gmra.mrb[0].mxu0 %v896
    %v1351 = vpop.f32.mrb[0].mxu0
    %v1352 = vadd.f32 %v889, %v1351
    %v1353 = vpop.f32.mrb[0].mxu0
    %1354 = vmatprep.mubr.f32.mxu0 0.0
    %1355 = vmatmul.mubr.f32.gmra.mrb[0].mxu0 %v899
    %v1356 = vpop.f32.mrb[0].mxu0
    %v1357 = vadd.f32 %v889, %v1356
    %v1358 = vpop.f32.mrb[0].mxu0
    %1359 = vmatprep.mubr.f32.mxu0 0.0
    %1360 = vmatmul.mubr.f32.gmra.mrb[0].mxu0 %v902
    %v1361 = vpop.f32.mrb[0].mxu0
    %v1362 = vadd.f32 %v889, %v1361
    %v1363 = vpop.f32.mrb[0].mxu0
    %1364 = vmatprep.mubr.f32.mxu0 0.0
    %1365 = vmatmul.mubr.f32.gmra.mrb[0].mxu0 %v905
    %v1366 = vpop.f32.mrb[0].mxu0
    %v1367 = vadd.f32 %v889, %v1366
    %v1368 = vpop.f32.mrb[0].mxu0
    %1369 = vmatprep.mubr.f32.mxu0 0.0
    %1370 = vmatmul.mubr.f32.gmra.mrb[0].mxu0 %v908
    %v1371 = vpop.f32.mrb[0].mxu0
    %v1372 = vadd.f32 %v889, %v1371
    %v1373 = vpop.f32.mrb[0].mxu0
    %1374 = vmatprep.mubr.f32.mxu0 0.0
    %1375 = vmatmul.mubr.f32.gmra.mrb[0].mxu0 %v911
    %v1376 = vpop.f32.mrb[0].mxu0
    %v1377 = vadd.f32 %v889, %v1376
    %v1378 = vpop.f32.mrb[0].mxu0
    %1379 = vmatprep.mubr.f32.mxu0 0.0
    %1380 = vmatmul.mubr.f32.gmra.mrb[0].mxu0 %v914
    %v1381 = vpop.f32.mrb[0].mxu0
    %v1382 = vadd.f32 %v889, %v1381
    %v1383 = vpop.f32.mrb[0].mxu0
    %1384 = vmatprep.mubr.f32.mxu0 0.0
    %1385 = vmatmul.mubr.f32.gmra.mrb[0].mxu0 %v917
    %v1386 = vpop.f32.mrb[0].mxu0
    %v1387 = vadd.f32 %v889, %v1386
    %v1388 = vpop.f32.mrb[0].mxu0
    %1389 = vmatprep.mubr.f32.mxu0 0.0
    %1390 = vmatmul.mubr.f32.gmra.mrb[0].mxu0 %v920
    %v1391 = vpop.f32.mrb[0].mxu0
    %v1392 = vadd.f32 %v889, %v1391
    %v1393 = vpop.f32.mrb[0].mxu0
    %1394 = vmatprep.mubr.f32.mxu0 0.0
    %1395 = vmatmul.mubr.f32.gmra.mrb[0].mxu0 %v923
    %v1396 = vpop.f32.mrb[0].mxu0
    %v1397 = vadd.f32 %v889, %v1396
    %v1398 = vpop.f32.mrb[0].mxu0
    %1399 = vmatprep.mubr.f32.mxu0 0.0
    %1400 = vmatmul.mubr.f32.gmra.mrb[0].mxu0 %v926
    %v1401 = vpop.f32.mrb[0].mxu0
    %v1402 = vadd.f32 %v889, %v1401
    %v1403 = vpop.f32.mrb[0].mxu0
    %1404 = vmatprep.mubr.f32.mxu0 0.0
    %1405 = vmatmul.mubr.f32.gmra.mrb[0].mxu0 %v929
    %v1406 = vpop.f32.mrb[0].mxu0
    %v1407 = vadd.f32 %v889, %v1406
    %v1408 = vpop.f32.mrb[0].mxu0
    %1409 = vmatprep.mubr.f32.mxu0 0.0
    %1410 = vmatmul.mubr.f32.gmra.mrb[0].mxu0 %v932
    %v1411 = vpop.f32.mrb[0].mxu0
    %v1412 = vadd.f32 %v889, %v1411
    %v1413 = vpop.f32.mrb[0].mxu0
    %1414 = vmatprep.mubr.f32.mxu0 0.0
    %1415 = vmatmul.mubr.f32.gmra.mrb[0].mxu0 %v935
    %v1416 = vpop.f32.mrb[0].mxu0
    %v1417 = vadd.f32 %v889, %v1416
    %v1418 = vpop.f32.mrb[0].mxu0
    %1419 = vmatprep.mubr.f32.mxu0 0.0
    %1420 = vmatmul.mubr.f32.gmra.mrb[0].mxu0 %v938
    %v1421 = vpop.f32.mrb[0].mxu0
    %v1422 = vadd.f32 %v889, %v1421
    %v1423 = vpop.f32.mrb[0].mxu0
    %1424 = vmatprep.mubr.f32.mxu0 0.0
    %1425 = vmatmul.mubr.f32.gmra.mrb[0].mxu0 %v941
    %v1426 = vpop.f32.mrb[0].mxu0
    %v1427 = vadd.f32 %v889, %v1426
    %v1428 = vpop.f32.mrb[0].mxu0
    %1429 = vmatprep.mubr.f32.mxu0 0.0
    %1430 = vmatmul.mubr.f32.gmra.mrb[0].mxu0 %v944
    %v1431 = vpop.f32.mrb[0].mxu0
    %v1432 = vadd.f32 %v889, %v1431
    %v1433 = vpop.f32.mrb[0].mxu0
    %1434 = vmatprep.mubr.f32.mxu0 0.0
    %1435 = vmatmul.mubr.f32.gmra.mrb[0].mxu0 %v947
    %v1436 = vpop.f32.mrb[0].mxu0
    %v1437 = vadd.f32 %v889, %v1436
    %v1438 = vpop.f32.mrb[0].mxu0
    %1439 = vmatprep.mubr.f32.mxu0 0.0
    %1440 = vmatmul.mubr.f32.gmra.mrb[0].mxu0 %v950
    %v1441 = vpop.f32.mrb[0].mxu0
    %v1442 = vadd.f32 %v889, %v1441
    %v1443 = vpop.f32.mrb[0].mxu0
    %1444 = vmatprep.mubr.f32.mxu0 0.0
    %1445 = vmatmul.mubr.f32.gmra.mrb[0].mxu0 %v953
    %v1446 = vpop.f32.mrb[0].mxu0
    %v1447 = vadd.f32 %v889, %v1446
    %v1448 = vpop.f32.mrb[0].mxu0
    %1449 = vmatprep.mubr.f32.mxu0 0.0
    %1450 = vmatmul.mubr.f32.gmra.mrb[0].mxu0 %v956
    %v1451 = vpop.f32.mrb[0].mxu0
    %v1452 = vadd.f32 %v889, %v1451
    %v1453 = vpop.f32.mrb[0].mxu0
    %1454 = vmatprep.mubr.f32.mxu0 0.0
    %1455 = vmatmul.mubr.f32.gmra.mrb[0].mxu0 %v959
    %v1456 = vpop.f32.mrb[0].mxu0
    %v1457 = vadd.f32 %v889, %v1456
    %v1458 = vpop.f32.mrb[0].mxu0
    %1459 = vmatprep.mubr.f32.mxu0 0.0
    %1460 = vmatmul.mubr.f32.gmra.mrb[0].mxu0 %v962
    %v1461 = vpop.f32.mrb[0].mxu0
    %v1462 = vadd.f32 %v889, %v1461
    %v1463 = vpop.f32.mrb[0].mxu0
    %1464 = vmatprep.mubr.f32.mxu0 0.0
    %1465 = vmatmul.mubr.f32.gmra.mrb[0].mxu0 %v965
    %v1466 = vpop.f32.mrb[0].mxu0
    %v1467 = vadd.f32 %v889, %v1466
    %v1468 = vpop.f32.mrb[0].mxu0
    %1469 = vmatprep.mubr.f32.mxu0 0.0
    %1470 = vmatmul.mubr.f32.gmra.mrb[0].mxu0 %v968
    %v1471 = vpop.f32.mrb[0].mxu0
    %v1472 = vadd.f32 %v889, %v1471
    %v1473 = vpop.f32.mrb[0].mxu0
    %1474 = vmatprep.mubr.f32.mxu0 0.0
    %1475 = vmatmul.mubr.f32.gmra.mrb[0].mxu0 %v971
    %v1476 = vpop.f32.mrb[0].mxu0
    %v1477 = vadd.f32 %v889, %v1476
    %v1478 = vpop.f32.mrb[0].mxu0
    %1479 = vmatprep.mubr.f32.mxu0 0.0
    %1480 = vmatmul.mubr.f32.gmra.mrb[0].mxu0 %v974
    %v1481 = vpop.f32.mrb[0].mxu0
    %v1482 = vadd.f32 %v889, %v1481
    %v1483 = vpop.f32.mrb[0].mxu0
    %1484 = vmatprep.mubr.f32.mxu0 0.0
    %1485 = vmatmul.mubr.f32.gmra.mrb[0].mxu0 %v977
    %v1486 = vpop.f32.mrb[0].mxu0
    %v1487 = vadd.f32 %v889, %v1486
    %v1488 = vpop.f32.mrb[0].mxu0
    %1489 = vmatprep.mubr.f32.mxu0 0.0
    %1490 = vmatmul.mubr.f32.gmra.mrb[0].mxu0 %v980
    %v1491 = vpop.f32.mrb[0].mxu0
    %v1492 = vadd.f32 %v889, %v1491
    %v1493 = vpop.f32.mrb[0].mxu0
    %1494 = vmatprep.mubr.f32.mxu0 0.0
    %1495 = vmatmul.mubr.f32.gmra.mrb[0].mxu0 %v983
    %v1496 = vpop.f32.mrb[0].mxu0
    %v1497 = vadd.f32 %v889, %v1496
    %v1498 = vpop.f32.mrb[0].mxu0
    %1499 = vmatprep.mubr.f32.mxu0 0.0
    %1500 = vmatmul.mubr.f32.gmra.mrb[0].mxu0 %v986
    %v1501 = vpop.f32.mrb[0].mxu0
    %v1502 = vadd.f32 %v889, %v1501
    %v1503 = vpop.f32.mrb[0].mxu0
    %1504 = vmatprep.mubr.f32.mxu0 0.0
    %1505 = vmatmul.mubr.f32.gmra.mrb[0].mxu0 %v989
    %v1506 = vpop.f32.mrb[0].mxu0
    %v1507 = vadd.f32 %v889, %v1506
    %v1508 = vpop.f32.mrb[0].mxu0
    %1509 = vmatprep.mubr.f32.mxu0 0.0
    %1510 = vmatmul.mubr.f32.gmra.mrb[0].mxu0 %v992
    %v1511 = vpop.f32.mrb[0].mxu0
    %v1512 = vadd.f32 %v889, %v1511
    %v1513 = vpop.f32.mrb[0].mxu0
    %1514 = vmatprep.mubr.f32.mxu0 0.0
    %1515 = vmatmul.mubr.f32.gmra.mrb[0].mxu0 %v995
    %v1516 = vpop.f32.mrb[0].mxu0
    %v1517 = vadd.f32 %v889, %v1516
    %v1518 = vpop.f32.mrb[0].mxu0
    %1519 = vmatprep.mubr.f32.mxu0 0.0
    %1520 = vmatmul.mubr.f32.gmra.mrb[0].mxu0 %v998
    %v1521 = vpop.f32.mrb[0].mxu0
    %v1522 = vadd.f32 %v889, %v1521
    %v1523 = vpop.f32.mrb[0].mxu0
    %1524 = vmatprep.mubr.f32.mxu0 0.0
    %1525 = vmatmul.mubr.f32.gmra.mrb[0].mxu0 %v1001
    %v1526 = vpop.f32.mrb[0].mxu0
    %v1527 = vadd.f32 %v889, %v1526
    %v1528 = vpop.f32.mrb[0].mxu0
    %1529 = vmatprep.mubr.f32.mxu0 0.0
    %1530 = vmatmul.mubr.f32.gmra.mrb[0].mxu0 %v1004
    %v1531 = vpop.f32.mrb[0].mxu0
    %v1532 = vadd.f32 %v889, %v1531
    %v1533 = vpop.f32.mrb[0].mxu0
    %1534 = vmatprep.mubr.f32.mxu0 0.0
    %1535 = vmatmul.mubr.f32.gmra.mrb[0].mxu0 %v1007
    %v1536 = vpop.f32.mrb[0].mxu0
    %v1537 = vadd.f32 %v889, %v1536
    %v1538 = vpop.f32.mrb[0].mxu0
    %1539 = vmatprep.mubr.f32.mxu0 0.0
    %1540 = vmatmul.mubr.f32.gmra.mrb[0].mxu0 %v1010
    %v1541 = vpop.f32.mrb[0].mxu0
    %v1542 = vadd.f32 %v889, %v1541
    %v1543 = vpop.f32.mrb[0].mxu0
    %1544 = vmatprep.mubr.f32.mxu0 0.0
    %1545 = vmatmul.mubr.f32.gmra.mrb[0].mxu0 %v1013
    %v1546 = vpop.f32.mrb[0].mxu0
    %v1547 = vadd.f32 %v889, %v1546
    %v1548 = vpop.f32.mrb[0].mxu0
    %1549 = vmatprep.mubr.f32.mxu0 0.0
    %1550 = vmatmul.mubr.f32.gmra.mrb[0].mxu0 %v1016
    %v1551 = vpop.f32.mrb[0].mxu0
    %v1552 = vadd.f32 %v889, %v1551
    %v1553 = vpop.f32.mrb[0].mxu0
    %1554 = vmatprep.mubr.f32.mxu0 0.0
    %1555 = vmatmul.mubr.f32.gmra.mrb[0].mxu0 %v1019
    %v1556 = vpop.f32.mrb[0].mxu0
    %v1557 = vadd.f32 %v889, %v1556
    %v1558 = vpop.f32.mrb[0].mxu0
    %1559 = vmatprep.mubr.f32.mxu0 0.0
    %1560 = vmatmul.mubr.f32.gmra.mrb[0].mxu0 %v1022
    %v1561 = vpop.f32.mrb[0].mxu0
    %v1562 = vadd.f32 %v889, %v1561
    %v1563 = vpop.f32.mrb[0].mxu0
    %1564 = vmatprep.mubr.f32.mxu0 0.0
    %1565 = vmatmul.mubr.f32.gmra.mrb[0].mxu0 %v1025
    %v1566 = vpop.f32.mrb[0].mxu0
    %v1567 = vadd.f32 %v889, %v1566
    %v1568 = vpop.f32.mrb[0].mxu0
    %1569 = vmatprep.mubr.f32.mxu0 0.0
    %1570 = vmatmul.mubr.f32.gmra.mrb[0].mxu0 %v1028
    %v1571 = vpop.f32.mrb[0].mxu0
    %v1572 = vadd.f32 %v889, %v1571
    %v1573 = vpop.f32.mrb[0].mxu0
    %1574 = vmatprep.mubr.f32.mxu0 0.0
    %1575 = vmatmul.mubr.f32.gmra.mrb[0].mxu0 %v1031
    %v1576 = vpop.f32.mrb[0].mxu0
    %v1577 = vadd.f32 %v889, %v1576
    %v1578 = vpop.f32.mrb[0].mxu0
    %1579 = vmatprep.mubr.f32.mxu0 0.0
    %1580 = vmatmul.mubr.f32.gmra.mrb[0].mxu0 %v1034
    %v1581 = vpop.f32.mrb[0].mxu0
    %v1582 = vadd.f32 %v889, %v1581
    %v1583 = vpop.f32.mrb[0].mxu0
    %1584 = vmatprep.mubr.f32.mxu0 0.0
    %1585 = vmatmul.mubr.f32.gmra.mrb[0].mxu0 %v1037
    %v1586 = vpop.f32.mrb[0].mxu0
    %v1587 = vadd.f32 %v889, %v1586
    %v1588 = vpop.f32.mrb[0].mxu0
    %1589 = vmatprep.mubr.f32.mxu0 0.0
    %1590 = vmatmul.mubr.f32.gmra.mrb[0].mxu0 %v1040
    %v1591 = vpop.f32.mrb[0].mxu0
    %v1592 = vadd.f32 %v889, %v1591
    %v1593 = vpop.f32.mrb[0].mxu0
    %1594 = vmatprep.mubr.f32.mxu0 0.0
    %1595 = vmatmul.mubr.f32.gmra.mrb[0].mxu0 %v1043
    %v1596 = vpop.f32.mrb[0].mxu0
    %v1597 = vadd.f32 %v889, %v1596
    %v1598 = vpop.f32.mrb[0].mxu0
    %1599 = vmatprep.mubr.f32.mxu0 0.0
    %1600 = vmatmul.mubr.f32.gmra.mrb[0].mxu0 %v1046
    %v1601 = vpop.f32.mrb[0].mxu0
    %v1602 = vadd.f32 %v889, %v1601
    %v1603 = vpop.f32.mrb[0].mxu0
    %1604 = vmatprep.mubr.f32.mxu0 0.0
    %1605 = vmatmul.mubr.f32.gmra.mrb[0].mxu0 %v1049
    %v1606 = vpop.f32.mrb[0].mxu0
    %v1607 = vadd.f32 %v889, %v1606
    %v1608 = vpop.f32.mrb[0].mxu0
    %1609 = vmatprep.mubr.f32.mxu0 0.0
    %1610 = vmatmul.mubr.f32.gmra.mrb[0].mxu0 %v1052
    %v1611 = vpop.f32.mrb[0].mxu0
    %v1612 = vadd.f32 %v889, %v1611
    %v1613 = vpop.f32.mrb[0].mxu0
    %1614 = vmatprep.mubr.f32.mxu0 0.0
    %1615 = vmatmul.mubr.f32.gmra.mrb[0].mxu0 %v1055
    %v1616 = vpop.f32.mrb[0].mxu0
    %v1617 = vadd.f32 %v889, %v1616
    %v1618 = vpop.f32.mrb[0].mxu0
    %1619 = vmatprep.mubr.f32.mxu0 0.0
    %1620 = vmatmul.mubr.f32.gmra.mrb[0].mxu0 %v1058
    %v1621 = vpop.f32.mrb[0].mxu0
    %v1622 = vadd.f32 %v889, %v1621
    %v1623 = vpop.f32.mrb[0].mxu0
    %1624 = vmatprep.mubr.f32.mxu0 0.0
    %1625 = vmatmul.mubr.f32.gmra.mrb[0].mxu0 %v1061
    %v1626 = vpop.f32.mrb[0].mxu0
    %v1627 = vadd.f32 %v889, %v1626
    %v1628 = vpop.f32.mrb[0].mxu0
    %1629 = vmatprep.mubr.f32.mxu0 0.0
    %1630 = vmatmul.mubr.f32.gmra.mrb[0].mxu0 %v1064
    %v1631 = vpop.f32.mrb[0].mxu0
    %v1632 = vadd.f32 %v889, %v1631
    %v1633 = vpop.f32.mrb[0].mxu0
    %1634 = vmatprep.mubr.f32.mxu0 0.0
    %1635 = vmatmul.mubr.f32.gmra.mrb[0].mxu0 %v1067
    %v1636 = vpop.f32.mrb[0].mxu0
    %v1637 = vadd.f32 %v889, %v1636
    %v1638 = vpop.f32.mrb[0].mxu0
    %1639 = vmatprep.mubr.f32.mxu0 0.0
    %1640 = vmatmul.mubr.f32.gmra.mrb[0].mxu0 %v1070
    %v1641 = vpop.f32.mrb[0].mxu0
    %v1642 = vadd.f32 %v889, %v1641
    %v1643 = vpop.f32.mrb[0].mxu0
    %1644 = vmatprep.mubr.f32.mxu0 0.0
    %1645 = vmatmul.mubr.f32.gmra.mrb[0].mxu0 %v1073
    %v1646 = vpop.f32.mrb[0].mxu0
    %v1647 = vadd.f32 %v889, %v1646
    %v1648 = vpop.f32.mrb[0].mxu0
    %1649 = vmatprep.mubr.f32.mxu0 0.0
    %1650 = vmatmul.mubr.f32.gmra.mrb[0].mxu0 %v1076
    %v1651 = vpop.f32.mrb[0].mxu0
    %v1652 = vadd.f32 %v889, %v1651
    %v1653 = vpop.f32.mrb[0].mxu0
    %1654 = vmatprep.mubr.f32.mxu0 0.0
    %1655 = vmatmul.mubr.f32.gmra.mrb[0].mxu0 %v1079
    %v1656 = vpop.f32.mrb[0].mxu0
    %v1657 = vadd.f32 %v889, %v1656
    %v1658 = vpop.f32.mrb[0].mxu0
    %1659 = vmatprep.mubr.f32.mxu0 0.0
    %1660 = vmatmul.mubr.f32.gmra.mrb[0].mxu0 %v1082
    %v1661 = vpop.f32.mrb[0].mxu0
    %v1662 = vadd.f32 %v889, %v1661
    %v1663 = vpop.f32.mrb[0].mxu0
    %1664 = vmatprep.mubr.f32.mxu0 0.0
    %1665 = vmatmul.mubr.f32.gmra.mrb[0].mxu0 %v1085
    %v1666 = vpop.f32.mrb[0].mxu0
    %v1667 = vadd.f32 %v889, %v1666
    %v1668 = vpop.f32.mrb[0].mxu0
    %1669 = vmatprep.mubr.f32.mxu0 0.0
    %1670 = vmatmul.mubr.f32.gmra.mrb[0].mxu0 %v1088
    %v1671 = vpop.f32.mrb[0].mxu0
    %v1672 = vadd.f32 %v889, %v1671
    %v1673 = vpop.f32.mrb[0].mxu0
    %1674 = vmatprep.mubr.f32.mxu0 0.0
    %1675 = vmatmul.mubr.f32.gmra.mrb[0].mxu0 %v1091
    %v1676 = vpop.f32.mrb[0].mxu0
    %v1677 = vadd.f32 %v889, %v1676
    %v1678 = vpop.f32.mrb[0].mxu0
    %1679 = vmatprep.mubr.f32.mxu0 0.0
    %1680 = vmatmul.mubr.f32.gmra.mrb[0].mxu0 %v1094
    %v1681 = vpop.f32.mrb[0].mxu0
    %v1682 = vadd.f32 %v889, %v1681
    %v1683 = vpop.f32.mrb[0].mxu0
    %1684 = vmatprep.mubr.f32.mxu0 0.0
    %1685 = vmatmul.mubr.f32.gmra.mrb[0].mxu0 %v1097
    %v1686 = vpop.f32.mrb[0].mxu0
    %v1687 = vadd.f32 %v889, %v1686
    %v1688 = vpop.f32.mrb[0].mxu0
    %1689 = vmatprep.mubr.f32.mxu0 0.0
    %1690 = vmatmul.mubr.f32.gmra.mrb[0].mxu0 %v1100
    %v1691 = vpop.f32.mrb[0].mxu0
    %v1692 = vadd.f32 %v889, %v1691
    %v1693 = vpop.f32.mrb[0].mxu0
    %1694 = vmatprep.mubr.f32.mxu0 0.0
    %1695 = vmatmul.mubr.f32.gmra.mrb[0].mxu0 %v1103
    %v1696 = vpop.f32.mrb[0].mxu0
    %v1697 = vadd.f32 %v889, %v1696
    %v1698 = vpop.f32.mrb[0].mxu0
    %1699 = vmatprep.mubr.f32.mxu0 0.0
    %1700 = vmatmul.mubr.f32.gmra.mrb[0].mxu0 %v1106
    %v1701 = vpop.f32.mrb[0].mxu0
    %v1702 = vadd.f32 %v889, %v1701
    %v1703 = vpop.f32.mrb[0].mxu0
    %1704 = vmatprep.mubr.f32.mxu0 0.0
    %1705 = vmatmul.mubr.f32.gmra.mrb[0].mxu0 %v1109
    %v1706 = vpop.f32.mrb[0].mxu0
    %v1707 = vadd.f32 %v889, %v1706
    %v1708 = vpop.f32.mrb[0].mxu0
    %1709 = vmatprep.mubr.f32.mxu0 0.0
    %1710 = vmatmul.mubr.f32.gmra.mrb[0].mxu0 %v1112
    %v1711 = vpop.f32.mrb[0].mxu0
    %v1712 = vadd.f32 %v889, %v1711
    %v1713 = vpop.f32.mrb[0].mxu0
    %1714 = vmatprep.mubr.f32.mxu0 0.0
    %1715 = vmatmul.mubr.f32.gmra.mrb[0].mxu0 %v1115
    %v1716 = vpop.f32.mrb[0].mxu0
    %v1717 = vadd.f32 %v889, %v1716
    %v1718 = vpop.f32.mrb[0].mxu0
    %1719 = vmatprep.mubr.f32.mxu0 0.0
    %1720 = vmatmul.mubr.f32.gmra.mrb[0].mxu0 %v1118
    %v1721 = vpop.f32.mrb[0].mxu0
    %v1722 = vadd.f32 %v889, %v1721
    %v1723 = vpop.f32.mrb[0].mxu0
    %1724 = vmatprep.mubr.f32.mxu0 0.0
    %1725 = vmatmul.mubr.f32.gmra.mrb[0].mxu0 %v1121
    %v1726 = vpop.f32.mrb[0].mxu0
    %v1727 = vadd.f32 %v889, %v1726
    %v1728 = vpop.f32.mrb[0].mxu0
    %1729 = vmatprep.mubr.f32.mxu0 0.0
    %1730 = vmatmul.mubr.f32.gmra.mrb[0].mxu0 %v1124
    %v1731 = vpop.f32.mrb[0].mxu0
    %v1732 = vadd.f32 %v889, %v1731
    %v1733 = vpop.f32.mrb[0].mxu0
    %1734 = vmatprep.mubr.f32.mxu0 0.0
    %1735 = vmatmul.mubr.f32.gmra.mrb[0].mxu0 %v1127
    %v1736 = vpop.f32.mrb[0].mxu0
    %v1737 = vadd.f32 %v889, %v1736
    %v1738 = vpop.f32.mrb[0].mxu0
    %1739 = vmatprep.mubr.f32.mxu0 0.0
    %1740 = vmatmul.mubr.f32.gmra.mrb[0].mxu0 %v1130
    %v1741 = vpop.f32.mrb[0].mxu0
    %v1742 = vadd.f32 %v889, %v1741
    %v1743 = vpop.f32.mrb[0].mxu0
    %1744 = vmatprep.mubr.f32.mxu0 0.0
    %1745 = vmatmul.mubr.f32.gmra.mrb[0].mxu0 %v1133
    %v1746 = vpop.f32.mrb[0].mxu0
    %v1747 = vadd.f32 %v889, %v1746
    %v1748 = vpop.f32.mrb[0].mxu0
    %1749 = vmatprep.mubr.f32.mxu0 0.0
    %1750 = vmatmul.mubr.f32.gmra.mrb[0].mxu0 %v1136
    %v1751 = vpop.f32.mrb[0].mxu0
    %v1752 = vadd.f32 %v889, %v1751
    %v1753 = vpop.f32.mrb[0].mxu0
    %1754 = vmatprep.mubr.f32.mxu0 0.0
    %1755 = vmatmul.mubr.f32.gmra.mrb[0].mxu0 %v1139
    %v1756 = vpop.f32.mrb[0].mxu0
    %v1757 = vadd.f32 %v889, %v1756
    %v1758 = vpop.f32.mrb[0].mxu0
    %1759 = vmatprep.mubr.f32.mxu0 0.0
    %1760 = vmatmul.mubr.f32.gmra.mrb[0].mxu0 %v1142
    %v1761 = vpop.f32.mrb[0].mxu0
    %v1762 = vadd.f32 %v889, %v1761
    %v1763 = vpop.f32.mrb[0].mxu0
    %1764 = vmatprep.mubr.f32.mxu0 0.0
    %1765 = vmatmul.mubr.f32.gmra.mrb[0].mxu0 %v1145
    %v1766 = vpop.f32.mrb[0].mxu0
    %v1767 = vadd.f32 %v889, %v1766
    %v1768 = vpop.f32.mrb[0].mxu0
    %1769 = vmatprep.mubr.f32.mxu0 0.0
    %1770 = vmatmul.mubr.f32.gmra.mrb[0].mxu0 %v1148
    %v1771 = vpop.f32.mrb[0].mxu0
    %v1772 = vadd.f32 %v889, %v1771
    %v1773 = vpop.f32.mrb[0].mxu0
    %1774 = vmatprep.mubr.f32.mxu0 0.0
    %1775 = vmatmul.mubr.f32.gmra.mrb[0].mxu0 %v1151
    %v1776 = vpop.f32.mrb[0].mxu0
    %v1777 = vadd.f32 %v889, %v1776
    %v1778 = vpop.f32.mrb[0].mxu0
    %1779 = vmatprep.mubr.f32.mxu0 0.0
    %1780 = vmatmul.mubr.f32.gmra.mrb[0].mxu0 %v1154
    %v1781 = vpop.f32.mrb[0].mxu0
    %v1782 = vadd.f32 %v889, %v1781
    %v1783 = vpop.f32.mrb[0].mxu0
    %1784 = vmatprep.mubr.f32.mxu0 0.0
    %1785 = vmatmul.mubr.f32.gmra.mrb[0].mxu0 %v1157
    %v1786 = vpop.f32.mrb[0].mxu0
    %v1787 = vadd.f32 %v889, %v1786
    %v1788 = vpop.f32.mrb[0].mxu0
    %1789 = vmatprep.mubr.f32.mxu0 0.0
    %1790 = vmatmul.mubr.f32.gmra.mrb[0].mxu0 %v1160
    %v1791 = vpop.f32.mrb[0].mxu0
    %v1792 = vadd.f32 %v889, %v1791
    %v1793 = vpop.f32.mrb[0].mxu0
    %1794 = vmatprep.mubr.f32.mxu0 0.0
    %1795 = vmatmul.mubr.f32.gmra.mrb[0].mxu0 %v1163
    %v1796 = vpop.f32.mrb[0].mxu0
    %v1797 = vadd.f32 %v889, %v1796
    %v1798 = vpop.f32.mrb[0].mxu0
    %1799 = vmatprep.mubr.f32.mxu0 0.0
    %1800 = vmatmul.mubr.f32.gmra.mrb[0].mxu0 %v1166
    %v1801 = vpop.f32.mrb[0].mxu0
    %v1802 = vadd.f32 %v889, %v1801
    %v1803 = vpop.f32.mrb[0].mxu0
    %1804 = vmatprep.mubr.f32.mxu0 0.0
    %1805 = vmatmul.mubr.f32.gmra.mrb[0].mxu0 %v1169
    %v1806 = vpop.f32.mrb[0].mxu0
    %v1807 = vadd.f32 %v889, %v1806
    %v1808 = vpop.f32.mrb[0].mxu0
    %1809 = vmatprep.mubr.f32.mxu0 0.0
    %1810 = vmatmul.mubr.f32.gmra.mrb[0].mxu0 %v1172
    %v1811 = vpop.f32.mrb[0].mxu0
    %v1812 = vadd.f32 %v889, %v1811
    %v1813 = vpop.f32.mrb[0].mxu0
    %1814 = vmatprep.mubr.f32.mxu0 0.0
    %1815 = vmatmul.mubr.f32.gmra.mrb[0].mxu0 %v1175
    %v1816 = vpop.f32.mrb[0].mxu0
    %v1817 = vadd.f32 %v889, %v1816
    %v1818 = vpop.f32.mrb[0].mxu0
    %1819 = vmatprep.mubr.f32.mxu0 0.0
    %1820 = vmatmul.mubr.f32.gmra.mrb[0].mxu0 %v1178
    %v1821 = vpop.f32.mrb[0].mxu0
    %v1822 = vadd.f32 %v889, %v1821
    %v1823 = vpop.f32.mrb[0].mxu0
    %1824 = vmatprep.mubr.f32.mxu0 0.0
    %1825 = vmatmul.mubr.f32.gmra.mrb[0].mxu0 %v1181
    %v1826 = vpop.f32.mrb[0].mxu0
    %v1827 = vadd.f32 %v889, %v1826
    %v1828 = vpop.f32.mrb[0].mxu0
    %1829 = vmatprep.mubr.f32.mxu0 0.0
    %1830 = vmatmul.mubr.f32.gmra.mrb[0].mxu0 %v1184
    %v1831 = vpop.f32.mrb[0].mxu0
    %v1832 = vadd.f32 %v889, %v1831
    %v1833 = vpop.f32.mrb[0].mxu0
    %1834 = vmatprep.mubr.f32.mxu0 0.0
    %1835 = vmatmul.mubr.f32.gmra.mrb[0].mxu0 %v1187
    %v1836 = vpop.f32.mrb[0].mxu0
    %v1837 = vadd.f32 %v889, %v1836
    %v1838 = vpop.f32.mrb[0].mxu0
    %1839 = vmatprep.mubr.f32.mxu0 0.0
    %1840 = vmatmul.mubr.f32.gmra.mrb[0].mxu0 %v1190
    %v1841 = vpop.f32.mrb[0].mxu0
    %v1842 = vadd.f32 %v889, %v1841
    %v1843 = vpop.f32.mrb[0].mxu0
    %1844 = vmatprep.mubr.f32.mxu0 0.0
    %1845 = vmatmul.mubr.f32.gmra.mrb[0].mxu0 %v1193
    %v1846 = vpop.f32.mrb[0].mxu0
    %v1847 = vadd.f32 %v889, %v1846
    %v1848 = vpop.f32.mrb[0].mxu0
    %1849 = vmatprep.mubr.f32.mxu0 0.0
    %1850 = vmatmul.mubr.f32.gmra.mrb[0].mxu0 %v1196
    %v1851 = vpop.f32.mrb[0].mxu0
    %v1852 = vadd.f32 %v889, %v1851
    %v1853 = vpop.f32.mrb[0].mxu0
    %1854 = vmatprep.mubr.f32.mxu0 0.0
    %1855 = vmatmul.mubr.f32.gmra.mrb[0].mxu0 %v1199
    %v1856 = vpop.f32.mrb[0].mxu0
    %v1857 = vadd.f32 %v889, %v1856
    %v1858 = vpop.f32.mrb[0].mxu0
    %1859 = vmatprep.mubr.f32.mxu0 0.0
    %1860 = vmatmul.mubr.f32.gmra.mrb[0].mxu0 %v1202
    %v1861 = vpop.f32.mrb[0].mxu0
    %v1862 = vadd.f32 %v889, %v1861
    %v1863 = vpop.f32.mrb[0].mxu0
    %1864 = vmatprep.mubr.f32.mxu0 0.0
    %1865 = vmatmul.mubr.f32.gmra.mrb[0].mxu0 %v1205
    %v1866 = vpop.f32.mrb[0].mxu0
    %v1867 = vadd.f32 %v889, %v1866
    %v1868 = vpop.f32.mrb[0].mxu0
    %1869 = vmatprep.mubr.f32.mxu0 0.0
    %1870 = vmatmul.mubr.f32.gmra.mrb[0].mxu0 %v1208
    %v1871 = vpop.f32.mrb[0].mxu0
    %v1872 = vadd.f32 %v889, %v1871
    %v1873 = vpop.f32.mrb[0].mxu0
    %1874 = vmatprep.mubr.f32.mxu0 0.0
    %1875 = vmatmul.mubr.f32.gmra.mrb[0].mxu0 %v1211
    %v1876 = vpop.f32.mrb[0].mxu0
    %v1877 = vadd.f32 %v889, %v1876
    %v1878 = vpop.f32.mrb[0].mxu0
    %1879 = vmatprep.mubr.f32.mxu0 0.0
    %1880 = vmatmul.mubr.f32.gmra.mrb[0].mxu0 %v1214
    %v1881 = vpop.f32.mrb[0].mxu0
    %v1882 = vadd.f32 %v889, %v1881
    %v1883 = vpop.f32.mrb[0].mxu0
    %1884 = vmatprep.mubr.f32.mxu0 0.0
    %1885 = vmatmul.mubr.f32.gmra.mrb[0].mxu0 %v1217
    %v1886 = vpop.f32.mrb[0].mxu0
    %v1887 = vadd.f32 %v889, %v1886
    %v1888 = vpop.f32.mrb[0].mxu0
    %1889 = vmatprep.mubr.f32.mxu0 0.0
    %1890 = vmatmul.mubr.f32.gmra.mrb[0].mxu0 %v1220
    %v1891 = vpop.f32.mrb[0].mxu0
    %v1892 = vadd.f32 %v889, %v1891
    %v1893 = vpop.f32.mrb[0].mxu0
    %1894 = vmatprep.mubr.f32.mxu0 0.0
    %1895 = vmatmul.mubr.f32.gmra.mrb[0].mxu0 %v1223
    %v1896 = vpop.f32.mrb[0].mxu0
    %v1897 = vadd.f32 %v889, %v1896
    %v1898 = vpop.f32.mrb[0].mxu0
    %1899 = vmatprep.mubr.f32.mxu0 0.0
    %1900 = vmatmul.mubr.f32.gmra.mrb[0].mxu0 %v1226
    %v1901 = vpop.f32.mrb[0].mxu0
    %v1902 = vadd.f32 %v889, %v1901
    %v1903 = vpop.f32.mrb[0].mxu0
    %1904 = vmatprep.mubr.f32.mxu0 0.0
    %1905 = vmatmul.mubr.f32.gmra.mrb[0].mxu0 %v1229
    %v1906 = vpop.f32.mrb[0].mxu0
    %v1907 = vadd.f32 %v889, %v1906
    %v1908 = vpop.f32.mrb[0].mxu0
    %1909 = vmatprep.mubr.f32.mxu0 0.0
    %1910 = vmatmul.mubr.f32.gmra.mrb[0].mxu0 %v1232
    %v1911 = vpop.f32.mrb[0].mxu0
    %v1912 = vadd.f32 %v889, %v1911
    %v1913 = vpop.f32.mrb[0].mxu0
    %1914 = vmatprep.mubr.f32.mxu0 0.0
    %1915 = vmatmul.mubr.f32.gmra.mrb[0].mxu0 %v1235
    %v1916 = vpop.f32.mrb[0].mxu0
    %v1917 = vadd.f32 %v889, %v1916
    %v1918 = vpop.f32.mrb[0].mxu0
    %1919 = vmatprep.mubr.f32.mxu0 0.0
    %1920 = vmatmul.mubr.f32.gmra.mrb[0].mxu0 %v1238
    %v1921 = vpop.f32.mrb[0].mxu0
    %v1922 = vadd.f32 %v889, %v1921
    %v1923 = vpop.f32.mrb[0].mxu0
    %1924 = vmatprep.mubr.f32.mxu0 0.0
    %1925 = vmatmul.mubr.f32.gmra.mrb[0].mxu0 %v1241
    %v1926 = vpop.f32.mrb[0].mxu0
    %v1927 = vadd.f32 %v889, %v1926
    %v1928 = vpop.f32.mrb[0].mxu0
    %1929 = vmatprep.mubr.f32.mxu0 0.0
    %1930 = vmatmul.mubr.f32.gmra.mrb[0].mxu0 %v1244
    %v1931 = vpop.f32.mrb[0].mxu0
    %v1932 = vadd.f32 %v889, %v1931
    %v1933 = vpop.f32.mrb[0].mxu0
    %1934 = vmatprep.mubr.f32.mxu0 0.0
    %1935 = vmatmul.mubr.f32.gmra.mrb[0].mxu0 %v1247
    %v1936 = vpop.f32.mrb[0].mxu0
    %v1937 = vadd.f32 %v889, %v1936
    %v1938 = vpop.f32.mrb[0].mxu0
    %1939 = vmatprep.mubr.f32.mxu0 0.0
    %1940 = vmatmul.mubr.f32.gmra.mrb[0].mxu0 %v1250
    %v1941 = vpop.f32.mrb[0].mxu0
    %v1942 = vadd.f32 %v889, %v1941
    %v1943 = vpop.f32.mrb[0].mxu0
    %1944 = vmatprep.mubr.f32.mxu0 0.0
    %1945 = vmatmul.mubr.f32.gmra.mrb[0].mxu0 %v1253
    %v1946 = vpop.f32.mrb[0].mxu0
    %v1947 = vadd.f32 %v889, %v1946
    %v1948 = vpop.f32.mrb[0].mxu0
    %1949 = vmatprep.mubr.f32.mxu0 0.0
    %1950 = vmatmul.mubr.f32.gmra.mrb[0].mxu0 %v1256
    %v1951 = vpop.f32.mrb[0].mxu0
    %v1952 = vadd.f32 %v889, %v1951
    %v1953 = vpop.f32.mrb[0].mxu0
    %1954 = vmatprep.mubr.f32.mxu0 0.0
    %1955 = vmatmul.mubr.f32.gmra.mrb[0].mxu0 %v1259
    %v1956 = vpop.f32.mrb[0].mxu0
    %v1957 = vadd.f32 %v889, %v1956
    %v1958 = vpop.f32.mrb[0].mxu0
    %1959 = vmatprep.mubr.f32.mxu0 0.0
    %1960 = vmatmul.mubr.f32.gmra.mrb[0].mxu0 %v1262
    %v1961 = vpop.f32.mrb[0].mxu0
    %v1962 = vadd.f32 %v889, %v1961
    %v1963 = vpop.f32.mrb[0].mxu0
    %1964 = vmatprep.mubr.f32.mxu0 0.0
    %1965 = vmatmul.mubr.f32.gmra.mrb[0].mxu0 %v1265
    %v1966 = vpop.f32.mrb[0].mxu0
    %v1967 = vadd.f32 %v889, %v1966
    %v1968 = vpop.f32.mrb[0].mxu0
    %1969 = vmatprep.mubr.f32.mxu0 0.0
    %1970 = vmatmul.mubr.f32.gmra.mrb[0].mxu0 %v1268
    %v1971 = vpop.f32.mrb[0].mxu0
    %v1972 = vadd.f32 %v889, %v1971
    %v1973 = vpop.f32.mrb[0].mxu0
    %1974 = vmatprep.mubr.f32.mxu0 0.0
    %1975 = vmatmul.mubr.f32.gmra.mrb[0].mxu0 %v1271
    %v1976 = vpop.f32.mrb[0].mxu0
    %v1977 = vadd.f32 %v889, %v1976
    %v1978 = vpop.f32.mrb[0].mxu0
    %1979 = vmatprep.mubr.f32.mxu0 0.0
    %1980 = vmatmul.mubr.f32.gmra.mrb[0].mxu0 %v1274
    %v1981 = vpop.f32.mrb[0].mxu0
    %v1982 = vadd.f32 %v889, %v1981
    %v1983 = vpop.f32.mrb[0].mxu0
    %1984 = vdwg.mxu0
    %v1985 = vmax.f32 %v1347, 0.0
    %v1986 = vmax.f32 %v1352, 0.0
    %v1987 = vmax.f32 %v1357, 0.0
    %v1988 = vmax.f32 %v1362, 0.0
    %v1989 = vmax.f32 %v1367, 0.0
    %v1990 = vmax.f32 %v1372, 0.0
    %v1991 = vmax.f32 %v1377, 0.0
    %v1992 = vmax.f32 %v1382, 0.0
    %v1993 = vmax.f32 %v1387, 0.0
    %v1994 = vmax.f32 %v1392, 0.0
    %v1995 = vmax.f32 %v1397, 0.0
    %v1996 = vmax.f32 %v1402, 0.0
    %v1997 = vmax.f32 %v1407, 0.0
    %v1998 = vmax.f32 %v1412, 0.0
    %v1999 = vmax.f32 %v1417, 0.0
    %v2000 = vmax.f32 %v1422, 0.0
    %v2001 = vmax.f32 %v1427, 0.0
    %v2002 = vmax.f32 %v1432, 0.0
    %v2003 = vmax.f32 %v1437, 0.0
    %v2004 = vmax.f32 %v1442, 0.0
    %v2005 = vmax.f32 %v1447, 0.0
    %v2006 = vmax.f32 %v1452, 0.0
    %v2007 = vmax.f32 %v1457, 0.0
    %v2008 = vmax.f32 %v1462, 0.0
    %v2009 = vmax.f32 %v1467, 0.0
    %v2010 = vmax.f32 %v1472, 0.0
    %v2011 = vmax.f32 %v1477, 0.0
    %v2012 = vmax.f32 %v1482, 0.0
    %v2013 = vmax.f32 %v1487, 0.0
    %v2014 = vmax.f32 %v1492, 0.0
    %v2015 = vmax.f32 %v1497, 0.0
    %v2016 = vmax.f32 %v1502, 0.0
    %v2017 = vmax.f32 %v1507, 0.0
    %v2018 = vmax.f32 %v1512, 0.0
    %v2019 = vmax.f32 %v1517, 0.0
    %v2020 = vmax.f32 %v1522, 0.0
    %v2021 = vmax.f32 %v1527, 0.0
    %v2022 = vmax.f32 %v1532, 0.0
    %v2023 = vmax.f32 %v1537, 0.0
    %v2024 = vmax.f32 %v1542, 0.0
    %v2025 = vmax.f32 %v1547, 0.0
    %v2026 = vmax.f32 %v1552, 0.0
    %v2027 = vmax.f32 %v1557, 0.0
    %v2028 = vmax.f32 %v1562, 0.0
    %v2029 = vmax.f32 %v1567, 0.0
    %v2030 = vmax.f32 %v1572, 0.0
    %v2031 = vmax.f32 %v1577, 0.0
    %v2032 = vmax.f32 %v1582, 0.0
    %v2033 = vmax.f32 %v1587, 0.0
    %v2034 = vmax.f32 %v1592, 0.0
    %v2035 = vmax.f32 %v1597, 0.0
    %v2036 = vmax.f32 %v1602, 0.0
    %v2037 = vmax.f32 %v1607, 0.0
    %v2038 = vmax.f32 %v1612, 0.0
    %v2039 = vmax.f32 %v1617, 0.0
    %v2040 = vmax.f32 %v1622, 0.0
    %v2041 = vmax.f32 %v1627, 0.0
    %v2042 = vmax.f32 %v1632, 0.0
    %v2043 = vmax.f32 %v1637, 0.0
    %v2044 = vmax.f32 %v1642, 0.0
    %v2045 = vmax.f32 %v1647, 0.0
    %v2046 = vmax.f32 %v1652, 0.0
    %v2047 = vmax.f32 %v1657, 0.0
    %v2048 = vmax.f32 %v1662, 0.0
    %v2049 = vmax.f32 %v1667, 0.0
    %v2050 = vmax.f32 %v1672, 0.0
    %v2051 = vmax.f32 %v1677, 0.0
    %v2052 = vmax.f32 %v1682, 0.0
    %v2053 = vmax.f32 %v1687, 0.0
    %v2054 = vmax.f32 %v1692, 0.0
    %v2055 = vmax.f32 %v1697, 0.0
    %v2056 = vmax.f32 %v1702, 0.0
    %v2057 = vmax.f32 %v1707, 0.0
    %v2058 = vmax.f32 %v1712, 0.0
    %v2059 = vmax.f32 %v1717, 0.0
    %v2060 = vmax.f32 %v1722, 0.0
    %v2061 = vmax.f32 %v1727, 0.0
    %v2062 = vmax.f32 %v1732, 0.0
    %v2063 = vmax.f32 %v1737, 0.0
    %v2064 = vmax.f32 %v1742, 0.0
    %v2065 = vmax.f32 %v1747, 0.0
    %v2066 = vmax.f32 %v1752, 0.0
    %v2067 = vmax.f32 %v1757, 0.0
    %v2068 = vmax.f32 %v1762, 0.0
    %v2069 = vmax.f32 %v1767, 0.0
    %v2070 = vmax.f32 %v1772, 0.0
    %v2071 = vmax.f32 %v1777, 0.0
    %v2072 = vmax.f32 %v1782, 0.0
    %v2073 = vmax.f32 %v1787, 0.0
    %v2074 = vmax.f32 %v1792, 0.0
    %v2075 = vmax.f32 %v1797, 0.0
    %v2076 = vmax.f32 %v1802, 0.0
    %v2077 = vmax.f32 %v1807, 0.0
    %v2078 = vmax.f32 %v1812, 0.0
    %v2079 = vmax.f32 %v1817, 0.0
    %v2080 = vmax.f32 %v1822, 0.0
    %v2081 = vmax.f32 %v1827, 0.0
    %v2082 = vmax.f32 %v1832, 0.0
    %v2083 = vmax.f32 %v1837, 0.0
    %v2084 = vmax.f32 %v1842, 0.0
    %v2085 = vmax.f32 %v1847, 0.0
    %v2086 = vmax.f32 %v1852, 0.0
    %v2087 = vmax.f32 %v1857, 0.0
    %v2088 = vmax.f32 %v1862, 0.0
    %v2089 = vmax.f32 %v1867, 0.0
    %v2090 = vmax.f32 %v1872, 0.0
    %v2091 = vmax.f32 %v1877, 0.0
    %v2092 = vmax.f32 %v1882, 0.0
    %v2093 = vmax.f32 %v1887, 0.0
    %v2094 = vmax.f32 %v1892, 0.0
    %v2095 = vmax.f32 %v1897, 0.0
    %v2096 = vmax.f32 %v1902, 0.0
    %v2097 = vmax.f32 %v1907, 0.0
    %v2098 = vmax.f32 %v1912, 0.0
    %v2099 = vmax.f32 %v1917, 0.0
    %v2100 = vmax.f32 %v1922, 0.0
    %v2101 = vmax.f32 %v1927, 0.0
    %v2102 = vmax.f32 %v1932, 0.0
    %v2103 = vmax.f32 %v1937, 0.0
    %v2104 = vmax.f32 %v1942, 0.0
    %v2105 = vmax.f32 %v1947, 0.0
    %v2106 = vmax.f32 %v1952, 0.0
    %v2107 = vmax.f32 %v1957, 0.0
    %v2108 = vmax.f32 %v1962, 0.0
    %v2109 = vmax.f32 %v1967, 0.0
    %v2110 = vmax.f32 %v1972, 0.0
    %v2111 = vmax.f32 %v1977, 0.0
    %v2112 = vmax.f32 %v1982, 0.0
    %v2113 = vld [vmem:[#allocation10] sm:$0xff]
    %v2114 = vld [vmem:[#allocation10 + $0x8] sm:$0xff]
    %v2115 = vld [vmem:[%s25] sm:$0x1]
    %v2117 = vlaneseq
    %v2118 = vshrl.u32 %v2117, 7
    %v2119 = vsub.s32 0, %v2118
    %v2120 = vrot.slane %v2115, %v2119
    %vm2122 = vcmask 130048
    %v2124 = vsel %vm2122, %v1985, 0
    %v2127 = vsel %vm2122, %v1986, 0
    %v2130 = vsel %vm2122, %v1987, 0
    %v2133 = vsel %vm2122, %v1988, 0
    %v2136 = vsel %vm2122, %v1989, 0
    %v2139 = vsel %vm2122, %v1990, 0
    %v2142 = vsel %vm2122, %v1991, 0
    %v2145 = vsel %vm2122, %v1992, 0
    %v2148 = vsel %vm2122, %v1993, 0
    %v2151 = vsel %vm2122, %v1994, 0
    %v2154 = vsel %vm2122, %v1995, 0
    %v2157 = vsel %vm2122, %v1996, 0
    %v2160 = vsel %vm2122, %v1997, 0
    %v2163 = vsel %vm2122, %v1998, 0
    %v2166 = vsel %vm2122, %v1999, 0
    %v2169 = vsel %vm2122, %v2000, 0
    %v2172 = vsel %vm2122, %v2001, 0
    %v2175 = vsel %vm2122, %v2002, 0
    %v2178 = vsel %vm2122, %v2003, 0
    %v2181 = vsel %vm2122, %v2004, 0
    %v2184 = vsel %vm2122, %v2005, 0
    %v2187 = vsel %vm2122, %v2006, 0
    %v2190 = vsel %vm2122, %v2007, 0
    %v2193 = vsel %vm2122, %v2008, 0
    %v2196 = vsel %vm2122, %v2009, 0
    %v2199 = vsel %vm2122, %v2010, 0
    %v2202 = vsel %vm2122, %v2011, 0
    %v2205 = vsel %vm2122, %v2012, 0
    %v2208 = vsel %vm2122, %v2013, 0
    %v2211 = vsel %vm2122, %v2014, 0
    %v2214 = vsel %vm2122, %v2015, 0
    %v2217 = vsel %vm2122, %v2016, 0
    %v2220 = vsel %vm2122, %v2017, 0
    %v2223 = vsel %vm2122, %v2018, 0
    %v2226 = vsel %vm2122, %v2019, 0
    %v2229 = vsel %vm2122, %v2020, 0
    %v2232 = vsel %vm2122, %v2021, 0
    %v2235 = vsel %vm2122, %v2022, 0
    %v2238 = vsel %vm2122, %v2023, 0
    %v2241 = vsel %vm2122, %v2024, 0
    %v2244 = vsel %vm2122, %v2025, 0
    %v2247 = vsel %vm2122, %v2026, 0
    %v2250 = vsel %vm2122, %v2027, 0
    %v2253 = vsel %vm2122, %v2028, 0
    %v2256 = vsel %vm2122, %v2029, 0
    %v2259 = vsel %vm2122, %v2030, 0
    %v2262 = vsel %vm2122, %v2031, 0
    %v2265 = vsel %vm2122, %v2032, 0
    %v2268 = vsel %vm2122, %v2033, 0
    %v2271 = vsel %vm2122, %v2034, 0
    %v2274 = vsel %vm2122, %v2035, 0
    %v2277 = vsel %vm2122, %v2036, 0
    %v2280 = vsel %vm2122, %v2037, 0
    %v2283 = vsel %vm2122, %v2038, 0
    %v2286 = vsel %vm2122, %v2039, 0
    %v2289 = vsel %vm2122, %v2040, 0
    %v2292 = vsel %vm2122, %v2041, 0
    %v2295 = vsel %vm2122, %v2042, 0
    %v2298 = vsel %vm2122, %v2043, 0
    %v2301 = vsel %vm2122, %v2044, 0
    %v2304 = vsel %vm2122, %v2045, 0
    %v2307 = vsel %vm2122, %v2046, 0
    %v2310 = vsel %vm2122, %v2047, 0
    %v2313 = vsel %vm2122, %v2048, 0
    %v2316 = vsel %vm2122, %v2049, 0
    %v2319 = vsel %vm2122, %v2050, 0
    %v2322 = vsel %vm2122, %v2051, 0
    %v2325 = vsel %vm2122, %v2052, 0
    %v2328 = vsel %vm2122, %v2053, 0
    %v2331 = vsel %vm2122, %v2054, 0
    %v2334 = vsel %vm2122, %v2055, 0
    %v2337 = vsel %vm2122, %v2056, 0
    %v2340 = vsel %vm2122, %v2057, 0
    %v2343 = vsel %vm2122, %v2058, 0
    %v2346 = vsel %vm2122, %v2059, 0
    %v2349 = vsel %vm2122, %v2060, 0
    %v2352 = vsel %vm2122, %v2061, 0
    %v2355 = vsel %vm2122, %v2062, 0
    %v2358 = vsel %vm2122, %v2063, 0
    %v2361 = vsel %vm2122, %v2064, 0
    %v2364 = vsel %vm2122, %v2065, 0
    %v2367 = vsel %vm2122, %v2066, 0
    %v2370 = vsel %vm2122, %v2067, 0
    %v2373 = vsel %vm2122, %v2068, 0
    %v2376 = vsel %vm2122, %v2069, 0
    %v2379 = vsel %vm2122, %v2070, 0
    %v2382 = vsel %vm2122, %v2071, 0
    %v2385 = vsel %vm2122, %v2072, 0
    %v2388 = vsel %vm2122, %v2073, 0
    %v2391 = vsel %vm2122, %v2074, 0
    %v2394 = vsel %vm2122, %v2075, 0
    %v2397 = vsel %vm2122, %v2076, 0
    %v2400 = vsel %vm2122, %v2077, 0
    %v2403 = vsel %vm2122, %v2078, 0
    %v2406 = vsel %vm2122, %v2079, 0
    %v2409 = vsel %vm2122, %v2080, 0
    %v2412 = vsel %vm2122, %v2081, 0
    %v2415 = vsel %vm2122, %v2082, 0
    %v2418 = vsel %vm2122, %v2083, 0
    %v2421 = vsel %vm2122, %v2084, 0
    %v2424 = vsel %vm2122, %v2085, 0
    %v2427 = vsel %vm2122, %v2086, 0
    %v2430 = vsel %vm2122, %v2087, 0
    %v2433 = vsel %vm2122, %v2088, 0
    %v2436 = vsel %vm2122, %v2089, 0
    %v2439 = vsel %vm2122, %v2090, 0
    %v2442 = vsel %vm2122, %v2091, 0
    %v2445 = vsel %vm2122, %v2092, 0
    %v2448 = vsel %vm2122, %v2093, 0
    %v2451 = vsel %vm2122, %v2094, 0
    %v2454 = vsel %vm2122, %v2095, 0
    %v2457 = vsel %vm2122, %v2096, 0
    %v2460 = vsel %vm2122, %v2097, 0
    %v2463 = vsel %vm2122, %v2098, 0
    %v2466 = vsel %vm2122, %v2099, 0
    %v2469 = vsel %vm2122, %v2100, 0
    %v2472 = vsel %vm2122, %v2101, 0
    %v2475 = vsel %vm2122, %v2102, 0
    %v2478 = vsel %vm2122, %v2103, 0
    %v2481 = vsel %vm2122, %v2104, 0
    %v2484 = vsel %vm2122, %v2105, 0
    %v2487 = vsel %vm2122, %v2106, 0
    %v2490 = vsel %vm2122, %v2107, 0
    %v2493 = vsel %vm2122, %v2108, 0
    %v2496 = vsel %vm2122, %v2109, 0
    %v2499 = vsel %vm2122, %v2110, 0
    %v2502 = vsel %vm2122, %v2111, 0
    %v2505 = vsel %vm2122, %v2112, 0
    %2507 = vmatprep.subr.mxu0 0.0
    %2508 = vmatpush1.msra.mxu0 %v2113
    %2509 = vmatprep.subr.mxu0 0.0
    %2510 = vmatpush1.msra.mxu0 %v2114
    %2511 = vmatprep.subr.mxu0 0.0
    %2512 = vmatpush1.msra.mxu0 0.0
    %2513 = vmatprep.subr.mxu0 0.0
    %2514 = vmatpush1.msra.mxu0 0.0
    %2515 = vmatprep.subr.mxu0 0.0
    %2516 = vmatpush1.msra.mxu0 0.0
    %2517 = vmatprep.subr.mxu0 0.0
    %2518 = vmatpush1.msra.mxu0 0.0
    %2519 = vmatprep.subr.mxu0 0.0
    %2520 = vmatpush1.msra.mxu0 0.0
    %2521 = vmatprep.subr.mxu0 0.0
    %2522 = vmatpush1.msra.mxu0 0.0
    %2523 = vmatprep.subr.mxu0 0.0
    %2524 = vmatpush1.msra.mxu0 0.0
    %2525 = vmatprep.subr.mxu0 0.0
    %2526 = vmatpush1.msra.mxu0 0.0
    %2527 = vmatprep.subr.mxu0 0.0
    %2528 = vmatpush1.msra.mxu0 0.0
    %2529 = vmatprep.subr.mxu0 0.0
    %2530 = vmatpush1.msra.mxu0 0.0
    %2531 = vmatprep.subr.mxu0 0.0
    %2532 = vmatpush1.msra.mxu0 0.0
    %2533 = vmatprep.subr.mxu0 0.0
    %2534 = vmatpush1.msra.mxu0 0.0
    %2535 = vmatprep.subr.mxu0 0.0
    %2536 = vmatpush1.msra.mxu0 0.0
    %2537 = vmatprep.subr.mxu0 0.0
    %2538 = vmatpush1.msra.mxu0 0.0
    %2539 = vmatprep.subr.mxu0 0.0
    %2540 = vmatpush1.msra.mxu0 0.0
    %2541 = vmatprep.subr.mxu0 0.0
    %2542 = vmatpush1.msra.mxu0 0.0
    %2543 = vmatprep.subr.mxu0 0.0
    %2544 = vmatpush1.msra.mxu0 0.0
    %2545 = vmatprep.subr.mxu0 0.0
    %2546 = vmatpush1.msra.mxu0 0.0
    %2547 = vmatprep.subr.mxu0 0.0
    %2548 = vmatpush1.msra.mxu0 0.0
    %2549 = vmatprep.subr.mxu0 0.0
    %2550 = vmatpush1.msra.mxu0 0.0
    %2551 = vmatprep.subr.mxu0 0.0
    %2552 = vmatpush1.msra.mxu0 0.0
    %2553 = vmatprep.subr.mxu0 0.0
    %2554 = vmatpush1.msra.mxu0 0.0
    %2555 = vmatprep.subr.mxu0 0.0
    %2556 = vmatpush1.msra.mxu0 0.0
    %2557 = vmatprep.subr.mxu0 0.0
    %2558 = vmatpush1.msra.mxu0 0.0
    %2559 = vmatprep.subr.mxu0 0.0
    %2560 = vmatpush1.msra.mxu0 0.0
    %2561 = vmatprep.subr.mxu0 0.0
    %2562 = vmatpush1.msra.mxu0 0.0
    %2563 = vmatprep.subr.mxu0 0.0
    %2564 = vmatpush1.msra.mxu0 0.0
    %2565 = vmatprep.subr.mxu0 0.0
    %2566 = vmatpush1.msra.mxu0 0.0
    %2567 = vmatprep.subr.mxu0 0.0
    %2568 = vmatpush1.msra.mxu0 0.0
    %2569 = vmatprep.subr.mxu0 0.0
    %2570 = vmatpush1.msra.mxu0 0.0
    %2571 = vmatprep.mubr.f32.mxu0 0.0
    %2572 = vmatmul.mubr.f32.gmra.mrb[0].mxu0 %v2124
    %v2573 = vpop.f32.mrb[0].mxu0
    %v2574 = vadd.f32 %v2120, %v2573
    %v2575 = vpop.f32.mrb[0].mxu0
    %2576 = vmatprep.mubr.f32.mxu0 0.0
    %2577 = vmatmul.mubr.f32.gmra.mrb[0].mxu0 %v2127
    %v2578 = vpop.f32.mrb[0].mxu0
    %v2579 = vadd.f32 %v2120, %v2578
    %v2580 = vpop.f32.mrb[0].mxu0
    %2581 = vmatprep.mubr.f32.mxu0 0.0
    %2582 = vmatmul.mubr.f32.gmra.mrb[0].mxu0 %v2130
    %v2583 = vpop.f32.mrb[0].mxu0
    %v2584 = vadd.f32 %v2120, %v2583
    %v2585 = vpop.f32.mrb[0].mxu0
    %2586 = vmatprep.mubr.f32.mxu0 0.0
    %2587 = vmatmul.mubr.f32.gmra.mrb[0].mxu0 %v2133
    %v2588 = vpop.f32.mrb[0].mxu0
    %v2589 = vadd.f32 %v2120, %v2588
    %v2590 = vpop.f32.mrb[0].mxu0
    %2591 = vmatprep.mubr.f32.mxu0 0.0
    %2592 = vmatmul.mubr.f32.gmra.mrb[0].mxu0 %v2136
    %v2593 = vpop.f32.mrb[0].mxu0
    %v2594 = vadd.f32 %v2120, %v2593
    %v2595 = vpop.f32.mrb[0].mxu0
    %2596 = vmatprep.mubr.f32.mxu0 0.0
    %2597 = vmatmul.mubr.f32.gmra.mrb[0].mxu0 %v2139
    %v2598 = vpop.f32.mrb[0].mxu0
    %v2599 = vadd.f32 %v2120, %v2598
    %v2600 = vpop.f32.mrb[0].mxu0
    %2601 = vmatprep.mubr.f32.mxu0 0.0
    %2602 = vmatmul.mubr.f32.gmra.mrb[0].mxu0 %v2142
    %v2603 = vpop.f32.mrb[0].mxu0
    %v2604 = vadd.f32 %v2120, %v2603
    %v2605 = vpop.f32.mrb[0].mxu0
    %2606 = vmatprep.mubr.f32.mxu0 0.0
    %2607 = vmatmul.mubr.f32.gmra.mrb[0].mxu0 %v2145
    %v2608 = vpop.f32.mrb[0].mxu0
    %v2609 = vadd.f32 %v2120, %v2608
    %v2610 = vpop.f32.mrb[0].mxu0
    %2611 = vmatprep.mubr.f32.mxu0 0.0
    %2612 = vmatmul.mubr.f32.gmra.mrb[0].mxu0 %v2148
    %v2613 = vpop.f32.mrb[0].mxu0
    %v2614 = vadd.f32 %v2120, %v2613
    %v2615 = vpop.f32.mrb[0].mxu0
    %2616 = vmatprep.mubr.f32.mxu0 0.0
    %2617 = vmatmul.mubr.f32.gmra.mrb[0].mxu0 %v2151
    %v2618 = vpop.f32.mrb[0].mxu0
    %v2619 = vadd.f32 %v2120, %v2618
    %v2620 = vpop.f32.mrb[0].mxu0
    %2621 = vmatprep.mubr.f32.mxu0 0.0
    %2622 = vmatmul.mubr.f32.gmra.mrb[0].mxu0 %v2154
    %v2623 = vpop.f32.mrb[0].mxu0
    %v2624 = vadd.f32 %v2120, %v2623
    %v2625 = vpop.f32.mrb[0].mxu0
    %2626 = vmatprep.mubr.f32.mxu0 0.0
    %2627 = vmatmul.mubr.f32.gmra.mrb[0].mxu0 %v2157
    %v2628 = vpop.f32.mrb[0].mxu0
    %v2629 = vadd.f32 %v2120, %v2628
    %v2630 = vpop.f32.mrb[0].mxu0
    %2631 = vmatprep.mubr.f32.mxu0 0.0
    %2632 = vmatmul.mubr.f32.gmra.mrb[0].mxu0 %v2160
    %v2633 = vpop.f32.mrb[0].mxu0
    %v2634 = vadd.f32 %v2120, %v2633
    %v2635 = vpop.f32.mrb[0].mxu0
    %2636 = vmatprep.mubr.f32.mxu0 0.0
    %2637 = vmatmul.mubr.f32.gmra.mrb[0].mxu0 %v2163
    %v2638 = vpop.f32.mrb[0].mxu0
    %v2639 = vadd.f32 %v2120, %v2638
    %v2640 = vpop.f32.mrb[0].mxu0
    %2641 = vmatprep.mubr.f32.mxu0 0.0
    %2642 = vmatmul.mubr.f32.gmra.mrb[0].mxu0 %v2166
    %v2643 = vpop.f32.mrb[0].mxu0
    %v2644 = vadd.f32 %v2120, %v2643
    %v2645 = vpop.f32.mrb[0].mxu0
    %2646 = vmatprep.mubr.f32.mxu0 0.0
    %2647 = vmatmul.mubr.f32.gmra.mrb[0].mxu0 %v2169
    %v2648 = vpop.f32.mrb[0].mxu0
    %v2649 = vadd.f32 %v2120, %v2648
    %v2650 = vpop.f32.mrb[0].mxu0
    %2651 = vmatprep.mubr.f32.mxu0 0.0
    %2652 = vmatmul.mubr.f32.gmra.mrb[0].mxu0 %v2172
    %v2653 = vpop.f32.mrb[0].mxu0
    %v2654 = vadd.f32 %v2120, %v2653
    %v2655 = vpop.f32.mrb[0].mxu0
    %2656 = vmatprep.mubr.f32.mxu0 0.0
    %2657 = vmatmul.mubr.f32.gmra.mrb[0].mxu0 %v2175
    %v2658 = vpop.f32.mrb[0].mxu0
    %v2659 = vadd.f32 %v2120, %v2658
    %v2660 = vpop.f32.mrb[0].mxu0
    %2661 = vmatprep.mubr.f32.mxu0 0.0
    %2662 = vmatmul.mubr.f32.gmra.mrb[0].mxu0 %v2178
    %v2663 = vpop.f32.mrb[0].mxu0
    %v2664 = vadd.f32 %v2120, %v2663
    %v2665 = vpop.f32.mrb[0].mxu0
    %2666 = vmatprep.mubr.f32.mxu0 0.0
    %2667 = vmatmul.mubr.f32.gmra.mrb[0].mxu0 %v2181
    %v2668 = vpop.f32.mrb[0].mxu0
    %v2669 = vadd.f32 %v2120, %v2668
    %v2670 = vpop.f32.mrb[0].mxu0
    %2671 = vmatprep.mubr.f32.mxu0 0.0
    %2672 = vmatmul.mubr.f32.gmra.mrb[0].mxu0 %v2184
    %v2673 = vpop.f32.mrb[0].mxu0
    %v2674 = vadd.f32 %v2120, %v2673
    %v2675 = vpop.f32.mrb[0].mxu0
    %2676 = vmatprep.mubr.f32.mxu0 0.0
    %2677 = vmatmul.mubr.f32.gmra.mrb[0].mxu0 %v2187
    %v2678 = vpop.f32.mrb[0].mxu0
    %v2679 = vadd.f32 %v2120, %v2678
    %v2680 = vpop.f32.mrb[0].mxu0
    %2681 = vmatprep.mubr.f32.mxu0 0.0
    %2682 = vmatmul.mubr.f32.gmra.mrb[0].mxu0 %v2190
    %v2683 = vpop.f32.mrb[0].mxu0
    %v2684 = vadd.f32 %v2120, %v2683
    %v2685 = vpop.f32.mrb[0].mxu0
    %2686 = vmatprep.mubr.f32.mxu0 0.0
    %2687 = vmatmul.mubr.f32.gmra.mrb[0].mxu0 %v2193
    %v2688 = vpop.f32.mrb[0].mxu0
    %v2689 = vadd.f32 %v2120, %v2688
    %v2690 = vpop.f32.mrb[0].mxu0
    %2691 = vmatprep.mubr.f32.mxu0 0.0
    %2692 = vmatmul.mubr.f32.gmra.mrb[0].mxu0 %v2196
    %v2693 = vpop.f32.mrb[0].mxu0
    %v2694 = vadd.f32 %v2120, %v2693
    %v2695 = vpop.f32.mrb[0].mxu0
    %2696 = vmatprep.mubr.f32.mxu0 0.0
    %2697 = vmatmul.mubr.f32.gmra.mrb[0].mxu0 %v2199
    %v2698 = vpop.f32.mrb[0].mxu0
    %v2699 = vadd.f32 %v2120, %v2698
    %v2700 = vpop.f32.mrb[0].mxu0
    %2701 = vmatprep.mubr.f32.mxu0 0.0
    %2702 = vmatmul.mubr.f32.gmra.mrb[0].mxu0 %v2202
    %v2703 = vpop.f32.mrb[0].mxu0
    %v2704 = vadd.f32 %v2120, %v2703
    %v2705 = vpop.f32.mrb[0].mxu0
    %2706 = vmatprep.mubr.f32.mxu0 0.0
    %2707 = vmatmul.mubr.f32.gmra.mrb[0].mxu0 %v2205
    %v2708 = vpop.f32.mrb[0].mxu0
    %v2709 = vadd.f32 %v2120, %v2708
    %v2710 = vpop.f32.mrb[0].mxu0
    %2711 = vmatprep.mubr.f32.mxu0 0.0
    %2712 = vmatmul.mubr.f32.gmra.mrb[0].mxu0 %v2208
    %v2713 = vpop.f32.mrb[0].mxu0
    %v2714 = vadd.f32 %v2120, %v2713
    %v2715 = vpop.f32.mrb[0].mxu0
    %2716 = vmatprep.mubr.f32.mxu0 0.0
    %2717 = vmatmul.mubr.f32.gmra.mrb[0].mxu0 %v2211
    %v2718 = vpop.f32.mrb[0].mxu0
    %v2719 = vadd.f32 %v2120, %v2718
    %v2720 = vpop.f32.mrb[0].mxu0
    %2721 = vmatprep.mubr.f32.mxu0 0.0
    %2722 = vmatmul.mubr.f32.gmra.mrb[0].mxu0 %v2214
    %v2723 = vpop.f32.mrb[0].mxu0
    %v2724 = vadd.f32 %v2120, %v2723
    %v2725 = vpop.f32.mrb[0].mxu0
    %2726 = vmatprep.mubr.f32.mxu0 0.0
    %2727 = vmatmul.mubr.f32.gmra.mrb[0].mxu0 %v2217
    %v2728 = vpop.f32.mrb[0].mxu0
    %v2729 = vadd.f32 %v2120, %v2728
    %v2730 = vpop.f32.mrb[0].mxu0
    %2731 = vmatprep.mubr.f32.mxu0 0.0
    %2732 = vmatmul.mubr.f32.gmra.mrb[0].mxu0 %v2220
    %v2733 = vpop.f32.mrb[0].mxu0
    %v2734 = vadd.f32 %v2120, %v2733
    %v2735 = vpop.f32.mrb[0].mxu0
    %2736 = vmatprep.mubr.f32.mxu0 0.0
    %2737 = vmatmul.mubr.f32.gmra.mrb[0].mxu0 %v2223
    %v2738 = vpop.f32.mrb[0].mxu0
    %v2739 = vadd.f32 %v2120, %v2738
    %v2740 = vpop.f32.mrb[0].mxu0
    %2741 = vmatprep.mubr.f32.mxu0 0.0
    %2742 = vmatmul.mubr.f32.gmra.mrb[0].mxu0 %v2226
    %v2743 = vpop.f32.mrb[0].mxu0
    %v2744 = vadd.f32 %v2120, %v2743
    %v2745 = vpop.f32.mrb[0].mxu0
    %2746 = vmatprep.mubr.f32.mxu0 0.0
    %2747 = vmatmul.mubr.f32.gmra.mrb[0].mxu0 %v2229
    %v2748 = vpop.f32.mrb[0].mxu0
    %v2749 = vadd.f32 %v2120, %v2748
    %v2750 = vpop.f32.mrb[0].mxu0
    %2751 = vmatprep.mubr.f32.mxu0 0.0
    %2752 = vmatmul.mubr.f32.gmra.mrb[0].mxu0 %v2232
    %v2753 = vpop.f32.mrb[0].mxu0
    %v2754 = vadd.f32 %v2120, %v2753
    %v2755 = vpop.f32.mrb[0].mxu0
    %2756 = vmatprep.mubr.f32.mxu0 0.0
    %2757 = vmatmul.mubr.f32.gmra.mrb[0].mxu0 %v2235
    %v2758 = vpop.f32.mrb[0].mxu0
    %v2759 = vadd.f32 %v2120, %v2758
    %v2760 = vpop.f32.mrb[0].mxu0
    %2761 = vmatprep.mubr.f32.mxu0 0.0
    %2762 = vmatmul.mubr.f32.gmra.mrb[0].mxu0 %v2238
    %v2763 = vpop.f32.mrb[0].mxu0
    %v2764 = vadd.f32 %v2120, %v2763
    %v2765 = vpop.f32.mrb[0].mxu0
    %2766 = vmatprep.mubr.f32.mxu0 0.0
    %2767 = vmatmul.mubr.f32.gmra.mrb[0].mxu0 %v2241
    %v2768 = vpop.f32.mrb[0].mxu0
    %v2769 = vadd.f32 %v2120, %v2768
    %v2770 = vpop.f32.mrb[0].mxu0
    %2771 = vmatprep.mubr.f32.mxu0 0.0
    %2772 = vmatmul.mubr.f32.gmra.mrb[0].mxu0 %v2244
    %v2773 = vpop.f32.mrb[0].mxu0
    %v2774 = vadd.f32 %v2120, %v2773
    %v2775 = vpop.f32.mrb[0].mxu0
    %2776 = vmatprep.mubr.f32.mxu0 0.0
    %2777 = vmatmul.mubr.f32.gmra.mrb[0].mxu0 %v2247
    %v2778 = vpop.f32.mrb[0].mxu0
    %v2779 = vadd.f32 %v2120, %v2778
    %v2780 = vpop.f32.mrb[0].mxu0
    %2781 = vmatprep.mubr.f32.mxu0 0.0
    %2782 = vmatmul.mubr.f32.gmra.mrb[0].mxu0 %v2250
    %v2783 = vpop.f32.mrb[0].mxu0
    %v2784 = vadd.f32 %v2120, %v2783
    %v2785 = vpop.f32.mrb[0].mxu0
    %2786 = vmatprep.mubr.f32.mxu0 0.0
    %2787 = vmatmul.mubr.f32.gmra.mrb[0].mxu0 %v2253
    %v2788 = vpop.f32.mrb[0].mxu0
    %v2789 = vadd.f32 %v2120, %v2788
    %v2790 = vpop.f32.mrb[0].mxu0
    %2791 = vmatprep.mubr.f32.mxu0 0.0
    %2792 = vmatmul.mubr.f32.gmra.mrb[0].mxu0 %v2256
    %v2793 = vpop.f32.mrb[0].mxu0
    %v2794 = vadd.f32 %v2120, %v2793
    %v2795 = vpop.f32.mrb[0].mxu0
    %2796 = vmatprep.mubr.f32.mxu0 0.0
    %2797 = vmatmul.mubr.f32.gmra.mrb[0].mxu0 %v2259
    %v2798 = vpop.f32.mrb[0].mxu0
    %v2799 = vadd.f32 %v2120, %v2798
    %v2800 = vpop.f32.mrb[0].mxu0
    %2801 = vmatprep.mubr.f32.mxu0 0.0
    %2802 = vmatmul.mubr.f32.gmra.mrb[0].mxu0 %v2262
    %v2803 = vpop.f32.mrb[0].mxu0
    %v2804 = vadd.f32 %v2120, %v2803
    %v2805 = vpop.f32.mrb[0].mxu0
    %2806 = vmatprep.mubr.f32.mxu0 0.0
    %2807 = vmatmul.mubr.f32.gmra.mrb[0].mxu0 %v2265
    %v2808 = vpop.f32.mrb[0].mxu0
    %v2809 = vadd.f32 %v2120, %v2808
    %v2810 = vpop.f32.mrb[0].mxu0
    %2811 = vmatprep.mubr.f32.mxu0 0.0
    %2812 = vmatmul.mubr.f32.gmra.mrb[0].mxu0 %v2268
    %v2813 = vpop.f32.mrb[0].mxu0
    %v2814 = vadd.f32 %v2120, %v2813
    %v2815 = vpop.f32.mrb[0].mxu0
    %2816 = vmatprep.mubr.f32.mxu0 0.0
    %2817 = vmatmul.mubr.f32.gmra.mrb[0].mxu0 %v2271
    %v2818 = vpop.f32.mrb[0].mxu0
    %v2819 = vadd.f32 %v2120, %v2818
    %v2820 = vpop.f32.mrb[0].mxu0
    %2821 = vmatprep.mubr.f32.mxu0 0.0
    %2822 = vmatmul.mubr.f32.gmra.mrb[0].mxu0 %v2274
    %v2823 = vpop.f32.mrb[0].mxu0
    %v2824 = vadd.f32 %v2120, %v2823
    %v2825 = vpop.f32.mrb[0].mxu0
    %2826 = vmatprep.mubr.f32.mxu0 0.0
    %2827 = vmatmul.mubr.f32.gmra.mrb[0].mxu0 %v2277
    %v2828 = vpop.f32.mrb[0].mxu0
    %v2829 = vadd.f32 %v2120, %v2828
    %v2830 = vpop.f32.mrb[0].mxu0
    %2831 = vmatprep.mubr.f32.mxu0 0.0
    %2832 = vmatmul.mubr.f32.gmra.mrb[0].mxu0 %v2280
    %v2833 = vpop.f32.mrb[0].mxu0
    %v2834 = vadd.f32 %v2120, %v2833
    %v2835 = vpop.f32.mrb[0].mxu0
    %2836 = vmatprep.mubr.f32.mxu0 0.0
    %2837 = vmatmul.mubr.f32.gmra.mrb[0].mxu0 %v2283
    %v2838 = vpop.f32.mrb[0].mxu0
    %v2839 = vadd.f32 %v2120, %v2838
    %v2840 = vpop.f32.mrb[0].mxu0
    %2841 = vmatprep.mubr.f32.mxu0 0.0
    %2842 = vmatmul.mubr.f32.gmra.mrb[0].mxu0 %v2286
    %v2843 = vpop.f32.mrb[0].mxu0
    %v2844 = vadd.f32 %v2120, %v2843
    %v2845 = vpop.f32.mrb[0].mxu0
    %2846 = vmatprep.mubr.f32.mxu0 0.0
    %2847 = vmatmul.mubr.f32.gmra.mrb[0].mxu0 %v2289
    %v2848 = vpop.f32.mrb[0].mxu0
    %v2849 = vadd.f32 %v2120, %v2848
    %v2850 = vpop.f32.mrb[0].mxu0
    %2851 = vmatprep.mubr.f32.mxu0 0.0
    %2852 = vmatmul.mubr.f32.gmra.mrb[0].mxu0 %v2292
    %v2853 = vpop.f32.mrb[0].mxu0
    %v2854 = vadd.f32 %v2120, %v2853
    %v2855 = vpop.f32.mrb[0].mxu0
    %2856 = vmatprep.mubr.f32.mxu0 0.0
    %2857 = vmatmul.mubr.f32.gmra.mrb[0].mxu0 %v2295
    %v2858 = vpop.f32.mrb[0].mxu0
    %v2859 = vadd.f32 %v2120, %v2858
    %v2860 = vpop.f32.mrb[0].mxu0
    %2861 = vmatprep.mubr.f32.mxu0 0.0
    %2862 = vmatmul.mubr.f32.gmra.mrb[0].mxu0 %v2298
    %v2863 = vpop.f32.mrb[0].mxu0
    %v2864 = vadd.f32 %v2120, %v2863
    %v2865 = vpop.f32.mrb[0].mxu0
    %2866 = vmatprep.mubr.f32.mxu0 0.0
    %2867 = vmatmul.mubr.f32.gmra.mrb[0].mxu0 %v2301
    %v2868 = vpop.f32.mrb[0].mxu0
    %v2869 = vadd.f32 %v2120, %v2868
    %v2870 = vpop.f32.mrb[0].mxu0
    %2871 = vmatprep.mubr.f32.mxu0 0.0
    %2872 = vmatmul.mubr.f32.gmra.mrb[0].mxu0 %v2304
    %v2873 = vpop.f32.mrb[0].mxu0
    %v2874 = vadd.f32 %v2120, %v2873
    %v2875 = vpop.f32.mrb[0].mxu0
    %2876 = vmatprep.mubr.f32.mxu0 0.0
    %2877 = vmatmul.mubr.f32.gmra.mrb[0].mxu0 %v2307
    %v2878 = vpop.f32.mrb[0].mxu0
    %v2879 = vadd.f32 %v2120, %v2878
    %v2880 = vpop.f32.mrb[0].mxu0
    %2881 = vmatprep.mubr.f32.mxu0 0.0
    %2882 = vmatmul.mubr.f32.gmra.mrb[0].mxu0 %v2310
    %v2883 = vpop.f32.mrb[0].mxu0
    %v2884 = vadd.f32 %v2120, %v2883
    %v2885 = vpop.f32.mrb[0].mxu0
    %2886 = vmatprep.mubr.f32.mxu0 0.0
    %2887 = vmatmul.mubr.f32.gmra.mrb[0].mxu0 %v2313
    %v2888 = vpop.f32.mrb[0].mxu0
    %v2889 = vadd.f32 %v2120, %v2888
    %v2890 = vpop.f32.mrb[0].mxu0
    %2891 = vmatprep.mubr.f32.mxu0 0.0
    %2892 = vmatmul.mubr.f32.gmra.mrb[0].mxu0 %v2316
    %v2893 = vpop.f32.mrb[0].mxu0
    %v2894 = vadd.f32 %v2120, %v2893
    %v2895 = vpop.f32.mrb[0].mxu0
    %2896 = vmatprep.mubr.f32.mxu0 0.0
    %2897 = vmatmul.mubr.f32.gmra.mrb[0].mxu0 %v2319
    %v2898 = vpop.f32.mrb[0].mxu0
    %v2899 = vadd.f32 %v2120, %v2898
    %v2900 = vpop.f32.mrb[0].mxu0
    %2901 = vmatprep.mubr.f32.mxu0 0.0
    %2902 = vmatmul.mubr.f32.gmra.mrb[0].mxu0 %v2322
    %v2903 = vpop.f32.mrb[0].mxu0
    %v2904 = vadd.f32 %v2120, %v2903
    %v2905 = vpop.f32.mrb[0].mxu0
    %2906 = vmatprep.mubr.f32.mxu0 0.0
    %2907 = vmatmul.mubr.f32.gmra.mrb[0].mxu0 %v2325
    %v2908 = vpop.f32.mrb[0].mxu0
    %v2909 = vadd.f32 %v2120, %v2908
    %v2910 = vpop.f32.mrb[0].mxu0
    %2911 = vmatprep.mubr.f32.mxu0 0.0
    %2912 = vmatmul.mubr.f32.gmra.mrb[0].mxu0 %v2328
    %v2913 = vpop.f32.mrb[0].mxu0
    %v2914 = vadd.f32 %v2120, %v2913
    %v2915 = vpop.f32.mrb[0].mxu0
    %2916 = vmatprep.mubr.f32.mxu0 0.0
    %2917 = vmatmul.mubr.f32.gmra.mrb[0].mxu0 %v2331
    %v2918 = vpop.f32.mrb[0].mxu0
    %v2919 = vadd.f32 %v2120, %v2918
    %v2920 = vpop.f32.mrb[0].mxu0
    %2921 = vmatprep.mubr.f32.mxu0 0.0
    %2922 = vmatmul.mubr.f32.gmra.mrb[0].mxu0 %v2334
    %v2923 = vpop.f32.mrb[0].mxu0
    %v2924 = vadd.f32 %v2120, %v2923
    %v2925 = vpop.f32.mrb[0].mxu0
    %2926 = vmatprep.mubr.f32.mxu0 0.0
    %2927 = vmatmul.mubr.f32.gmra.mrb[0].mxu0 %v2337
    %v2928 = vpop.f32.mrb[0].mxu0
    %v2929 = vadd.f32 %v2120, %v2928
    %v2930 = vpop.f32.mrb[0].mxu0
    %2931 = vmatprep.mubr.f32.mxu0 0.0
    %2932 = vmatmul.mubr.f32.gmra.mrb[0].mxu0 %v2340
    %v2933 = vpop.f32.mrb[0].mxu0
    %v2934 = vadd.f32 %v2120, %v2933
    %v2935 = vpop.f32.mrb[0].mxu0
    %2936 = vmatprep.mubr.f32.mxu0 0.0
    %2937 = vmatmul.mubr.f32.gmra.mrb[0].mxu0 %v2343
    %v2938 = vpop.f32.mrb[0].mxu0
    %v2939 = vadd.f32 %v2120, %v2938
    %v2940 = vpop.f32.mrb[0].mxu0
    %2941 = vmatprep.mubr.f32.mxu0 0.0
    %2942 = vmatmul.mubr.f32.gmra.mrb[0].mxu0 %v2346
    %v2943 = vpop.f32.mrb[0].mxu0
    %v2944 = vadd.f32 %v2120, %v2943
    %v2945 = vpop.f32.mrb[0].mxu0
    %2946 = vmatprep.mubr.f32.mxu0 0.0
    %2947 = vmatmul.mubr.f32.gmra.mrb[0].mxu0 %v2349
    %v2948 = vpop.f32.mrb[0].mxu0
    %v2949 = vadd.f32 %v2120, %v2948
    %v2950 = vpop.f32.mrb[0].mxu0
    %2951 = vmatprep.mubr.f32.mxu0 0.0
    %2952 = vmatmul.mubr.f32.gmra.mrb[0].mxu0 %v2352
    %v2953 = vpop.f32.mrb[0].mxu0
    %v2954 = vadd.f32 %v2120, %v2953
    %v2955 = vpop.f32.mrb[0].mxu0
    %2956 = vmatprep.mubr.f32.mxu0 0.0
    %2957 = vmatmul.mubr.f32.gmra.mrb[0].mxu0 %v2355
    %v2958 = vpop.f32.mrb[0].mxu0
    %v2959 = vadd.f32 %v2120, %v2958
    %v2960 = vpop.f32.mrb[0].mxu0
    %2961 = vmatprep.mubr.f32.mxu0 0.0
    %2962 = vmatmul.mubr.f32.gmra.mrb[0].mxu0 %v2358
    %v2963 = vpop.f32.mrb[0].mxu0
    %v2964 = vadd.f32 %v2120, %v2963
    %v2965 = vpop.f32.mrb[0].mxu0
    %2966 = vmatprep.mubr.f32.mxu0 0.0
    %2967 = vmatmul.mubr.f32.gmra.mrb[0].mxu0 %v2361
    %v2968 = vpop.f32.mrb[0].mxu0
    %v2969 = vadd.f32 %v2120, %v2968
    %v2970 = vpop.f32.mrb[0].mxu0
    %2971 = vmatprep.mubr.f32.mxu0 0.0
    %2972 = vmatmul.mubr.f32.gmra.mrb[0].mxu0 %v2364
    %v2973 = vpop.f32.mrb[0].mxu0
    %v2974 = vadd.f32 %v2120, %v2973
    %v2975 = vpop.f32.mrb[0].mxu0
    %2976 = vmatprep.mubr.f32.mxu0 0.0
    %2977 = vmatmul.mubr.f32.gmra.mrb[0].mxu0 %v2367
    %v2978 = vpop.f32.mrb[0].mxu0
    %v2979 = vadd.f32 %v2120, %v2978
    %v2980 = vpop.f32.mrb[0].mxu0
    %2981 = vmatprep.mubr.f32.mxu0 0.0
    %2982 = vmatmul.mubr.f32.gmra.mrb[0].mxu0 %v2370
    %v2983 = vpop.f32.mrb[0].mxu0
    %v2984 = vadd.f32 %v2120, %v2983
    %v2985 = vpop.f32.mrb[0].mxu0
    %2986 = vmatprep.mubr.f32.mxu0 0.0
    %2987 = vmatmul.mubr.f32.gmra.mrb[0].mxu0 %v2373
    %v2988 = vpop.f32.mrb[0].mxu0
    %v2989 = vadd.f32 %v2120, %v2988
    %v2990 = vpop.f32.mrb[0].mxu0
    %2991 = vmatprep.mubr.f32.mxu0 0.0
    %2992 = vmatmul.mubr.f32.gmra.mrb[0].mxu0 %v2376
    %v2993 = vpop.f32.mrb[0].mxu0
    %v2994 = vadd.f32 %v2120, %v2993
    %v2995 = vpop.f32.mrb[0].mxu0
    %2996 = vmatprep.mubr.f32.mxu0 0.0
    %2997 = vmatmul.mubr.f32.gmra.mrb[0].mxu0 %v2379
    %v2998 = vpop.f32.mrb[0].mxu0
    %v2999 = vadd.f32 %v2120, %v2998
    %v3000 = vpop.f32.mrb[0].mxu0
    %3001 = vmatprep.mubr.f32.mxu0 0.0
    %3002 = vmatmul.mubr.f32.gmra.mrb[0].mxu0 %v2382
    %v3003 = vpop.f32.mrb[0].mxu0
    %v3004 = vadd.f32 %v2120, %v3003
    %v3005 = vpop.f32.mrb[0].mxu0
    %3006 = vmatprep.mubr.f32.mxu0 0.0
    %3007 = vmatmul.mubr.f32.gmra.mrb[0].mxu0 %v2385
    %v3008 = vpop.f32.mrb[0].mxu0
    %v3009 = vadd.f32 %v2120, %v3008
    %v3010 = vpop.f32.mrb[0].mxu0
    %3011 = vmatprep.mubr.f32.mxu0 0.0
    %3012 = vmatmul.mubr.f32.gmra.mrb[0].mxu0 %v2388
    %v3013 = vpop.f32.mrb[0].mxu0
    %v3014 = vadd.f32 %v2120, %v3013
    %v3015 = vpop.f32.mrb[0].mxu0
    %3016 = vmatprep.mubr.f32.mxu0 0.0
    %3017 = vmatmul.mubr.f32.gmra.mrb[0].mxu0 %v2391
    %v3018 = vpop.f32.mrb[0].mxu0
    %v3019 = vadd.f32 %v2120, %v3018
    %v3020 = vpop.f32.mrb[0].mxu0
    %3021 = vmatprep.mubr.f32.mxu0 0.0
    %3022 = vmatmul.mubr.f32.gmra.mrb[0].mxu0 %v2394
    %v3023 = vpop.f32.mrb[0].mxu0
    %v3024 = vadd.f32 %v2120, %v3023
    %v3025 = vpop.f32.mrb[0].mxu0
    %3026 = vmatprep.mubr.f32.mxu0 0.0
    %3027 = vmatmul.mubr.f32.gmra.mrb[0].mxu0 %v2397
    %v3028 = vpop.f32.mrb[0].mxu0
    %v3029 = vadd.f32 %v2120, %v3028
    %v3030 = vpop.f32.mrb[0].mxu0
    %3031 = vmatprep.mubr.f32.mxu0 0.0
    %3032 = vmatmul.mubr.f32.gmra.mrb[0].mxu0 %v2400
    %v3033 = vpop.f32.mrb[0].mxu0
    %v3034 = vadd.f32 %v2120, %v3033
    %v3035 = vpop.f32.mrb[0].mxu0
    %3036 = vmatprep.mubr.f32.mxu0 0.0
    %3037 = vmatmul.mubr.f32.gmra.mrb[0].mxu0 %v2403
    %v3038 = vpop.f32.mrb[0].mxu0
    %v3039 = vadd.f32 %v2120, %v3038
    %v3040 = vpop.f32.mrb[0].mxu0
    %3041 = vmatprep.mubr.f32.mxu0 0.0
    %3042 = vmatmul.mubr.f32.gmra.mrb[0].mxu0 %v2406
    %v3043 = vpop.f32.mrb[0].mxu0
    %v3044 = vadd.f32 %v2120, %v3043
    %v3045 = vpop.f32.mrb[0].mxu0
    %3046 = vmatprep.mubr.f32.mxu0 0.0
    %3047 = vmatmul.mubr.f32.gmra.mrb[0].mxu0 %v2409
    %v3048 = vpop.f32.mrb[0].mxu0
    %v3049 = vadd.f32 %v2120, %v3048
    %v3050 = vpop.f32.mrb[0].mxu0
    %3051 = vmatprep.mubr.f32.mxu0 0.0
    %3052 = vmatmul.mubr.f32.gmra.mrb[0].mxu0 %v2412
    %v3053 = vpop.f32.mrb[0].mxu0
    %v3054 = vadd.f32 %v2120, %v3053
    %v3055 = vpop.f32.mrb[0].mxu0
    %3056 = vmatprep.mubr.f32.mxu0 0.0
    %3057 = vmatmul.mubr.f32.gmra.mrb[0].mxu0 %v2415
    %v3058 = vpop.f32.mrb[0].mxu0
    %v3059 = vadd.f32 %v2120, %v3058
    %v3060 = vpop.f32.mrb[0].mxu0
    %3061 = vmatprep.mubr.f32.mxu0 0.0
    %3062 = vmatmul.mubr.f32.gmra.mrb[0].mxu0 %v2418
    %v3063 = vpop.f32.mrb[0].mxu0
    %v3064 = vadd.f32 %v2120, %v3063
    %v3065 = vpop.f32.mrb[0].mxu0
    %3066 = vmatprep.mubr.f32.mxu0 0.0
    %3067 = vmatmul.mubr.f32.gmra.mrb[0].mxu0 %v2421
    %v3068 = vpop.f32.mrb[0].mxu0
    %v3069 = vadd.f32 %v2120, %v3068
    %v3070 = vpop.f32.mrb[0].mxu0
    %3071 = vmatprep.mubr.f32.mxu0 0.0
    %3072 = vmatmul.mubr.f32.gmra.mrb[0].mxu0 %v2424
    %v3073 = vpop.f32.mrb[0].mxu0
    %v3074 = vadd.f32 %v2120, %v3073
    %v3075 = vpop.f32.mrb[0].mxu0
    %3076 = vmatprep.mubr.f32.mxu0 0.0
    %3077 = vmatmul.mubr.f32.gmra.mrb[0].mxu0 %v2427
    %v3078 = vpop.f32.mrb[0].mxu0
    %v3079 = vadd.f32 %v2120, %v3078
    %v3080 = vpop.f32.mrb[0].mxu0
    %3081 = vmatprep.mubr.f32.mxu0 0.0
    %3082 = vmatmul.mubr.f32.gmra.mrb[0].mxu0 %v2430
    %v3083 = vpop.f32.mrb[0].mxu0
    %v3084 = vadd.f32 %v2120, %v3083
    %v3085 = vpop.f32.mrb[0].mxu0
    %3086 = vmatprep.mubr.f32.mxu0 0.0
    %3087 = vmatmul.mubr.f32.gmra.mrb[0].mxu0 %v2433
    %v3088 = vpop.f32.mrb[0].mxu0
    %v3089 = vadd.f32 %v2120, %v3088
    %v3090 = vpop.f32.mrb[0].mxu0
    %3091 = vmatprep.mubr.f32.mxu0 0.0
    %3092 = vmatmul.mubr.f32.gmra.mrb[0].mxu0 %v2436
    %v3093 = vpop.f32.mrb[0].mxu0
    %v3094 = vadd.f32 %v2120, %v3093
    %v3095 = vpop.f32.mrb[0].mxu0
    %3096 = vmatprep.mubr.f32.mxu0 0.0
    %3097 = vmatmul.mubr.f32.gmra.mrb[0].mxu0 %v2439
    %v3098 = vpop.f32.mrb[0].mxu0
    %v3099 = vadd.f32 %v2120, %v3098
    %v3100 = vpop.f32.mrb[0].mxu0
    %3101 = vmatprep.mubr.f32.mxu0 0.0
    %3102 = vmatmul.mubr.f32.gmra.mrb[0].mxu0 %v2442
    %v3103 = vpop.f32.mrb[0].mxu0
    %v3104 = vadd.f32 %v2120, %v3103
    %v3105 = vpop.f32.mrb[0].mxu0
    %3106 = vmatprep.mubr.f32.mxu0 0.0
    %3107 = vmatmul.mubr.f32.gmra.mrb[0].mxu0 %v2445
    %v3108 = vpop.f32.mrb[0].mxu0
    %v3109 = vadd.f32 %v2120, %v3108
    %v3110 = vpop.f32.mrb[0].mxu0
    %3111 = vmatprep.mubr.f32.mxu0 0.0
    %3112 = vmatmul.mubr.f32.gmra.mrb[0].mxu0 %v2448
    %v3113 = vpop.f32.mrb[0].mxu0
    %v3114 = vadd.f32 %v2120, %v3113
    %v3115 = vpop.f32.mrb[0].mxu0
    %3116 = vmatprep.mubr.f32.mxu0 0.0
    %3117 = vmatmul.mubr.f32.gmra.mrb[0].mxu0 %v2451
    %v3118 = vpop.f32.mrb[0].mxu0
    %v3119 = vadd.f32 %v2120, %v3118
    %v3120 = vpop.f32.mrb[0].mxu0
    %3121 = vmatprep.mubr.f32.mxu0 0.0
    %3122 = vmatmul.mubr.f32.gmra.mrb[0].mxu0 %v2454
    %v3123 = vpop.f32.mrb[0].mxu0
    %v3124 = vadd.f32 %v2120, %v3123
    %v3125 = vpop.f32.mrb[0].mxu0
    %3126 = vmatprep.mubr.f32.mxu0 0.0
    %3127 = vmatmul.mubr.f32.gmra.mrb[0].mxu0 %v2457
    %v3128 = vpop.f32.mrb[0].mxu0
    %v3129 = vadd.f32 %v2120, %v3128
    %v3130 = vpop.f32.mrb[0].mxu0
    %3131 = vmatprep.mubr.f32.mxu0 0.0
    %3132 = vmatmul.mubr.f32.gmra.mrb[0].mxu0 %v2460
    %v3133 = vpop.f32.mrb[0].mxu0
    %v3134 = vadd.f32 %v2120, %v3133
    %v3135 = vpop.f32.mrb[0].mxu0
    %3136 = vmatprep.mubr.f32.mxu0 0.0
    %3137 = vmatmul.mubr.f32.gmra.mrb[0].mxu0 %v2463
    %v3138 = vpop.f32.mrb[0].mxu0
    %v3139 = vadd.f32 %v2120, %v3138
    %v3140 = vpop.f32.mrb[0].mxu0
    %3141 = vmatprep.mubr.f32.mxu0 0.0
    %3142 = vmatmul.mubr.f32.gmra.mrb[0].mxu0 %v2466
    %v3143 = vpop.f32.mrb[0].mxu0
    %v3144 = vadd.f32 %v2120, %v3143
    %v3145 = vpop.f32.mrb[0].mxu0
    %3146 = vmatprep.mubr.f32.mxu0 0.0
    %3147 = vmatmul.mubr.f32.gmra.mrb[0].mxu0 %v2469
    %v3148 = vpop.f32.mrb[0].mxu0
    %v3149 = vadd.f32 %v2120, %v3148
    %v3150 = vpop.f32.mrb[0].mxu0
    %3151 = vmatprep.mubr.f32.mxu0 0.0
    %3152 = vmatmul.mubr.f32.gmra.mrb[0].mxu0 %v2472
    %v3153 = vpop.f32.mrb[0].mxu0
    %v3154 = vadd.f32 %v2120, %v3153
    %v3155 = vpop.f32.mrb[0].mxu0
    %3156 = vmatprep.mubr.f32.mxu0 0.0
    %3157 = vmatmul.mubr.f32.gmra.mrb[0].mxu0 %v2475
    %v3158 = vpop.f32.mrb[0].mxu0
    %v3159 = vadd.f32 %v2120, %v3158
    %v3160 = vpop.f32.mrb[0].mxu0
    %3161 = vmatprep.mubr.f32.mxu0 0.0
    %3162 = vmatmul.mubr.f32.gmra.mrb[0].mxu0 %v2478
    %v3163 = vpop.f32.mrb[0].mxu0
    %v3164 = vadd.f32 %v2120, %v3163
    %v3165 = vpop.f32.mrb[0].mxu0
    %3166 = vmatprep.mubr.f32.mxu0 0.0
    %3167 = vmatmul.mubr.f32.gmra.mrb[0].mxu0 %v2481
    %v3168 = vpop.f32.mrb[0].mxu0
    %v3169 = vadd.f32 %v2120, %v3168
    %v3170 = vpop.f32.mrb[0].mxu0
    %3171 = vmatprep.mubr.f32.mxu0 0.0
    %3172 = vmatmul.mubr.f32.gmra.mrb[0].mxu0 %v2484
    %v3173 = vpop.f32.mrb[0].mxu0
    %v3174 = vadd.f32 %v2120, %v3173
    %v3175 = vpop.f32.mrb[0].mxu0
    %3176 = vmatprep.mubr.f32.mxu0 0.0
    %3177 = vmatmul.mubr.f32.gmra.mrb[0].mxu0 %v2487
    %v3178 = vpop.f32.mrb[0].mxu0
    %v3179 = vadd.f32 %v2120, %v3178
    %v3180 = vpop.f32.mrb[0].mxu0
    %3181 = vmatprep.mubr.f32.mxu0 0.0
    %3182 = vmatmul.mubr.f32.gmra.mrb[0].mxu0 %v2490
    %v3183 = vpop.f32.mrb[0].mxu0
    %v3184 = vadd.f32 %v2120, %v3183
    %v3185 = vpop.f32.mrb[0].mxu0
    %3186 = vmatprep.mubr.f32.mxu0 0.0
    %3187 = vmatmul.mubr.f32.gmra.mrb[0].mxu0 %v2493
    %v3188 = vpop.f32.mrb[0].mxu0
    %v3189 = vadd.f32 %v2120, %v3188
    %v3190 = vpop.f32.mrb[0].mxu0
    %3191 = vmatprep.mubr.f32.mxu0 0.0
    %3192 = vmatmul.mubr.f32.gmra.mrb[0].mxu0 %v2496
    %v3193 = vpop.f32.mrb[0].mxu0
    %v3194 = vadd.f32 %v2120, %v3193
    %v3195 = vpop.f32.mrb[0].mxu0
    %3196 = vmatprep.mubr.f32.mxu0 0.0
    %3197 = vmatmul.mubr.f32.gmra.mrb[0].mxu0 %v2499
    %v3198 = vpop.f32.mrb[0].mxu0
    %v3199 = vadd.f32 %v2120, %v3198
    %v3200 = vpop.f32.mrb[0].mxu0
    %3201 = vmatprep.mubr.f32.mxu0 0.0
    %3202 = vmatmul.mubr.f32.gmra.mrb[0].mxu0 %v2502
    %v3203 = vpop.f32.mrb[0].mxu0
    %v3204 = vadd.f32 %v2120, %v3203
    %v3205 = vpop.f32.mrb[0].mxu0
    %3206 = vmatprep.mubr.f32.mxu0 0.0
    %3207 = vmatmul.mubr.f32.gmra.mrb[0].mxu0 %v2505
    %v3208 = vpop.f32.mrb[0].mxu0
    %v3209 = vadd.f32 %v2120, %v3208
    %v3210 = vpop.f32.mrb[0].mxu0
    %3211 = vdwg.mxu0
    %v3212 = vmax.f32 %v2574, 0.0
    %v3213 = vmax.f32 %v2579, 0.0
    %v3214 = vmax.f32 %v2584, 0.0
    %v3215 = vmax.f32 %v2589, 0.0
    %v3216 = vmax.f32 %v2594, 0.0
    %v3217 = vmax.f32 %v2599, 0.0
    %v3218 = vmax.f32 %v2604, 0.0
    %v3219 = vmax.f32 %v2609, 0.0
    %v3220 = vmax.f32 %v2614, 0.0
    %v3221 = vmax.f32 %v2619, 0.0
    %v3222 = vmax.f32 %v2624, 0.0
    %v3223 = vmax.f32 %v2629, 0.0
    %v3224 = vmax.f32 %v2634, 0.0
    %v3225 = vmax.f32 %v2639, 0.0
    %v3226 = vmax.f32 %v2644, 0.0
    %v3227 = vmax.f32 %v2649, 0.0
    %v3228 = vmax.f32 %v2654, 0.0
    %v3229 = vmax.f32 %v2659, 0.0
    %v3230 = vmax.f32 %v2664, 0.0
    %v3231 = vmax.f32 %v2669, 0.0
    %v3232 = vmax.f32 %v2674, 0.0
    %v3233 = vmax.f32 %v2679, 0.0
    %v3234 = vmax.f32 %v2684, 0.0
    %v3235 = vmax.f32 %v2689, 0.0
    %v3236 = vmax.f32 %v2694, 0.0
    %v3237 = vmax.f32 %v2699, 0.0
    %v3238 = vmax.f32 %v2704, 0.0
    %v3239 = vmax.f32 %v2709, 0.0
    %v3240 = vmax.f32 %v2714, 0.0
    %v3241 = vmax.f32 %v2719, 0.0
    %v3242 = vmax.f32 %v2724, 0.0
    %v3243 = vmax.f32 %v2729, 0.0
    %v3244 = vmax.f32 %v2734, 0.0
    %v3245 = vmax.f32 %v2739, 0.0
    %v3246 = vmax.f32 %v2744, 0.0
    %v3247 = vmax.f32 %v2749, 0.0
    %v3248 = vmax.f32 %v2754, 0.0
    %v3249 = vmax.f32 %v2759, 0.0
    %v3250 = vmax.f32 %v2764, 0.0
    %v3251 = vmax.f32 %v2769, 0.0
    %v3252 = vmax.f32 %v2774, 0.0
    %v3253 = vmax.f32 %v2779, 0.0
    %v3254 = vmax.f32 %v2784, 0.0
    %v3255 = vmax.f32 %v2789, 0.0
    %v3256 = vmax.f32 %v2794, 0.0
    %v3257 = vmax.f32 %v2799, 0.0
    %v3258 = vmax.f32 %v2804, 0.0
    %v3259 = vmax.f32 %v2809, 0.0
    %v3260 = vmax.f32 %v2814, 0.0
    %v3261 = vmax.f32 %v2819, 0.0
    %v3262 = vmax.f32 %v2824, 0.0
    %v3263 = vmax.f32 %v2829, 0.0
    %v3264 = vmax.f32 %v2834, 0.0
    %v3265 = vmax.f32 %v2839, 0.0
    %v3266 = vmax.f32 %v2844, 0.0
    %v3267 = vmax.f32 %v2849, 0.0
    %v3268 = vmax.f32 %v2854, 0.0
    %v3269 = vmax.f32 %v2859, 0.0
    %v3270 = vmax.f32 %v2864, 0.0
    %v3271 = vmax.f32 %v2869, 0.0
    %v3272 = vmax.f32 %v2874, 0.0
    %v3273 = vmax.f32 %v2879, 0.0
    %v3274 = vmax.f32 %v2884, 0.0
    %v3275 = vmax.f32 %v2889, 0.0
    %v3276 = vmax.f32 %v2894, 0.0
    %v3277 = vmax.f32 %v2899, 0.0
    %v3278 = vmax.f32 %v2904, 0.0
    %v3279 = vmax.f32 %v2909, 0.0
    %v3280 = vmax.f32 %v2914, 0.0
    %v3281 = vmax.f32 %v2919, 0.0
    %v3282 = vmax.f32 %v2924, 0.0
    %v3283 = vmax.f32 %v2929, 0.0
    %v3284 = vmax.f32 %v2934, 0.0
    %v3285 = vmax.f32 %v2939, 0.0
    %v3286 = vmax.f32 %v2944, 0.0
    %v3287 = vmax.f32 %v2949, 0.0
    %v3288 = vmax.f32 %v2954, 0.0
    %v3289 = vmax.f32 %v2959, 0.0
    %v3290 = vmax.f32 %v2964, 0.0
    %v3291 = vmax.f32 %v2969, 0.0
    %v3292 = vmax.f32 %v2974, 0.0
    %v3293 = vmax.f32 %v2979, 0.0
    %v3294 = vmax.f32 %v2984, 0.0
    %v3295 = vmax.f32 %v2989, 0.0
    %v3296 = vmax.f32 %v2994, 0.0
    %v3297 = vmax.f32 %v2999, 0.0
    %v3298 = vmax.f32 %v3004, 0.0
    %v3299 = vmax.f32 %v3009, 0.0
    %v3300 = vmax.f32 %v3014, 0.0
    %v3301 = vmax.f32 %v3019, 0.0
    %v3302 = vmax.f32 %v3024, 0.0
    %v3303 = vmax.f32 %v3029, 0.0
    %v3304 = vmax.f32 %v3034, 0.0
    %v3305 = vmax.f32 %v3039, 0.0
    %v3306 = vmax.f32 %v3044, 0.0
    %v3307 = vmax.f32 %v3049, 0.0
    %v3308 = vmax.f32 %v3054, 0.0
    %v3309 = vmax.f32 %v3059, 0.0
    %v3310 = vmax.f32 %v3064, 0.0
    %v3311 = vmax.f32 %v3069, 0.0
    %v3312 = vmax.f32 %v3074, 0.0
    %v3313 = vmax.f32 %v3079, 0.0
    %v3314 = vmax.f32 %v3084, 0.0
    %v3315 = vmax.f32 %v3089, 0.0
    %v3316 = vmax.f32 %v3094, 0.0
    %v3317 = vmax.f32 %v3099, 0.0
    %v3318 = vmax.f32 %v3104, 0.0
    %v3319 = vmax.f32 %v3109, 0.0
    %v3320 = vmax.f32 %v3114, 0.0
    %v3321 = vmax.f32 %v3119, 0.0
    %v3322 = vmax.f32 %v3124, 0.0
    %v3323 = vmax.f32 %v3129, 0.0
    %v3324 = vmax.f32 %v3134, 0.0
    %v3325 = vmax.f32 %v3139, 0.0
    %v3326 = vmax.f32 %v3144, 0.0
    %v3327 = vmax.f32 %v3149, 0.0
    %v3328 = vmax.f32 %v3154, 0.0
    %v3329 = vmax.f32 %v3159, 0.0
    %v3330 = vmax.f32 %v3164, 0.0
    %v3331 = vmax.f32 %v3169, 0.0
    %v3332 = vmax.f32 %v3174, 0.0
    %v3333 = vmax.f32 %v3179, 0.0
    %v3334 = vmax.f32 %v3184, 0.0
    %v3335 = vmax.f32 %v3189, 0.0
    %v3336 = vmax.f32 %v3194, 0.0
    %v3337 = vmax.f32 %v3199, 0.0
    %v3338 = vmax.f32 %v3204, 0.0
    %v3339 = vmax.f32 %v3209, 0.0
    %v3340 = vld [vmem:[#allocation12] sm:$0xff]
    %v3341 = vld [vmem:[#allocation12 + $0x8] sm:$0xff]
    %v3342 = vld [vmem:[#allocation13] sm:$0x1]
    %v3344 = vlaneseq
    %v3345 = vshrl.u32 %v3344, 7
    %v3346 = vsub.s32 0, %v3345
    %v3347 = vrot.slane %v3342, %v3346
    %v3350 = vsel %vm2122, %v3212, 0
    %v3353 = vsel %vm2122, %v3213, 0
    %v3356 = vsel %vm2122, %v3214, 0
    %v3359 = vsel %vm2122, %v3215, 0
    %v3362 = vsel %vm2122, %v3216, 0
    %v3365 = vsel %vm2122, %v3217, 0
    %v3368 = vsel %vm2122, %v3218, 0
    %v3371 = vsel %vm2122, %v3219, 0
    %v3374 = vsel %vm2122, %v3220, 0
    %v3377 = vsel %vm2122, %v3221, 0
    %v3380 = vsel %vm2122, %v3222, 0
    %v3383 = vsel %vm2122, %v3223, 0
    %v3386 = vsel %vm2122, %v3224, 0
    %v3389 = vsel %vm2122, %v3225, 0
    %v3392 = vsel %vm2122, %v3226, 0
    %v3395 = vsel %vm2122, %v3227, 0
    %v3398 = vsel %vm2122, %v3228, 0
    %v3401 = vsel %vm2122, %v3229, 0
    %v3404 = vsel %vm2122, %v3230, 0
    %v3407 = vsel %vm2122, %v3231, 0
    %v3410 = vsel %vm2122, %v3232, 0
    %v3413 = vsel %vm2122, %v3233, 0
    %v3416 = vsel %vm2122, %v3234, 0
    %v3419 = vsel %vm2122, %v3235, 0
    %v3422 = vsel %vm2122, %v3236, 0
    %v3425 = vsel %vm2122, %v3237, 0
    %v3428 = vsel %vm2122, %v3238, 0
    %v3431 = vsel %vm2122, %v3239, 0
    %v3434 = vsel %vm2122, %v3240, 0
    %v3437 = vsel %vm2122, %v3241, 0
    %v3440 = vsel %vm2122, %v3242, 0
    %v3443 = vsel %vm2122, %v3243, 0
    %v3446 = vsel %vm2122, %v3244, 0
    %v3449 = vsel %vm2122, %v3245, 0
    %v3452 = vsel %vm2122, %v3246, 0
    %v3455 = vsel %vm2122, %v3247, 0
    %v3458 = vsel %vm2122, %v3248, 0
    %v3461 = vsel %vm2122, %v3249, 0
    %v3464 = vsel %vm2122, %v3250, 0
    %v3467 = vsel %vm2122, %v3251, 0
    %v3470 = vsel %vm2122, %v3252, 0
    %v3473 = vsel %vm2122, %v3253, 0
    %v3476 = vsel %vm2122, %v3254, 0
    %v3479 = vsel %vm2122, %v3255, 0
    %v3482 = vsel %vm2122, %v3256, 0
    %v3485 = vsel %vm2122, %v3257, 0
    %v3488 = vsel %vm2122, %v3258, 0
    %v3491 = vsel %vm2122, %v3259, 0
    %v3494 = vsel %vm2122, %v3260, 0
    %v3497 = vsel %vm2122, %v3261, 0
    %v3500 = vsel %vm2122, %v3262, 0
    %v3503 = vsel %vm2122, %v3263, 0
    %v3506 = vsel %vm2122, %v3264, 0
    %v3509 = vsel %vm2122, %v3265, 0
    %v3512 = vsel %vm2122, %v3266, 0
    %v3515 = vsel %vm2122, %v3267, 0
    %v3518 = vsel %vm2122, %v3268, 0
    %v3521 = vsel %vm2122, %v3269, 0
    %v3524 = vsel %vm2122, %v3270, 0
    %v3527 = vsel %vm2122, %v3271, 0
    %v3530 = vsel %vm2122, %v3272, 0
    %v3533 = vsel %vm2122, %v3273, 0
    %v3536 = vsel %vm2122, %v3274, 0
    %v3539 = vsel %vm2122, %v3275, 0
    %v3542 = vsel %vm2122, %v3276, 0
    %v3545 = vsel %vm2122, %v3277, 0
    %v3548 = vsel %vm2122, %v3278, 0
    %v3551 = vsel %vm2122, %v3279, 0
    %v3554 = vsel %vm2122, %v3280, 0
    %v3557 = vsel %vm2122, %v3281, 0
    %v3560 = vsel %vm2122, %v3282, 0
    %v3563 = vsel %vm2122, %v3283, 0
    %v3566 = vsel %vm2122, %v3284, 0
    %v3569 = vsel %vm2122, %v3285, 0
    %v3572 = vsel %vm2122, %v3286, 0
    %v3575 = vsel %vm2122, %v3287, 0
    %v3578 = vsel %vm2122, %v3288, 0
    %v3581 = vsel %vm2122, %v3289, 0
    %v3584 = vsel %vm2122, %v3290, 0
    %v3587 = vsel %vm2122, %v3291, 0
    %v3590 = vsel %vm2122, %v3292, 0
    %v3593 = vsel %vm2122, %v3293, 0
    %v3596 = vsel %vm2122, %v3294, 0
    %v3599 = vsel %vm2122, %v3295, 0
    %v3602 = vsel %vm2122, %v3296, 0
    %v3605 = vsel %vm2122, %v3297, 0
    %v3608 = vsel %vm2122, %v3298, 0
    %v3611 = vsel %vm2122, %v3299, 0
    %v3614 = vsel %vm2122, %v3300, 0
    %v3617 = vsel %vm2122, %v3301, 0
    %v3620 = vsel %vm2122, %v3302, 0
    %v3623 = vsel %vm2122, %v3303, 0
    %v3626 = vsel %vm2122, %v3304, 0
    %v3629 = vsel %vm2122, %v3305, 0
    %v3632 = vsel %vm2122, %v3306, 0
    %v3635 = vsel %vm2122, %v3307, 0
    %v3638 = vsel %vm2122, %v3308, 0
    %v3641 = vsel %vm2122, %v3309, 0
    %v3644 = vsel %vm2122, %v3310, 0
    %v3647 = vsel %vm2122, %v3311, 0
    %v3650 = vsel %vm2122, %v3312, 0
    %v3653 = vsel %vm2122, %v3313, 0
    %v3656 = vsel %vm2122, %v3314, 0
    %v3659 = vsel %vm2122, %v3315, 0
    %v3662 = vsel %vm2122, %v3316, 0
    %v3665 = vsel %vm2122, %v3317, 0
    %v3668 = vsel %vm2122, %v3318, 0
    %v3671 = vsel %vm2122, %v3319, 0
    %v3674 = vsel %vm2122, %v3320, 0
    %v3677 = vsel %vm2122, %v3321, 0
    %v3680 = vsel %vm2122, %v3322, 0
    %v3683 = vsel %vm2122, %v3323, 0
    %v3686 = vsel %vm2122, %v3324, 0
    %v3689 = vsel %vm2122, %v3325, 0
    %v3692 = vsel %vm2122, %v3326, 0
    %v3695 = vsel %vm2122, %v3327, 0
    %v3698 = vsel %vm2122, %v3328, 0
    %v3701 = vsel %vm2122, %v3329, 0
    %v3704 = vsel %vm2122, %v3330, 0
    %v3707 = vsel %vm2122, %v3331, 0
    %v3710 = vsel %vm2122, %v3332, 0
    %v3713 = vsel %vm2122, %v3333, 0
    %v3716 = vsel %vm2122, %v3334, 0
    %v3719 = vsel %vm2122, %v3335, 0
    %v3722 = vsel %vm2122, %v3336, 0
    %v3725 = vsel %vm2122, %v3337, 0
    %v3728 = vsel %vm2122, %v3338, 0
    %v3731 = vsel %vm2122, %v3339, 0
    %3733 = vmatprep.subr.mxu0 0.0
    %3734 = vmatpush1.msra.mxu0 %v3340
    %3735 = vmatprep.subr.mxu0 0.0
    %3736 = vmatpush1.msra.mxu0 %v3341
    %3737 = vmatprep.subr.mxu0 0.0
    %3738 = vmatpush1.msra.mxu0 0.0
    %3739 = vmatprep.subr.mxu0 0.0
    %3740 = vmatpush1.msra.mxu0 0.0
    %3741 = vmatprep.subr.mxu0 0.0
    %3742 = vmatpush1.msra.mxu0 0.0
    %3743 = vmatprep.subr.mxu0 0.0
    %3744 = vmatpush1.msra.mxu0 0.0
    %3745 = vmatprep.subr.mxu0 0.0
    %3746 = vmatpush1.msra.mxu0 0.0
    %3747 = vmatprep.subr.mxu0 0.0
    %3748 = vmatpush1.msra.mxu0 0.0
    %3749 = vmatprep.subr.mxu0 0.0
    %3750 = vmatpush1.msra.mxu0 0.0
    %3751 = vmatprep.subr.mxu0 0.0
    %3752 = vmatpush1.msra.mxu0 0.0
    %3753 = vmatprep.subr.mxu0 0.0
    %3754 = vmatpush1.msra.mxu0 0.0
    %3755 = vmatprep.subr.mxu0 0.0
    %3756 = vmatpush1.msra.mxu0 0.0
    %3757 = vmatprep.subr.mxu0 0.0
    %3758 = vmatpush1.msra.mxu0 0.0
    %3759 = vmatprep.subr.mxu0 0.0
    %3760 = vmatpush1.msra.mxu0 0.0
    %3761 = vmatprep.subr.mxu0 0.0
    %3762 = vmatpush1.msra.mxu0 0.0
    %3763 = vmatprep.subr.mxu0 0.0
    %3764 = vmatpush1.msra.mxu0 0.0
    %3765 = vmatprep.subr.mxu0 0.0
    %3766 = vmatpush1.msra.mxu0 0.0
    %3767 = vmatprep.subr.mxu0 0.0
    %3768 = vmatpush1.msra.mxu0 0.0
    %3769 = vmatprep.subr.mxu0 0.0
    %3770 = vmatpush1.msra.mxu0 0.0
    %3771 = vmatprep.subr.mxu0 0.0
    %3772 = vmatpush1.msra.mxu0 0.0
    %3773 = vmatprep.subr.mxu0 0.0
    %3774 = vmatpush1.msra.mxu0 0.0
    %3775 = vmatprep.subr.mxu0 0.0
    %3776 = vmatpush1.msra.mxu0 0.0
    %3777 = vmatprep.subr.mxu0 0.0
    %3778 = vmatpush1.msra.mxu0 0.0
    %3779 = vmatprep.subr.mxu0 0.0
    %3780 = vmatpush1.msra.mxu0 0.0
    %3781 = vmatprep.subr.mxu0 0.0
    %3782 = vmatpush1.msra.mxu0 0.0
    %3783 = vmatprep.subr.mxu0 0.0
    %3784 = vmatpush1.msra.mxu0 0.0
    %3785 = vmatprep.subr.mxu0 0.0
    %3786 = vmatpush1.msra.mxu0 0.0
    %3787 = vmatprep.subr.mxu0 0.0
    %3788 = vmatpush1.msra.mxu0 0.0
    %3789 = vmatprep.subr.mxu0 0.0
    %3790 = vmatpush1.msra.mxu0 0.0
    %3791 = vmatprep.subr.mxu0 0.0
    %3792 = vmatpush1.msra.mxu0 0.0
    %3793 = vmatprep.subr.mxu0 0.0
    %3794 = vmatpush1.msra.mxu0 0.0
    %3795 = vmatprep.subr.mxu0 0.0
    %3796 = vmatpush1.msra.mxu0 0.0
    %3797 = vmatprep.mubr.f32.mxu0 0.0
    %3798 = vmatmul.mubr.f32.gmra.mrb[0].mxu0 %v3350
    %v3799 = vpop.f32.mrb[0].mxu0
    %v3800 = vadd.f32 %v3347, %v3799
    %v3801 = vpop.f32.mrb[0].mxu0
    %3802 = vmatprep.mubr.f32.mxu0 0.0
    %3803 = vmatmul.mubr.f32.gmra.mrb[0].mxu0 %v3353
    %v3804 = vpop.f32.mrb[0].mxu0
    %v3805 = vadd.f32 %v3347, %v3804
    %v3806 = vpop.f32.mrb[0].mxu0
    %3807 = vmatprep.mubr.f32.mxu0 0.0
    %3808 = vmatmul.mubr.f32.gmra.mrb[0].mxu0 %v3356
    %v3809 = vpop.f32.mrb[0].mxu0
    %v3810 = vadd.f32 %v3347, %v3809
    %v3811 = vpop.f32.mrb[0].mxu0
    %3812 = vmatprep.mubr.f32.mxu0 0.0
    %3813 = vmatmul.mubr.f32.gmra.mrb[0].mxu0 %v3359
    %v3814 = vpop.f32.mrb[0].mxu0
    %v3815 = vadd.f32 %v3347, %v3814
    %v3816 = vpop.f32.mrb[0].mxu0
    %3817 = vmatprep.mubr.f32.mxu0 0.0
    %3818 = vmatmul.mubr.f32.gmra.mrb[0].mxu0 %v3362
    %v3819 = vpop.f32.mrb[0].mxu0
    %v3820 = vadd.f32 %v3347, %v3819
    %v3821 = vpop.f32.mrb[0].mxu0
    %3822 = vmatprep.mubr.f32.mxu0 0.0
    %3823 = vmatmul.mubr.f32.gmra.mrb[0].mxu0 %v3365
    %v3824 = vpop.f32.mrb[0].mxu0
    %v3825 = vadd.f32 %v3347, %v3824
    %v3826 = vpop.f32.mrb[0].mxu0
    %3827 = vmatprep.mubr.f32.mxu0 0.0
    %3828 = vmatmul.mubr.f32.gmra.mrb[0].mxu0 %v3368
    %v3829 = vpop.f32.mrb[0].mxu0
    %v3830 = vadd.f32 %v3347, %v3829
    %v3831 = vpop.f32.mrb[0].mxu0
    %3832 = vmatprep.mubr.f32.mxu0 0.0
    %3833 = vmatmul.mubr.f32.gmra.mrb[0].mxu0 %v3371
    %v3834 = vpop.f32.mrb[0].mxu0
    %v3835 = vadd.f32 %v3347, %v3834
    %v3836 = vpop.f32.mrb[0].mxu0
    %3837 = vmatprep.mubr.f32.mxu0 0.0
    %3838 = vmatmul.mubr.f32.gmra.mrb[0].mxu0 %v3374
    %v3839 = vpop.f32.mrb[0].mxu0
    %v3840 = vadd.f32 %v3347, %v3839
    %v3841 = vpop.f32.mrb[0].mxu0
    %3842 = vmatprep.mubr.f32.mxu0 0.0
    %3843 = vmatmul.mubr.f32.gmra.mrb[0].mxu0 %v3377
    %v3844 = vpop.f32.mrb[0].mxu0
    %v3845 = vadd.f32 %v3347, %v3844
    %v3846 = vpop.f32.mrb[0].mxu0
    %3847 = vmatprep.mubr.f32.mxu0 0.0
    %3848 = vmatmul.mubr.f32.gmra.mrb[0].mxu0 %v3380
    %v3849 = vpop.f32.mrb[0].mxu0
    %v3850 = vadd.f32 %v3347, %v3849
    %v3851 = vpop.f32.mrb[0].mxu0
    %3852 = vmatprep.mubr.f32.mxu0 0.0
    %3853 = vmatmul.mubr.f32.gmra.mrb[0].mxu0 %v3383
    %v3854 = vpop.f32.mrb[0].mxu0
    %v3855 = vadd.f32 %v3347, %v3854
    %v3856 = vpop.f32.mrb[0].mxu0
    %3857 = vmatprep.mubr.f32.mxu0 0.0
    %3858 = vmatmul.mubr.f32.gmra.mrb[0].mxu0 %v3386
    %v3859 = vpop.f32.mrb[0].mxu0
    %v3860 = vadd.f32 %v3347, %v3859
    %v3861 = vpop.f32.mrb[0].mxu0
    %3862 = vmatprep.mubr.f32.mxu0 0.0
    %3863 = vmatmul.mubr.f32.gmra.mrb[0].mxu0 %v3389
    %v3864 = vpop.f32.mrb[0].mxu0
    %v3865 = vadd.f32 %v3347, %v3864
    %v3866 = vpop.f32.mrb[0].mxu0
    %3867 = vmatprep.mubr.f32.mxu0 0.0
    %3868 = vmatmul.mubr.f32.gmra.mrb[0].mxu0 %v3392
    %v3869 = vpop.f32.mrb[0].mxu0
    %v3870 = vadd.f32 %v3347, %v3869
    %v3871 = vpop.f32.mrb[0].mxu0
    %3872 = vmatprep.mubr.f32.mxu0 0.0
    %3873 = vmatmul.mubr.f32.gmra.mrb[0].mxu0 %v3395
    %v3874 = vpop.f32.mrb[0].mxu0
    %v3875 = vadd.f32 %v3347, %v3874
    %v3876 = vpop.f32.mrb[0].mxu0
    %3877 = vmatprep.mubr.f32.mxu0 0.0
    %3878 = vmatmul.mubr.f32.gmra.mrb[0].mxu0 %v3398
    %v3879 = vpop.f32.mrb[0].mxu0
    %v3880 = vadd.f32 %v3347, %v3879
    %v3881 = vpop.f32.mrb[0].mxu0
    %3882 = vmatprep.mubr.f32.mxu0 0.0
    %3883 = vmatmul.mubr.f32.gmra.mrb[0].mxu0 %v3401
    %v3884 = vpop.f32.mrb[0].mxu0
    %v3885 = vadd.f32 %v3347, %v3884
    %v3886 = vpop.f32.mrb[0].mxu0
    %3887 = vmatprep.mubr.f32.mxu0 0.0
    %3888 = vmatmul.mubr.f32.gmra.mrb[0].mxu0 %v3404
    %v3889 = vpop.f32.mrb[0].mxu0
    %v3890 = vadd.f32 %v3347, %v3889
    %v3891 = vpop.f32.mrb[0].mxu0
    %3892 = vmatprep.mubr.f32.mxu0 0.0
    %3893 = vmatmul.mubr.f32.gmra.mrb[0].mxu0 %v3407
    %v3894 = vpop.f32.mrb[0].mxu0
    %v3895 = vadd.f32 %v3347, %v3894
    %v3896 = vpop.f32.mrb[0].mxu0
    %3897 = vmatprep.mubr.f32.mxu0 0.0
    %3898 = vmatmul.mubr.f32.gmra.mrb[0].mxu0 %v3410
    %v3899 = vpop.f32.mrb[0].mxu0
    %v3900 = vadd.f32 %v3347, %v3899
    %v3901 = vpop.f32.mrb[0].mxu0
    %3902 = vmatprep.mubr.f32.mxu0 0.0
    %3903 = vmatmul.mubr.f32.gmra.mrb[0].mxu0 %v3413
    %v3904 = vpop.f32.mrb[0].mxu0
    %v3905 = vadd.f32 %v3347, %v3904
    %v3906 = vpop.f32.mrb[0].mxu0
    %3907 = vmatprep.mubr.f32.mxu0 0.0
    %3908 = vmatmul.mubr.f32.gmra.mrb[0].mxu0 %v3416
    %v3909 = vpop.f32.mrb[0].mxu0
    %v3910 = vadd.f32 %v3347, %v3909
    %v3911 = vpop.f32.mrb[0].mxu0
    %3912 = vmatprep.mubr.f32.mxu0 0.0
    %3913 = vmatmul.mubr.f32.gmra.mrb[0].mxu0 %v3419
    %v3914 = vpop.f32.mrb[0].mxu0
    %v3915 = vadd.f32 %v3347, %v3914
    %v3916 = vpop.f32.mrb[0].mxu0
    %3917 = vmatprep.mubr.f32.mxu0 0.0
    %3918 = vmatmul.mubr.f32.gmra.mrb[0].mxu0 %v3422
    %v3919 = vpop.f32.mrb[0].mxu0
    %v3920 = vadd.f32 %v3347, %v3919
    %v3921 = vpop.f32.mrb[0].mxu0
    %3922 = vmatprep.mubr.f32.mxu0 0.0
    %3923 = vmatmul.mubr.f32.gmra.mrb[0].mxu0 %v3425
    %v3924 = vpop.f32.mrb[0].mxu0
    %v3925 = vadd.f32 %v3347, %v3924
    %v3926 = vpop.f32.mrb[0].mxu0
    %3927 = vmatprep.mubr.f32.mxu0 0.0
    %3928 = vmatmul.mubr.f32.gmra.mrb[0].mxu0 %v3428
    %v3929 = vpop.f32.mrb[0].mxu0
    %v3930 = vadd.f32 %v3347, %v3929
    %v3931 = vpop.f32.mrb[0].mxu0
    %3932 = vmatprep.mubr.f32.mxu0 0.0
    %3933 = vmatmul.mubr.f32.gmra.mrb[0].mxu0 %v3431
    %v3934 = vpop.f32.mrb[0].mxu0
    %v3935 = vadd.f32 %v3347, %v3934
    %v3936 = vpop.f32.mrb[0].mxu0
    %3937 = vmatprep.mubr.f32.mxu0 0.0
    %3938 = vmatmul.mubr.f32.gmra.mrb[0].mxu0 %v3434
    %v3939 = vpop.f32.mrb[0].mxu0
    %v3940 = vadd.f32 %v3347, %v3939
    %v3941 = vpop.f32.mrb[0].mxu0
    %3942 = vmatprep.mubr.f32.mxu0 0.0
    %3943 = vmatmul.mubr.f32.gmra.mrb[0].mxu0 %v3437
    %v3944 = vpop.f32.mrb[0].mxu0
    %v3945 = vadd.f32 %v3347, %v3944
    %v3946 = vpop.f32.mrb[0].mxu0
    %3947 = vmatprep.mubr.f32.mxu0 0.0
    %3948 = vmatmul.mubr.f32.gmra.mrb[0].mxu0 %v3440
    %v3949 = vpop.f32.mrb[0].mxu0
    %v3950 = vadd.f32 %v3347, %v3949
    %v3951 = vpop.f32.mrb[0].mxu0
    %3952 = vmatprep.mubr.f32.mxu0 0.0
    %3953 = vmatmul.mubr.f32.gmra.mrb[0].mxu0 %v3443
    %v3954 = vpop.f32.mrb[0].mxu0
    %v3955 = vadd.f32 %v3347, %v3954
    %v3956 = vpop.f32.mrb[0].mxu0
    %3957 = vmatprep.mubr.f32.mxu0 0.0
    %3958 = vmatmul.mubr.f32.gmra.mrb[0].mxu0 %v3446
    %v3959 = vpop.f32.mrb[0].mxu0
    %v3960 = vadd.f32 %v3347, %v3959
    %v3961 = vpop.f32.mrb[0].mxu0
    %3962 = vmatprep.mubr.f32.mxu0 0.0
    %3963 = vmatmul.mubr.f32.gmra.mrb[0].mxu0 %v3449
    %v3964 = vpop.f32.mrb[0].mxu0
    %v3965 = vadd.f32 %v3347, %v3964
    %v3966 = vpop.f32.mrb[0].mxu0
    %3967 = vmatprep.mubr.f32.mxu0 0.0
    %3968 = vmatmul.mubr.f32.gmra.mrb[0].mxu0 %v3452
    %v3969 = vpop.f32.mrb[0].mxu0
    %v3970 = vadd.f32 %v3347, %v3969
    %v3971 = vpop.f32.mrb[0].mxu0
    %3972 = vmatprep.mubr.f32.mxu0 0.0
    %3973 = vmatmul.mubr.f32.gmra.mrb[0].mxu0 %v3455
    %v3974 = vpop.f32.mrb[0].mxu0
    %v3975 = vadd.f32 %v3347, %v3974
    %v3976 = vpop.f32.mrb[0].mxu0
    %3977 = vmatprep.mubr.f32.mxu0 0.0
    %3978 = vmatmul.mubr.f32.gmra.mrb[0].mxu0 %v3458
    %v3979 = vpop.f32.mrb[0].mxu0
    %v3980 = vadd.f32 %v3347, %v3979
    %v3981 = vpop.f32.mrb[0].mxu0
    %3982 = vmatprep.mubr.f32.mxu0 0.0
    %3983 = vmatmul.mubr.f32.gmra.mrb[0].mxu0 %v3461
    %v3984 = vpop.f32.mrb[0].mxu0
    %v3985 = vadd.f32 %v3347, %v3984
    %v3986 = vpop.f32.mrb[0].mxu0
    %3987 = vmatprep.mubr.f32.mxu0 0.0
    %3988 = vmatmul.mubr.f32.gmra.mrb[0].mxu0 %v3464
    %v3989 = vpop.f32.mrb[0].mxu0
    %v3990 = vadd.f32 %v3347, %v3989
    %v3991 = vpop.f32.mrb[0].mxu0
    %3992 = vmatprep.mubr.f32.mxu0 0.0
    %3993 = vmatmul.mubr.f32.gmra.mrb[0].mxu0 %v3467
    %v3994 = vpop.f32.mrb[0].mxu0
    %v3995 = vadd.f32 %v3347, %v3994
    %v3996 = vpop.f32.mrb[0].mxu0
    %3997 = vmatprep.mubr.f32.mxu0 0.0
    %3998 = vmatmul.mubr.f32.gmra.mrb[0].mxu0 %v3470
    %v3999 = vpop.f32.mrb[0].mxu0
    %v4000 = vadd.f32 %v3347, %v3999
    %v4001 = vpop.f32.mrb[0].mxu0
    %4002 = vmatprep.mubr.f32.mxu0 0.0
    %4003 = vmatmul.mubr.f32.gmra.mrb[0].mxu0 %v3473
    %v4004 = vpop.f32.mrb[0].mxu0
    %v4005 = vadd.f32 %v3347, %v4004
    %v4006 = vpop.f32.mrb[0].mxu0
    %4007 = vmatprep.mubr.f32.mxu0 0.0
    %4008 = vmatmul.mubr.f32.gmra.mrb[0].mxu0 %v3476
    %v4009 = vpop.f32.mrb[0].mxu0
    %v4010 = vadd.f32 %v3347, %v4009
    %v4011 = vpop.f32.mrb[0].mxu0
    %4012 = vmatprep.mubr.f32.mxu0 0.0
    %4013 = vmatmul.mubr.f32.gmra.mrb[0].mxu0 %v3479
    %v4014 = vpop.f32.mrb[0].mxu0
    %v4015 = vadd.f32 %v3347, %v4014
    %v4016 = vpop.f32.mrb[0].mxu0
    %4017 = vmatprep.mubr.f32.mxu0 0.0
    %4018 = vmatmul.mubr.f32.gmra.mrb[0].mxu0 %v3482
    %v4019 = vpop.f32.mrb[0].mxu0
    %v4020 = vadd.f32 %v3347, %v4019
    %v4021 = vpop.f32.mrb[0].mxu0
    %4022 = vmatprep.mubr.f32.mxu0 0.0
    %4023 = vmatmul.mubr.f32.gmra.mrb[0].mxu0 %v3485
    %v4024 = vpop.f32.mrb[0].mxu0
    %v4025 = vadd.f32 %v3347, %v4024
    %v4026 = vpop.f32.mrb[0].mxu0
    %4027 = vmatprep.mubr.f32.mxu0 0.0
    %4028 = vmatmul.mubr.f32.gmra.mrb[0].mxu0 %v3488
    %v4029 = vpop.f32.mrb[0].mxu0
    %v4030 = vadd.f32 %v3347, %v4029
    %v4031 = vpop.f32.mrb[0].mxu0
    %4032 = vmatprep.mubr.f32.mxu0 0.0
    %4033 = vmatmul.mubr.f32.gmra.mrb[0].mxu0 %v3491
    %v4034 = vpop.f32.mrb[0].mxu0
    %v4035 = vadd.f32 %v3347, %v4034
    %v4036 = vpop.f32.mrb[0].mxu0
    %4037 = vmatprep.mubr.f32.mxu0 0.0
    %4038 = vmatmul.mubr.f32.gmra.mrb[0].mxu0 %v3494
    %v4039 = vpop.f32.mrb[0].mxu0
    %v4040 = vadd.f32 %v3347, %v4039
    %v4041 = vpop.f32.mrb[0].mxu0
    %4042 = vmatprep.mubr.f32.mxu0 0.0
    %4043 = vmatmul.mubr.f32.gmra.mrb[0].mxu0 %v3497
    %v4044 = vpop.f32.mrb[0].mxu0
    %v4045 = vadd.f32 %v3347, %v4044
    %v4046 = vpop.f32.mrb[0].mxu0
    %4047 = vmatprep.mubr.f32.mxu0 0.0
    %4048 = vmatmul.mubr.f32.gmra.mrb[0].mxu0 %v3500
    %v4049 = vpop.f32.mrb[0].mxu0
    %v4050 = vadd.f32 %v3347, %v4049
    %v4051 = vpop.f32.mrb[0].mxu0
    %4052 = vmatprep.mubr.f32.mxu0 0.0
    %4053 = vmatmul.mubr.f32.gmra.mrb[0].mxu0 %v3503
    %v4054 = vpop.f32.mrb[0].mxu0
    %v4055 = vadd.f32 %v3347, %v4054
    %v4056 = vpop.f32.mrb[0].mxu0
    %4057 = vmatprep.mubr.f32.mxu0 0.0
    %4058 = vmatmul.mubr.f32.gmra.mrb[0].mxu0 %v3506
    %v4059 = vpop.f32.mrb[0].mxu0
    %v4060 = vadd.f32 %v3347, %v4059
    %v4061 = vpop.f32.mrb[0].mxu0
    %4062 = vmatprep.mubr.f32.mxu0 0.0
    %4063 = vmatmul.mubr.f32.gmra.mrb[0].mxu0 %v3509
    %v4064 = vpop.f32.mrb[0].mxu0
    %v4065 = vadd.f32 %v3347, %v4064
    %v4066 = vpop.f32.mrb[0].mxu0
    %4067 = vmatprep.mubr.f32.mxu0 0.0
    %4068 = vmatmul.mubr.f32.gmra.mrb[0].mxu0 %v3512
    %v4069 = vpop.f32.mrb[0].mxu0
    %v4070 = vadd.f32 %v3347, %v4069
    %v4071 = vpop.f32.mrb[0].mxu0
    %4072 = vmatprep.mubr.f32.mxu0 0.0
    %4073 = vmatmul.mubr.f32.gmra.mrb[0].mxu0 %v3515
    %v4074 = vpop.f32.mrb[0].mxu0
    %v4075 = vadd.f32 %v3347, %v4074
    %v4076 = vpop.f32.mrb[0].mxu0
    %4077 = vmatprep.mubr.f32.mxu0 0.0
    %4078 = vmatmul.mubr.f32.gmra.mrb[0].mxu0 %v3518
    %v4079 = vpop.f32.mrb[0].mxu0
    %v4080 = vadd.f32 %v3347, %v4079
    %v4081 = vpop.f32.mrb[0].mxu0
    %4082 = vmatprep.mubr.f32.mxu0 0.0
    %4083 = vmatmul.mubr.f32.gmra.mrb[0].mxu0 %v3521
    %v4084 = vpop.f32.mrb[0].mxu0
    %v4085 = vadd.f32 %v3347, %v4084
    %v4086 = vpop.f32.mrb[0].mxu0
    %4087 = vmatprep.mubr.f32.mxu0 0.0
    %4088 = vmatmul.mubr.f32.gmra.mrb[0].mxu0 %v3524
    %v4089 = vpop.f32.mrb[0].mxu0
    %v4090 = vadd.f32 %v3347, %v4089
    %v4091 = vpop.f32.mrb[0].mxu0
    %4092 = vmatprep.mubr.f32.mxu0 0.0
    %4093 = vmatmul.mubr.f32.gmra.mrb[0].mxu0 %v3527
    %v4094 = vpop.f32.mrb[0].mxu0
    %v4095 = vadd.f32 %v3347, %v4094
    %v4096 = vpop.f32.mrb[0].mxu0
    %4097 = vmatprep.mubr.f32.mxu0 0.0
    %4098 = vmatmul.mubr.f32.gmra.mrb[0].mxu0 %v3530
    %v4099 = vpop.f32.mrb[0].mxu0
    %v4100 = vadd.f32 %v3347, %v4099
    %v4101 = vpop.f32.mrb[0].mxu0
    %4102 = vmatprep.mubr.f32.mxu0 0.0
    %4103 = vmatmul.mubr.f32.gmra.mrb[0].mxu0 %v3533
    %v4104 = vpop.f32.mrb[0].mxu0
    %v4105 = vadd.f32 %v3347, %v4104
    %v4106 = vpop.f32.mrb[0].mxu0
    %4107 = vmatprep.mubr.f32.mxu0 0.0
    %4108 = vmatmul.mubr.f32.gmra.mrb[0].mxu0 %v3536
    %v4109 = vpop.f32.mrb[0].mxu0
    %v4110 = vadd.f32 %v3347, %v4109
    %v4111 = vpop.f32.mrb[0].mxu0
    %4112 = vmatprep.mubr.f32.mxu0 0.0
    %4113 = vmatmul.mubr.f32.gmra.mrb[0].mxu0 %v3539
    %v4114 = vpop.f32.mrb[0].mxu0
    %v4115 = vadd.f32 %v3347, %v4114
    %v4116 = vpop.f32.mrb[0].mxu0
    %4117 = vmatprep.mubr.f32.mxu0 0.0
    %4118 = vmatmul.mubr.f32.gmra.mrb[0].mxu0 %v3542
    %v4119 = vpop.f32.mrb[0].mxu0
    %v4120 = vadd.f32 %v3347, %v4119
    %v4121 = vpop.f32.mrb[0].mxu0
    %4122 = vmatprep.mubr.f32.mxu0 0.0
    %4123 = vmatmul.mubr.f32.gmra.mrb[0].mxu0 %v3545
    %v4124 = vpop.f32.mrb[0].mxu0
    %v4125 = vadd.f32 %v3347, %v4124
    %v4126 = vpop.f32.mrb[0].mxu0
    %4127 = vmatprep.mubr.f32.mxu0 0.0
    %4128 = vmatmul.mubr.f32.gmra.mrb[0].mxu0 %v3548
    %v4129 = vpop.f32.mrb[0].mxu0
    %v4130 = vadd.f32 %v3347, %v4129
    %v4131 = vpop.f32.mrb[0].mxu0
    %4132 = vmatprep.mubr.f32.mxu0 0.0
    %4133 = vmatmul.mubr.f32.gmra.mrb[0].mxu0 %v3551
    %v4134 = vpop.f32.mrb[0].mxu0
    %v4135 = vadd.f32 %v3347, %v4134
    %v4136 = vpop.f32.mrb[0].mxu0
    %4137 = vmatprep.mubr.f32.mxu0 0.0
    %4138 = vmatmul.mubr.f32.gmra.mrb[0].mxu0 %v3554
    %v4139 = vpop.f32.mrb[0].mxu0
    %v4140 = vadd.f32 %v3347, %v4139
    %v4141 = vpop.f32.mrb[0].mxu0
    %4142 = vmatprep.mubr.f32.mxu0 0.0
    %4143 = vmatmul.mubr.f32.gmra.mrb[0].mxu0 %v3557
    %v4144 = vpop.f32.mrb[0].mxu0
    %v4145 = vadd.f32 %v3347, %v4144
    %v4146 = vpop.f32.mrb[0].mxu0
    %4147 = vmatprep.mubr.f32.mxu0 0.0
    %4148 = vmatmul.mubr.f32.gmra.mrb[0].mxu0 %v3560
    %v4149 = vpop.f32.mrb[0].mxu0
    %v4150 = vadd.f32 %v3347, %v4149
    %v4151 = vpop.f32.mrb[0].mxu0
    %4152 = vmatprep.mubr.f32.mxu0 0.0
    %4153 = vmatmul.mubr.f32.gmra.mrb[0].mxu0 %v3563
    %v4154 = vpop.f32.mrb[0].mxu0
    %v4155 = vadd.f32 %v3347, %v4154
    %v4156 = vpop.f32.mrb[0].mxu0
    %4157 = vmatprep.mubr.f32.mxu0 0.0
    %4158 = vmatmul.mubr.f32.gmra.mrb[0].mxu0 %v3566
    %v4159 = vpop.f32.mrb[0].mxu0
    %v4160 = vadd.f32 %v3347, %v4159
    %v4161 = vpop.f32.mrb[0].mxu0
    %4162 = vmatprep.mubr.f32.mxu0 0.0
    %4163 = vmatmul.mubr.f32.gmra.mrb[0].mxu0 %v3569
    %v4164 = vpop.f32.mrb[0].mxu0
    %v4165 = vadd.f32 %v3347, %v4164
    %v4166 = vpop.f32.mrb[0].mxu0
    %4167 = vmatprep.mubr.f32.mxu0 0.0
    %4168 = vmatmul.mubr.f32.gmra.mrb[0].mxu0 %v3572
    %v4169 = vpop.f32.mrb[0].mxu0
    %v4170 = vadd.f32 %v3347, %v4169
    %v4171 = vpop.f32.mrb[0].mxu0
    %4172 = vmatprep.mubr.f32.mxu0 0.0
    %4173 = vmatmul.mubr.f32.gmra.mrb[0].mxu0 %v3575
    %v4174 = vpop.f32.mrb[0].mxu0
    %v4175 = vadd.f32 %v3347, %v4174
    %v4176 = vpop.f32.mrb[0].mxu0
    %4177 = vmatprep.mubr.f32.mxu0 0.0
    %4178 = vmatmul.mubr.f32.gmra.mrb[0].mxu0 %v3578
    %v4179 = vpop.f32.mrb[0].mxu0
    %v4180 = vadd.f32 %v3347, %v4179
    %v4181 = vpop.f32.mrb[0].mxu0
    %4182 = vmatprep.mubr.f32.mxu0 0.0
    %4183 = vmatmul.mubr.f32.gmra.mrb[0].mxu0 %v3581
    %v4184 = vpop.f32.mrb[0].mxu0
    %v4185 = vadd.f32 %v3347, %v4184
    %v4186 = vpop.f32.mrb[0].mxu0
    %4187 = vmatprep.mubr.f32.mxu0 0.0
    %4188 = vmatmul.mubr.f32.gmra.mrb[0].mxu0 %v3584
    %v4189 = vpop.f32.mrb[0].mxu0
    %v4190 = vadd.f32 %v3347, %v4189
    %v4191 = vpop.f32.mrb[0].mxu0
    %4192 = vmatprep.mubr.f32.mxu0 0.0
    %4193 = vmatmul.mubr.f32.gmra.mrb[0].mxu0 %v3587
    %v4194 = vpop.f32.mrb[0].mxu0
    %v4195 = vadd.f32 %v3347, %v4194
    %v4196 = vpop.f32.mrb[0].mxu0
    %4197 = vmatprep.mubr.f32.mxu0 0.0
    %4198 = vmatmul.mubr.f32.gmra.mrb[0].mxu0 %v3590
    %v4199 = vpop.f32.mrb[0].mxu0
    %v4200 = vadd.f32 %v3347, %v4199
    %v4201 = vpop.f32.mrb[0].mxu0
    %4202 = vmatprep.mubr.f32.mxu0 0.0
    %4203 = vmatmul.mubr.f32.gmra.mrb[0].mxu0 %v3593
    %v4204 = vpop.f32.mrb[0].mxu0
    %v4205 = vadd.f32 %v3347, %v4204
    %v4206 = vpop.f32.mrb[0].mxu0
    %4207 = vmatprep.mubr.f32.mxu0 0.0
    %4208 = vmatmul.mubr.f32.gmra.mrb[0].mxu0 %v3596
    %v4209 = vpop.f32.mrb[0].mxu0
    %v4210 = vadd.f32 %v3347, %v4209
    %v4211 = vpop.f32.mrb[0].mxu0
    %4212 = vmatprep.mubr.f32.mxu0 0.0
    %4213 = vmatmul.mubr.f32.gmra.mrb[0].mxu0 %v3599
    %v4214 = vpop.f32.mrb[0].mxu0
    %v4215 = vadd.f32 %v3347, %v4214
    %v4216 = vpop.f32.mrb[0].mxu0
    %4217 = vmatprep.mubr.f32.mxu0 0.0
    %4218 = vmatmul.mubr.f32.gmra.mrb[0].mxu0 %v3602
    %v4219 = vpop.f32.mrb[0].mxu0
    %v4220 = vadd.f32 %v3347, %v4219
    %v4221 = vpop.f32.mrb[0].mxu0
    %4222 = vmatprep.mubr.f32.mxu0 0.0
    %4223 = vmatmul.mubr.f32.gmra.mrb[0].mxu0 %v3605
    %v4224 = vpop.f32.mrb[0].mxu0
    %v4225 = vadd.f32 %v3347, %v4224
    %v4226 = vpop.f32.mrb[0].mxu0
    %4227 = vmatprep.mubr.f32.mxu0 0.0
    %4228 = vmatmul.mubr.f32.gmra.mrb[0].mxu0 %v3608
    %v4229 = vpop.f32.mrb[0].mxu0
    %v4230 = vadd.f32 %v3347, %v4229
    %v4231 = vpop.f32.mrb[0].mxu0
    %4232 = vmatprep.mubr.f32.mxu0 0.0
    %4233 = vmatmul.mubr.f32.gmra.mrb[0].mxu0 %v3611
    %v4234 = vpop.f32.mrb[0].mxu0
    %v4235 = vadd.f32 %v3347, %v4234
    %v4236 = vpop.f32.mrb[0].mxu0
    %4237 = vmatprep.mubr.f32.mxu0 0.0
    %4238 = vmatmul.mubr.f32.gmra.mrb[0].mxu0 %v3614
    %v4239 = vpop.f32.mrb[0].mxu0
    %v4240 = vadd.f32 %v3347, %v4239
    %v4241 = vpop.f32.mrb[0].mxu0
    %4242 = vmatprep.mubr.f32.mxu0 0.0
    %4243 = vmatmul.mubr.f32.gmra.mrb[0].mxu0 %v3617
    %v4244 = vpop.f32.mrb[0].mxu0
    %v4245 = vadd.f32 %v3347, %v4244
    %v4246 = vpop.f32.mrb[0].mxu0
    %4247 = vmatprep.mubr.f32.mxu0 0.0
    %4248 = vmatmul.mubr.f32.gmra.mrb[0].mxu0 %v3620
    %v4249 = vpop.f32.mrb[0].mxu0
    %v4250 = vadd.f32 %v3347, %v4249
    %v4251 = vpop.f32.mrb[0].mxu0
    %4252 = vmatprep.mubr.f32.mxu0 0.0
    %4253 = vmatmul.mubr.f32.gmra.mrb[0].mxu0 %v3623
    %v4254 = vpop.f32.mrb[0].mxu0
    %v4255 = vadd.f32 %v3347, %v4254
    %v4256 = vpop.f32.mrb[0].mxu0
    %4257 = vmatprep.mubr.f32.mxu0 0.0
    %4258 = vmatmul.mubr.f32.gmra.mrb[0].mxu0 %v3626
    %v4259 = vpop.f32.mrb[0].mxu0
    %v4260 = vadd.f32 %v3347, %v4259
    %v4261 = vpop.f32.mrb[0].mxu0
    %4262 = vmatprep.mubr.f32.mxu0 0.0
    %4263 = vmatmul.mubr.f32.gmra.mrb[0].mxu0 %v3629
    %v4264 = vpop.f32.mrb[0].mxu0
    %v4265 = vadd.f32 %v3347, %v4264
    %v4266 = vpop.f32.mrb[0].mxu0
    %4267 = vmatprep.mubr.f32.mxu0 0.0
    %4268 = vmatmul.mubr.f32.gmra.mrb[0].mxu0 %v3632
    %v4269 = vpop.f32.mrb[0].mxu0
    %v4270 = vadd.f32 %v3347, %v4269
    %v4271 = vpop.f32.mrb[0].mxu0
    %4272 = vmatprep.mubr.f32.mxu0 0.0
    %4273 = vmatmul.mubr.f32.gmra.mrb[0].mxu0 %v3635
    %v4274 = vpop.f32.mrb[0].mxu0
    %v4275 = vadd.f32 %v3347, %v4274
    %v4276 = vpop.f32.mrb[0].mxu0
    %4277 = vmatprep.mubr.f32.mxu0 0.0
    %4278 = vmatmul.mubr.f32.gmra.mrb[0].mxu0 %v3638
    %v4279 = vpop.f32.mrb[0].mxu0
    %v4280 = vadd.f32 %v3347, %v4279
    %v4281 = vpop.f32.mrb[0].mxu0
    %4282 = vmatprep.mubr.f32.mxu0 0.0
    %4283 = vmatmul.mubr.f32.gmra.mrb[0].mxu0 %v3641
    %v4284 = vpop.f32.mrb[0].mxu0
    %v4285 = vadd.f32 %v3347, %v4284
    %v4286 = vpop.f32.mrb[0].mxu0
    %4287 = vmatprep.mubr.f32.mxu0 0.0
    %4288 = vmatmul.mubr.f32.gmra.mrb[0].mxu0 %v3644
    %v4289 = vpop.f32.mrb[0].mxu0
    %v4290 = vadd.f32 %v3347, %v4289
    %v4291 = vpop.f32.mrb[0].mxu0
    %4292 = vmatprep.mubr.f32.mxu0 0.0
    %4293 = vmatmul.mubr.f32.gmra.mrb[0].mxu0 %v3647
    %v4294 = vpop.f32.mrb[0].mxu0
    %v4295 = vadd.f32 %v3347, %v4294
    %v4296 = vpop.f32.mrb[0].mxu0
    %4297 = vmatprep.mubr.f32.mxu0 0.0
    %4298 = vmatmul.mubr.f32.gmra.mrb[0].mxu0 %v3650
    %v4299 = vpop.f32.mrb[0].mxu0
    %v4300 = vadd.f32 %v3347, %v4299
    %v4301 = vpop.f32.mrb[0].mxu0
    %4302 = vmatprep.mubr.f32.mxu0 0.0
    %4303 = vmatmul.mubr.f32.gmra.mrb[0].mxu0 %v3653
    %v4304 = vpop.f32.mrb[0].mxu0
    %v4305 = vadd.f32 %v3347, %v4304
    %v4306 = vpop.f32.mrb[0].mxu0
    %4307 = vmatprep.mubr.f32.mxu0 0.0
    %4308 = vmatmul.mubr.f32.gmra.mrb[0].mxu0 %v3656
    %v4309 = vpop.f32.mrb[0].mxu0
    %v4310 = vadd.f32 %v3347, %v4309
    %v4311 = vpop.f32.mrb[0].mxu0
    %4312 = vmatprep.mubr.f32.mxu0 0.0
    %4313 = vmatmul.mubr.f32.gmra.mrb[0].mxu0 %v3659
    %v4314 = vpop.f32.mrb[0].mxu0
    %v4315 = vadd.f32 %v3347, %v4314
    %v4316 = vpop.f32.mrb[0].mxu0
    %4317 = vmatprep.mubr.f32.mxu0 0.0
    %4318 = vmatmul.mubr.f32.gmra.mrb[0].mxu0 %v3662
    %v4319 = vpop.f32.mrb[0].mxu0
    %v4320 = vadd.f32 %v3347, %v4319
    %v4321 = vpop.f32.mrb[0].mxu0
    %4322 = vmatprep.mubr.f32.mxu0 0.0
    %4323 = vmatmul.mubr.f32.gmra.mrb[0].mxu0 %v3665
    %v4324 = vpop.f32.mrb[0].mxu0
    %v4325 = vadd.f32 %v3347, %v4324
    %v4326 = vpop.f32.mrb[0].mxu0
    %4327 = vmatprep.mubr.f32.mxu0 0.0
    %4328 = vmatmul.mubr.f32.gmra.mrb[0].mxu0 %v3668
    %v4329 = vpop.f32.mrb[0].mxu0
    %v4330 = vadd.f32 %v3347, %v4329
    %v4331 = vpop.f32.mrb[0].mxu0
    %4332 = vmatprep.mubr.f32.mxu0 0.0
    %4333 = vmatmul.mubr.f32.gmra.mrb[0].mxu0 %v3671
    %v4334 = vpop.f32.mrb[0].mxu0
    %v4335 = vadd.f32 %v3347, %v4334
    %v4336 = vpop.f32.mrb[0].mxu0
    %4337 = vmatprep.mubr.f32.mxu0 0.0
    %4338 = vmatmul.mubr.f32.gmra.mrb[0].mxu0 %v3674
    %v4339 = vpop.f32.mrb[0].mxu0
    %v4340 = vadd.f32 %v3347, %v4339
    %v4341 = vpop.f32.mrb[0].mxu0
    %4342 = vmatprep.mubr.f32.mxu0 0.0
    %4343 = vmatmul.mubr.f32.gmra.mrb[0].mxu0 %v3677
    %v4344 = vpop.f32.mrb[0].mxu0
    %v4345 = vadd.f32 %v3347, %v4344
    %v4346 = vpop.f32.mrb[0].mxu0
    %4347 = vmatprep.mubr.f32.mxu0 0.0
    %4348 = vmatmul.mubr.f32.gmra.mrb[0].mxu0 %v3680
    %v4349 = vpop.f32.mrb[0].mxu0
    %v4350 = vadd.f32 %v3347, %v4349
    %v4351 = vpop.f32.mrb[0].mxu0
    %4352 = vmatprep.mubr.f32.mxu0 0.0
    %4353 = vmatmul.mubr.f32.gmra.mrb[0].mxu0 %v3683
    %v4354 = vpop.f32.mrb[0].mxu0
    %v4355 = vadd.f32 %v3347, %v4354
    %v4356 = vpop.f32.mrb[0].mxu0
    %4357 = vmatprep.mubr.f32.mxu0 0.0
    %4358 = vmatmul.mubr.f32.gmra.mrb[0].mxu0 %v3686
    %v4359 = vpop.f32.mrb[0].mxu0
    %v4360 = vadd.f32 %v3347, %v4359
    %v4361 = vpop.f32.mrb[0].mxu0
    %4362 = vmatprep.mubr.f32.mxu0 0.0
    %4363 = vmatmul.mubr.f32.gmra.mrb[0].mxu0 %v3689
    %v4364 = vpop.f32.mrb[0].mxu0
    %v4365 = vadd.f32 %v3347, %v4364
    %v4366 = vpop.f32.mrb[0].mxu0
    %4367 = vmatprep.mubr.f32.mxu0 0.0
    %4368 = vmatmul.mubr.f32.gmra.mrb[0].mxu0 %v3692
    %v4369 = vpop.f32.mrb[0].mxu0
    %v4370 = vadd.f32 %v3347, %v4369
    %v4371 = vpop.f32.mrb[0].mxu0
    %4372 = vmatprep.mubr.f32.mxu0 0.0
    %4373 = vmatmul.mubr.f32.gmra.mrb[0].mxu0 %v3695
    %v4374 = vpop.f32.mrb[0].mxu0
    %v4375 = vadd.f32 %v3347, %v4374
    %v4376 = vpop.f32.mrb[0].mxu0
    %4377 = vmatprep.mubr.f32.mxu0 0.0
    %4378 = vmatmul.mubr.f32.gmra.mrb[0].mxu0 %v3698
    %v4379 = vpop.f32.mrb[0].mxu0
    %v4380 = vadd.f32 %v3347, %v4379
    %v4381 = vpop.f32.mrb[0].mxu0
    %4382 = vmatprep.mubr.f32.mxu0 0.0
    %4383 = vmatmul.mubr.f32.gmra.mrb[0].mxu0 %v3701
    %v4384 = vpop.f32.mrb[0].mxu0
    %v4385 = vadd.f32 %v3347, %v4384
    %v4386 = vpop.f32.mrb[0].mxu0
    %4387 = vmatprep.mubr.f32.mxu0 0.0
    %4388 = vmatmul.mubr.f32.gmra.mrb[0].mxu0 %v3704
    %v4389 = vpop.f32.mrb[0].mxu0
    %v4390 = vadd.f32 %v3347, %v4389
    %v4391 = vpop.f32.mrb[0].mxu0
    %4392 = vmatprep.mubr.f32.mxu0 0.0
    %4393 = vmatmul.mubr.f32.gmra.mrb[0].mxu0 %v3707
    %v4394 = vpop.f32.mrb[0].mxu0
    %v4395 = vadd.f32 %v3347, %v4394
    %v4396 = vpop.f32.mrb[0].mxu0
    %4397 = vmatprep.mubr.f32.mxu0 0.0
    %4398 = vmatmul.mubr.f32.gmra.mrb[0].mxu0 %v3710
    %v4399 = vpop.f32.mrb[0].mxu0
    %v4400 = vadd.f32 %v3347, %v4399
    %v4401 = vpop.f32.mrb[0].mxu0
    %4402 = vmatprep.mubr.f32.mxu0 0.0
    %4403 = vmatmul.mubr.f32.gmra.mrb[0].mxu0 %v3713
    %v4404 = vpop.f32.mrb[0].mxu0
    %v4405 = vadd.f32 %v3347, %v4404
    %v4406 = vpop.f32.mrb[0].mxu0
    %4407 = vmatprep.mubr.f32.mxu0 0.0
    %4408 = vmatmul.mubr.f32.gmra.mrb[0].mxu0 %v3716
    %v4409 = vpop.f32.mrb[0].mxu0
    %v4410 = vadd.f32 %v3347, %v4409
    %v4411 = vpop.f32.mrb[0].mxu0
    %4412 = vmatprep.mubr.f32.mxu0 0.0
    %4413 = vmatmul.mubr.f32.gmra.mrb[0].mxu0 %v3719
    %v4414 = vpop.f32.mrb[0].mxu0
    %v4415 = vadd.f32 %v3347, %v4414
    %v4416 = vpop.f32.mrb[0].mxu0
    %4417 = vmatprep.mubr.f32.mxu0 0.0
    %4418 = vmatmul.mubr.f32.gmra.mrb[0].mxu0 %v3722
    %v4419 = vpop.f32.mrb[0].mxu0
    %v4420 = vadd.f32 %v3347, %v4419
    %v4421 = vpop.f32.mrb[0].mxu0
    %4422 = vmatprep.mubr.f32.mxu0 0.0
    %4423 = vmatmul.mubr.f32.gmra.mrb[0].mxu0 %v3725
    %v4424 = vpop.f32.mrb[0].mxu0
    %v4425 = vadd.f32 %v3347, %v4424
    %v4426 = vpop.f32.mrb[0].mxu0
    %4427 = vmatprep.mubr.f32.mxu0 0.0
    %4428 = vmatmul.mubr.f32.gmra.mrb[0].mxu0 %v3728
    %v4429 = vpop.f32.mrb[0].mxu0
    %v4430 = vadd.f32 %v3347, %v4429
    %v4431 = vpop.f32.mrb[0].mxu0
    %4432 = vmatprep.mubr.f32.mxu0 0.0
    %4433 = vmatmul.mubr.f32.gmra.mrb[0].mxu0 %v3731
    %v4434 = vpop.f32.mrb[0].mxu0
    %v4435 = vadd.f32 %v3347, %v4434
    %v4436 = vpop.f32.mrb[0].mxu0
    %4437 = vdwg.mxu0
    %v4438 = vld [vmem:[%s3] sm:$0xff]
    %v4439 = vld [vmem:[%s3 + $0x8] sm:$0xff]
    %v4440 = vld [vmem:[%s3 + $0x10] sm:$0xff]
    %v4441 = vld [vmem:[%s3 + $0x18] sm:$0xff]
    %v4442 = vld [vmem:[%s3 + $0x20] sm:$0xff]
    %v4443 = vld [vmem:[%s3 + $0x28] sm:$0xff]
    %v4444 = vld [vmem:[%s3 + $0x30] sm:$0xff]
    %v4445 = vld [vmem:[%s3 + $0x38] sm:$0xff]
    %v4446 = vlaneseq
    %v4447 = vshrl.u32 %v4446, 7
    %v4448 = vsub.s32 0, %v4447
    %v4449 = vrot.slane %v4438, %v4448
    %4451 = vbcast.lane.b32.xlu0 %v4449, 256
    %v4452 = vpop.permute.xlu0 %4451
    %s4454 = sor.u32 256, 8
    %4455 = vbcast.lane.b32.xlu0 %v4449, %s4454
    %v4456 = vpop.permute.xlu0 %4455
    %v4457 = vlaneseq
    %v4458 = vshrl.u32 %v4457, 7
    %v4459 = vsub.s32 1, %v4458
    %v4460 = vrot.slane %v4438, %v4459
    %4462 = vbcast.lane.b32.xlu0 %v4460, 256
    %v4463 = vpop.permute.xlu0 %4462
    %s4465 = sor.u32 256, 8
    %4466 = vbcast.lane.b32.xlu0 %v4460, %s4465
    %v4467 = vpop.permute.xlu0 %4466
    %v4468 = vlaneseq
    %v4469 = vshrl.u32 %v4468, 7
    %v4470 = vsub.s32 2, %v4469
    %v4471 = vrot.slane %v4438, %v4470
    %4473 = vbcast.lane.b32.xlu0 %v4471, 256
    %v4474 = vpop.permute.xlu0 %4473
    %s4476 = sor.u32 256, 8
    %4477 = vbcast.lane.b32.xlu0 %v4471, %s4476
    %v4478 = vpop.permute.xlu0 %4477
    %v4479 = vlaneseq
    %v4480 = vshrl.u32 %v4479, 7
    %v4481 = vsub.s32 3, %v4480
    %v4482 = vrot.slane %v4438, %v4481
    %4484 = vbcast.lane.b32.xlu0 %v4482, 256
    %v4485 = vpop.permute.xlu0 %4484
    %s4487 = sor.u32 256, 8
    %4488 = vbcast.lane.b32.xlu0 %v4482, %s4487
    %v4489 = vpop.permute.xlu0 %4488
    %v4490 = vlaneseq
    %v4491 = vshrl.u32 %v4490, 7
    %v4492 = vsub.s32 4, %v4491
    %v4493 = vrot.slane %v4438, %v4492
    %4495 = vbcast.lane.b32.xlu0 %v4493, 256
    %v4496 = vpop.permute.xlu0 %4495
    %s4498 = sor.u32 256, 8
    %4499 = vbcast.lane.b32.xlu0 %v4493, %s4498
    %v4500 = vpop.permute.xlu0 %4499
    %v4501 = vlaneseq
    %v4502 = vshrl.u32 %v4501, 7
    %v4503 = vsub.s32 5, %v4502
    %v4504 = vrot.slane %v4438, %v4503
    %4506 = vbcast.lane.b32.xlu0 %v4504, 256
    %v4507 = vpop.permute.xlu0 %4506
    %s4509 = sor.u32 256, 8
    %4510 = vbcast.lane.b32.xlu0 %v4504, %s4509
    %v4511 = vpop.permute.xlu0 %4510
    %v4512 = vlaneseq
    %v4513 = vshrl.u32 %v4512, 7
    %v4514 = vsub.s32 6, %v4513
    %v4515 = vrot.slane %v4438, %v4514
    %4517 = vbcast.lane.b32.xlu0 %v4515, 256
    %v4518 = vpop.permute.xlu0 %4517
    %s4520 = sor.u32 256, 8
    %4521 = vbcast.lane.b32.xlu0 %v4515, %s4520
    %v4522 = vpop.permute.xlu0 %4521
    %v4523 = vlaneseq
    %v4524 = vshrl.u32 %v4523, 7
    %v4525 = vsub.s32 7, %v4524
    %v4526 = vrot.slane %v4438, %v4525
    %4528 = vbcast.lane.b32.xlu0 %v4526, 256
    %v4529 = vpop.permute.xlu0 %4528
    %s4531 = sor.u32 256, 8
    %4532 = vbcast.lane.b32.xlu0 %v4526, %s4531
    %v4533 = vpop.permute.xlu0 %4532
    %v4534 = vlaneseq
    %v4535 = vshrl.u32 %v4534, 7
    %v4536 = vsub.s32 0, %v4535
    %v4537 = vrot.slane %v4439, %v4536
    %4539 = vbcast.lane.b32.xlu0 %v4537, 256
    %v4540 = vpop.permute.xlu0 %4539
    %s4542 = sor.u32 256, 8
    %4543 = vbcast.lane.b32.xlu0 %v4537, %s4542
    %v4544 = vpop.permute.xlu0 %4543
    %v4545 = vlaneseq
    %v4546 = vshrl.u32 %v4545, 7
    %v4547 = vsub.s32 1, %v4546
    %v4548 = vrot.slane %v4439, %v4547
    %4550 = vbcast.lane.b32.xlu0 %v4548, 256
    %v4551 = vpop.permute.xlu0 %4550
    %s4553 = sor.u32 256, 8
    %4554 = vbcast.lane.b32.xlu0 %v4548, %s4553
    %v4555 = vpop.permute.xlu0 %4554
    %v4556 = vlaneseq
    %v4557 = vshrl.u32 %v4556, 7
    %v4558 = vsub.s32 2, %v4557
    %v4559 = vrot.slane %v4439, %v4558
    %4561 = vbcast.lane.b32.xlu0 %v4559, 256
    %v4562 = vpop.permute.xlu0 %4561
    %s4564 = sor.u32 256, 8
    %4565 = vbcast.lane.b32.xlu0 %v4559, %s4564
    %v4566 = vpop.permute.xlu0 %4565
    %v4567 = vlaneseq
    %v4568 = vshrl.u32 %v4567, 7
    %v4569 = vsub.s32 3, %v4568
    %v4570 = vrot.slane %v4439, %v4569
    %4572 = vbcast.lane.b32.xlu0 %v4570, 256
    %v4573 = vpop.permute.xlu0 %4572
    %s4575 = sor.u32 256, 8
    %4576 = vbcast.lane.b32.xlu0 %v4570, %s4575
    %v4577 = vpop.permute.xlu0 %4576
    %v4578 = vlaneseq
    %v4579 = vshrl.u32 %v4578, 7
    %v4580 = vsub.s32 4, %v4579
    %v4581 = vrot.slane %v4439, %v4580
    %4583 = vbcast.lane.b32.xlu0 %v4581, 256
    %v4584 = vpop.permute.xlu0 %4583
    %s4586 = sor.u32 256, 8
    %4587 = vbcast.lane.b32.xlu0 %v4581, %s4586
    %v4588 = vpop.permute.xlu0 %4587
    %v4589 = vlaneseq
    %v4590 = vshrl.u32 %v4589, 7
    %v4591 = vsub.s32 5, %v4590
    %v4592 = vrot.slane %v4439, %v4591
    %4594 = vbcast.lane.b32.xlu0 %v4592, 256
    %v4595 = vpop.permute.xlu0 %4594
    %s4597 = sor.u32 256, 8
    %4598 = vbcast.lane.b32.xlu0 %v4592, %s4597
    %v4599 = vpop.permute.xlu0 %4598
    %v4600 = vlaneseq
    %v4601 = vshrl.u32 %v4600, 7
    %v4602 = vsub.s32 6, %v4601
    %v4603 = vrot.slane %v4439, %v4602
    %4605 = vbcast.lane.b32.xlu0 %v4603, 256
    %v4606 = vpop.permute.xlu0 %4605
    %s4608 = sor.u32 256, 8
    %4609 = vbcast.lane.b32.xlu0 %v4603, %s4608
    %v4610 = vpop.permute.xlu0 %4609
    %v4611 = vlaneseq
    %v4612 = vshrl.u32 %v4611, 7
    %v4613 = vsub.s32 7, %v4612
    %v4614 = vrot.slane %v4439, %v4613
    %4616 = vbcast.lane.b32.xlu0 %v4614, 256
    %v4617 = vpop.permute.xlu0 %4616
    %s4619 = sor.u32 256, 8
    %4620 = vbcast.lane.b32.xlu0 %v4614, %s4619
    %v4621 = vpop.permute.xlu0 %4620
    %v4622 = vlaneseq
    %v4623 = vshrl.u32 %v4622, 7
    %v4624 = vsub.s32 0, %v4623
    %v4625 = vrot.slane %v4440, %v4624
    %4627 = vbcast.lane.b32.xlu0 %v4625, 256
    %v4628 = vpop.permute.xlu0 %4627
    %s4630 = sor.u32 256, 8
    %4631 = vbcast.lane.b32.xlu0 %v4625, %s4630
    %v4632 = vpop.permute.xlu0 %4631
    %v4633 = vlaneseq
    %v4634 = vshrl.u32 %v4633, 7
    %v4635 = vsub.s32 1, %v4634
    %v4636 = vrot.slane %v4440, %v4635
    %4638 = vbcast.lane.b32.xlu0 %v4636, 256
    %v4639 = vpop.permute.xlu0 %4638
    %s4641 = sor.u32 256, 8
    %4642 = vbcast.lane.b32.xlu0 %v4636, %s4641
    %v4643 = vpop.permute.xlu0 %4642
    %v4644 = vlaneseq
    %v4645 = vshrl.u32 %v4644, 7
    %v4646 = vsub.s32 2, %v4645
    %v4647 = vrot.slane %v4440, %v4646
    %4649 = vbcast.lane.b32.xlu0 %v4647, 256
    %v4650 = vpop.permute.xlu0 %4649
    %s4652 = sor.u32 256, 8
    %4653 = vbcast.lane.b32.xlu0 %v4647, %s4652
    %v4654 = vpop.permute.xlu0 %4653
    %v4655 = vlaneseq
    %v4656 = vshrl.u32 %v4655, 7
    %v4657 = vsub.s32 3, %v4656
    %v4658 = vrot.slane %v4440, %v4657
    %4660 = vbcast.lane.b32.xlu0 %v4658, 256
    %v4661 = vpop.permute.xlu0 %4660
    %s4663 = sor.u32 256, 8
    %4664 = vbcast.lane.b32.xlu0 %v4658, %s4663
    %v4665 = vpop.permute.xlu0 %4664
    %v4666 = vlaneseq
    %v4667 = vshrl.u32 %v4666, 7
    %v4668 = vsub.s32 4, %v4667
    %v4669 = vrot.slane %v4440, %v4668
    %4671 = vbcast.lane.b32.xlu0 %v4669, 256
    %v4672 = vpop.permute.xlu0 %4671
    %s4674 = sor.u32 256, 8
    %4675 = vbcast.lane.b32.xlu0 %v4669, %s4674
    %v4676 = vpop.permute.xlu0 %4675
    %v4677 = vlaneseq
    %v4678 = vshrl.u32 %v4677, 7
    %v4679 = vsub.s32 5, %v4678
    %v4680 = vrot.slane %v4440, %v4679
    %4682 = vbcast.lane.b32.xlu0 %v4680, 256
    %v4683 = vpop.permute.xlu0 %4682
    %s4685 = sor.u32 256, 8
    %4686 = vbcast.lane.b32.xlu0 %v4680, %s4685
    %v4687 = vpop.permute.xlu0 %4686
    %v4688 = vlaneseq
    %v4689 = vshrl.u32 %v4688, 7
    %v4690 = vsub.s32 6, %v4689
    %v4691 = vrot.slane %v4440, %v4690
    %4693 = vbcast.lane.b32.xlu0 %v4691, 256
    %v4694 = vpop.permute.xlu0 %4693
    %s4696 = sor.u32 256, 8
    %4697 = vbcast.lane.b32.xlu0 %v4691, %s4696
    %v4698 = vpop.permute.xlu0 %4697
    %v4699 = vlaneseq
    %v4700 = vshrl.u32 %v4699, 7
    %v4701 = vsub.s32 7, %v4700
    %v4702 = vrot.slane %v4440, %v4701
    %4704 = vbcast.lane.b32.xlu0 %v4702, 256
    %v4705 = vpop.permute.xlu0 %4704
    %s4707 = sor.u32 256, 8
    %4708 = vbcast.lane.b32.xlu0 %v4702, %s4707
    %v4709 = vpop.permute.xlu0 %4708
    %v4710 = vlaneseq
    %v4711 = vshrl.u32 %v4710, 7
    %v4712 = vsub.s32 0, %v4711
    %v4713 = vrot.slane %v4441, %v4712
    %4715 = vbcast.lane.b32.xlu0 %v4713, 256
    %v4716 = vpop.permute.xlu0 %4715
    %s4718 = sor.u32 256, 8
    %4719 = vbcast.lane.b32.xlu0 %v4713, %s4718
    %v4720 = vpop.permute.xlu0 %4719
    %v4721 = vlaneseq
    %v4722 = vshrl.u32 %v4721, 7
    %v4723 = vsub.s32 1, %v4722
    %v4724 = vrot.slane %v4441, %v4723
    %4726 = vbcast.lane.b32.xlu0 %v4724, 256
    %v4727 = vpop.permute.xlu0 %4726
    %s4729 = sor.u32 256, 8
    %4730 = vbcast.lane.b32.xlu0 %v4724, %s4729
    %v4731 = vpop.permute.xlu0 %4730
    %v4732 = vlaneseq
    %v4733 = vshrl.u32 %v4732, 7
    %v4734 = vsub.s32 2, %v4733
    %v4735 = vrot.slane %v4441, %v4734
    %4737 = vbcast.lane.b32.xlu0 %v4735, 256
    %v4738 = vpop.permute.xlu0 %4737
    %s4740 = sor.u32 256, 8
    %4741 = vbcast.lane.b32.xlu0 %v4735, %s4740
    %v4742 = vpop.permute.xlu0 %4741
    %v4743 = vlaneseq
    %v4744 = vshrl.u32 %v4743, 7
    %v4745 = vsub.s32 3, %v4744
    %v4746 = vrot.slane %v4441, %v4745
    %4748 = vbcast.lane.b32.xlu0 %v4746, 256
    %v4749 = vpop.permute.xlu0 %4748
    %s4751 = sor.u32 256, 8
    %4752 = vbcast.lane.b32.xlu0 %v4746, %s4751
    %v4753 = vpop.permute.xlu0 %4752
    %v4754 = vlaneseq
    %v4755 = vshrl.u32 %v4754, 7
    %v4756 = vsub.s32 4, %v4755
    %v4757 = vrot.slane %v4441, %v4756
    %4759 = vbcast.lane.b32.xlu0 %v4757, 256
    %v4760 = vpop.permute.xlu0 %4759
    %s4762 = sor.u32 256, 8
    %4763 = vbcast.lane.b32.xlu0 %v4757, %s4762
    %v4764 = vpop.permute.xlu0 %4763
    %v4765 = vlaneseq
    %v4766 = vshrl.u32 %v4765, 7
    %v4767 = vsub.s32 5, %v4766
    %v4768 = vrot.slane %v4441, %v4767
    %4770 = vbcast.lane.b32.xlu0 %v4768, 256
    %v4771 = vpop.permute.xlu0 %4770
    %s4773 = sor.u32 256, 8
    %4774 = vbcast.lane.b32.xlu0 %v4768, %s4773
    %v4775 = vpop.permute.xlu0 %4774
    %v4776 = vlaneseq
    %v4777 = vshrl.u32 %v4776, 7
    %v4778 = vsub.s32 6, %v4777
    %v4779 = vrot.slane %v4441, %v4778
    %4781 = vbcast.lane.b32.xlu0 %v4779, 256
    %v4782 = vpop.permute.xlu0 %4781
    %s4784 = sor.u32 256, 8
    %4785 = vbcast.lane.b32.xlu0 %v4779, %s4784
    %v4786 = vpop.permute.xlu0 %4785
    %v4787 = vlaneseq
    %v4788 = vshrl.u32 %v4787, 7
    %v4789 = vsub.s32 7, %v4788
    %v4790 = vrot.slane %v4441, %v4789
    %4792 = vbcast.lane.b32.xlu0 %v4790, 256
    %v4793 = vpop.permute.xlu0 %4792
    %s4795 = sor.u32 256, 8
    %4796 = vbcast.lane.b32.xlu0 %v4790, %s4795
    %v4797 = vpop.permute.xlu0 %4796
    %v4798 = vlaneseq
    %v4799 = vshrl.u32 %v4798, 7
    %v4800 = vsub.s32 0, %v4799
    %v4801 = vrot.slane %v4442, %v4800
    %4803 = vbcast.lane.b32.xlu0 %v4801, 256
    %v4804 = vpop.permute.xlu0 %4803
    %s4806 = sor.u32 256, 8
    %4807 = vbcast.lane.b32.xlu0 %v4801, %s4806
    %v4808 = vpop.permute.xlu0 %4807
    %v4809 = vlaneseq
    %v4810 = vshrl.u32 %v4809, 7
    %v4811 = vsub.s32 1, %v4810
    %v4812 = vrot.slane %v4442, %v4811
    %4814 = vbcast.lane.b32.xlu0 %v4812, 256
    %v4815 = vpop.permute.xlu0 %4814
    %s4817 = sor.u32 256, 8
    %4818 = vbcast.lane.b32.xlu0 %v4812, %s4817
    %v4819 = vpop.permute.xlu0 %4818
    %v4820 = vlaneseq
    %v4821 = vshrl.u32 %v4820, 7
    %v4822 = vsub.s32 2, %v4821
    %v4823 = vrot.slane %v4442, %v4822
    %4825 = vbcast.lane.b32.xlu0 %v4823, 256
    %v4826 = vpop.permute.xlu0 %4825
    %s4828 = sor.u32 256, 8
    %4829 = vbcast.lane.b32.xlu0 %v4823, %s4828
    %v4830 = vpop.permute.xlu0 %4829
    %v4831 = vlaneseq
    %v4832 = vshrl.u32 %v4831, 7
    %v4833 = vsub.s32 3, %v4832
    %v4834 = vrot.slane %v4442, %v4833
    %4836 = vbcast.lane.b32.xlu0 %v4834, 256
    %v4837 = vpop.permute.xlu0 %4836
    %s4839 = sor.u32 256, 8
    %4840 = vbcast.lane.b32.xlu0 %v4834, %s4839
    %v4841 = vpop.permute.xlu0 %4840
    %v4842 = vlaneseq
    %v4843 = vshrl.u32 %v4842, 7
    %v4844 = vsub.s32 4, %v4843
    %v4845 = vrot.slane %v4442, %v4844
    %4847 = vbcast.lane.b32.xlu0 %v4845, 256
    %v4848 = vpop.permute.xlu0 %4847
    %s4850 = sor.u32 256, 8
    %4851 = vbcast.lane.b32.xlu0 %v4845, %s4850
    %v4852 = vpop.permute.xlu0 %4851
    %v4853 = vlaneseq
    %v4854 = vshrl.u32 %v4853, 7
    %v4855 = vsub.s32 5, %v4854
    %v4856 = vrot.slane %v4442, %v4855
    %4858 = vbcast.lane.b32.xlu0 %v4856, 256
    %v4859 = vpop.permute.xlu0 %4858
    %s4861 = sor.u32 256, 8
    %4862 = vbcast.lane.b32.xlu0 %v4856, %s4861
    %v4863 = vpop.permute.xlu0 %4862
    %v4864 = vlaneseq
    %v4865 = vshrl.u32 %v4864, 7
    %v4866 = vsub.s32 6, %v4865
    %v4867 = vrot.slane %v4442, %v4866
    %4869 = vbcast.lane.b32.xlu0 %v4867, 256
    %v4870 = vpop.permute.xlu0 %4869
    %s4872 = sor.u32 256, 8
    %4873 = vbcast.lane.b32.xlu0 %v4867, %s4872
    %v4874 = vpop.permute.xlu0 %4873
    %v4875 = vlaneseq
    %v4876 = vshrl.u32 %v4875, 7
    %v4877 = vsub.s32 7, %v4876
    %v4878 = vrot.slane %v4442, %v4877
    %4880 = vbcast.lane.b32.xlu0 %v4878, 256
    %v4881 = vpop.permute.xlu0 %4880
    %s4883 = sor.u32 256, 8
    %4884 = vbcast.lane.b32.xlu0 %v4878, %s4883
    %v4885 = vpop.permute.xlu0 %4884
    %v4886 = vlaneseq
    %v4887 = vshrl.u32 %v4886, 7
    %v4888 = vsub.s32 0, %v4887
    %v4889 = vrot.slane %v4443, %v4888
    %4891 = vbcast.lane.b32.xlu0 %v4889, 256
    %v4892 = vpop.permute.xlu0 %4891
    %s4894 = sor.u32 256, 8
    %4895 = vbcast.lane.b32.xlu0 %v4889, %s4894
    %v4896 = vpop.permute.xlu0 %4895
    %v4897 = vlaneseq
    %v4898 = vshrl.u32 %v4897, 7
    %v4899 = vsub.s32 1, %v4898
    %v4900 = vrot.slane %v4443, %v4899
    %4902 = vbcast.lane.b32.xlu0 %v4900, 256
    %v4903 = vpop.permute.xlu0 %4902
    %s4905 = sor.u32 256, 8
    %4906 = vbcast.lane.b32.xlu0 %v4900, %s4905
    %v4907 = vpop.permute.xlu0 %4906
    %v4908 = vlaneseq
    %v4909 = vshrl.u32 %v4908, 7
    %v4910 = vsub.s32 2, %v4909
    %v4911 = vrot.slane %v4443, %v4910
    %4913 = vbcast.lane.b32.xlu0 %v4911, 256
    %v4914 = vpop.permute.xlu0 %4913
    %s4916 = sor.u32 256, 8
    %4917 = vbcast.lane.b32.xlu0 %v4911, %s4916
    %v4918 = vpop.permute.xlu0 %4917
    %v4919 = vlaneseq
    %v4920 = vshrl.u32 %v4919, 7
    %v4921 = vsub.s32 3, %v4920
    %v4922 = vrot.slane %v4443, %v4921
    %4924 = vbcast.lane.b32.xlu0 %v4922, 256
    %v4925 = vpop.permute.xlu0 %4924
    %s4927 = sor.u32 256, 8
    %4928 = vbcast.lane.b32.xlu0 %v4922, %s4927
    %v4929 = vpop.permute.xlu0 %4928
    %v4930 = vlaneseq
    %v4931 = vshrl.u32 %v4930, 7
    %v4932 = vsub.s32 4, %v4931
    %v4933 = vrot.slane %v4443, %v4932
    %4935 = vbcast.lane.b32.xlu0 %v4933, 256
    %v4936 = vpop.permute.xlu0 %4935
    %s4938 = sor.u32 256, 8
    %4939 = vbcast.lane.b32.xlu0 %v4933, %s4938
    %v4940 = vpop.permute.xlu0 %4939
    %v4941 = vlaneseq
    %v4942 = vshrl.u32 %v4941, 7
    %v4943 = vsub.s32 5, %v4942
    %v4944 = vrot.slane %v4443, %v4943
    %4946 = vbcast.lane.b32.xlu0 %v4944, 256
    %v4947 = vpop.permute.xlu0 %4946
    %s4949 = sor.u32 256, 8
    %4950 = vbcast.lane.b32.xlu0 %v4944, %s4949
    %v4951 = vpop.permute.xlu0 %4950
    %v4952 = vlaneseq
    %v4953 = vshrl.u32 %v4952, 7
    %v4954 = vsub.s32 6, %v4953
    %v4955 = vrot.slane %v4443, %v4954
    %4957 = vbcast.lane.b32.xlu0 %v4955, 256
    %v4958 = vpop.permute.xlu0 %4957
    %s4960 = sor.u32 256, 8
    %4961 = vbcast.lane.b32.xlu0 %v4955, %s4960
    %v4962 = vpop.permute.xlu0 %4961
    %v4963 = vlaneseq
    %v4964 = vshrl.u32 %v4963, 7
    %v4965 = vsub.s32 7, %v4964
    %v4966 = vrot.slane %v4443, %v4965
    %4968 = vbcast.lane.b32.xlu0 %v4966, 256
    %v4969 = vpop.permute.xlu0 %4968
    %s4971 = sor.u32 256, 8
    %4972 = vbcast.lane.b32.xlu0 %v4966, %s4971
    %v4973 = vpop.permute.xlu0 %4972
    %v4974 = vlaneseq
    %v4975 = vshrl.u32 %v4974, 7
    %v4976 = vsub.s32 0, %v4975
    %v4977 = vrot.slane %v4444, %v4976
    %4979 = vbcast.lane.b32.xlu0 %v4977, 256
    %v4980 = vpop.permute.xlu0 %4979
    %s4982 = sor.u32 256, 8
    %4983 = vbcast.lane.b32.xlu0 %v4977, %s4982
    %v4984 = vpop.permute.xlu0 %4983
    %v4985 = vlaneseq
    %v4986 = vshrl.u32 %v4985, 7
    %v4987 = vsub.s32 1, %v4986
    %v4988 = vrot.slane %v4444, %v4987
    %4990 = vbcast.lane.b32.xlu0 %v4988, 256
    %v4991 = vpop.permute.xlu0 %4990
    %s4993 = sor.u32 256, 8
    %4994 = vbcast.lane.b32.xlu0 %v4988, %s4993
    %v4995 = vpop.permute.xlu0 %4994
    %v4996 = vlaneseq
    %v4997 = vshrl.u32 %v4996, 7
    %v4998 = vsub.s32 2, %v4997
    %v4999 = vrot.slane %v4444, %v4998
    %5001 = vbcast.lane.b32.xlu0 %v4999, 256
    %v5002 = vpop.permute.xlu0 %5001
    %s5004 = sor.u32 256, 8
    %5005 = vbcast.lane.b32.xlu0 %v4999, %s5004
    %v5006 = vpop.permute.xlu0 %5005
    %v5007 = vlaneseq
    %v5008 = vshrl.u32 %v5007, 7
    %v5009 = vsub.s32 3, %v5008
    %v5010 = vrot.slane %v4444, %v5009
    %5012 = vbcast.lane.b32.xlu0 %v5010, 256
    %v5013 = vpop.permute.xlu0 %5012
    %s5015 = sor.u32 256, 8
    %5016 = vbcast.lane.b32.xlu0 %v5010, %s5015
    %v5017 = vpop.permute.xlu0 %5016
    %v5018 = vlaneseq
    %v5019 = vshrl.u32 %v5018, 7
    %v5020 = vsub.s32 4, %v5019
    %v5021 = vrot.slane %v4444, %v5020
    %5023 = vbcast.lane.b32.xlu0 %v5021, 256
    %v5024 = vpop.permute.xlu0 %5023
    %s5026 = sor.u32 256, 8
    %5027 = vbcast.lane.b32.xlu0 %v5021, %s5026
    %v5028 = vpop.permute.xlu0 %5027
    %v5029 = vlaneseq
    %v5030 = vshrl.u32 %v5029, 7
    %v5031 = vsub.s32 5, %v5030
    %v5032 = vrot.slane %v4444, %v5031
    %5034 = vbcast.lane.b32.xlu0 %v5032, 256
    %v5035 = vpop.permute.xlu0 %5034
    %s5037 = sor.u32 256, 8
    %5038 = vbcast.lane.b32.xlu0 %v5032, %s5037
    %v5039 = vpop.permute.xlu0 %5038
    %v5040 = vlaneseq
    %v5041 = vshrl.u32 %v5040, 7
    %v5042 = vsub.s32 6, %v5041
    %v5043 = vrot.slane %v4444, %v5042
    %5045 = vbcast.lane.b32.xlu0 %v5043, 256
    %v5046 = vpop.permute.xlu0 %5045
    %s5048 = sor.u32 256, 8
    %5049 = vbcast.lane.b32.xlu0 %v5043, %s5048
    %v5050 = vpop.permute.xlu0 %5049
    %v5051 = vlaneseq
    %v5052 = vshrl.u32 %v5051, 7
    %v5053 = vsub.s32 7, %v5052
    %v5054 = vrot.slane %v4444, %v5053
    %5056 = vbcast.lane.b32.xlu0 %v5054, 256
    %v5057 = vpop.permute.xlu0 %5056
    %s5059 = sor.u32 256, 8
    %5060 = vbcast.lane.b32.xlu0 %v5054, %s5059
    %v5061 = vpop.permute.xlu0 %5060
    %v5062 = vlaneseq
    %v5063 = vshrl.u32 %v5062, 7
    %v5064 = vsub.s32 0, %v5063
    %v5065 = vrot.slane %v4445, %v5064
    %5067 = vbcast.lane.b32.xlu0 %v5065, 256
    %v5068 = vpop.permute.xlu0 %5067
    %s5070 = sor.u32 256, 8
    %5071 = vbcast.lane.b32.xlu0 %v5065, %s5070
    %v5072 = vpop.permute.xlu0 %5071
    %v5073 = vlaneseq
    %v5074 = vshrl.u32 %v5073, 7
    %v5075 = vsub.s32 1, %v5074
    %v5076 = vrot.slane %v4445, %v5075
    %5078 = vbcast.lane.b32.xlu0 %v5076, 256
    %v5079 = vpop.permute.xlu0 %5078
    %s5081 = sor.u32 256, 8
    %5082 = vbcast.lane.b32.xlu0 %v5076, %s5081
    %v5083 = vpop.permute.xlu0 %5082
    %v5084 = vlaneseq
    %v5085 = vshrl.u32 %v5084, 7
    %v5086 = vsub.s32 2, %v5085
    %v5087 = vrot.slane %v4445, %v5086
    %5089 = vbcast.lane.b32.xlu0 %v5087, 256
    %v5090 = vpop.permute.xlu0 %5089
    %s5092 = sor.u32 256, 8
    %5093 = vbcast.lane.b32.xlu0 %v5087, %s5092
    %v5094 = vpop.permute.xlu0 %5093
    %v5095 = vlaneseq
    %v5096 = vshrl.u32 %v5095, 7
    %v5097 = vsub.s32 3, %v5096
    %v5098 = vrot.slane %v4445, %v5097
    %5100 = vbcast.lane.b32.xlu0 %v5098, 256
    %v5101 = vpop.permute.xlu0 %5100
    %s5103 = sor.u32 256, 8
    %5104 = vbcast.lane.b32.xlu0 %v5098, %s5103
    %v5105 = vpop.permute.xlu0 %5104
    %v5106 = vlaneseq
    %v5107 = vshrl.u32 %v5106, 7
    %v5108 = vsub.s32 4, %v5107
    %v5109 = vrot.slane %v4445, %v5108
    %5111 = vbcast.lane.b32.xlu0 %v5109, 256
    %v5112 = vpop.permute.xlu0 %5111
    %s5114 = sor.u32 256, 8
    %5115 = vbcast.lane.b32.xlu0 %v5109, %s5114
    %v5116 = vpop.permute.xlu0 %5115
    %v5117 = vlaneseq
    %v5118 = vshrl.u32 %v5117, 7
    %v5119 = vsub.s32 5, %v5118
    %v5120 = vrot.slane %v4445, %v5119
    %5122 = vbcast.lane.b32.xlu0 %v5120, 256
    %v5123 = vpop.permute.xlu0 %5122
    %s5125 = sor.u32 256, 8
    %5126 = vbcast.lane.b32.xlu0 %v5120, %s5125
    %v5127 = vpop.permute.xlu0 %5126
    %v5128 = vlaneseq
    %v5129 = vshrl.u32 %v5128, 7
    %v5130 = vsub.s32 6, %v5129
    %v5131 = vrot.slane %v4445, %v5130
    %5133 = vbcast.lane.b32.xlu0 %v5131, 256
    %v5134 = vpop.permute.xlu0 %5133
    %s5136 = sor.u32 256, 8
    %5137 = vbcast.lane.b32.xlu0 %v5131, %s5136
    %v5138 = vpop.permute.xlu0 %5137
    %v5139 = vlaneseq
    %v5140 = vshrl.u32 %v5139, 7
    %v5141 = vsub.s32 7, %v5140
    %v5142 = vrot.slane %v4445, %v5141
    %5144 = vbcast.lane.b32.xlu0 %v5142, 256
    %v5145 = vpop.permute.xlu0 %5144
    %s5147 = sor.u32 256, 8
    %5148 = vbcast.lane.b32.xlu0 %v5142, %s5147
    %v5149 = vpop.permute.xlu0 %5148
    %v5150 = vadd.f32 %v3800, %v4452
    %v5151 = vadd.f32 %v3805, %v4456
    %v5152 = vadd.f32 %v3810, %v4463
    %v5153 = vadd.f32 %v3815, %v4467
    %v5154 = vadd.f32 %v3820, %v4474
    %v5155 = vadd.f32 %v3825, %v4478
    %v5156 = vadd.f32 %v3830, %v4485
    %v5157 = vadd.f32 %v3835, %v4489
    %v5158 = vadd.f32 %v3840, %v4496
    %v5159 = vadd.f32 %v3845, %v4500
    %v5160 = vadd.f32 %v3850, %v4507
    %v5161 = vadd.f32 %v3855, %v4511
    %v5162 = vadd.f32 %v3860, %v4518
    %v5163 = vadd.f32 %v3865, %v4522
    %v5164 = vadd.f32 %v3870, %v4529
    %v5165 = vadd.f32 %v3875, %v4533
    %v5166 = vadd.f32 %v3880, %v4540
    %v5167 = vadd.f32 %v3885, %v4544
    %v5168 = vadd.f32 %v3890, %v4551
    %v5169 = vadd.f32 %v3895, %v4555
    %v5170 = vadd.f32 %v3900, %v4562
    %v5171 = vadd.f32 %v3905, %v4566
    %v5172 = vadd.f32 %v3910, %v4573
    %v5173 = vadd.f32 %v3915, %v4577
    %v5174 = vadd.f32 %v3920, %v4584
    %v5175 = vadd.f32 %v3925, %v4588
    %v5176 = vadd.f32 %v3930, %v4595
    %v5177 = vadd.f32 %v3935, %v4599
    %v5178 = vadd.f32 %v3940, %v4606
    %v5179 = vadd.f32 %v3945, %v4610
    %v5180 = vadd.f32 %v3950, %v4617
    %v5181 = vadd.f32 %v3955, %v4621
    %v5182 = vadd.f32 %v3960, %v4628
    %v5183 = vadd.f32 %v3965, %v4632
    %v5184 = vadd.f32 %v3970, %v4639
    %v5185 = vadd.f32 %v3975, %v4643
    %v5186 = vadd.f32 %v3980, %v4650
    %v5187 = vadd.f32 %v3985, %v4654
    %v5188 = vadd.f32 %v3990, %v4661
    %v5189 = vadd.f32 %v3995, %v4665
    %v5190 = vadd.f32 %v4000, %v4672
    %v5191 = vadd.f32 %v4005, %v4676
    %v5192 = vadd.f32 %v4010, %v4683
    %v5193 = vadd.f32 %v4015, %v4687
    %v5194 = vadd.f32 %v4020, %v4694
    %v5195 = vadd.f32 %v4025, %v4698
    %v5196 = vadd.f32 %v4030, %v4705
    %v5197 = vadd.f32 %v4035, %v4709
    %v5198 = vadd.f32 %v4040, %v4716
    %v5199 = vadd.f32 %v4045, %v4720
    %v5200 = vadd.f32 %v4050, %v4727
    %v5201 = vadd.f32 %v4055, %v4731
    %v5202 = vadd.f32 %v4060, %v4738
    %v5203 = vadd.f32 %v4065, %v4742
    %v5204 = vadd.f32 %v4070, %v4749
    %v5205 = vadd.f32 %v4075, %v4753
    %v5206 = vadd.f32 %v4080, %v4760
    %v5207 = vadd.f32 %v4085, %v4764
    %v5208 = vadd.f32 %v4090, %v4771
    %v5209 = vadd.f32 %v4095, %v4775
    %v5210 = vadd.f32 %v4100, %v4782
    %v5211 = vadd.f32 %v4105, %v4786
    %v5212 = vadd.f32 %v4110, %v4793
    %v5213 = vadd.f32 %v4115, %v4797
    %v5214 = vadd.f32 %v4120, %v4804
    %v5215 = vadd.f32 %v4125, %v4808
    %v5216 = vadd.f32 %v4130, %v4815
    %v5217 = vadd.f32 %v4135, %v4819
    %v5218 = vadd.f32 %v4140, %v4826
    %v5219 = vadd.f32 %v4145, %v4830
    %v5220 = vadd.f32 %v4150, %v4837
    %v5221 = vadd.f32 %v4155, %v4841
    %v5222 = vadd.f32 %v4160, %v4848
    %v5223 = vadd.f32 %v4165, %v4852
    %v5224 = vadd.f32 %v4170, %v4859
    %v5225 = vadd.f32 %v4175, %v4863
    %v5226 = vadd.f32 %v4180, %v4870
    %v5227 = vadd.f32 %v4185, %v4874
    %v5228 = vadd.f32 %v4190, %v4881
    %v5229 = vadd.f32 %v4195, %v4885
    %v5230 = vadd.f32 %v4200, %v4892
    %v5231 = vadd.f32 %v4205, %v4896
    %v5232 = vadd.f32 %v4210, %v4903
    %v5233 = vadd.f32 %v4215, %v4907
    %v5234 = vadd.f32 %v4220, %v4914
    %v5235 = vadd.f32 %v4225, %v4918
    %v5236 = vadd.f32 %v4230, %v4925
    %v5237 = vadd.f32 %v4235, %v4929
    %v5238 = vadd.f32 %v4240, %v4936
    %v5239 = vadd.f32 %v4245, %v4940
    %v5240 = vadd.f32 %v4250, %v4947
    %v5241 = vadd.f32 %v4255, %v4951
    %v5242 = vadd.f32 %v4260, %v4958
    %v5243 = vadd.f32 %v4265, %v4962
    %v5244 = vadd.f32 %v4270, %v4969
    %v5245 = vadd.f32 %v4275, %v4973
    %v5246 = vadd.f32 %v4280, %v4980
    %v5247 = vadd.f32 %v4285, %v4984
    %v5248 = vadd.f32 %v4290, %v4991
    %v5249 = vadd.f32 %v4295, %v4995
    %v5250 = vadd.f32 %v4300, %v5002
    %v5251 = vadd.f32 %v4305, %v5006
    %v5252 = vadd.f32 %v4310, %v5013
    %v5253 = vadd.f32 %v4315, %v5017
    %v5254 = vadd.f32 %v4320, %v5024
    %v5255 = vadd.f32 %v4325, %v5028
    %v5256 = vadd.f32 %v4330, %v5035
    %v5257 = vadd.f32 %v4335, %v5039
    %v5258 = vadd.f32 %v4340, %v5046
    %v5259 = vadd.f32 %v4345, %v5050
    %v5260 = vadd.f32 %v4350, %v5057
    %v5261 = vadd.f32 %v4355, %v5061
    %v5262 = vadd.f32 %v4360, %v5068
    %v5263 = vadd.f32 %v4365, %v5072
    %v5264 = vadd.f32 %v4370, %v5079
    %v5265 = vadd.f32 %v4375, %v5083
    %v5266 = vadd.f32 %v4380, %v5090
    %v5267 = vadd.f32 %v4385, %v5094
    %v5268 = vadd.f32 %v4390, %v5101
    %v5269 = vadd.f32 %v4395, %v5105
    %v5270 = vadd.f32 %v4400, %v5112
    %v5271 = vadd.f32 %v4405, %v5116
    %v5272 = vadd.f32 %v4410, %v5123
    %v5273 = vadd.f32 %v4415, %v5127
    %v5274 = vadd.f32 %v4420, %v5134
    %v5275 = vadd.f32 %v4425, %v5138
    %v5276 = vadd.f32 %v4430, %v5145
    %v5277 = vadd.f32 %v4435, %v5149
    %vm5278 = vcmask 261120
    %v5279 = vsel %vm5278, %v5150, -inf
    %v5280 = vsel %vm5278, %v5151, -inf
    %v5281 = vmax.f32 %v5279, %v5280
    %v5282 = vrot.slane %v5281, 4
    %v5283 = vmax.f32 %v5281, %v5282
    %v5284 = vrot.slane %v5283, 2
    %v5285 = vmax.f32 %v5283, %v5284
    %v5286 = vrot.slane %v5285, 1
    %v5287 = vmax.f32 %v5285, %v5286
    %v5288 = vsel %vm5278, %v5152, -inf
    %v5289 = vsel %vm5278, %v5153, -inf
    %v5290 = vmax.f32 %v5288, %v5289
    %v5291 = vrot.slane %v5290, 4
    %v5292 = vmax.f32 %v5290, %v5291
    %v5293 = vrot.slane %v5292, 2
    %v5294 = vmax.f32 %v5292, %v5293
    %v5295 = vrot.slane %v5294, 1
    %v5296 = vmax.f32 %v5294, %v5295
    %v5297 = vsel %vm5278, %v5154, -inf
    %v5298 = vsel %vm5278, %v5155, -inf
    %v5299 = vmax.f32 %v5297, %v5298
    %v5300 = vrot.slane %v5299, 4
    %v5301 = vmax.f32 %v5299, %v5300
    %v5302 = vrot.slane %v5301, 2
    %v5303 = vmax.f32 %v5301, %v5302
    %v5304 = vrot.slane %v5303, 1
    %v5305 = vmax.f32 %v5303, %v5304
    %v5306 = vsel %vm5278, %v5156, -inf
    %v5307 = vsel %vm5278, %v5157, -inf
    %v5308 = vmax.f32 %v5306, %v5307
    %v5309 = vrot.slane %v5308, 4
    %v5310 = vmax.f32 %v5308, %v5309
    %v5311 = vrot.slane %v5310, 2
    %v5312 = vmax.f32 %v5310, %v5311
    %v5313 = vrot.slane %v5312, 1
    %v5314 = vmax.f32 %v5312, %v5313
    %v5315 = vsel %vm5278, %v5158, -inf
    %v5316 = vsel %vm5278, %v5159, -inf
    %v5317 = vmax.f32 %v5315, %v5316
    %v5318 = vrot.slane %v5317, 4
    %v5319 = vmax.f32 %v5317, %v5318
    %v5320 = vrot.slane %v5319, 2
    %v5321 = vmax.f32 %v5319, %v5320
    %v5322 = vrot.slane %v5321, 1
    %v5323 = vmax.f32 %v5321, %v5322
    %v5324 = vsel %vm5278, %v5160, -inf
    %v5325 = vsel %vm5278, %v5161, -inf
    %v5326 = vmax.f32 %v5324, %v5325
    %v5327 = vrot.slane %v5326, 4
    %v5328 = vmax.f32 %v5326, %v5327
    %v5329 = vrot.slane %v5328, 2
    %v5330 = vmax.f32 %v5328, %v5329
    %v5331 = vrot.slane %v5330, 1
    %v5332 = vmax.f32 %v5330, %v5331
    %v5333 = vsel %vm5278, %v5162, -inf
    %v5334 = vsel %vm5278, %v5163, -inf
    %v5335 = vmax.f32 %v5333, %v5334
    %v5336 = vrot.slane %v5335, 4
    %v5337 = vmax.f32 %v5335, %v5336
    %v5338 = vrot.slane %v5337, 2
    %v5339 = vmax.f32 %v5337, %v5338
    %v5340 = vrot.slane %v5339, 1
    %v5341 = vmax.f32 %v5339, %v5340
    %v5342 = vsel %vm5278, %v5164, -inf
    %v5343 = vsel %vm5278, %v5165, -inf
    %v5344 = vmax.f32 %v5342, %v5343
    %v5345 = vrot.slane %v5344, 4
    %v5346 = vmax.f32 %v5344, %v5345
    %v5347 = vrot.slane %v5346, 2
    %v5348 = vmax.f32 %v5346, %v5347
    %v5349 = vrot.slane %v5348, 1
    %v5350 = vmax.f32 %v5348, %v5349
    %v5351 = vsel %vm5278, %v5166, -inf
    %v5352 = vsel %vm5278, %v5167, -inf
    %v5353 = vmax.f32 %v5351, %v5352
    %v5354 = vrot.slane %v5353, 4
    %v5355 = vmax.f32 %v5353, %v5354
    %v5356 = vrot.slane %v5355, 2
    %v5357 = vmax.f32 %v5355, %v5356
    %v5358 = vrot.slane %v5357, 1
    %v5359 = vmax.f32 %v5357, %v5358
    %v5360 = vsel %vm5278, %v5168, -inf
    %v5361 = vsel %vm5278, %v5169, -inf
    %v5362 = vmax.f32 %v5360, %v5361
    %v5363 = vrot.slane %v5362, 4
    %v5364 = vmax.f32 %v5362, %v5363
    %v5365 = vrot.slane %v5364, 2
    %v5366 = vmax.f32 %v5364, %v5365
    %v5367 = vrot.slane %v5366, 1
    %v5368 = vmax.f32 %v5366, %v5367
    %v5369 = vsel %vm5278, %v5170, -inf
    %v5370 = vsel %vm5278, %v5171, -inf
    %v5371 = vmax.f32 %v5369, %v5370
    %v5372 = vrot.slane %v5371, 4
    %v5373 = vmax.f32 %v5371, %v5372
    %v5374 = vrot.slane %v5373, 2
    %v5375 = vmax.f32 %v5373, %v5374
    %v5376 = vrot.slane %v5375, 1
    %v5377 = vmax.f32 %v5375, %v5376
    %v5378 = vsel %vm5278, %v5172, -inf
    %v5379 = vsel %vm5278, %v5173, -inf
    %v5380 = vmax.f32 %v5378, %v5379
    %v5381 = vrot.slane %v5380, 4
    %v5382 = vmax.f32 %v5380, %v5381
    %v5383 = vrot.slane %v5382, 2
    %v5384 = vmax.f32 %v5382, %v5383
    %v5385 = vrot.slane %v5384, 1
    %v5386 = vmax.f32 %v5384, %v5385
    %v5387 = vsel %vm5278, %v5174, -inf
    %v5388 = vsel %vm5278, %v5175, -inf
    %v5389 = vmax.f32 %v5387, %v5388
    %v5390 = vrot.slane %v5389, 4
    %v5391 = vmax.f32 %v5389, %v5390
    %v5392 = vrot.slane %v5391, 2
    %v5393 = vmax.f32 %v5391, %v5392
    %v5394 = vrot.slane %v5393, 1
    %v5395 = vmax.f32 %v5393, %v5394
    %v5396 = vsel %vm5278, %v5176, -inf
    %v5397 = vsel %vm5278, %v5177, -inf
    %v5398 = vmax.f32 %v5396, %v5397
    %v5399 = vrot.slane %v5398, 4
    %v5400 = vmax.f32 %v5398, %v5399
    %v5401 = vrot.slane %v5400, 2
    %v5402 = vmax.f32 %v5400, %v5401
    %v5403 = vrot.slane %v5402, 1
    %v5404 = vmax.f32 %v5402, %v5403
    %v5405 = vsel %vm5278, %v5178, -inf
    %v5406 = vsel %vm5278, %v5179, -inf
    %v5407 = vmax.f32 %v5405, %v5406
    %v5408 = vrot.slane %v5407, 4
    %v5409 = vmax.f32 %v5407, %v5408
    %v5410 = vrot.slane %v5409, 2
    %v5411 = vmax.f32 %v5409, %v5410
    %v5412 = vrot.slane %v5411, 1
    %v5413 = vmax.f32 %v5411, %v5412
    %v5414 = vsel %vm5278, %v5180, -inf
    %v5415 = vsel %vm5278, %v5181, -inf
    %v5416 = vmax.f32 %v5414, %v5415
    %v5417 = vrot.slane %v5416, 4
    %v5418 = vmax.f32 %v5416, %v5417
    %v5419 = vrot.slane %v5418, 2
    %v5420 = vmax.f32 %v5418, %v5419
    %v5421 = vrot.slane %v5420, 1
    %v5422 = vmax.f32 %v5420, %v5421
    %v5423 = vsel %vm5278, %v5182, -inf
    %v5424 = vsel %vm5278, %v5183, -inf
    %v5425 = vmax.f32 %v5423, %v5424
    %v5426 = vrot.slane %v5425, 4
    %v5427 = vmax.f32 %v5425, %v5426
    %v5428 = vrot.slane %v5427, 2
    %v5429 = vmax.f32 %v5427, %v5428
    %v5430 = vrot.slane %v5429, 1
    %v5431 = vmax.f32 %v5429, %v5430
    %v5432 = vsel %vm5278, %v5184, -inf
    %v5433 = vsel %vm5278, %v5185, -inf
    %v5434 = vmax.f32 %v5432, %v5433
    %v5435 = vrot.slane %v5434, 4
    %v5436 = vmax.f32 %v5434, %v5435
    %v5437 = vrot.slane %v5436, 2
    %v5438 = vmax.f32 %v5436, %v5437
    %v5439 = vrot.slane %v5438, 1
    %v5440 = vmax.f32 %v5438, %v5439
    %v5441 = vsel %vm5278, %v5186, -inf
    %v5442 = vsel %vm5278, %v5187, -inf
    %v5443 = vmax.f32 %v5441, %v5442
    %v5444 = vrot.slane %v5443, 4
    %v5445 = vmax.f32 %v5443, %v5444
    %v5446 = vrot.slane %v5445, 2
    %v5447 = vmax.f32 %v5445, %v5446
    %v5448 = vrot.slane %v5447, 1
    %v5449 = vmax.f32 %v5447, %v5448
    %v5450 = vsel %vm5278, %v5188, -inf
    %v5451 = vsel %vm5278, %v5189, -inf
    %v5452 = vmax.f32 %v5450, %v5451
    %v5453 = vrot.slane %v5452, 4
    %v5454 = vmax.f32 %v5452, %v5453
    %v5455 = vrot.slane %v5454, 2
    %v5456 = vmax.f32 %v5454, %v5455
    %v5457 = vrot.slane %v5456, 1
    %v5458 = vmax.f32 %v5456, %v5457
    %v5459 = vsel %vm5278, %v5190, -inf
    %v5460 = vsel %vm5278, %v5191, -inf
    %v5461 = vmax.f32 %v5459, %v5460
    %v5462 = vrot.slane %v5461, 4
    %v5463 = vmax.f32 %v5461, %v5462
    %v5464 = vrot.slane %v5463, 2
    %v5465 = vmax.f32 %v5463, %v5464
    %v5466 = vrot.slane %v5465, 1
    %v5467 = vmax.f32 %v5465, %v5466
    %v5468 = vsel %vm5278, %v5192, -inf
    %v5469 = vsel %vm5278, %v5193, -inf
    %v5470 = vmax.f32 %v5468, %v5469
    %v5471 = vrot.slane %v5470, 4
    %v5472 = vmax.f32 %v5470, %v5471
    %v5473 = vrot.slane %v5472, 2
    %v5474 = vmax.f32 %v5472, %v5473
    %v5475 = vrot.slane %v5474, 1
    %v5476 = vmax.f32 %v5474, %v5475
    %v5477 = vsel %vm5278, %v5194, -inf
    %v5478 = vsel %vm5278, %v5195, -inf
    %v5479 = vmax.f32 %v5477, %v5478
    %v5480 = vrot.slane %v5479, 4
    %v5481 = vmax.f32 %v5479, %v5480
    %v5482 = vrot.slane %v5481, 2
    %v5483 = vmax.f32 %v5481, %v5482
    %v5484 = vrot.slane %v5483, 1
    %v5485 = vmax.f32 %v5483, %v5484
    %v5486 = vsel %vm5278, %v5196, -inf
    %v5487 = vsel %vm5278, %v5197, -inf
    %v5488 = vmax.f32 %v5486, %v5487
    %v5489 = vrot.slane %v5488, 4
    %v5490 = vmax.f32 %v5488, %v5489
    %v5491 = vrot.slane %v5490, 2
    %v5492 = vmax.f32 %v5490, %v5491
    %v5493 = vrot.slane %v5492, 1
    %v5494 = vmax.f32 %v5492, %v5493
    %v5495 = vsel %vm5278, %v5198, -inf
    %v5496 = vsel %vm5278, %v5199, -inf
    %v5497 = vmax.f32 %v5495, %v5496
    %v5498 = vrot.slane %v5497, 4
    %v5499 = vmax.f32 %v5497, %v5498
    %v5500 = vrot.slane %v5499, 2
    %v5501 = vmax.f32 %v5499, %v5500
    %v5502 = vrot.slane %v5501, 1
    %v5503 = vmax.f32 %v5501, %v5502
    %v5504 = vsel %vm5278, %v5200, -inf
    %v5505 = vsel %vm5278, %v5201, -inf
    %v5506 = vmax.f32 %v5504, %v5505
    %v5507 = vrot.slane %v5506, 4
    %v5508 = vmax.f32 %v5506, %v5507
    %v5509 = vrot.slane %v5508, 2
    %v5510 = vmax.f32 %v5508, %v5509
    %v5511 = vrot.slane %v5510, 1
    %v5512 = vmax.f32 %v5510, %v5511
    %v5513 = vsel %vm5278, %v5202, -inf
    %v5514 = vsel %vm5278, %v5203, -inf
    %v5515 = vmax.f32 %v5513, %v5514
    %v5516 = vrot.slane %v5515, 4
    %v5517 = vmax.f32 %v5515, %v5516
    %v5518 = vrot.slane %v5517, 2
    %v5519 = vmax.f32 %v5517, %v5518
    %v5520 = vrot.slane %v5519, 1
    %v5521 = vmax.f32 %v5519, %v5520
    %v5522 = vsel %vm5278, %v5204, -inf
    %v5523 = vsel %vm5278, %v5205, -inf
    %v5524 = vmax.f32 %v5522, %v5523
    %v5525 = vrot.slane %v5524, 4
    %v5526 = vmax.f32 %v5524, %v5525
    %v5527 = vrot.slane %v5526, 2
    %v5528 = vmax.f32 %v5526, %v5527
    %v5529 = vrot.slane %v5528, 1
    %v5530 = vmax.f32 %v5528, %v5529
    %v5531 = vsel %vm5278, %v5206, -inf
    %v5532 = vsel %vm5278, %v5207, -inf
    %v5533 = vmax.f32 %v5531, %v5532
    %v5534 = vrot.slane %v5533, 4
    %v5535 = vmax.f32 %v5533, %v5534
    %v5536 = vrot.slane %v5535, 2
    %v5537 = vmax.f32 %v5535, %v5536
    %v5538 = vrot.slane %v5537, 1
    %v5539 = vmax.f32 %v5537, %v5538
    %v5540 = vsel %vm5278, %v5208, -inf
    %v5541 = vsel %vm5278, %v5209, -inf
    %v5542 = vmax.f32 %v5540, %v5541
    %v5543 = vrot.slane %v5542, 4
    %v5544 = vmax.f32 %v5542, %v5543
    %v5545 = vrot.slane %v5544, 2
    %v5546 = vmax.f32 %v5544, %v5545
    %v5547 = vrot.slane %v5546, 1
    %v5548 = vmax.f32 %v5546, %v5547
    %v5549 = vsel %vm5278, %v5210, -inf
    %v5550 = vsel %vm5278, %v5211, -inf
    %v5551 = vmax.f32 %v5549, %v5550
    %v5552 = vrot.slane %v5551, 4
    %v5553 = vmax.f32 %v5551, %v5552
    %v5554 = vrot.slane %v5553, 2
    %v5555 = vmax.f32 %v5553, %v5554
    %v5556 = vrot.slane %v5555, 1
    %v5557 = vmax.f32 %v5555, %v5556
    %v5558 = vsel %vm5278, %v5212, -inf
    %v5559 = vsel %vm5278, %v5213, -inf
    %v5560 = vmax.f32 %v5558, %v5559
    %v5561 = vrot.slane %v5560, 4
    %v5562 = vmax.f32 %v5560, %v5561
    %v5563 = vrot.slane %v5562, 2
    %v5564 = vmax.f32 %v5562, %v5563
    %v5565 = vrot.slane %v5564, 1
    %v5566 = vmax.f32 %v5564, %v5565
    %v5567 = vsel %vm5278, %v5214, -inf
    %v5568 = vsel %vm5278, %v5215, -inf
    %v5569 = vmax.f32 %v5567, %v5568
    %v5570 = vrot.slane %v5569, 4
    %v5571 = vmax.f32 %v5569, %v5570
    %v5572 = vrot.slane %v5571, 2
    %v5573 = vmax.f32 %v5571, %v5572
    %v5574 = vrot.slane %v5573, 1
    %v5575 = vmax.f32 %v5573, %v5574
    %v5576 = vsel %vm5278, %v5216, -inf
    %v5577 = vsel %vm5278, %v5217, -inf
    %v5578 = vmax.f32 %v5576, %v5577
    %v5579 = vrot.slane %v5578, 4
    %v5580 = vmax.f32 %v5578, %v5579
    %v5581 = vrot.slane %v5580, 2
    %v5582 = vmax.f32 %v5580, %v5581
    %v5583 = vrot.slane %v5582, 1
    %v5584 = vmax.f32 %v5582, %v5583
    %v5585 = vsel %vm5278, %v5218, -inf
    %v5586 = vsel %vm5278, %v5219, -inf
    %v5587 = vmax.f32 %v5585, %v5586
    %v5588 = vrot.slane %v5587, 4
    %v5589 = vmax.f32 %v5587, %v5588
    %v5590 = vrot.slane %v5589, 2
    %v5591 = vmax.f32 %v5589, %v5590
    %v5592 = vrot.slane %v5591, 1
    %v5593 = vmax.f32 %v5591, %v5592
    %v5594 = vsel %vm5278, %v5220, -inf
    %v5595 = vsel %vm5278, %v5221, -inf
    %v5596 = vmax.f32 %v5594, %v5595
    %v5597 = vrot.slane %v5596, 4
    %v5598 = vmax.f32 %v5596, %v5597
    %v5599 = vrot.slane %v5598, 2
    %v5600 = vmax.f32 %v5598, %v5599
    %v5601 = vrot.slane %v5600, 1
    %v5602 = vmax.f32 %v5600, %v5601
    %v5603 = vsel %vm5278, %v5222, -inf
    %v5604 = vsel %vm5278, %v5223, -inf
    %v5605 = vmax.f32 %v5603, %v5604
    %v5606 = vrot.slane %v5605, 4
    %v5607 = vmax.f32 %v5605, %v5606
    %v5608 = vrot.slane %v5607, 2
    %v5609 = vmax.f32 %v5607, %v5608
    %v5610 = vrot.slane %v5609, 1
    %v5611 = vmax.f32 %v5609, %v5610
    %v5612 = vsel %vm5278, %v5224, -inf
    %v5613 = vsel %vm5278, %v5225, -inf
    %v5614 = vmax.f32 %v5612, %v5613
    %v5615 = vrot.slane %v5614, 4
    %v5616 = vmax.f32 %v5614, %v5615
    %v5617 = vrot.slane %v5616, 2
    %v5618 = vmax.f32 %v5616, %v5617
    %v5619 = vrot.slane %v5618, 1
    %v5620 = vmax.f32 %v5618, %v5619
    %v5621 = vsel %vm5278, %v5226, -inf
    %v5622 = vsel %vm5278, %v5227, -inf
    %v5623 = vmax.f32 %v5621, %v5622
    %v5624 = vrot.slane %v5623, 4
    %v5625 = vmax.f32 %v5623, %v5624
    %v5626 = vrot.slane %v5625, 2
    %v5627 = vmax.f32 %v5625, %v5626
    %v5628 = vrot.slane %v5627, 1
    %v5629 = vmax.f32 %v5627, %v5628
    %v5630 = vsel %vm5278, %v5228, -inf
    %v5631 = vsel %vm5278, %v5229, -inf
    %v5632 = vmax.f32 %v5630, %v5631
    %v5633 = vrot.slane %v5632, 4
    %v5634 = vmax.f32 %v5632, %v5633
    %v5635 = vrot.slane %v5634, 2
    %v5636 = vmax.f32 %v5634, %v5635
    %v5637 = vrot.slane %v5636, 1
    %v5638 = vmax.f32 %v5636, %v5637
    %v5639 = vsel %vm5278, %v5230, -inf
    %v5640 = vsel %vm5278, %v5231, -inf
    %v5641 = vmax.f32 %v5639, %v5640
    %v5642 = vrot.slane %v5641, 4
    %v5643 = vmax.f32 %v5641, %v5642
    %v5644 = vrot.slane %v5643, 2
    %v5645 = vmax.f32 %v5643, %v5644
    %v5646 = vrot.slane %v5645, 1
    %v5647 = vmax.f32 %v5645, %v5646
    %v5648 = vsel %vm5278, %v5232, -inf
    %v5649 = vsel %vm5278, %v5233, -inf
    %v5650 = vmax.f32 %v5648, %v5649
    %v5651 = vrot.slane %v5650, 4
    %v5652 = vmax.f32 %v5650, %v5651
    %v5653 = vrot.slane %v5652, 2
    %v5654 = vmax.f32 %v5652, %v5653
    %v5655 = vrot.slane %v5654, 1
    %v5656 = vmax.f32 %v5654, %v5655
    %v5657 = vsel %vm5278, %v5234, -inf
    %v5658 = vsel %vm5278, %v5235, -inf
    %v5659 = vmax.f32 %v5657, %v5658
    %v5660 = vrot.slane %v5659, 4
    %v5661 = vmax.f32 %v5659, %v5660
    %v5662 = vrot.slane %v5661, 2
    %v5663 = vmax.f32 %v5661, %v5662
    %v5664 = vrot.slane %v5663, 1
    %v5665 = vmax.f32 %v5663, %v5664
    %v5666 = vsel %vm5278, %v5236, -inf
    %v5667 = vsel %vm5278, %v5237, -inf
    %v5668 = vmax.f32 %v5666, %v5667
    %v5669 = vrot.slane %v5668, 4
    %v5670 = vmax.f32 %v5668, %v5669
    %v5671 = vrot.slane %v5670, 2
    %v5672 = vmax.f32 %v5670, %v5671
    %v5673 = vrot.slane %v5672, 1
    %v5674 = vmax.f32 %v5672, %v5673
    %v5675 = vsel %vm5278, %v5238, -inf
    %v5676 = vsel %vm5278, %v5239, -inf
    %v5677 = vmax.f32 %v5675, %v5676
    %v5678 = vrot.slane %v5677, 4
    %v5679 = vmax.f32 %v5677, %v5678
    %v5680 = vrot.slane %v5679, 2
    %v5681 = vmax.f32 %v5679, %v5680
    %v5682 = vrot.slane %v5681, 1
    %v5683 = vmax.f32 %v5681, %v5682
    %v5684 = vsel %vm5278, %v5240, -inf
    %v5685 = vsel %vm5278, %v5241, -inf
    %v5686 = vmax.f32 %v5684, %v5685
    %v5687 = vrot.slane %v5686, 4
    %v5688 = vmax.f32 %v5686, %v5687
    %v5689 = vrot.slane %v5688, 2
    %v5690 = vmax.f32 %v5688, %v5689
    %v5691 = vrot.slane %v5690, 1
    %v5692 = vmax.f32 %v5690, %v5691
    %v5693 = vsel %vm5278, %v5242, -inf
    %v5694 = vsel %vm5278, %v5243, -inf
    %v5695 = vmax.f32 %v5693, %v5694
    %v5696 = vrot.slane %v5695, 4
    %v5697 = vmax.f32 %v5695, %v5696
    %v5698 = vrot.slane %v5697, 2
    %v5699 = vmax.f32 %v5697, %v5698
    %v5700 = vrot.slane %v5699, 1
    %v5701 = vmax.f32 %v5699, %v5700
    %v5702 = vsel %vm5278, %v5244, -inf
    %v5703 = vsel %vm5278, %v5245, -inf
    %v5704 = vmax.f32 %v5702, %v5703
    %v5705 = vrot.slane %v5704, 4
    %v5706 = vmax.f32 %v5704, %v5705
    %v5707 = vrot.slane %v5706, 2
    %v5708 = vmax.f32 %v5706, %v5707
    %v5709 = vrot.slane %v5708, 1
    %v5710 = vmax.f32 %v5708, %v5709
    %v5711 = vsel %vm5278, %v5246, -inf
    %v5712 = vsel %vm5278, %v5247, -inf
    %v5713 = vmax.f32 %v5711, %v5712
    %v5714 = vrot.slane %v5713, 4
    %v5715 = vmax.f32 %v5713, %v5714
    %v5716 = vrot.slane %v5715, 2
    %v5717 = vmax.f32 %v5715, %v5716
    %v5718 = vrot.slane %v5717, 1
    %v5719 = vmax.f32 %v5717, %v5718
    %v5720 = vsel %vm5278, %v5248, -inf
    %v5721 = vsel %vm5278, %v5249, -inf
    %v5722 = vmax.f32 %v5720, %v5721
    %v5723 = vrot.slane %v5722, 4
    %v5724 = vmax.f32 %v5722, %v5723
    %v5725 = vrot.slane %v5724, 2
    %v5726 = vmax.f32 %v5724, %v5725
    %v5727 = vrot.slane %v5726, 1
    %v5728 = vmax.f32 %v5726, %v5727
    %v5729 = vsel %vm5278, %v5250, -inf
    %v5730 = vsel %vm5278, %v5251, -inf
    %v5731 = vmax.f32 %v5729, %v5730
    %v5732 = vrot.slane %v5731, 4
    %v5733 = vmax.f32 %v5731, %v5732
    %v5734 = vrot.slane %v5733, 2
    %v5735 = vmax.f32 %v5733, %v5734
    %v5736 = vrot.slane %v5735, 1
    %v5737 = vmax.f32 %v5735, %v5736
    %v5738 = vsel %vm5278, %v5252, -inf
    %v5739 = vsel %vm5278, %v5253, -inf
    %v5740 = vmax.f32 %v5738, %v5739
    %v5741 = vrot.slane %v5740, 4
    %v5742 = vmax.f32 %v5740, %v5741
    %v5743 = vrot.slane %v5742, 2
    %v5744 = vmax.f32 %v5742, %v5743
    %v5745 = vrot.slane %v5744, 1
    %v5746 = vmax.f32 %v5744, %v5745
    %v5747 = vsel %vm5278, %v5254, -inf
    %v5748 = vsel %vm5278, %v5255, -inf
    %v5749 = vmax.f32 %v5747, %v5748
    %v5750 = vrot.slane %v5749, 4
    %v5751 = vmax.f32 %v5749, %v5750
    %v5752 = vrot.slane %v5751, 2
    %v5753 = vmax.f32 %v5751, %v5752
    %v5754 = vrot.slane %v5753, 1
    %v5755 = vmax.f32 %v5753, %v5754
    %v5756 = vsel %vm5278, %v5256, -inf
    %v5757 = vsel %vm5278, %v5257, -inf
    %v5758 = vmax.f32 %v5756, %v5757
    %v5759 = vrot.slane %v5758, 4
    %v5760 = vmax.f32 %v5758, %v5759
    %v5761 = vrot.slane %v5760, 2
    %v5762 = vmax.f32 %v5760, %v5761
    %v5763 = vrot.slane %v5762, 1
    %v5764 = vmax.f32 %v5762, %v5763
    %v5765 = vsel %vm5278, %v5258, -inf
    %v5766 = vsel %vm5278, %v5259, -inf
    %v5767 = vmax.f32 %v5765, %v5766
    %v5768 = vrot.slane %v5767, 4
    %v5769 = vmax.f32 %v5767, %v5768
    %v5770 = vrot.slane %v5769, 2
    %v5771 = vmax.f32 %v5769, %v5770
    %v5772 = vrot.slane %v5771, 1
    %v5773 = vmax.f32 %v5771, %v5772
    %v5774 = vsel %vm5278, %v5260, -inf
    %v5775 = vsel %vm5278, %v5261, -inf
    %v5776 = vmax.f32 %v5774, %v5775
    %v5777 = vrot.slane %v5776, 4
    %v5778 = vmax.f32 %v5776, %v5777
    %v5779 = vrot.slane %v5778, 2
    %v5780 = vmax.f32 %v5778, %v5779
    %v5781 = vrot.slane %v5780, 1
    %v5782 = vmax.f32 %v5780, %v5781
    %v5783 = vsel %vm5278, %v5262, -inf
    %v5784 = vsel %vm5278, %v5263, -inf
    %v5785 = vmax.f32 %v5783, %v5784
    %v5786 = vrot.slane %v5785, 4
    %v5787 = vmax.f32 %v5785, %v5786
    %v5788 = vrot.slane %v5787, 2
    %v5789 = vmax.f32 %v5787, %v5788
    %v5790 = vrot.slane %v5789, 1
    %v5791 = vmax.f32 %v5789, %v5790
    %v5792 = vsel %vm5278, %v5264, -inf
    %v5793 = vsel %vm5278, %v5265, -inf
    %v5794 = vmax.f32 %v5792, %v5793
    %v5795 = vrot.slane %v5794, 4
    %v5796 = vmax.f32 %v5794, %v5795
    %v5797 = vrot.slane %v5796, 2
    %v5798 = vmax.f32 %v5796, %v5797
    %v5799 = vrot.slane %v5798, 1
    %v5800 = vmax.f32 %v5798, %v5799
    %v5801 = vsel %vm5278, %v5266, -inf
    %v5802 = vsel %vm5278, %v5267, -inf
    %v5803 = vmax.f32 %v5801, %v5802
    %v5804 = vrot.slane %v5803, 4
    %v5805 = vmax.f32 %v5803, %v5804
    %v5806 = vrot.slane %v5805, 2
    %v5807 = vmax.f32 %v5805, %v5806
    %v5808 = vrot.slane %v5807, 1
    %v5809 = vmax.f32 %v5807, %v5808
    %v5810 = vsel %vm5278, %v5268, -inf
    %v5811 = vsel %vm5278, %v5269, -inf
    %v5812 = vmax.f32 %v5810, %v5811
    %v5813 = vrot.slane %v5812, 4
    %v5814 = vmax.f32 %v5812, %v5813
    %v5815 = vrot.slane %v5814, 2
    %v5816 = vmax.f32 %v5814, %v5815
    %v5817 = vrot.slane %v5816, 1
    %v5818 = vmax.f32 %v5816, %v5817
    %v5819 = vsel %vm5278, %v5270, -inf
    %v5820 = vsel %vm5278, %v5271, -inf
    %v5821 = vmax.f32 %v5819, %v5820
    %v5822 = vrot.slane %v5821, 4
    %v5823 = vmax.f32 %v5821, %v5822
    %v5824 = vrot.slane %v5823, 2
    %v5825 = vmax.f32 %v5823, %v5824
    %v5826 = vrot.slane %v5825, 1
    %v5827 = vmax.f32 %v5825, %v5826
    %v5828 = vsel %vm5278, %v5272, -inf
    %v5829 = vsel %vm5278, %v5273, -inf
    %v5830 = vmax.f32 %v5828, %v5829
    %v5831 = vrot.slane %v5830, 4
    %v5832 = vmax.f32 %v5830, %v5831
    %v5833 = vrot.slane %v5832, 2
    %v5834 = vmax.f32 %v5832, %v5833
    %v5835 = vrot.slane %v5834, 1
    %v5836 = vmax.f32 %v5834, %v5835
    %v5837 = vsel %vm5278, %v5274, -inf
    %v5838 = vsel %vm5278, %v5275, -inf
    %v5839 = vmax.f32 %v5837, %v5838
    %v5840 = vrot.slane %v5839, 4
    %v5841 = vmax.f32 %v5839, %v5840
    %v5842 = vrot.slane %v5841, 2
    %v5843 = vmax.f32 %v5841, %v5842
    %v5844 = vrot.slane %v5843, 1
    %v5845 = vmax.f32 %v5843, %v5844
    %v5846 = vsel %vm5278, %v5276, -inf
    %v5847 = vsel %vm5278, %v5277, -inf
    %v5848 = vmax.f32 %v5846, %v5847
    %v5849 = vrot.slane %v5848, 4
    %v5850 = vmax.f32 %v5848, %v5849
    %v5851 = vrot.slane %v5850, 2
    %v5852 = vmax.f32 %v5850, %v5851
    %v5853 = vrot.slane %v5852, 1
    %v5854 = vmax.f32 %v5852, %v5853
    %v5855 = vld [vmem:[%s5] sm:$0xff]
    %v5856 = vld [vmem:[%s5 + $0x8] sm:$0xff]
    %v5857 = vld [vmem:[%s5 + $0x10] sm:$0xff]
    %v5858 = vld [vmem:[%s5 + $0x18] sm:$0xff]
    %v5859 = vld [vmem:[%s5 + $0x20] sm:$0xff]
    %v5860 = vld [vmem:[%s5 + $0x28] sm:$0xff]
    %v5861 = vld [vmem:[%s5 + $0x30] sm:$0xff]
    %v5862 = vld [vmem:[%s5 + $0x38] sm:$0xff]
    %v5863 = vld [vmem:[%s5 + $0x40] sm:$0xff]
    %v5864 = vld [vmem:[%s5 + $0x48] sm:$0xff]
    %v5865 = vld [vmem:[%s5 + $0x50] sm:$0xff]
    %v5866 = vld [vmem:[%s5 + $0x58] sm:$0xff]
    %v5867 = vld [vmem:[%s5 + $0x60] sm:$0xff]
    %v5868 = vld [vmem:[%s5 + $0x68] sm:$0xff]
    %v5869 = vld [vmem:[%s5 + $0x70] sm:$0xff]
    %v5870 = vld [vmem:[%s5 + $0x78] sm:$0xff]
    %vm5935 = vcmask 1041409
    %v5936 = vsel %vm5935, %v5296, %v5287
    %vm5937 = vcmask 1042434
    %v5938 = vsel %vm5937, %v5305, %v5936
    %vm5939 = vcmask 1043459
    %v5940 = vsel %vm5939, %v5314, %v5938
    %vm5941 = vcmask 1044484
    %v5942 = vsel %vm5941, %v5323, %v5940
    %vm5943 = vcmask 1045509
    %v5944 = vsel %vm5943, %v5332, %v5942
    %vm5945 = vcmask 1046534
    %v5946 = vsel %vm5945, %v5341, %v5944
    %vm5947 = vcmask 1047559
    %v5948 = vsel %vm5947, %v5350, %v5946
    %v5949 = vsel %vm5935, %v5368, %v5359
    %v5950 = vsel %vm5937, %v5377, %v5949
    %v5951 = vsel %vm5939, %v5386, %v5950
    %v5952 = vsel %vm5941, %v5395, %v5951
    %v5953 = vsel %vm5943, %v5404, %v5952
    %v5954 = vsel %vm5945, %v5413, %v5953
    %v5955 = vsel %vm5947, %v5422, %v5954
    %v5956 = vsel %vm5935, %v5440, %v5431
    %v5957 = vsel %vm5937, %v5449, %v5956
    %v5958 = vsel %vm5939, %v5458, %v5957
    %v5959 = vsel %vm5941, %v5467, %v5958
    %v5960 = vsel %vm5943, %v5476, %v5959
    %v5961 = vsel %vm5945, %v5485, %v5960
    %v5962 = vsel %vm5947, %v5494, %v5961
    %v5963 = vsel %vm5935, %v5512, %v5503
    %v5964 = vsel %vm5937, %v5521, %v5963
    %v5965 = vsel %vm5939, %v5530, %v5964
    %v5966 = vsel %vm5941, %v5539, %v5965
    %v5967 = vsel %vm5943, %v5548, %v5966
    %v5968 = vsel %vm5945, %v5557, %v5967
    %v5969 = vsel %vm5947, %v5566, %v5968
    %v5970 = vsel %vm5935, %v5584, %v5575
    %v5971 = vsel %vm5937, %v5593, %v5970
    %v5972 = vsel %vm5939, %v5602, %v5971
    %v5973 = vsel %vm5941, %v5611, %v5972
    %v5974 = vsel %vm5943, %v5620, %v5973
    %v5975 = vsel %vm5945, %v5629, %v5974
    %v5976 = vsel %vm5947, %v5638, %v5975
    %v5977 = vsel %vm5935, %v5656, %v5647
    %v5978 = vsel %vm5937, %v5665, %v5977
    %v5979 = vsel %vm5939, %v5674, %v5978
    %v5980 = vsel %vm5941, %v5683, %v5979
    %v5981 = vsel %vm5943, %v5692, %v5980
    %v5982 = vsel %vm5945, %v5701, %v5981
    %v5983 = vsel %vm5947, %v5710, %v5982
    %v5984 = vsel %vm5935, %v5728, %v5719
    %v5985 = vsel %vm5937, %v5737, %v5984
    %v5986 = vsel %vm5939, %v5746, %v5985
    %v5987 = vsel %vm5941, %v5755, %v5986
    %v5988 = vsel %vm5943, %v5764, %v5987
    %v5989 = vsel %vm5945, %v5773, %v5988
    %v5990 = vsel %vm5947, %v5782, %v5989
    %v5991 = vsel %vm5935, %v5800, %v5791
    %v5992 = vsel %vm5937, %v5809, %v5991
    %v5993 = vsel %vm5939, %v5818, %v5992
    %v5994 = vsel %vm5941, %v5827, %v5993
    %v5995 = vsel %vm5943, %v5836, %v5994
    %v5996 = vsel %vm5945, %v5845, %v5995
    %v5997 = vsel %vm5947, %v5854, %v5996
    %vm6006 = vcmask 523264
    %v6008 = vsel %vm6006, %v5855, 0
    %v6011 = vsel %vm6006, %v5856, 0
    %v6014 = vsel %vm6006, %v5857, 0
    %v6017 = vsel %vm6006, %v5858, 0
    %v6020 = vsel %vm6006, %v5859, 0
    %v6023 = vsel %vm6006, %v5860, 0
    %v6026 = vsel %vm6006, %v5861, 0
    %v6029 = vsel %vm6006, %v5862, 0
    %v6032 = vsel %vm6006, %v5863, 0
    %v6035 = vsel %vm6006, %v5864, 0
    %v6038 = vsel %vm6006, %v5865, 0
    %v6041 = vsel %vm6006, %v5866, 0
    %v6044 = vsel %vm6006, %v5867, 0
    %v6047 = vsel %vm6006, %v5868, 0
    %v6050 = vsel %vm6006, %v5869, 0
    %v6053 = vsel %vm6006, %v5870, 0
    %6055 = vmatprep.subr.mxu0 0.0
    %6056 = vmatpush1.msra.mxu0 %v5948
    %6057 = vmatprep.subr.mxu0 0.0
    %6058 = vmatpush1.msra.mxu0 %v5955
    %6059 = vmatprep.subr.mxu0 0.0
    %6060 = vmatpush1.msra.mxu0 %v5962
    %6061 = vmatprep.subr.mxu0 0.0
    %6062 = vmatpush1.msra.mxu0 %v5969
    %6063 = vmatprep.subr.mxu0 0.0
    %6064 = vmatpush1.msra.mxu0 %v5976
    %6065 = vmatprep.subr.mxu0 0.0
    %6066 = vmatpush1.msra.mxu0 %v5983
    %6067 = vmatprep.subr.mxu0 0.0
    %6068 = vmatpush1.msra.mxu0 %v5990
    %6069 = vmatprep.subr.mxu0 0.0
    %6070 = vmatpush1.msra.mxu0 %v5997
    %6071 = vmatprep.subr.mxu0 0.0
    %6072 = vmatpush1.msra.mxu0 0.0
    %6073 = vmatprep.subr.mxu0 0.0
    %6074 = vmatpush1.msra.mxu0 0.0
    %6075 = vmatprep.subr.mxu0 0.0
    %6076 = vmatpush1.msra.mxu0 0.0
    %6077 = vmatprep.subr.mxu0 0.0
    %6078 = vmatpush1.msra.mxu0 0.0
    %6079 = vmatprep.subr.mxu0 0.0
    %6080 = vmatpush1.msra.mxu0 0.0
    %6081 = vmatprep.subr.mxu0 0.0
    %6082 = vmatpush1.msra.mxu0 0.0
    %6083 = vmatprep.subr.mxu0 0.0
    %6084 = vmatpush1.msra.mxu0 0.0
    %6085 = vmatprep.subr.mxu0 0.0
    %6086 = vmatpush1.msra.mxu0 0.0
    %6087 = vmatprep.subr.mxu0 0.0
    %6088 = vmatpush1.msra.mxu0 0.0
    %6089 = vmatprep.subr.mxu0 0.0
    %6090 = vmatpush1.msra.mxu0 0.0
    %6091 = vmatprep.subr.mxu0 0.0
    %6092 = vmatpush1.msra.mxu0 0.0
    %6093 = vmatprep.subr.mxu0 0.0
    %6094 = vmatpush1.msra.mxu0 0.0
    %6095 = vmatprep.subr.mxu0 0.0
    %6096 = vmatpush1.msra.mxu0 0.0
    %6097 = vmatprep.subr.mxu0 0.0
    %6098 = vmatpush1.msra.mxu0 0.0
    %6099 = vmatprep.subr.mxu0 0.0
    %6100 = vmatpush1.msra.mxu0 0.0
    %6101 = vmatprep.subr.mxu0 0.0
    %6102 = vmatpush1.msra.mxu0 0.0
    %6103 = vmatprep.subr.mxu0 0.0
    %6104 = vmatpush1.msra.mxu0 0.0
    %6105 = vmatprep.subr.mxu0 0.0
    %6106 = vmatpush1.msra.mxu0 0.0
    %6107 = vmatprep.subr.mxu0 0.0
    %6108 = vmatpush1.msra.mxu0 0.0
    %6109 = vmatprep.subr.mxu0 0.0
    %6110 = vmatpush1.msra.mxu0 0.0
    %6111 = vmatprep.subr.mxu0 0.0
    %6112 = vmatpush1.msra.mxu0 0.0
    %6113 = vmatprep.subr.mxu0 0.0
    %6114 = vmatpush1.msra.mxu0 0.0
    %6115 = vmatprep.subr.mxu0 0.0
    %6116 = vmatpush1.msra.mxu0 0.0
    %6117 = vmatprep.subr.mxu0 0.0
    %6118 = vmatpush1.msra.mxu0 0.0
    %6119 = vmatprep.mubr.f32.mxu0 0.0
    %6120 = vmatmul.mubr.f32.gmra.mrb[0].mxu0 %v6008
    %v6121 = vpop.f32.mrb[0].mxu0
    %v6122 = vadd.f32 0.0, %v6121
    %v6123 = vpop.f32.mrb[0].mxu0
    %6124 = vmatprep.mubr.f32.mxu0 0.0
    %6125 = vmatmul.mubr.f32.gmra.mrb[0].mxu0 %v6011
    %v6126 = vpop.f32.mrb[0].mxu0
    %v6127 = vadd.f32 0.0, %v6126
    %v6128 = vpop.f32.mrb[0].mxu0
    %6129 = vmatprep.mubr.f32.mxu0 0.0
    %6130 = vmatmul.mubr.f32.gmra.mrb[0].mxu0 %v6014
    %v6131 = vpop.f32.mrb[0].mxu0
    %v6132 = vadd.f32 0.0, %v6131
    %v6133 = vpop.f32.mrb[0].mxu0
    %6134 = vmatprep.mubr.f32.mxu0 0.0
    %6135 = vmatmul.mubr.f32.gmra.mrb[0].mxu0 %v6017
    %v6136 = vpop.f32.mrb[0].mxu0
    %v6137 = vadd.f32 0.0, %v6136
    %v6138 = vpop.f32.mrb[0].mxu0
    %6139 = vmatprep.mubr.f32.mxu0 0.0
    %6140 = vmatmul.mubr.f32.gmra.mrb[0].mxu0 %v6020
    %v6141 = vpop.f32.mrb[0].mxu0
    %v6142 = vadd.f32 0.0, %v6141
    %v6143 = vpop.f32.mrb[0].mxu0
    %6144 = vmatprep.mubr.f32.mxu0 0.0
    %6145 = vmatmul.mubr.f32.gmra.mrb[0].mxu0 %v6023
    %v6146 = vpop.f32.mrb[0].mxu0
    %v6147 = vadd.f32 0.0, %v6146
    %v6148 = vpop.f32.mrb[0].mxu0
    %6149 = vmatprep.mubr.f32.mxu0 0.0
    %6150 = vmatmul.mubr.f32.gmra.mrb[0].mxu0 %v6026
    %v6151 = vpop.f32.mrb[0].mxu0
    %v6152 = vadd.f32 0.0, %v6151
    %v6153 = vpop.f32.mrb[0].mxu0
    %6154 = vmatprep.mubr.f32.mxu0 0.0
    %6155 = vmatmul.mubr.f32.gmra.mrb[0].mxu0 %v6029
    %v6156 = vpop.f32.mrb[0].mxu0
    %v6157 = vadd.f32 0.0, %v6156
    %v6158 = vpop.f32.mrb[0].mxu0
    %6159 = vmatprep.mubr.f32.mxu0 0.0
    %6160 = vmatmul.mubr.f32.gmra.mrb[0].mxu0 %v6032
    %v6161 = vpop.f32.mrb[0].mxu0
    %v6162 = vadd.f32 0.0, %v6161
    %v6163 = vpop.f32.mrb[0].mxu0
    %6164 = vmatprep.mubr.f32.mxu0 0.0
    %6165 = vmatmul.mubr.f32.gmra.mrb[0].mxu0 %v6035
    %v6166 = vpop.f32.mrb[0].mxu0
    %v6167 = vadd.f32 0.0, %v6166
    %v6168 = vpop.f32.mrb[0].mxu0
    %6169 = vmatprep.mubr.f32.mxu0 0.0
    %6170 = vmatmul.mubr.f32.gmra.mrb[0].mxu0 %v6038
    %v6171 = vpop.f32.mrb[0].mxu0
    %v6172 = vadd.f32 0.0, %v6171
    %v6173 = vpop.f32.mrb[0].mxu0
    %6174 = vmatprep.mubr.f32.mxu0 0.0
    %6175 = vmatmul.mubr.f32.gmra.mrb[0].mxu0 %v6041
    %v6176 = vpop.f32.mrb[0].mxu0
    %v6177 = vadd.f32 0.0, %v6176
    %v6178 = vpop.f32.mrb[0].mxu0
    %6179 = vmatprep.mubr.f32.mxu0 0.0
    %6180 = vmatmul.mubr.f32.gmra.mrb[0].mxu0 %v6044
    %v6181 = vpop.f32.mrb[0].mxu0
    %v6182 = vadd.f32 0.0, %v6181
    %v6183 = vpop.f32.mrb[0].mxu0
    %6184 = vmatprep.mubr.f32.mxu0 0.0
    %6185 = vmatmul.mubr.f32.gmra.mrb[0].mxu0 %v6047
    %v6186 = vpop.f32.mrb[0].mxu0
    %v6187 = vadd.f32 0.0, %v6186
    %v6188 = vpop.f32.mrb[0].mxu0
    %6189 = vmatprep.mubr.f32.mxu0 0.0
    %6190 = vmatmul.mubr.f32.gmra.mrb[0].mxu0 %v6050
    %v6191 = vpop.f32.mrb[0].mxu0
    %v6192 = vadd.f32 0.0, %v6191
    %v6193 = vpop.f32.mrb[0].mxu0
    %6194 = vmatprep.mubr.f32.mxu0 0.0
    %6195 = vmatmul.mubr.f32.gmra.mrb[0].mxu0 %v6053
    %v6196 = vpop.f32.mrb[0].mxu0
    %v6197 = vadd.f32 0.0, %v6196
    %v6198 = vpop.f32.mrb[0].mxu0
    %6199 = vdwg.mxu0
    %v6200 = vld [vmem:[#allocation15] sm:$0xff]
    %v6201 = vld [vmem:[#allocation15 + $0x8] sm:$0xff]
    %v6202 = vld [vmem:[#allocation15 + $0x10] sm:$0xff]
    %v6203 = vld [vmem:[#allocation15 + $0x18] sm:$0xff]
    %v6204 = vld [vmem:[#allocation2] sm:$0xff]
    %v6205 = vld [vmem:[#allocation2 + $0x8] sm:$0xff]
    %v6206 = vld [vmem:[#allocation2 + $0x10] sm:$0xff]
    %v6207 = vld [vmem:[#allocation2 + $0x18] sm:$0xff]
    %v6208 = vld [vmem:[#allocation2 + $0x20] sm:$0xff]
    %v6209 = vld [vmem:[#allocation2 + $0x28] sm:$0xff]
    %v6210 = vld [vmem:[#allocation2 + $0x30] sm:$0xff]
    %v6211 = vld [vmem:[#allocation2 + $0x38] sm:$0xff]
    %v6212 = vld [vmem:[#allocation2 + $0x40] sm:$0xff]
    %v6213 = vld [vmem:[#allocation2 + $0x48] sm:$0xff]
    %v6214 = vld [vmem:[#allocation2 + $0x50] sm:$0xff]
    %v6215 = vld [vmem:[#allocation2 + $0x58] sm:$0xff]
    %v6216 = vld [vmem:[#allocation2 + $0x60] sm:$0xff]
    %v6217 = vld [vmem:[#allocation2 + $0x68] sm:$0xff]
    %v6218 = vld [vmem:[#allocation2 + $0x70] sm:$0xff]
    %v6219 = vld [vmem:[#allocation2 + $0x78] sm:$0xff]
    %v6220 = vld [vmem:[%s33] sm:$0x7]
    %v6222 = vsel %vm891, %v6204, 0
    %v6225 = vsel %vm891, %v6205, 0
    %v6228 = vsel %vm891, %v6206, 0
    %v6231 = vsel %vm891, %v6207, 0
    %v6234 = vsel %vm891, %v6208, 0
    %v6237 = vsel %vm891, %v6209, 0
    %v6240 = vsel %vm891, %v6210, 0
    %v6243 = vsel %vm891, %v6211, 0
    %v6246 = vsel %vm891, %v6212, 0
    %v6249 = vsel %vm891, %v6213, 0
    %v6252 = vsel %vm891, %v6214, 0
    %v6255 = vsel %vm891, %v6215, 0
    %v6258 = vsel %vm891, %v6216, 0
    %v6261 = vsel %vm891, %v6217, 0
    %v6264 = vsel %vm891, %v6218, 0
    %v6267 = vsel %vm891, %v6219, 0
    %v6270 = vsel %vm1276, %v6220, 0
    %6272 = vmatprep.subr.mxu0 0.0
    %6273 = vmatpush1.msra.mxu0 %v6270
    %6274 = vmatprep.subr.mxu0 0.0
    %6275 = vmatpush1.msra.mxu0 0.0
    %6276 = vmatprep.subr.mxu0 0.0
    %6277 = vmatpush1.msra.mxu0 0.0
    %6278 = vmatprep.subr.mxu0 0.0
    %6279 = vmatpush1.msra.mxu0 0.0
    %6280 = vmatprep.subr.mxu0 0.0
    %6281 = vmatpush1.msra.mxu0 0.0
    %6282 = vmatprep.subr.mxu0 0.0
    %6283 = vmatpush1.msra.mxu0 0.0
    %6284 = vmatprep.subr.mxu0 0.0
    %6285 = vmatpush1.msra.mxu0 0.0
    %6286 = vmatprep.subr.mxu0 0.0
    %6287 = vmatpush1.msra.mxu0 0.0
    %6288 = vmatprep.subr.mxu0 0.0
    %6289 = vmatpush1.msra.mxu0 0.0
    %6290 = vmatprep.subr.mxu0 0.0
    %6291 = vmatpush1.msra.mxu0 0.0
    %6292 = vmatprep.subr.mxu0 0.0
    %6293 = vmatpush1.msra.mxu0 0.0
    %6294 = vmatprep.subr.mxu0 0.0
    %6295 = vmatpush1.msra.mxu0 0.0
    %6296 = vmatprep.subr.mxu0 0.0
    %6297 = vmatpush1.msra.mxu0 0.0
    %6298 = vmatprep.subr.mxu0 0.0
    %6299 = vmatpush1.msra.mxu0 0.0
    %6300 = vmatprep.subr.mxu0 0.0
    %6301 = vmatpush1.msra.mxu0 0.0
    %6302 = vmatprep.subr.mxu0 0.0
    %6303 = vmatpush1.msra.mxu0 0.0
    %6304 = vmatprep.subr.mxu0 0.0
    %6305 = vmatpush1.msra.mxu0 0.0
    %6306 = vmatprep.subr.mxu0 0.0
    %6307 = vmatpush1.msra.mxu0 0.0
    %6308 = vmatprep.subr.mxu0 0.0
    %6309 = vmatpush1.msra.mxu0 0.0
    %6310 = vmatprep.subr.mxu0 0.0
    %6311 = vmatpush1.msra.mxu0 0.0
    %6312 = vmatprep.subr.mxu0 0.0
    %6313 = vmatpush1.msra.mxu0 0.0
    %6314 = vmatprep.subr.mxu0 0.0
    %6315 = vmatpush1.msra.mxu0 0.0
    %6316 = vmatprep.subr.mxu0 0.0
    %6317 = vmatpush1.msra.mxu0 0.0
    %6318 = vmatprep.subr.mxu0 0.0
    %6319 = vmatpush1.msra.mxu0 0.0
    %6320 = vmatprep.subr.mxu0 0.0
    %6321 = vmatpush1.msra.mxu0 0.0
    %6322 = vmatprep.subr.mxu0 0.0
    %6323 = vmatpush1.msra.mxu0 0.0
    %6324 = vmatprep.subr.mxu0 0.0
    %6325 = vmatpush1.msra.mxu0 0.0
    %6326 = vmatprep.subr.mxu0 0.0
    %6327 = vmatpush1.msra.mxu0 0.0
    %6328 = vmatprep.subr.mxu0 0.0
    %6329 = vmatpush1.msra.mxu0 0.0
    %6330 = vmatprep.subr.mxu0 0.0
    %6331 = vmatpush1.msra.mxu0 0.0
    %6332 = vmatprep.subr.mxu0 0.0
    %6333 = vmatpush1.msra.mxu0 0.0
    %6334 = vmatprep.subr.mxu0 0.0
    %6335 = vmatpush1.msra.mxu0 0.0
    %6336 = vmatprep.mubr.f32.mxu0 0.0
    %6337 = vmatmul.mubr.f32.gmra.mrb[0].mxu0 %v6222
    %v6338 = vpop.f32.mrb[0].mxu0
    %v6339 = vadd.f32 0.0, %v6338
    %v6340 = vpop.f32.mrb[0].mxu0
    %6341 = vmatprep.mubr.f32.mxu0 0.0
    %6342 = vmatmul.mubr.f32.gmra.mrb[0].mxu0 %v6225
    %v6343 = vpop.f32.mrb[0].mxu0
    %v6344 = vadd.f32 0.0, %v6343
    %v6345 = vpop.f32.mrb[0].mxu0
    %6346 = vmatprep.mubr.f32.mxu0 0.0
    %6347 = vmatmul.mubr.f32.gmra.mrb[0].mxu0 %v6228
    %v6348 = vpop.f32.mrb[0].mxu0
    %v6349 = vadd.f32 0.0, %v6348
    %v6350 = vpop.f32.mrb[0].mxu0
    %6351 = vmatprep.mubr.f32.mxu0 0.0
    %6352 = vmatmul.mubr.f32.gmra.mrb[0].mxu0 %v6231
    %v6353 = vpop.f32.mrb[0].mxu0
    %v6354 = vadd.f32 0.0, %v6353
    %v6355 = vpop.f32.mrb[0].mxu0
    %6356 = vmatprep.mubr.f32.mxu0 0.0
    %6357 = vmatmul.mubr.f32.gmra.mrb[0].mxu0 %v6234
    %v6358 = vpop.f32.mrb[0].mxu0
    %v6359 = vadd.f32 0.0, %v6358
    %v6360 = vpop.f32.mrb[0].mxu0
    %6361 = vmatprep.mubr.f32.mxu0 0.0
    %6362 = vmatmul.mubr.f32.gmra.mrb[0].mxu0 %v6237
    %v6363 = vpop.f32.mrb[0].mxu0
    %v6364 = vadd.f32 0.0, %v6363
    %v6365 = vpop.f32.mrb[0].mxu0
    %6366 = vmatprep.mubr.f32.mxu0 0.0
    %6367 = vmatmul.mubr.f32.gmra.mrb[0].mxu0 %v6240
    %v6368 = vpop.f32.mrb[0].mxu0
    %v6369 = vadd.f32 0.0, %v6368
    %v6370 = vpop.f32.mrb[0].mxu0
    %6371 = vmatprep.mubr.f32.mxu0 0.0
    %6372 = vmatmul.mubr.f32.gmra.mrb[0].mxu0 %v6243
    %v6373 = vpop.f32.mrb[0].mxu0
    %v6374 = vadd.f32 0.0, %v6373
    %v6375 = vpop.f32.mrb[0].mxu0
    %6376 = vmatprep.mubr.f32.mxu0 0.0
    %6377 = vmatmul.mubr.f32.gmra.mrb[0].mxu0 %v6246
    %v6378 = vpop.f32.mrb[0].mxu0
    %v6379 = vadd.f32 0.0, %v6378
    %v6380 = vpop.f32.mrb[0].mxu0
    %6381 = vmatprep.mubr.f32.mxu0 0.0
    %6382 = vmatmul.mubr.f32.gmra.mrb[0].mxu0 %v6249
    %v6383 = vpop.f32.mrb[0].mxu0
    %v6384 = vadd.f32 0.0, %v6383
    %v6385 = vpop.f32.mrb[0].mxu0
    %6386 = vmatprep.mubr.f32.mxu0 0.0
    %6387 = vmatmul.mubr.f32.gmra.mrb[0].mxu0 %v6252
    %v6388 = vpop.f32.mrb[0].mxu0
    %v6389 = vadd.f32 0.0, %v6388
    %v6390 = vpop.f32.mrb[0].mxu0
    %6391 = vmatprep.mubr.f32.mxu0 0.0
    %6392 = vmatmul.mubr.f32.gmra.mrb[0].mxu0 %v6255
    %v6393 = vpop.f32.mrb[0].mxu0
    %v6394 = vadd.f32 0.0, %v6393
    %v6395 = vpop.f32.mrb[0].mxu0
    %6396 = vmatprep.mubr.f32.mxu0 0.0
    %6397 = vmatmul.mubr.f32.gmra.mrb[0].mxu0 %v6258
    %v6398 = vpop.f32.mrb[0].mxu0
    %v6399 = vadd.f32 0.0, %v6398
    %v6400 = vpop.f32.mrb[0].mxu0
    %6401 = vmatprep.mubr.f32.mxu0 0.0
    %6402 = vmatmul.mubr.f32.gmra.mrb[0].mxu0 %v6261
    %v6403 = vpop.f32.mrb[0].mxu0
    %v6404 = vadd.f32 0.0, %v6403
    %v6405 = vpop.f32.mrb[0].mxu0
    %6406 = vmatprep.mubr.f32.mxu0 0.0
    %6407 = vmatmul.mubr.f32.gmra.mrb[0].mxu0 %v6264
    %v6408 = vpop.f32.mrb[0].mxu0
    %v6409 = vadd.f32 0.0, %v6408
    %v6410 = vpop.f32.mrb[0].mxu0
    %6411 = vmatprep.mubr.f32.mxu0 0.0
    %6412 = vmatmul.mubr.f32.gmra.mrb[0].mxu0 %v6267
    %v6413 = vpop.f32.mrb[0].mxu0
    %v6414 = vadd.f32 0.0, %v6413
    %v6415 = vpop.f32.mrb[0].mxu0
    %6416 = vdwg.mxu0
    %v6418 = vsel %vm5278, %v6122, 0
    %v6421 = vsel %vm5278, %v6127, 0
    %v6424 = vsel %vm5278, %v6132, 0
    %v6427 = vsel %vm5278, %v6137, 0
    %v6430 = vsel %vm5278, %v6142, 0
    %v6433 = vsel %vm5278, %v6147, 0
    %v6436 = vsel %vm5278, %v6152, 0
    %v6439 = vsel %vm5278, %v6157, 0
    %v6442 = vsel %vm5278, %v6162, 0
    %v6445 = vsel %vm5278, %v6167, 0
    %v6448 = vsel %vm5278, %v6172, 0
    %v6451 = vsel %vm5278, %v6177, 0
    %v6454 = vsel %vm5278, %v6182, 0
    %v6457 = vsel %vm5278, %v6187, 0
    %v6460 = vsel %vm5278, %v6192, 0
    %v6463 = vsel %vm5278, %v6197, 0
    %6465 = vmatprep.subr.mxu0 0.0
    %6466 = vmatpush1.msra.mxu0 %v6200
    %6467 = vmatprep.subr.mxu0 0.0
    %6468 = vmatpush1.msra.mxu0 %v6201
    %6469 = vmatprep.subr.mxu0 0.0
    %6470 = vmatpush1.msra.mxu0 %v6202
    %6471 = vmatprep.subr.mxu0 0.0
    %6472 = vmatpush1.msra.mxu0 %v6203
    %6473 = vmatprep.subr.mxu0 0.0
    %6474 = vmatpush1.msra.mxu0 0.0
    %6475 = vmatprep.subr.mxu0 0.0
    %6476 = vmatpush1.msra.mxu0 0.0
    %6477 = vmatprep.subr.mxu0 0.0
    %6478 = vmatpush1.msra.mxu0 0.0
    %6479 = vmatprep.subr.mxu0 0.0
    %6480 = vmatpush1.msra.mxu0 0.0
    %6481 = vmatprep.subr.mxu0 0.0
    %6482 = vmatpush1.msra.mxu0 0.0
    %6483 = vmatprep.subr.mxu0 0.0
    %6484 = vmatpush1.msra.mxu0 0.0
    %6485 = vmatprep.subr.mxu0 0.0
    %6486 = vmatpush1.msra.mxu0 0.0
    %6487 = vmatprep.subr.mxu0 0.0
    %6488 = vmatpush1.msra.mxu0 0.0
    %6489 = vmatprep.subr.mxu0 0.0
    %6490 = vmatpush1.msra.mxu0 0.0
    %6491 = vmatprep.subr.mxu0 0.0
    %6492 = vmatpush1.msra.mxu0 0.0
    %6493 = vmatprep.subr.mxu0 0.0
    %6494 = vmatpush1.msra.mxu0 0.0
    %6495 = vmatprep.subr.mxu0 0.0
    %6496 = vmatpush1.msra.mxu0 0.0
    %6497 = vmatprep.subr.mxu0 0.0
    %6498 = vmatpush1.msra.mxu0 0.0
    %6499 = vmatprep.subr.mxu0 0.0
    %6500 = vmatpush1.msra.mxu0 0.0
    %6501 = vmatprep.subr.mxu0 0.0
    %6502 = vmatpush1.msra.mxu0 0.0
    %6503 = vmatprep.subr.mxu0 0.0
    %6504 = vmatpush1.msra.mxu0 0.0
    %6505 = vmatprep.subr.mxu0 0.0
    %6506 = vmatpush1.msra.mxu0 0.0
    %6507 = vmatprep.subr.mxu0 0.0
    %6508 = vmatpush1.msra.mxu0 0.0
    %6509 = vmatprep.subr.mxu0 0.0
    %6510 = vmatpush1.msra.mxu0 0.0
    %6511 = vmatprep.subr.mxu0 0.0
    %6512 = vmatpush1.msra.mxu0 0.0
    %6513 = vmatprep.subr.mxu0 0.0
    %6514 = vmatpush1.msra.mxu0 0.0
    %6515 = vmatprep.subr.mxu0 0.0
    %6516 = vmatpush1.msra.mxu0 0.0
    %6517 = vmatprep.subr.mxu0 0.0
    %6518 = vmatpush1.msra.mxu0 0.0
    %6519 = vmatprep.subr.mxu0 0.0
    %6520 = vmatpush1.msra.mxu0 0.0
    %6521 = vmatprep.subr.mxu0 0.0
    %6522 = vmatpush1.msra.mxu0 0.0
    %6523 = vmatprep.subr.mxu0 0.0
    %6524 = vmatpush1.msra.mxu0 0.0
    %6525 = vmatprep.subr.mxu0 0.0
    %6526 = vmatpush1.msra.mxu0 0.0
    %6527 = vmatprep.subr.mxu0 0.0
    %6528 = vmatpush1.msra.mxu0 0.0
    %6529 = vmatprep.mubr.f32.mxu0 0.0
    %6530 = vmatmul.mubr.f32.gmra.mrb[0].mxu0 %v6418
    %v6531 = vpop.f32.mrb[0].mxu0
    %v6532 = vadd.f32 %v6339, %v6531
    %v6533 = vpop.f32.mrb[0].mxu0
    %6534 = vmatprep.mubr.f32.mxu0 0.0
    %6535 = vmatmul.mubr.f32.gmra.mrb[0].mxu0 %v6421
    %v6536 = vpop.f32.mrb[0].mxu0
    %v6537 = vadd.f32 %v6344, %v6536
    %v6538 = vpop.f32.mrb[0].mxu0
    %6539 = vmatprep.mubr.f32.mxu0 0.0
    %6540 = vmatmul.mubr.f32.gmra.mrb[0].mxu0 %v6424
    %v6541 = vpop.f32.mrb[0].mxu0
    %v6542 = vadd.f32 %v6349, %v6541
    %v6543 = vpop.f32.mrb[0].mxu0
    %6544 = vmatprep.mubr.f32.mxu0 0.0
    %6545 = vmatmul.mubr.f32.gmra.mrb[0].mxu0 %v6427
    %v6546 = vpop.f32.mrb[0].mxu0
    %v6547 = vadd.f32 %v6354, %v6546
    %v6548 = vpop.f32.mrb[0].mxu0
    %6549 = vmatprep.mubr.f32.mxu0 0.0
    %6550 = vmatmul.mubr.f32.gmra.mrb[0].mxu0 %v6430
    %v6551 = vpop.f32.mrb[0].mxu0
    %v6552 = vadd.f32 %v6359, %v6551
    %v6553 = vpop.f32.mrb[0].mxu0
    %6554 = vmatprep.mubr.f32.mxu0 0.0
    %6555 = vmatmul.mubr.f32.gmra.mrb[0].mxu0 %v6433
    %v6556 = vpop.f32.mrb[0].mxu0
    %v6557 = vadd.f32 %v6364, %v6556
    %v6558 = vpop.f32.mrb[0].mxu0
    %6559 = vmatprep.mubr.f32.mxu0 0.0
    %6560 = vmatmul.mubr.f32.gmra.mrb[0].mxu0 %v6436
    %v6561 = vpop.f32.mrb[0].mxu0
    %v6562 = vadd.f32 %v6369, %v6561
    %v6563 = vpop.f32.mrb[0].mxu0
    %6564 = vmatprep.mubr.f32.mxu0 0.0
    %6565 = vmatmul.mubr.f32.gmra.mrb[0].mxu0 %v6439
    %v6566 = vpop.f32.mrb[0].mxu0
    %v6567 = vadd.f32 %v6374, %v6566
    %v6568 = vpop.f32.mrb[0].mxu0
    %6569 = vmatprep.mubr.f32.mxu0 0.0
    %6570 = vmatmul.mubr.f32.gmra.mrb[0].mxu0 %v6442
    %v6571 = vpop.f32.mrb[0].mxu0
    %v6572 = vadd.f32 %v6379, %v6571
    %v6573 = vpop.f32.mrb[0].mxu0
    %6574 = vmatprep.mubr.f32.mxu0 0.0
    %6575 = vmatmul.mubr.f32.gmra.mrb[0].mxu0 %v6445
    %v6576 = vpop.f32.mrb[0].mxu0
    %v6577 = vadd.f32 %v6384, %v6576
    %v6578 = vpop.f32.mrb[0].mxu0
    %6579 = vmatprep.mubr.f32.mxu0 0.0
    %6580 = vmatmul.mubr.f32.gmra.mrb[0].mxu0 %v6448
    %v6581 = vpop.f32.mrb[0].mxu0
    %v6582 = vadd.f32 %v6389, %v6581
    %v6583 = vpop.f32.mrb[0].mxu0
    %6584 = vmatprep.mubr.f32.mxu0 0.0
    %6585 = vmatmul.mubr.f32.gmra.mrb[0].mxu0 %v6451
    %v6586 = vpop.f32.mrb[0].mxu0
    %v6587 = vadd.f32 %v6394, %v6586
    %v6588 = vpop.f32.mrb[0].mxu0
    %6589 = vmatprep.mubr.f32.mxu0 0.0
    %6590 = vmatmul.mubr.f32.gmra.mrb[0].mxu0 %v6454
    %v6591 = vpop.f32.mrb[0].mxu0
    %v6592 = vadd.f32 %v6399, %v6591
    %v6593 = vpop.f32.mrb[0].mxu0
    %6594 = vmatprep.mubr.f32.mxu0 0.0
    %6595 = vmatmul.mubr.f32.gmra.mrb[0].mxu0 %v6457
    %v6596 = vpop.f32.mrb[0].mxu0
    %v6597 = vadd.f32 %v6404, %v6596
    %v6598 = vpop.f32.mrb[0].mxu0
    %6599 = vmatprep.mubr.f32.mxu0 0.0
    %6600 = vmatmul.mubr.f32.gmra.mrb[0].mxu0 %v6460
    %v6601 = vpop.f32.mrb[0].mxu0
    %v6602 = vadd.f32 %v6409, %v6601
    %v6603 = vpop.f32.mrb[0].mxu0
    %6604 = vmatprep.mubr.f32.mxu0 0.0
    %6605 = vmatmul.mubr.f32.gmra.mrb[0].mxu0 %v6463
    %v6606 = vpop.f32.mrb[0].mxu0
    %v6607 = vadd.f32 %v6414, %v6606
    %v6608 = vpop.f32.mrb[0].mxu0
    %6609 = vdwg.mxu0
    %v6610 = vld [vmem:[#allocation16] sm:$0x1]
    %v6612 = vlaneseq
    %v6613 = vshrl.u32 %v6612, 7
    %v6614 = vsub.s32 0, %v6613
    %v6615 = vrot.slane %v6610, %v6614
    %v6617 = vadd.f32 %v6532, %v6615
    %v6618 = vadd.f32 %v6537, %v6615
    %v6619 = vadd.f32 %v6542, %v6615
    %v6620 = vadd.f32 %v6547, %v6615
    %v6621 = vadd.f32 %v6552, %v6615
    %v6622 = vadd.f32 %v6557, %v6615
    %v6623 = vadd.f32 %v6562, %v6615
    %v6624 = vadd.f32 %v6567, %v6615
    %v6625 = vadd.f32 %v6572, %v6615
    %v6626 = vadd.f32 %v6577, %v6615
    %v6627 = vadd.f32 %v6582, %v6615
    %v6628 = vadd.f32 %v6587, %v6615
    %v6629 = vadd.f32 %v6592, %v6615
    %v6630 = vadd.f32 %v6597, %v6615
    %v6631 = vadd.f32 %v6602, %v6615
    %v6632 = vadd.f32 %v6607, %v6615
    %v6633 = vmax.f32 %v6617, 0.0
    %v6634 = vmax.f32 %v6618, 0.0
    %v6635 = vmax.f32 %v6619, 0.0
    %v6636 = vmax.f32 %v6620, 0.0
    %v6637 = vmax.f32 %v6621, 0.0
    %v6638 = vmax.f32 %v6622, 0.0
    %v6639 = vmax.f32 %v6623, 0.0
    %v6640 = vmax.f32 %v6624, 0.0
    %v6641 = vmax.f32 %v6625, 0.0
    %v6642 = vmax.f32 %v6626, 0.0
    %v6643 = vmax.f32 %v6627, 0.0
    %v6644 = vmax.f32 %v6628, 0.0
    %v6645 = vmax.f32 %v6629, 0.0
    %v6646 = vmax.f32 %v6630, 0.0
    %v6647 = vmax.f32 %v6631, 0.0
    %v6648 = vmax.f32 %v6632, 0.0
    %v6649 = vld [vmem:[#allocation18] sm:$0xff]
    %v6650 = vld [vmem:[#allocation18 + $0x8] sm:$0xff]
    %v6651 = vld [vmem:[#allocation18 + $0x10] sm:$0xff]
    %v6652 = vld [vmem:[#allocation18 + $0x18] sm:$0xff]
    %v6653 = vld [vmem:[#allocation19] sm:$0x1]
    %v6655 = vlaneseq
    %v6656 = vshrl.u32 %v6655, 7
    %v6657 = vsub.s32 0, %v6656
    %v6658 = vrot.slane %v6653, %v6657
    %v6661 = vsel %vm5278, %v6633, 0
    %v6664 = vsel %vm5278, %v6634, 0
    %v6667 = vsel %vm5278, %v6635, 0
    %v6670 = vsel %vm5278, %v6636, 0
    %v6673 = vsel %vm5278, %v6637, 0
    %v6676 = vsel %vm5278, %v6638, 0
    %v6679 = vsel %vm5278, %v6639, 0
    %v6682 = vsel %vm5278, %v6640, 0
    %v6685 = vsel %vm5278, %v6641, 0
    %v6688 = vsel %vm5278, %v6642, 0
    %v6691 = vsel %vm5278, %v6643, 0
    %v6694 = vsel %vm5278, %v6644, 0
    %v6697 = vsel %vm5278, %v6645, 0
    %v6700 = vsel %vm5278, %v6646, 0
    %v6703 = vsel %vm5278, %v6647, 0
    %v6706 = vsel %vm5278, %v6648, 0
    %6708 = vmatprep.subr.mxu0 0.0
    %6709 = vmatpush1.msra.mxu0 %v6649
    %6710 = vmatprep.subr.mxu0 0.0
    %6711 = vmatpush1.msra.mxu0 %v6650
    %6712 = vmatprep.subr.mxu0 0.0
    %6713 = vmatpush1.msra.mxu0 %v6651
    %6714 = vmatprep.subr.mxu0 0.0
    %6715 = vmatpush1.msra.mxu0 %v6652
    %6716 = vmatprep.subr.mxu0 0.0
    %6717 = vmatpush1.msra.mxu0 0.0
    %6718 = vmatprep.subr.mxu0 0.0
    %6719 = vmatpush1.msra.mxu0 0.0
    %6720 = vmatprep.subr.mxu0 0.0
    %6721 = vmatpush1.msra.mxu0 0.0
    %6722 = vmatprep.subr.mxu0 0.0
    %6723 = vmatpush1.msra.mxu0 0.0
    %6724 = vmatprep.subr.mxu0 0.0
    %6725 = vmatpush1.msra.mxu0 0.0
    %6726 = vmatprep.subr.mxu0 0.0
    %6727 = vmatpush1.msra.mxu0 0.0
    %6728 = vmatprep.subr.mxu0 0.0
    %6729 = vmatpush1.msra.mxu0 0.0
    %6730 = vmatprep.subr.mxu0 0.0
    %6731 = vmatpush1.msra.mxu0 0.0
    %6732 = vmatprep.subr.mxu0 0.0
    %6733 = vmatpush1.msra.mxu0 0.0
    %6734 = vmatprep.subr.mxu0 0.0
    %6735 = vmatpush1.msra.mxu0 0.0
    %6736 = vmatprep.subr.mxu0 0.0
    %6737 = vmatpush1.msra.mxu0 0.0
    %6738 = vmatprep.subr.mxu0 0.0
    %6739 = vmatpush1.msra.mxu0 0.0
    %6740 = vmatprep.subr.mxu0 0.0
    %6741 = vmatpush1.msra.mxu0 0.0
    %6742 = vmatprep.subr.mxu0 0.0
    %6743 = vmatpush1.msra.mxu0 0.0
    %6744 = vmatprep.subr.mxu0 0.0
    %6745 = vmatpush1.msra.mxu0 0.0
    %6746 = vmatprep.subr.mxu0 0.0
    %6747 = vmatpush1.msra.mxu0 0.0
    %6748 = vmatprep.subr.mxu0 0.0
    %6749 = vmatpush1.msra.mxu0 0.0
    %6750 = vmatprep.subr.mxu0 0.0
    %6751 = vmatpush1.msra.mxu0 0.0
    %6752 = vmatprep.subr.mxu0 0.0
    %6753 = vmatpush1.msra.mxu0 0.0
    %6754 = vmatprep.subr.mxu0 0.0
    %6755 = vmatpush1.msra.mxu0 0.0
    %6756 = vmatprep.subr.mxu0 0.0
    %6757 = vmatpush1.msra.mxu0 0.0
    %6758 = vmatprep.subr.mxu0 0.0
    %6759 = vmatpush1.msra.mxu0 0.0
    %6760 = vmatprep.subr.mxu0 0.0
    %6761 = vmatpush1.msra.mxu0 0.0
    %6762 = vmatprep.subr.mxu0 0.0
    %6763 = vmatpush1.msra.mxu0 0.0
    %6764 = vmatprep.subr.mxu0 0.0
    %6765 = vmatpush1.msra.mxu0 0.0
    %6766 = vmatprep.subr.mxu0 0.0
    %6767 = vmatpush1.msra.mxu0 0.0
    %6768 = vmatprep.subr.mxu0 0.0
    %6769 = vmatpush1.msra.mxu0 0.0
    %6770 = vmatprep.subr.mxu0 0.0
    %6771 = vmatpush1.msra.mxu0 0.0
    %6772 = vmatprep.mubr.f32.mxu0 0.0
    %6773 = vmatmul.mubr.f32.gmra.mrb[0].mxu0 %v6661
    %v6774 = vpop.f32.mrb[0].mxu0
    %v6775 = vadd.f32 %v6658, %v6774
    %v6776 = vpop.f32.mrb[0].mxu0
    %6777 = vmatprep.mubr.f32.mxu0 0.0
    %6778 = vmatmul.mubr.f32.gmra.mrb[0].mxu0 %v6664
    %v6779 = vpop.f32.mrb[0].mxu0
    %v6780 = vadd.f32 %v6658, %v6779
    %v6781 = vpop.f32.mrb[0].mxu0
    %6782 = vmatprep.mubr.f32.mxu0 0.0
    %6783 = vmatmul.mubr.f32.gmra.mrb[0].mxu0 %v6667
    %v6784 = vpop.f32.mrb[0].mxu0
    %v6785 = vadd.f32 %v6658, %v6784
    %v6786 = vpop.f32.mrb[0].mxu0
    %6787 = vmatprep.mubr.f32.mxu0 0.0
    %6788 = vmatmul.mubr.f32.gmra.mrb[0].mxu0 %v6670
    %v6789 = vpop.f32.mrb[0].mxu0
    %v6790 = vadd.f32 %v6658, %v6789
    %v6791 = vpop.f32.mrb[0].mxu0
    %6792 = vmatprep.mubr.f32.mxu0 0.0
    %6793 = vmatmul.mubr.f32.gmra.mrb[0].mxu0 %v6673
    %v6794 = vpop.f32.mrb[0].mxu0
    %v6795 = vadd.f32 %v6658, %v6794
    %v6796 = vpop.f32.mrb[0].mxu0
    %6797 = vmatprep.mubr.f32.mxu0 0.0
    %6798 = vmatmul.mubr.f32.gmra.mrb[0].mxu0 %v6676
    %v6799 = vpop.f32.mrb[0].mxu0
    %v6800 = vadd.f32 %v6658, %v6799
    %v6801 = vpop.f32.mrb[0].mxu0
    %6802 = vmatprep.mubr.f32.mxu0 0.0
    %6803 = vmatmul.mubr.f32.gmra.mrb[0].mxu0 %v6679
    %v6804 = vpop.f32.mrb[0].mxu0
    %v6805 = vadd.f32 %v6658, %v6804
    %v6806 = vpop.f32.mrb[0].mxu0
    %6807 = vmatprep.mubr.f32.mxu0 0.0
    %6808 = vmatmul.mubr.f32.gmra.mrb[0].mxu0 %v6682
    %v6809 = vpop.f32.mrb[0].mxu0
    %v6810 = vadd.f32 %v6658, %v6809
    %v6811 = vpop.f32.mrb[0].mxu0
    %6812 = vmatprep.mubr.f32.mxu0 0.0
    %6813 = vmatmul.mubr.f32.gmra.mrb[0].mxu0 %v6685
    %v6814 = vpop.f32.mrb[0].mxu0
    %v6815 = vadd.f32 %v6658, %v6814
    %v6816 = vpop.f32.mrb[0].mxu0
    %6817 = vmatprep.mubr.f32.mxu0 0.0
    %6818 = vmatmul.mubr.f32.gmra.mrb[0].mxu0 %v6688
    %v6819 = vpop.f32.mrb[0].mxu0
    %v6820 = vadd.f32 %v6658, %v6819
    %v6821 = vpop.f32.mrb[0].mxu0
    %6822 = vmatprep.mubr.f32.mxu0 0.0
    %6823 = vmatmul.mubr.f32.gmra.mrb[0].mxu0 %v6691
    %v6824 = vpop.f32.mrb[0].mxu0
    %v6825 = vadd.f32 %v6658, %v6824
    %v6826 = vpop.f32.mrb[0].mxu0
    %6827 = vmatprep.mubr.f32.mxu0 0.0
    %6828 = vmatmul.mubr.f32.gmra.mrb[0].mxu0 %v6694
    %v6829 = vpop.f32.mrb[0].mxu0
    %v6830 = vadd.f32 %v6658, %v6829
    %v6831 = vpop.f32.mrb[0].mxu0
    %6832 = vmatprep.mubr.f32.mxu0 0.0
    %6833 = vmatmul.mubr.f32.gmra.mrb[0].mxu0 %v6697
    %v6834 = vpop.f32.mrb[0].mxu0
    %v6835 = vadd.f32 %v6658, %v6834
    %v6836 = vpop.f32.mrb[0].mxu0
    %6837 = vmatprep.mubr.f32.mxu0 0.0
    %6838 = vmatmul.mubr.f32.gmra.mrb[0].mxu0 %v6700
    %v6839 = vpop.f32.mrb[0].mxu0
    %v6840 = vadd.f32 %v6658, %v6839
    %v6841 = vpop.f32.mrb[0].mxu0
    %6842 = vmatprep.mubr.f32.mxu0 0.0
    %6843 = vmatmul.mubr.f32.gmra.mrb[0].mxu0 %v6703
    %v6844 = vpop.f32.mrb[0].mxu0
    %v6845 = vadd.f32 %v6658, %v6844
    %v6846 = vpop.f32.mrb[0].mxu0
    %6847 = vmatprep.mubr.f32.mxu0 0.0
    %6848 = vmatmul.mubr.f32.gmra.mrb[0].mxu0 %v6706
    %v6849 = vpop.f32.mrb[0].mxu0
    %v6850 = vadd.f32 %v6658, %v6849
    %v6851 = vpop.f32.mrb[0].mxu0
    %6852 = vdwg.mxu0
    %v6853 = vmax.f32 %v6775, 0.0
    %v6854 = vmax.f32 %v6780, 0.0
    %v6855 = vmax.f32 %v6785, 0.0
    %v6856 = vmax.f32 %v6790, 0.0
    %v6857 = vmax.f32 %v6795, 0.0
    %v6858 = vmax.f32 %v6800, 0.0
    %v6859 = vmax.f32 %v6805, 0.0
    %v6860 = vmax.f32 %v6810, 0.0
    %v6861 = vmax.f32 %v6815, 0.0
    %v6862 = vmax.f32 %v6820, 0.0
    %v6863 = vmax.f32 %v6825, 0.0
    %v6864 = vmax.f32 %v6830, 0.0
    %v6865 = vmax.f32 %v6835, 0.0
    %v6866 = vmax.f32 %v6840, 0.0
    %v6867 = vmax.f32 %v6845, 0.0
    %v6868 = vmax.f32 %v6850, 0.0
    %v6869 = vld [vmem:[#allocation21] sm:$0xff]
    %v6870 = vld [vmem:[#allocation21 + $0x8] sm:$0xff]
    %v6871 = vld [vmem:[#allocation21 + $0x10] sm:$0xff]
    %v6872 = vld [vmem:[#allocation21 + $0x18] sm:$0xff]
    %v6873 = vld [vmem:[#allocation22] sm:$0x1]
    %v6875 = vlaneseq
    %v6876 = vshrl.u32 %v6875, 7
    %v6877 = vsub.s32 0, %v6876
    %v6878 = vrot.slane %v6873, %v6877
    %v6881 = vsel %vm5278, %v6853, 0
    %v6884 = vsel %vm5278, %v6854, 0
    %v6887 = vsel %vm5278, %v6855, 0
    %v6890 = vsel %vm5278, %v6856, 0
    %v6893 = vsel %vm5278, %v6857, 0
    %v6896 = vsel %vm5278, %v6858, 0
    %v6899 = vsel %vm5278, %v6859, 0
    %v6902 = vsel %vm5278, %v6860, 0
    %v6905 = vsel %vm5278, %v6861, 0
    %v6908 = vsel %vm5278, %v6862, 0
    %v6911 = vsel %vm5278, %v6863, 0
    %v6914 = vsel %vm5278, %v6864, 0
    %v6917 = vsel %vm5278, %v6865, 0
    %v6920 = vsel %vm5278, %v6866, 0
    %v6923 = vsel %vm5278, %v6867, 0
    %v6926 = vsel %vm5278, %v6868, 0
    %6928 = vmatprep.subr.mxu0 0.0
    %6929 = vmatpush1.msra.mxu0 %v6869
    %6930 = vmatprep.subr.mxu0 0.0
    %6931 = vmatpush1.msra.mxu0 %v6870
    %6932 = vmatprep.subr.mxu0 0.0
    %6933 = vmatpush1.msra.mxu0 %v6871
    %6934 = vmatprep.subr.mxu0 0.0
    %6935 = vmatpush1.msra.mxu0 %v6872
    %6936 = vmatprep.subr.mxu0 0.0
    %6937 = vmatpush1.msra.mxu0 0.0
    %6938 = vmatprep.subr.mxu0 0.0
    %6939 = vmatpush1.msra.mxu0 0.0
    %6940 = vmatprep.subr.mxu0 0.0
    %6941 = vmatpush1.msra.mxu0 0.0
    %6942 = vmatprep.subr.mxu0 0.0
    %6943 = vmatpush1.msra.mxu0 0.0
    %6944 = vmatprep.subr.mxu0 0.0
    %6945 = vmatpush1.msra.mxu0 0.0
    %6946 = vmatprep.subr.mxu0 0.0
    %6947 = vmatpush1.msra.mxu0 0.0
    %6948 = vmatprep.subr.mxu0 0.0
    %6949 = vmatpush1.msra.mxu0 0.0
    %6950 = vmatprep.subr.mxu0 0.0
    %6951 = vmatpush1.msra.mxu0 0.0
    %6952 = vmatprep.subr.mxu0 0.0
    %6953 = vmatpush1.msra.mxu0 0.0
    %6954 = vmatprep.subr.mxu0 0.0
    %6955 = vmatpush1.msra.mxu0 0.0
    %6956 = vmatprep.subr.mxu0 0.0
    %6957 = vmatpush1.msra.mxu0 0.0
    %6958 = vmatprep.subr.mxu0 0.0
    %6959 = vmatpush1.msra.mxu0 0.0
    %6960 = vmatprep.subr.mxu0 0.0
    %6961 = vmatpush1.msra.mxu0 0.0
    %6962 = vmatprep.subr.mxu0 0.0
    %6963 = vmatpush1.msra.mxu0 0.0
    %6964 = vmatprep.subr.mxu0 0.0
    %6965 = vmatpush1.msra.mxu0 0.0
    %6966 = vmatprep.subr.mxu0 0.0
    %6967 = vmatpush1.msra.mxu0 0.0
    %6968 = vmatprep.subr.mxu0 0.0
    %6969 = vmatpush1.msra.mxu0 0.0
    %6970 = vmatprep.subr.mxu0 0.0
    %6971 = vmatpush1.msra.mxu0 0.0
    %6972 = vmatprep.subr.mxu0 0.0
    %6973 = vmatpush1.msra.mxu0 0.0
    %6974 = vmatprep.subr.mxu0 0.0
    %6975 = vmatpush1.msra.mxu0 0.0
    %6976 = vmatprep.subr.mxu0 0.0
    %6977 = vmatpush1.msra.mxu0 0.0
    %6978 = vmatprep.subr.mxu0 0.0
    %6979 = vmatpush1.msra.mxu0 0.0
    %6980 = vmatprep.subr.mxu0 0.0
    %6981 = vmatpush1.msra.mxu0 0.0
    %6982 = vmatprep.subr.mxu0 0.0
    %6983 = vmatpush1.msra.mxu0 0.0
    %6984 = vmatprep.subr.mxu0 0.0
    %6985 = vmatpush1.msra.mxu0 0.0
    %6986 = vmatprep.subr.mxu0 0.0
    %6987 = vmatpush1.msra.mxu0 0.0
    %6988 = vmatprep.subr.mxu0 0.0
    %6989 = vmatpush1.msra.mxu0 0.0
    %6990 = vmatprep.subr.mxu0 0.0
    %6991 = vmatpush1.msra.mxu0 0.0
    %6992 = vmatprep.mubr.f32.mxu0 0.0
    %6993 = vmatmul.mubr.f32.gmra.mrb[0].mxu0 %v6881
    %v6994 = vpop.f32.mrb[0].mxu0
    %v6995 = vadd.f32 %v6878, %v6994
    %v6996 = vpop.f32.mrb[0].mxu0
    %6997 = vmatprep.mubr.f32.mxu0 0.0
    %6998 = vmatmul.mubr.f32.gmra.mrb[0].mxu0 %v6884
    %v6999 = vpop.f32.mrb[0].mxu0
    %v7000 = vadd.f32 %v6878, %v6999
    %v7001 = vpop.f32.mrb[0].mxu0
    %7002 = vmatprep.mubr.f32.mxu0 0.0
    %7003 = vmatmul.mubr.f32.gmra.mrb[0].mxu0 %v6887
    %v7004 = vpop.f32.mrb[0].mxu0
    %v7005 = vadd.f32 %v6878, %v7004
    %v7006 = vpop.f32.mrb[0].mxu0
    %7007 = vmatprep.mubr.f32.mxu0 0.0
    %7008 = vmatmul.mubr.f32.gmra.mrb[0].mxu0 %v6890
    %v7009 = vpop.f32.mrb[0].mxu0
    %v7010 = vadd.f32 %v6878, %v7009
    %v7011 = vpop.f32.mrb[0].mxu0
    %7012 = vmatprep.mubr.f32.mxu0 0.0
    %7013 = vmatmul.mubr.f32.gmra.mrb[0].mxu0 %v6893
    %v7014 = vpop.f32.mrb[0].mxu0
    %v7015 = vadd.f32 %v6878, %v7014
    %v7016 = vpop.f32.mrb[0].mxu0
    %7017 = vmatprep.mubr.f32.mxu0 0.0
    %7018 = vmatmul.mubr.f32.gmra.mrb[0].mxu0 %v6896
    %v7019 = vpop.f32.mrb[0].mxu0
    %v7020 = vadd.f32 %v6878, %v7019
    %v7021 = vpop.f32.mrb[0].mxu0
    %7022 = vmatprep.mubr.f32.mxu0 0.0
    %7023 = vmatmul.mubr.f32.gmra.mrb[0].mxu0 %v6899
    %v7024 = vpop.f32.mrb[0].mxu0
    %v7025 = vadd.f32 %v6878, %v7024
    %v7026 = vpop.f32.mrb[0].mxu0
    %7027 = vmatprep.mubr.f32.mxu0 0.0
    %7028 = vmatmul.mubr.f32.gmra.mrb[0].mxu0 %v6902
    %v7029 = vpop.f32.mrb[0].mxu0
    %v7030 = vadd.f32 %v6878, %v7029
    %v7031 = vpop.f32.mrb[0].mxu0
    %7032 = vmatprep.mubr.f32.mxu0 0.0
    %7033 = vmatmul.mubr.f32.gmra.mrb[0].mxu0 %v6905
    %v7034 = vpop.f32.mrb[0].mxu0
    %v7035 = vadd.f32 %v6878, %v7034
    %v7036 = vpop.f32.mrb[0].mxu0
    %7037 = vmatprep.mubr.f32.mxu0 0.0
    %7038 = vmatmul.mubr.f32.gmra.mrb[0].mxu0 %v6908
    %v7039 = vpop.f32.mrb[0].mxu0
    %v7040 = vadd.f32 %v6878, %v7039
    %v7041 = vpop.f32.mrb[0].mxu0
    %7042 = vmatprep.mubr.f32.mxu0 0.0
    %7043 = vmatmul.mubr.f32.gmra.mrb[0].mxu0 %v6911
    %v7044 = vpop.f32.mrb[0].mxu0
    %v7045 = vadd.f32 %v6878, %v7044
    %v7046 = vpop.f32.mrb[0].mxu0
    %7047 = vmatprep.mubr.f32.mxu0 0.0
    %7048 = vmatmul.mubr.f32.gmra.mrb[0].mxu0 %v6914
    %v7049 = vpop.f32.mrb[0].mxu0
    %v7050 = vadd.f32 %v6878, %v7049
    %v7051 = vpop.f32.mrb[0].mxu0
    %7052 = vmatprep.mubr.f32.mxu0 0.0
    %7053 = vmatmul.mubr.f32.gmra.mrb[0].mxu0 %v6917
    %v7054 = vpop.f32.mrb[0].mxu0
    %v7055 = vadd.f32 %v6878, %v7054
    %v7056 = vpop.f32.mrb[0].mxu0
    %7057 = vmatprep.mubr.f32.mxu0 0.0
    %7058 = vmatmul.mubr.f32.gmra.mrb[0].mxu0 %v6920
    %v7059 = vpop.f32.mrb[0].mxu0
    %v7060 = vadd.f32 %v6878, %v7059
    %v7061 = vpop.f32.mrb[0].mxu0
    %7062 = vmatprep.mubr.f32.mxu0 0.0
    %7063 = vmatmul.mubr.f32.gmra.mrb[0].mxu0 %v6923
    %v7064 = vpop.f32.mrb[0].mxu0
    %v7065 = vadd.f32 %v6878, %v7064
    %v7066 = vpop.f32.mrb[0].mxu0
    %7067 = vmatprep.mubr.f32.mxu0 0.0
    %7068 = vmatmul.mubr.f32.gmra.mrb[0].mxu0 %v6926
    %v7069 = vpop.f32.mrb[0].mxu0
    %v7070 = vadd.f32 %v6878, %v7069
    %v7071 = vpop.f32.mrb[0].mxu0
    %7072 = vdwg.mxu0
    %v7073 = vld [vmem:[#allocation4] sm:$0xff]
    %v7074 = vld [vmem:[#allocation4 + $0x8] sm:$0xff]
    %v7075 = vlaneseq
    %v7076 = vshrl.u32 %v7075, 7
    %v7077 = vsub.s32 0, %v7076
    %v7078 = vrot.slane %v7073, %v7077
    %7080 = vbcast.lane.b32.xlu0 %v7078, 256
    %v7081 = vpop.permute.xlu0 %7080
    %v7082 = vlaneseq
    %v7083 = vshrl.u32 %v7082, 7
    %v7084 = vsub.s32 1, %v7083
    %v7085 = vrot.slane %v7073, %v7084
    %7087 = vbcast.lane.b32.xlu0 %v7085, 256
    %v7088 = vpop.permute.xlu0 %7087
    %v7089 = vlaneseq
    %v7090 = vshrl.u32 %v7089, 7
    %v7091 = vsub.s32 2, %v7090
    %v7092 = vrot.slane %v7073, %v7091
    %7094 = vbcast.lane.b32.xlu0 %v7092, 256
    %v7095 = vpop.permute.xlu0 %7094
    %v7096 = vlaneseq
    %v7097 = vshrl.u32 %v7096, 7
    %v7098 = vsub.s32 3, %v7097
    %v7099 = vrot.slane %v7073, %v7098
    %7101 = vbcast.lane.b32.xlu0 %v7099, 256
    %v7102 = vpop.permute.xlu0 %7101
    %v7103 = vlaneseq
    %v7104 = vshrl.u32 %v7103, 7
    %v7105 = vsub.s32 4, %v7104
    %v7106 = vrot.slane %v7073, %v7105
    %7108 = vbcast.lane.b32.xlu0 %v7106, 256
    %v7109 = vpop.permute.xlu0 %7108
    %v7110 = vlaneseq
    %v7111 = vshrl.u32 %v7110, 7
    %v7112 = vsub.s32 5, %v7111
    %v7113 = vrot.slane %v7073, %v7112
    %7115 = vbcast.lane.b32.xlu0 %v7113, 256
    %v7116 = vpop.permute.xlu0 %7115
    %v7117 = vlaneseq
    %v7118 = vshrl.u32 %v7117, 7
    %v7119 = vsub.s32 6, %v7118
    %v7120 = vrot.slane %v7073, %v7119
    %7122 = vbcast.lane.b32.xlu0 %v7120, 256
    %v7123 = vpop.permute.xlu0 %7122
    %v7124 = vlaneseq
    %v7125 = vshrl.u32 %v7124, 7
    %v7126 = vsub.s32 7, %v7125
    %v7127 = vrot.slane %v7073, %v7126
    %7129 = vbcast.lane.b32.xlu0 %v7127, 256
    %v7130 = vpop.permute.xlu0 %7129
    %v7131 = vlaneseq
    %v7132 = vshrl.u32 %v7131, 7
    %v7133 = vsub.s32 0, %v7132
    %v7134 = vrot.slane %v7074, %v7133
    %7136 = vbcast.lane.b32.xlu0 %v7134, 256
    %v7137 = vpop.permute.xlu0 %7136
    %v7138 = vlaneseq
    %v7139 = vshrl.u32 %v7138, 7
    %v7140 = vsub.s32 1, %v7139
    %v7141 = vrot.slane %v7074, %v7140
    %7143 = vbcast.lane.b32.xlu0 %v7141, 256
    %v7144 = vpop.permute.xlu0 %7143
    %v7145 = vlaneseq
    %v7146 = vshrl.u32 %v7145, 7
    %v7147 = vsub.s32 2, %v7146
    %v7148 = vrot.slane %v7074, %v7147
    %7150 = vbcast.lane.b32.xlu0 %v7148, 256
    %v7151 = vpop.permute.xlu0 %7150
    %v7152 = vlaneseq
    %v7153 = vshrl.u32 %v7152, 7
    %v7154 = vsub.s32 3, %v7153
    %v7155 = vrot.slane %v7074, %v7154
    %7157 = vbcast.lane.b32.xlu0 %v7155, 256
    %v7158 = vpop.permute.xlu0 %7157
    %v7159 = vlaneseq
    %v7160 = vshrl.u32 %v7159, 7
    %v7161 = vsub.s32 4, %v7160
    %v7162 = vrot.slane %v7074, %v7161
    %7164 = vbcast.lane.b32.xlu0 %v7162, 256
    %v7165 = vpop.permute.xlu0 %7164
    %v7166 = vlaneseq
    %v7167 = vshrl.u32 %v7166, 7
    %v7168 = vsub.s32 5, %v7167
    %v7169 = vrot.slane %v7074, %v7168
    %7171 = vbcast.lane.b32.xlu0 %v7169, 256
    %v7172 = vpop.permute.xlu0 %7171
    %v7173 = vlaneseq
    %v7174 = vshrl.u32 %v7173, 7
    %v7175 = vsub.s32 6, %v7174
    %v7176 = vrot.slane %v7074, %v7175
    %7178 = vbcast.lane.b32.xlu0 %v7176, 256
    %v7179 = vpop.permute.xlu0 %7178
    %v7180 = vlaneseq
    %v7181 = vshrl.u32 %v7180, 7
    %v7182 = vsub.s32 7, %v7181
    %v7183 = vrot.slane %v7074, %v7182
    %7185 = vbcast.lane.b32.xlu0 %v7183, 256
    %v7186 = vpop.permute.xlu0 %7185
    %v7187 = vadd.f32 %v6995, %v7081
    %v7188 = vadd.f32 %v7000, %v7088
    %v7189 = vadd.f32 %v7005, %v7095
    %v7190 = vadd.f32 %v7010, %v7102
    %v7191 = vadd.f32 %v7015, %v7109
    %v7192 = vadd.f32 %v7020, %v7116
    %v7193 = vadd.f32 %v7025, %v7123
    %v7194 = vadd.f32 %v7030, %v7130
    %v7195 = vadd.f32 %v7035, %v7137
    %v7196 = vadd.f32 %v7040, %v7144
    %v7197 = vadd.f32 %v7045, %v7151
    %v7198 = vadd.f32 %v7050, %v7158
    %v7199 = vadd.f32 %v7055, %v7165
    %v7200 = vadd.f32 %v7060, %v7172
    %v7201 = vadd.f32 %v7065, %v7179
    %v7202 = vadd.f32 %v7070, %v7186
    %v7203 = vsel %vm6006, %v7187, -inf
    %v7204 = vrot.slane %v7203, 4
    %v7205 = vmax.f32 %v7203, %v7204
    %v7206 = vrot.slane %v7205, 2
    %v7207 = vmax.f32 %v7205, %v7206
    %v7208 = vrot.slane %v7207, 1
    %v7209 = vmax.f32 %v7207, %v7208
    %v7210 = vsel %vm6006, %v7188, -inf
    %v7211 = vrot.slane %v7210, 4
    %v7212 = vmax.f32 %v7210, %v7211
    %v7213 = vrot.slane %v7212, 2
    %v7214 = vmax.f32 %v7212, %v7213
    %v7215 = vrot.slane %v7214, 1
    %v7216 = vmax.f32 %v7214, %v7215
    %v7217 = vsel %vm6006, %v7189, -inf
    %v7218 = vrot.slane %v7217, 4
    %v7219 = vmax.f32 %v7217, %v7218
    %v7220 = vrot.slane %v7219, 2
    %v7221 = vmax.f32 %v7219, %v7220
    %v7222 = vrot.slane %v7221, 1
    %v7223 = vmax.f32 %v7221, %v7222
    %v7224 = vsel %vm6006, %v7190, -inf
    %v7225 = vrot.slane %v7224, 4
    %v7226 = vmax.f32 %v7224, %v7225
    %v7227 = vrot.slane %v7226, 2
    %v7228 = vmax.f32 %v7226, %v7227
    %v7229 = vrot.slane %v7228, 1
    %v7230 = vmax.f32 %v7228, %v7229
    %v7231 = vsel %vm6006, %v7191, -inf
    %v7232 = vrot.slane %v7231, 4
    %v7233 = vmax.f32 %v7231, %v7232
    %v7234 = vrot.slane %v7233, 2
    %v7235 = vmax.f32 %v7233, %v7234
    %v7236 = vrot.slane %v7235, 1
    %v7237 = vmax.f32 %v7235, %v7236
    %v7238 = vsel %vm6006, %v7192, -inf
    %v7239 = vrot.slane %v7238, 4
    %v7240 = vmax.f32 %v7238, %v7239
    %v7241 = vrot.slane %v7240, 2
    %v7242 = vmax.f32 %v7240, %v7241
    %v7243 = vrot.slane %v7242, 1
    %v7244 = vmax.f32 %v7242, %v7243
    %v7245 = vsel %vm6006, %v7193, -inf
    %v7246 = vrot.slane %v7245, 4
    %v7247 = vmax.f32 %v7245, %v7246
    %v7248 = vrot.slane %v7247, 2
    %v7249 = vmax.f32 %v7247, %v7248
    %v7250 = vrot.slane %v7249, 1
    %v7251 = vmax.f32 %v7249, %v7250
    %v7252 = vsel %vm6006, %v7194, -inf
    %v7253 = vrot.slane %v7252, 4
    %v7254 = vmax.f32 %v7252, %v7253
    %v7255 = vrot.slane %v7254, 2
    %v7256 = vmax.f32 %v7254, %v7255
    %v7257 = vrot.slane %v7256, 1
    %v7258 = vmax.f32 %v7256, %v7257
    %v7259 = vsel %vm6006, %v7195, -inf
    %v7260 = vrot.slane %v7259, 4
    %v7261 = vmax.f32 %v7259, %v7260
    %v7262 = vrot.slane %v7261, 2
    %v7263 = vmax.f32 %v7261, %v7262
    %v7264 = vrot.slane %v7263, 1
    %v7265 = vmax.f32 %v7263, %v7264
    %v7266 = vsel %vm6006, %v7196, -inf
    %v7267 = vrot.slane %v7266, 4
    %v7268 = vmax.f32 %v7266, %v7267
    %v7269 = vrot.slane %v7268, 2
    %v7270 = vmax.f32 %v7268, %v7269
    %v7271 = vrot.slane %v7270, 1
    %v7272 = vmax.f32 %v7270, %v7271
    %v7273 = vsel %vm6006, %v7197, -inf
    %v7274 = vrot.slane %v7273, 4
    %v7275 = vmax.f32 %v7273, %v7274
    %v7276 = vrot.slane %v7275, 2
    %v7277 = vmax.f32 %v7275, %v7276
    %v7278 = vrot.slane %v7277, 1
    %v7279 = vmax.f32 %v7277, %v7278
    %v7280 = vsel %vm6006, %v7198, -inf
    %v7281 = vrot.slane %v7280, 4
    %v7282 = vmax.f32 %v7280, %v7281
    %v7283 = vrot.slane %v7282, 2
    %v7284 = vmax.f32 %v7282, %v7283
    %v7285 = vrot.slane %v7284, 1
    %v7286 = vmax.f32 %v7284, %v7285
    %v7287 = vsel %vm6006, %v7199, -inf
    %v7288 = vrot.slane %v7287, 4
    %v7289 = vmax.f32 %v7287, %v7288
    %v7290 = vrot.slane %v7289, 2
    %v7291 = vmax.f32 %v7289, %v7290
    %v7292 = vrot.slane %v7291, 1
    %v7293 = vmax.f32 %v7291, %v7292
    %v7294 = vsel %vm6006, %v7200, -inf
    %v7295 = vrot.slane %v7294, 4
    %v7296 = vmax.f32 %v7294, %v7295
    %v7297 = vrot.slane %v7296, 2
    %v7298 = vmax.f32 %v7296, %v7297
    %v7299 = vrot.slane %v7298, 1
    %v7300 = vmax.f32 %v7298, %v7299
    %v7301 = vsel %vm6006, %v7201, -inf
    %v7302 = vrot.slane %v7301, 4
    %v7303 = vmax.f32 %v7301, %v7302
    %v7304 = vrot.slane %v7303, 2
    %v7305 = vmax.f32 %v7303, %v7304
    %v7306 = vrot.slane %v7305, 1
    %v7307 = vmax.f32 %v7305, %v7306
    %v7308 = vsel %vm6006, %v7202, -inf
    %v7309 = vrot.slane %v7308, 4
    %v7310 = vmax.f32 %v7308, %v7309
    %v7311 = vrot.slane %v7310, 2
    %v7312 = vmax.f32 %v7310, %v7311
    %v7313 = vrot.slane %v7312, 1
    %v7314 = vmax.f32 %v7312, %v7313
    %v7315 = vld [vmem:[#allocation24] sm:$0xff]
    %v7316 = vld [vmem:[#allocation24 + $0x8] sm:$0xff]
    %v7317 = vld [vmem:[#allocation24 + $0x10] sm:$0xff]
    %v7318 = vld [vmem:[#allocation24 + $0x18] sm:$0xff]
    %v7319 = vld [vmem:[#allocation24 + $0x20] sm:$0xff]
    %v7320 = vld [vmem:[#allocation24 + $0x28] sm:$0xff]
    %v7321 = vld [vmem:[#allocation24 + $0x30] sm:$0xff]
    %v7322 = vld [vmem:[#allocation24 + $0x38] sm:$0xff]
    %v7323 = vld [vmem:[#allocation6] sm:$0xff]
    %v7324 = vld [vmem:[#allocation6 + $0x8] sm:$0xff]
    %v7325 = vld [vmem:[#allocation25] sm:$0x7]
    %v7327 = vsel %vm891, %v7323, 0
    %v7330 = vsel %vm891, %v7324, 0
    %v7333 = vsel %vm1276, %v7325, 0
    %7335 = vmatprep.subr.mxu0 0.0
    %7336 = vmatpush1.msra.mxu0 %v7333
    %7337 = vmatprep.subr.mxu0 0.0
    %7338 = vmatpush1.msra.mxu0 0.0
    %7339 = vmatprep.subr.mxu0 0.0
    %7340 = vmatpush1.msra.mxu0 0.0
    %7341 = vmatprep.subr.mxu0 0.0
    %7342 = vmatpush1.msra.mxu0 0.0
    %7343 = vmatprep.subr.mxu0 0.0
    %7344 = vmatpush1.msra.mxu0 0.0
    %7345 = vmatprep.subr.mxu0 0.0
    %7346 = vmatpush1.msra.mxu0 0.0
    %7347 = vmatprep.subr.mxu0 0.0
    %7348 = vmatpush1.msra.mxu0 0.0
    %7349 = vmatprep.subr.mxu0 0.0
    %7350 = vmatpush1.msra.mxu0 0.0
    %7351 = vmatprep.subr.mxu0 0.0
    %7352 = vmatpush1.msra.mxu0 0.0
    %7353 = vmatprep.subr.mxu0 0.0
    %7354 = vmatpush1.msra.mxu0 0.0
    %7355 = vmatprep.subr.mxu0 0.0
    %7356 = vmatpush1.msra.mxu0 0.0
    %7357 = vmatprep.subr.mxu0 0.0
    %7358 = vmatpush1.msra.mxu0 0.0
    %7359 = vmatprep.subr.mxu0 0.0
    %7360 = vmatpush1.msra.mxu0 0.0
    %7361 = vmatprep.subr.mxu0 0.0
    %7362 = vmatpush1.msra.mxu0 0.0
    %7363 = vmatprep.subr.mxu0 0.0
    %7364 = vmatpush1.msra.mxu0 0.0
    %7365 = vmatprep.subr.mxu0 0.0
    %7366 = vmatpush1.msra.mxu0 0.0
    %7367 = vmatprep.subr.mxu0 0.0
    %7368 = vmatpush1.msra.mxu0 0.0
    %7369 = vmatprep.subr.mxu0 0.0
    %7370 = vmatpush1.msra.mxu0 0.0
    %7371 = vmatprep.subr.mxu0 0.0
    %7372 = vmatpush1.msra.mxu0 0.0
    %7373 = vmatprep.subr.mxu0 0.0
    %7374 = vmatpush1.msra.mxu0 0.0
    %7375 = vmatprep.subr.mxu0 0.0
    %7376 = vmatpush1.msra.mxu0 0.0
    %7377 = vmatprep.subr.mxu0 0.0
    %7378 = vmatpush1.msra.mxu0 0.0
    %7379 = vmatprep.subr.mxu0 0.0
    %7380 = vmatpush1.msra.mxu0 0.0
    %7381 = vmatprep.subr.mxu0 0.0
    %7382 = vmatpush1.msra.mxu0 0.0
    %7383 = vmatprep.subr.mxu0 0.0
    %7384 = vmatpush1.msra.mxu0 0.0
    %7385 = vmatprep.subr.mxu0 0.0
    %7386 = vmatpush1.msra.mxu0 0.0
    %7387 = vmatprep.subr.mxu0 0.0
    %7388 = vmatpush1.msra.mxu0 0.0
    %7389 = vmatprep.subr.mxu0 0.0
    %7390 = vmatpush1.msra.mxu0 0.0
    %7391 = vmatprep.subr.mxu0 0.0
    %7392 = vmatpush1.msra.mxu0 0.0
    %7393 = vmatprep.subr.mxu0 0.0
    %7394 = vmatpush1.msra.mxu0 0.0
    %7395 = vmatprep.subr.mxu0 0.0
    %7396 = vmatpush1.msra.mxu0 0.0
    %7397 = vmatprep.subr.mxu0 0.0
    %7398 = vmatpush1.msra.mxu0 0.0
    %7399 = vmatprep.mubr.f32.mxu0 0.0
    %7400 = vmatmul.mubr.f32.gmra.mrb[0].mxu0 %v7327
    %v7401 = vpop.f32.mrb[0].mxu0
    %v7402 = vadd.f32 0.0, %v7401
    %v7403 = vpop.f32.mrb[0].mxu0
    %7404 = vmatprep.mubr.f32.mxu0 0.0
    %7405 = vmatmul.mubr.f32.gmra.mrb[0].mxu0 %v7330
    %v7406 = vpop.f32.mrb[0].mxu0
    %v7407 = vadd.f32 0.0, %v7406
    %v7408 = vpop.f32.mrb[0].mxu0
    %7409 = vdwg.mxu0
    %v7426 = vsel %vm5935, %v7216, %v7209
    %v7427 = vsel %vm5937, %v7223, %v7426
    %v7428 = vsel %vm5939, %v7230, %v7427
    %v7429 = vsel %vm5941, %v7237, %v7428
    %v7430 = vsel %vm5943, %v7244, %v7429
    %v7431 = vsel %vm5945, %v7251, %v7430
    %v7432 = vsel %vm5947, %v7258, %v7431
    %v7433 = vsel %vm5935, %v7272, %v7265
    %v7434 = vsel %vm5937, %v7279, %v7433
    %v7435 = vsel %vm5939, %v7286, %v7434
    %v7436 = vsel %vm5941, %v7293, %v7435
    %v7437 = vsel %vm5943, %v7300, %v7436
    %v7438 = vsel %vm5945, %v7307, %v7437
    %v7439 = vsel %vm5947, %v7314, %v7438
    %v7440 = vsel %vm6006, %v7432, 0
    %v7442 = vsel %vm6006, %v7439, 0
    %7444 = vmatprep.subr.mxu0 0.0
    %7445 = vmatpush1.msra.mxu0 %v7315
    %7446 = vmatprep.subr.mxu0 0.0
    %7447 = vmatpush1.msra.mxu0 %v7316
    %7448 = vmatprep.subr.mxu0 0.0
    %7449 = vmatpush1.msra.mxu0 %v7317
    %7450 = vmatprep.subr.mxu0 0.0
    %7451 = vmatpush1.msra.mxu0 %v7318
    %7452 = vmatprep.subr.mxu0 0.0
    %7453 = vmatpush1.msra.mxu0 %v7319
    %7454 = vmatprep.subr.mxu0 0.0
    %7455 = vmatpush1.msra.mxu0 %v7320
    %7456 = vmatprep.subr.mxu0 0.0
    %7457 = vmatpush1.msra.mxu0 %v7321
    %7458 = vmatprep.subr.mxu0 0.0
    %7459 = vmatpush1.msra.mxu0 %v7322
    %7460 = vmatprep.subr.mxu0 0.0
    %7461 = vmatpush1.msra.mxu0 0.0
    %7462 = vmatprep.subr.mxu0 0.0
    %7463 = vmatpush1.msra.mxu0 0.0
    %7464 = vmatprep.subr.mxu0 0.0
    %7465 = vmatpush1.msra.mxu0 0.0
    %7466 = vmatprep.subr.mxu0 0.0
    %7467 = vmatpush1.msra.mxu0 0.0
    %7468 = vmatprep.subr.mxu0 0.0
    %7469 = vmatpush1.msra.mxu0 0.0
    %7470 = vmatprep.subr.mxu0 0.0
    %7471 = vmatpush1.msra.mxu0 0.0
    %7472 = vmatprep.subr.mxu0 0.0
    %7473 = vmatpush1.msra.mxu0 0.0
    %7474 = vmatprep.subr.mxu0 0.0
    %7475 = vmatpush1.msra.mxu0 0.0
    %7476 = vmatprep.subr.mxu0 0.0
    %7477 = vmatpush1.msra.mxu0 0.0
    %7478 = vmatprep.subr.mxu0 0.0
    %7479 = vmatpush1.msra.mxu0 0.0
    %7480 = vmatprep.subr.mxu0 0.0
    %7481 = vmatpush1.msra.mxu0 0.0
    %7482 = vmatprep.subr.mxu0 0.0
    %7483 = vmatpush1.msra.mxu0 0.0
    %7484 = vmatprep.subr.mxu0 0.0
    %7485 = vmatpush1.msra.mxu0 0.0
    %7486 = vmatprep.subr.mxu0 0.0
    %7487 = vmatpush1.msra.mxu0 0.0
    %7488 = vmatprep.subr.mxu0 0.0
    %7489 = vmatpush1.msra.mxu0 0.0
    %7490 = vmatprep.subr.mxu0 0.0
    %7491 = vmatpush1.msra.mxu0 0.0
    %7492 = vmatprep.subr.mxu0 0.0
    %7493 = vmatpush1.msra.mxu0 0.0
    %7494 = vmatprep.subr.mxu0 0.0
    %7495 = vmatpush1.msra.mxu0 0.0
    %7496 = vmatprep.subr.mxu0 0.0
    %7497 = vmatpush1.msra.mxu0 0.0
    %7498 = vmatprep.subr.mxu0 0.0
    %7499 = vmatpush1.msra.mxu0 0.0
    %7500 = vmatprep.subr.mxu0 0.0
    %7501 = vmatpush1.msra.mxu0 0.0
    %7502 = vmatprep.subr.mxu0 0.0
    %7503 = vmatpush1.msra.mxu0 0.0
    %7504 = vmatprep.subr.mxu0 0.0
    %7505 = vmatpush1.msra.mxu0 0.0
    %7506 = vmatprep.subr.mxu0 0.0
    %7507 = vmatpush1.msra.mxu0 0.0
    %7508 = vmatprep.mubr.f32.mxu0 0.0
    %7509 = vmatmul.mubr.f32.gmra.mrb[0].mxu0 %v7440
    %v7510 = vpop.f32.mrb[0].mxu0
    %v7511 = vadd.f32 %v7402, %v7510
    %v7512 = vpop.f32.mrb[0].mxu0
    %7513 = vmatprep.mubr.f32.mxu0 0.0
    %7514 = vmatmul.mubr.f32.gmra.mrb[0].mxu0 %v7442
    %v7515 = vpop.f32.mrb[0].mxu0
    %v7516 = vadd.f32 %v7407, %v7515
    %v7517 = vpop.f32.mrb[0].mxu0
    %7518 = vdwg.mxu0
    %v7519 = vld [vmem:[#allocation27] sm:$0x1]
    %v7521 = vlaneseq
    %v7522 = vshrl.u32 %v7521, 7
    %v7523 = vsub.s32 0, %v7522
    %v7524 = vrot.slane %v7519, %v7523
    %v7526 = vadd.f32 %v7511, %v7524
    %v7527 = vadd.f32 %v7516, %v7524
    %v7528 = vmax.f32 %v7526, 0.0
    %v7529 = vmax.f32 %v7527, 0.0
    %v7530 = vld [vmem:[#allocation28] sm:$0xff]
    %v7531 = vld [vmem:[#allocation28 + $0x8] sm:$0xff]
    %v7532 = vld [vmem:[#allocation28 + $0x10] sm:$0xff]
    %v7533 = vld [vmem:[#allocation28 + $0x18] sm:$0xff]
    %v7534 = vld [vmem:[#allocation28 + $0x20] sm:$0xff]
    %v7535 = vld [vmem:[#allocation28 + $0x28] sm:$0xff]
    %v7536 = vld [vmem:[#allocation28 + $0x30] sm:$0xff]
    %v7537 = vld [vmem:[#allocation28 + $0x38] sm:$0xff]
    %v7538 = vld [vmem:[#allocation30] sm:$0x1]
    %v7540 = vlaneseq
    %v7541 = vshrl.u32 %v7540, 7
    %v7542 = vsub.s32 0, %v7541
    %v7543 = vrot.slane %v7538, %v7542
    %v7546 = vsel %vm6006, %v7528, 0
    %v7549 = vsel %vm6006, %v7529, 0
    %7551 = vmatprep.subr.mxu0 0.0
    %7552 = vmatpush1.msra.mxu0 %v7530
    %7553 = vmatprep.subr.mxu0 0.0
    %7554 = vmatpush1.msra.mxu0 %v7531
    %7555 = vmatprep.subr.mxu0 0.0
    %7556 = vmatpush1.msra.mxu0 %v7532
    %7557 = vmatprep.subr.mxu0 0.0
    %7558 = vmatpush1.msra.mxu0 %v7533
    %7559 = vmatprep.subr.mxu0 0.0
    %7560 = vmatpush1.msra.mxu0 %v7534
    %7561 = vmatprep.subr.mxu0 0.0
    %7562 = vmatpush1.msra.mxu0 %v7535
    %7563 = vmatprep.subr.mxu0 0.0
    %7564 = vmatpush1.msra.mxu0 %v7536
    %7565 = vmatprep.subr.mxu0 0.0
    %7566 = vmatpush1.msra.mxu0 %v7537
    %7567 = vmatprep.subr.mxu0 0.0
    %7568 = vmatpush1.msra.mxu0 0.0
    %7569 = vmatprep.subr.mxu0 0.0
    %7570 = vmatpush1.msra.mxu0 0.0
    %7571 = vmatprep.subr.mxu0 0.0
    %7572 = vmatpush1.msra.mxu0 0.0
    %7573 = vmatprep.subr.mxu0 0.0
    %7574 = vmatpush1.msra.mxu0 0.0
    %7575 = vmatprep.subr.mxu0 0.0
    %7576 = vmatpush1.msra.mxu0 0.0
    %7577 = vmatprep.subr.mxu0 0.0
    %7578 = vmatpush1.msra.mxu0 0.0
    %7579 = vmatprep.subr.mxu0 0.0
    %7580 = vmatpush1.msra.mxu0 0.0
    %7581 = vmatprep.subr.mxu0 0.0
    %7582 = vmatpush1.msra.mxu0 0.0
    %7583 = vmatprep.subr.mxu0 0.0
    %7584 = vmatpush1.msra.mxu0 0.0
    %7585 = vmatprep.subr.mxu0 0.0
    %7586 = vmatpush1.msra.mxu0 0.0
    %7587 = vmatprep.subr.mxu0 0.0
    %7588 = vmatpush1.msra.mxu0 0.0
    %7589 = vmatprep.subr.mxu0 0.0
    %7590 = vmatpush1.msra.mxu0 0.0
    %7591 = vmatprep.subr.mxu0 0.0
    %7592 = vmatpush1.msra.mxu0 0.0
    %7593 = vmatprep.subr.mxu0 0.0
    %7594 = vmatpush1.msra.mxu0 0.0
    %7595 = vmatprep.subr.mxu0 0.0
    %7596 = vmatpush1.msra.mxu0 0.0
    %7597 = vmatprep.subr.mxu0 0.0
    %7598 = vmatpush1.msra.mxu0 0.0
    %7599 = vmatprep.subr.mxu0 0.0
    %7600 = vmatpush1.msra.mxu0 0.0
    %7601 = vmatprep.subr.mxu0 0.0
    %7602 = vmatpush1.msra.mxu0 0.0
    %7603 = vmatprep.subr.mxu0 0.0
    %7604 = vmatpush1.msra.mxu0 0.0
    %7605 = vmatprep.subr.mxu0 0.0
    %7606 = vmatpush1.msra.mxu0 0.0
    %7607 = vmatprep.subr.mxu0 0.0
    %7608 = vmatpush1.msra.mxu0 0.0
    %7609 = vmatprep.subr.mxu0 0.0
    %7610 = vmatpush1.msra.mxu0 0.0
    %7611 = vmatprep.subr.mxu0 0.0
    %7612 = vmatpush1.msra.mxu0 0.0
    %7613 = vmatprep.subr.mxu0 0.0
    %7614 = vmatpush1.msra.mxu0 0.0
    %7615 = vmatprep.mubr.f32.mxu0 0.0
    %7616 = vmatmul.mubr.f32.gmra.mrb[0].mxu0 %v7546
    %v7617 = vpop.f32.mrb[0].mxu0
    %v7618 = vadd.f32 %v7543, %v7617
    %v7619 = vpop.f32.mrb[0].mxu0
    %7620 = vmatprep.mubr.f32.mxu0 0.0
    %7621 = vmatmul.mubr.f32.gmra.mrb[0].mxu0 %v7549
    %v7622 = vpop.f32.mrb[0].mxu0
    %v7623 = vadd.f32 %v7543, %v7622
    %v7624 = vpop.f32.mrb[0].mxu0
    %7625 = vdwg.mxu0
    %v7626 = vmax.f32 %v7618, 0.0
    %v7627 = vmax.f32 %v7623, 0.0
    %v7628 = vld [vmem:[#allocation31] sm:$0xff]
    %v7629 = vld [vmem:[#allocation31 + $0x8] sm:$0xff]
    %v7630 = vld [vmem:[#allocation31 + $0x10] sm:$0xff]
    %v7631 = vld [vmem:[#allocation31 + $0x18] sm:$0xff]
    %v7632 = vld [vmem:[#allocation31 + $0x20] sm:$0xff]
    %v7633 = vld [vmem:[#allocation31 + $0x28] sm:$0xff]
    %v7634 = vld [vmem:[#allocation31 + $0x30] sm:$0xff]
    %v7635 = vld [vmem:[#allocation31 + $0x38] sm:$0xff]
    %v7636 = vld [vmem:[#allocation31 + $0x40] sm:$0xff]
    %v7637 = vld [vmem:[#allocation31 + $0x48] sm:$0xff]
    %v7638 = vld [vmem:[#allocation31 + $0x50] sm:$0xff]
    %v7639 = vld [vmem:[#allocation31 + $0x58] sm:$0xff]
    %v7640 = vld [vmem:[#allocation31 + $0x60] sm:$0xff]
    %v7641 = vld [vmem:[#allocation31 + $0x68] sm:$0xff]
    %v7642 = vld [vmem:[#allocation31 + $0x70] sm:$0xff]
    %v7643 = vld [vmem:[#allocation31 + $0x78] sm:$0xff]
    %v7644 = vld [vmem:[#allocation33] sm:$0x1]
    %v7646 = vlaneseq
    %v7647 = vshrl.u32 %v7646, 7
    %v7648 = vsub.s32 0, %v7647
    %v7649 = vrot.slane %v7644, %v7648
    %7651 = vmatprep.subr.mxu0 0.0
    %7652 = vmatpush1.msra.mxu0 %v7628
    %7653 = vmatprep.subr.mxu0 0.0
    %7654 = vmatpush1.msra.mxu0 %v7629
    %7655 = vmatprep.subr.mxu0 0.0
    %7656 = vmatpush1.msra.mxu0 %v7630
    %7657 = vmatprep.subr.mxu0 0.0
    %7658 = vmatpush1.msra.mxu0 %v7631
    %7659 = vmatprep.subr.mxu0 0.0
    %7660 = vmatpush1.msra.mxu0 %v7632
    %7661 = vmatprep.subr.mxu0 0.0
    %7662 = vmatpush1.msra.mxu0 %v7633
    %7663 = vmatprep.subr.mxu0 0.0
    %7664 = vmatpush1.msra.mxu0 %v7634
    %7665 = vmatprep.subr.mxu0 0.0
    %7666 = vmatpush1.msra.mxu0 %v7635
    %7667 = vmatprep.subr.mxu0 0.0
    %7668 = vmatpush1.msra.mxu0 %v7636
    %7669 = vmatprep.subr.mxu0 0.0
    %7670 = vmatpush1.msra.mxu0 %v7637
    %7671 = vmatprep.subr.mxu0 0.0
    %7672 = vmatpush1.msra.mxu0 %v7638
    %7673 = vmatprep.subr.mxu0 0.0
    %7674 = vmatpush1.msra.mxu0 %v7639
    %7675 = vmatprep.subr.mxu0 0.0
    %7676 = vmatpush1.msra.mxu0 %v7640
    %7677 = vmatprep.subr.mxu0 0.0
    %7678 = vmatpush1.msra.mxu0 %v7641
    %7679 = vmatprep.subr.mxu0 0.0
    %7680 = vmatpush1.msra.mxu0 %v7642
    %7681 = vmatprep.subr.mxu0 0.0
    %7682 = vmatpush1.msra.mxu0 %v7643
    %7683 = vmatprep.subr.mxu0 0.0
    %7684 = vmatpush1.msra.mxu0 0.0
    %7685 = vmatprep.subr.mxu0 0.0
    %7686 = vmatpush1.msra.mxu0 0.0
    %7687 = vmatprep.subr.mxu0 0.0
    %7688 = vmatpush1.msra.mxu0 0.0
    %7689 = vmatprep.subr.mxu0 0.0
    %7690 = vmatpush1.msra.mxu0 0.0
    %7691 = vmatprep.subr.mxu0 0.0
    %7692 = vmatpush1.msra.mxu0 0.0
    %7693 = vmatprep.subr.mxu0 0.0
    %7694 = vmatpush1.msra.mxu0 0.0
    %7695 = vmatprep.subr.mxu0 0.0
    %7696 = vmatpush1.msra.mxu0 0.0
    %7697 = vmatprep.subr.mxu0 0.0
    %7698 = vmatpush1.msra.mxu0 0.0
    %7699 = vmatprep.subr.mxu0 0.0
    %7700 = vmatpush1.msra.mxu0 0.0
    %7701 = vmatprep.subr.mxu0 0.0
    %7702 = vmatpush1.msra.mxu0 0.0
    %7703 = vmatprep.subr.mxu0 0.0
    %7704 = vmatpush1.msra.mxu0 0.0
    %7705 = vmatprep.subr.mxu0 0.0
    %7706 = vmatpush1.msra.mxu0 0.0
    %7707 = vmatprep.subr.mxu0 0.0
    %7708 = vmatpush1.msra.mxu0 0.0
    %7709 = vmatprep.subr.mxu0 0.0
    %7710 = vmatpush1.msra.mxu0 0.0
    %7711 = vmatprep.subr.mxu0 0.0
    %7712 = vmatpush1.msra.mxu0 0.0
    %7713 = vmatprep.subr.mxu0 0.0
    %7714 = vmatpush1.msra.mxu0 0.0
    %7715 = vmatprep.mubr.f32.mxu0 0.0
    %7716 = vmatmul.mubr.f32.gmra.mrb[0].mxu0 %v7626
    %v7717 = vpop.f32.mrb[0].mxu0
    %v7718 = vadd.f32 %v7649, %v7717
    %v7719 = vpop.f32.mrb[0].mxu0
    %7720 = vmatprep.mubr.f32.mxu0 0.0
    %7721 = vmatmul.mubr.f32.gmra.mrb[0].mxu0 %v7627
    %v7722 = vpop.f32.mrb[0].mxu0
    %v7723 = vadd.f32 %v7649, %v7722
    %v7724 = vpop.f32.mrb[0].mxu0
    %7725 = vdwg.mxu0
    %v7726 = vrot.slane %v7718, 4
    %v7727 = vmax.f32 %v7718, %v7726
    %v7728 = vrot.slane %v7727, 2
    %v7729 = vmax.f32 %v7727, %v7728
    %v7730 = vrot.slane %v7729, 1
    %v7731 = vmax.f32 %v7729, %v7730
    %v7732 = vrot.slane %v7723, 4
    %v7733 = vmax.f32 %v7723, %v7732
    %v7734 = vrot.slane %v7733, 2
    %v7735 = vmax.f32 %v7733, %v7734
    %v7736 = vrot.slane %v7735, 1
    %v7737 = vmax.f32 %v7735, %v7736
    %v7738 = vld [vmem:[#allocation7] sm:$0xff]
    %v7739 = vld [vmem:[#allocation7 + $0x8] sm:$0xff]
    %v7742 = vsel %vm5935, %v7737, %v7731
    %vm7743 = vcmask 15360
    %v7745 = vsel %vm7743, %v7738, 0
    %v7748 = vsel %vm7743, %v7739, 0
    %vm7750 = vcmask 1041408
    %v7751 = vsel %vm7750, %v7742, 0
    %7753 = vmatprep.subr.mxu0 0.0
    %7754 = vmatpush1.msra.mxu0 %v7751
    %7755 = vmatprep.subr.mxu0 0.0
    %7756 = vmatpush1.msra.mxu0 0.0
    %7757 = vmatprep.subr.mxu0 0.0
    %7758 = vmatpush1.msra.mxu0 0.0
    %7759 = vmatprep.subr.mxu0 0.0
    %7760 = vmatpush1.msra.mxu0 0.0
    %7761 = vmatprep.subr.mxu0 0.0
    %7762 = vmatpush1.msra.mxu0 0.0
    %7763 = vmatprep.subr.mxu0 0.0
    %7764 = vmatpush1.msra.mxu0 0.0
    %7765 = vmatprep.subr.mxu0 0.0
    %7766 = vmatpush1.msra.mxu0 0.0
    %7767 = vmatprep.subr.mxu0 0.0
    %7768 = vmatpush1.msra.mxu0 0.0
    %7769 = vmatprep.subr.mxu0 0.0
    %7770 = vmatpush1.msra.mxu0 0.0
    %7771 = vmatprep.subr.mxu0 0.0
    %7772 = vmatpush1.msra.mxu0 0.0
    %7773 = vmatprep.subr.mxu0 0.0
    %7774 = vmatpush1.msra.mxu0 0.0
    %7775 = vmatprep.subr.mxu0 0.0
    %7776 = vmatpush1.msra.mxu0 0.0
    %7777 = vmatprep.subr.mxu0 0.0
    %7778 = vmatpush1.msra.mxu0 0.0
    %7779 = vmatprep.subr.mxu0 0.0
    %7780 = vmatpush1.msra.mxu0 0.0
    %7781 = vmatprep.subr.mxu0 0.0
    %7782 = vmatpush1.msra.mxu0 0.0
    %7783 = vmatprep.subr.mxu0 0.0
    %7784 = vmatpush1.msra.mxu0 0.0
    %7785 = vmatprep.subr.mxu0 0.0
    %7786 = vmatpush1.msra.mxu0 0.0
    %7787 = vmatprep.subr.mxu0 0.0
    %7788 = vmatpush1.msra.mxu0 0.0
    %7789 = vmatprep.subr.mxu0 0.0
    %7790 = vmatpush1.msra.mxu0 0.0
    %7791 = vmatprep.subr.mxu0 0.0
    %7792 = vmatpush1.msra.mxu0 0.0
    %7793 = vmatprep.subr.mxu0 0.0
    %7794 = vmatpush1.msra.mxu0 0.0
    %7795 = vmatprep.subr.mxu0 0.0
    %7796 = vmatpush1.msra.mxu0 0.0
    %7797 = vmatprep.subr.mxu0 0.0
    %7798 = vmatpush1.msra.mxu0 0.0
    %7799 = vmatprep.subr.mxu0 0.0
    %7800 = vmatpush1.msra.mxu0 0.0
    %7801 = vmatprep.subr.mxu0 0.0
    %7802 = vmatpush1.msra.mxu0 0.0
    %7803 = vmatprep.subr.mxu0 0.0
    %7804 = vmatpush1.msra.mxu0 0.0
    %7805 = vmatprep.subr.mxu0 0.0
    %7806 = vmatpush1.msra.mxu0 0.0
    %7807 = vmatprep.subr.mxu0 0.0
    %7808 = vmatpush1.msra.mxu0 0.0
    %7809 = vmatprep.subr.mxu0 0.0
    %7810 = vmatpush1.msra.mxu0 0.0
    %7811 = vmatprep.subr.mxu0 0.0
    %7812 = vmatpush1.msra.mxu0 0.0
    %7813 = vmatprep.subr.mxu0 0.0
    %7814 = vmatpush1.msra.mxu0 0.0
    %7815 = vmatprep.subr.mxu0 0.0
    %7816 = vmatpush1.msra.mxu0 0.0
    %7817 = vmatprep.mubr.f32.mxu0 0.0
    %7818 = vmatmul.mubr.f32.gmra.mrb[0].mxu0 %v7745
    %v7819 = vpop.f32.mrb[0].mxu0
    %v7820 = vadd.f32 0.0, %v7819
    %v7821 = vpop.f32.mrb[0].mxu0
    %7822 = vmatprep.mubr.f32.mxu0 0.0
    %7823 = vmatmul.mubr.f32.gmra.mrb[0].mxu0 %v7748
    %v7824 = vpop.f32.mrb[0].mxu0
    %v7825 = vadd.f32 0.0, %v7824
    %v7826 = vpop.f32.mrb[0].mxu0
    %7827 = vdwg.mxu0
    %v7828 = vld [vmem:[#allocation34] sm:$0xff]
    %v7829 = vld [vmem:[#allocation34 + $0x8] sm:$0xff]
    %v7830 = vld [vmem:[#allocation34 + $0x10] sm:$0xff]
    %v7831 = vld [vmem:[#allocation34 + $0x18] sm:$0xff]
    %v7832 = vld [vmem:[#allocation34 + $0x20] sm:$0xff]
    %v7833 = vld [vmem:[#allocation34 + $0x28] sm:$0xff]
    %v7834 = vld [vmem:[#allocation34 + $0x30] sm:$0xff]
    %v7835 = vld [vmem:[#allocation34 + $0x38] sm:$0xff]
    %v7836 = vld [vmem:[#allocation34 + $0x40] sm:$0xff]
    %v7837 = vld [vmem:[#allocation34 + $0x48] sm:$0xff]
    %v7838 = vld [vmem:[#allocation34 + $0x50] sm:$0xff]
    %v7839 = vld [vmem:[#allocation34 + $0x58] sm:$0xff]
    %v7840 = vld [vmem:[#allocation34 + $0x60] sm:$0xff]
    %v7841 = vld [vmem:[#allocation34 + $0x68] sm:$0xff]
    %v7842 = vld [vmem:[#allocation34 + $0x70] sm:$0xff]
    %v7843 = vld [vmem:[#allocation34 + $0x78] sm:$0xff]
    %v7844 = vld [vmem:[#allocation36] sm:$0xff]
    %v7845 = vld [vmem:[#allocation36 + $0x8] sm:$0xff]
    %v7846 = vld [vmem:[#allocation36 + $0x10] sm:$0xff]
    %v7847 = vld [vmem:[#allocation36 + $0x18] sm:$0xff]
    %v7848 = vld [vmem:[#allocation36 + $0x20] sm:$0xff]
    %v7849 = vld [vmem:[#allocation36 + $0x28] sm:$0xff]
    %v7850 = vld [vmem:[#allocation36 + $0x30] sm:$0xff]
    %v7851 = vld [vmem:[#allocation36 + $0x38] sm:$0xff]
    %7852 = vmatprep.subr.mxu0 0.0
    %7853 = vmatpush1.msra.mxu0 %v7844
    %7854 = vmatprep.subr.mxu0 0.0
    %7855 = vmatpush1.msra.mxu0 %v7845
    %7856 = vmatprep.subr.mxu0 0.0
    %7857 = vmatpush1.msra.mxu0 %v7846
    %7858 = vmatprep.subr.mxu0 0.0
    %7859 = vmatpush1.msra.mxu0 %v7847
    %7860 = vmatprep.subr.mxu0 0.0
    %7861 = vmatpush1.msra.mxu0 %v7848
    %7862 = vmatprep.subr.mxu0 0.0
    %7863 = vmatpush1.msra.mxu0 %v7849
    %7864 = vmatprep.subr.mxu0 0.0
    %7865 = vmatpush1.msra.mxu0 %v7850
    %7866 = vmatprep.subr.mxu0 0.0
    %7867 = vmatpush1.msra.mxu0 %v7851
    %7868 = vmatprep.subr.mxu0 0.0
    %7869 = vmatpush1.msra.mxu0 0.0
    %7870 = vmatprep.subr.mxu0 0.0
    %7871 = vmatpush1.msra.mxu0 0.0
    %7872 = vmatprep.subr.mxu0 0.0
    %7873 = vmatpush1.msra.mxu0 0.0
    %7874 = vmatprep.subr.mxu0 0.0
    %7875 = vmatpush1.msra.mxu0 0.0
    %7876 = vmatprep.subr.mxu0 0.0
    %7877 = vmatpush1.msra.mxu0 0.0
    %7878 = vmatprep.subr.mxu0 0.0
    %7879 = vmatpush1.msra.mxu0 0.0
    %7880 = vmatprep.subr.mxu0 0.0
    %7881 = vmatpush1.msra.mxu0 0.0
    %7882 = vmatprep.subr.mxu0 0.0
    %7883 = vmatpush1.msra.mxu0 0.0
    %7884 = vmatprep.subr.mxu0 0.0
    %7885 = vmatpush1.msra.mxu0 0.0
    %7886 = vmatprep.subr.mxu0 0.0
    %7887 = vmatpush1.msra.mxu0 0.0
    %7888 = vmatprep.subr.mxu0 0.0
    %7889 = vmatpush1.msra.mxu0 0.0
    %7890 = vmatprep.subr.mxu0 0.0
    %7891 = vmatpush1.msra.mxu0 0.0
    %7892 = vmatprep.subr.mxu0 0.0
    %7893 = vmatpush1.msra.mxu0 0.0
    %7894 = vmatprep.subr.mxu0 0.0
    %7895 = vmatpush1.msra.mxu0 0.0
    %7896 = vmatprep.subr.mxu0 0.0
    %7897 = vmatpush1.msra.mxu0 0.0
    %7898 = vmatprep.subr.mxu0 0.0
    %7899 = vmatpush1.msra.mxu0 0.0
    %7900 = vmatprep.subr.mxu0 0.0
    %7901 = vmatpush1.msra.mxu0 0.0
    %7902 = vmatprep.subr.mxu0 0.0
    %7903 = vmatpush1.msra.mxu0 0.0
    %7904 = vmatprep.subr.mxu0 0.0
    %7905 = vmatpush1.msra.mxu0 0.0
    %7906 = vmatprep.subr.mxu0 0.0
    %7907 = vmatpush1.msra.mxu0 0.0
    %7908 = vmatprep.subr.mxu0 0.0
    %7909 = vmatpush1.msra.mxu0 0.0
    %7910 = vmatprep.subr.mxu0 0.0
    %7911 = vmatpush1.msra.mxu0 0.0
    %7912 = vmatprep.subr.mxu0 0.0
    %7913 = vmatpush1.msra.mxu0 0.0
    %7914 = vmatprep.subr.mxu0 0.0
    %7915 = vmatpush1.msra.mxu0 0.0
    %7916 = vmatprep.mubr.f32.mxu0 0.0
    %7917 = vmatmul.mubr.f32.gmra.mrb[0].mxu0 %v7440
    %v7918 = vpop.f32.mrb[0].mxu0
    %v7919 = vadd.f32 0.0, %v7918
    %v7920 = vpop.f32.mrb[0].mxu0
    %7921 = vmatprep.mubr.f32.mxu0 0.0
    %7922 = vmatmul.mubr.f32.gmra.mrb[0].mxu0 %v7442
    %v7923 = vpop.f32.mrb[0].mxu0
    %v7924 = vadd.f32 0.0, %v7923
    %v7925 = vpop.f32.mrb[0].mxu0
    %7926 = vdwg.mxu0
    %7927 = vmatprep.subr.mxu0 0.0
    %7928 = vmatpush1.msra.mxu0 %v7828
    %7929 = vmatprep.subr.mxu0 0.0
    %7930 = vmatpush1.msra.mxu0 %v7829
    %7931 = vmatprep.subr.mxu0 0.0
    %7932 = vmatpush1.msra.mxu0 %v7830
    %7933 = vmatprep.subr.mxu0 0.0
    %7934 = vmatpush1.msra.mxu0 %v7831
    %7935 = vmatprep.subr.mxu0 0.0
    %7936 = vmatpush1.msra.mxu0 %v7832
    %7937 = vmatprep.subr.mxu0 0.0
    %7938 = vmatpush1.msra.mxu0 %v7833
    %7939 = vmatprep.subr.mxu0 0.0
    %7940 = vmatpush1.msra.mxu0 %v7834
    %7941 = vmatprep.subr.mxu0 0.0
    %7942 = vmatpush1.msra.mxu0 %v7835
    %7943 = vmatprep.subr.mxu0 0.0
    %7944 = vmatpush1.msra.mxu0 %v7836
    %7945 = vmatprep.subr.mxu0 0.0
    %7946 = vmatpush1.msra.mxu0 %v7837
    %7947 = vmatprep.subr.mxu0 0.0
    %7948 = vmatpush1.msra.mxu0 %v7838
    %7949 = vmatprep.subr.mxu0 0.0
    %7950 = vmatpush1.msra.mxu0 %v7839
    %7951 = vmatprep.subr.mxu0 0.0
    %7952 = vmatpush1.msra.mxu0 %v7840
    %7953 = vmatprep.subr.mxu0 0.0
    %7954 = vmatpush1.msra.mxu0 %v7841
    %7955 = vmatprep.subr.mxu0 0.0
    %7956 = vmatpush1.msra.mxu0 %v7842
    %7957 = vmatprep.subr.mxu0 0.0
    %7958 = vmatpush1.msra.mxu0 %v7843
    %7959 = vmatprep.subr.mxu0 0.0
    %7960 = vmatpush1.msra.mxu0 0.0
    %7961 = vmatprep.subr.mxu0 0.0
    %7962 = vmatpush1.msra.mxu0 0.0
    %7963 = vmatprep.subr.mxu0 0.0
    %7964 = vmatpush1.msra.mxu0 0.0
    %7965 = vmatprep.subr.mxu0 0.0
    %7966 = vmatpush1.msra.mxu0 0.0
    %7967 = vmatprep.subr.mxu0 0.0
    %7968 = vmatpush1.msra.mxu0 0.0
    %7969 = vmatprep.subr.mxu0 0.0
    %7970 = vmatpush1.msra.mxu0 0.0
    %7971 = vmatprep.subr.mxu0 0.0
    %7972 = vmatpush1.msra.mxu0 0.0
    %7973 = vmatprep.subr.mxu0 0.0
    %7974 = vmatpush1.msra.mxu0 0.0
    %7975 = vmatprep.subr.mxu0 0.0
    %7976 = vmatpush1.msra.mxu0 0.0
    %7977 = vmatprep.subr.mxu0 0.0
    %7978 = vmatpush1.msra.mxu0 0.0
    %7979 = vmatprep.subr.mxu0 0.0
    %7980 = vmatpush1.msra.mxu0 0.0
    %7981 = vmatprep.subr.mxu0 0.0
    %7982 = vmatpush1.msra.mxu0 0.0
    %7983 = vmatprep.subr.mxu0 0.0
    %7984 = vmatpush1.msra.mxu0 0.0
    %7985 = vmatprep.subr.mxu0 0.0
    %7986 = vmatpush1.msra.mxu0 0.0
    %7987 = vmatprep.subr.mxu0 0.0
    %7988 = vmatpush1.msra.mxu0 0.0
    %7989 = vmatprep.subr.mxu0 0.0
    %7990 = vmatpush1.msra.mxu0 0.0
    %7991 = vmatprep.mubr.f32.mxu0 0.0
    %7992 = vmatmul.mubr.f32.gmra.mrb[0].mxu0 %v7820
    %v7993 = vpop.f32.mrb[0].mxu0
    %v7994 = vadd.f32 %v7919, %v7993
    %v7995 = vpop.f32.mrb[0].mxu0
    %7996 = vmatprep.mubr.f32.mxu0 0.0
    %7997 = vmatmul.mubr.f32.gmra.mrb[0].mxu0 %v7825
    %v7998 = vpop.f32.mrb[0].mxu0
    %v7999 = vadd.f32 %v7924, %v7998
    %v8000 = vpop.f32.mrb[0].mxu0
    %8001 = vdwg.mxu0
    %v8002 = vld [vmem:[#allocation37] sm:$0x1]
    %v8004 = vlaneseq
    %v8005 = vshrl.u32 %v8004, 7
    %v8006 = vsub.s32 0, %v8005
    %v8007 = vrot.slane %v8002, %v8006
    %v8009 = vadd.f32 %v7994, %v8007
    %v8010 = vadd.f32 %v7999, %v8007
    %v8011 = vmax.f32 %v8009, 0.0
    %v8012 = vmax.f32 %v8010, 0.0
    %v8013 = vld [vmem:[#allocation39] sm:$0xff]
    %v8014 = vld [vmem:[#allocation39 + $0x8] sm:$0xff]
    %v8015 = vld [vmem:[#allocation39 + $0x10] sm:$0xff]
    %v8016 = vld [vmem:[#allocation39 + $0x18] sm:$0xff]
    %v8017 = vld [vmem:[#allocation39 + $0x20] sm:$0xff]
    %v8018 = vld [vmem:[#allocation39 + $0x28] sm:$0xff]
    %v8019 = vld [vmem:[#allocation39 + $0x30] sm:$0xff]
    %v8020 = vld [vmem:[#allocation39 + $0x38] sm:$0xff]
    %v8021 = vld [vmem:[#allocation40] sm:$0x1]
    %v8023 = vlaneseq
    %v8024 = vshrl.u32 %v8023, 7
    %v8025 = vsub.s32 0, %v8024
    %v8026 = vrot.slane %v8021, %v8025
    %v8029 = vsel %vm6006, %v8011, 0
    %v8032 = vsel %vm6006, %v8012, 0
    %8034 = vmatprep.subr.mxu0 0.0
    %8035 = vmatpush1.msra.mxu0 %v8013
    %8036 = vmatprep.subr.mxu0 0.0
    %8037 = vmatpush1.msra.mxu0 %v8014
    %8038 = vmatprep.subr.mxu0 0.0
    %8039 = vmatpush1.msra.mxu0 %v8015
    %8040 = vmatprep.subr.mxu0 0.0
    %8041 = vmatpush1.msra.mxu0 %v8016
    %8042 = vmatprep.subr.mxu0 0.0
    %8043 = vmatpush1.msra.mxu0 %v8017
    %8044 = vmatprep.subr.mxu0 0.0
    %8045 = vmatpush1.msra.mxu0 %v8018
    %8046 = vmatprep.subr.mxu0 0.0
    %8047 = vmatpush1.msra.mxu0 %v8019
    %8048 = vmatprep.subr.mxu0 0.0
    %8049 = vmatpush1.msra.mxu0 %v8020
    %8050 = vmatprep.subr.mxu0 0.0
    %8051 = vmatpush1.msra.mxu0 0.0
    %8052 = vmatprep.subr.mxu0 0.0
    %8053 = vmatpush1.msra.mxu0 0.0
    %8054 = vmatprep.subr.mxu0 0.0
    %8055 = vmatpush1.msra.mxu0 0.0
    %8056 = vmatprep.subr.mxu0 0.0
    %8057 = vmatpush1.msra.mxu0 0.0
    %8058 = vmatprep.subr.mxu0 0.0
    %8059 = vmatpush1.msra.mxu0 0.0
    %8060 = vmatprep.subr.mxu0 0.0
    %8061 = vmatpush1.msra.mxu0 0.0
    %8062 = vmatprep.subr.mxu0 0.0
    %8063 = vmatpush1.msra.mxu0 0.0
    %8064 = vmatprep.subr.mxu0 0.0
    %8065 = vmatpush1.msra.mxu0 0.0
    %8066 = vmatprep.subr.mxu0 0.0
    %8067 = vmatpush1.msra.mxu0 0.0
    %8068 = vmatprep.subr.mxu0 0.0
    %8069 = vmatpush1.msra.mxu0 0.0
    %8070 = vmatprep.subr.mxu0 0.0
    %8071 = vmatpush1.msra.mxu0 0.0
    %8072 = vmatprep.subr.mxu0 0.0
    %8073 = vmatpush1.msra.mxu0 0.0
    %8074 = vmatprep.subr.mxu0 0.0
    %8075 = vmatpush1.msra.mxu0 0.0
    %8076 = vmatprep.subr.mxu0 0.0
    %8077 = vmatpush1.msra.mxu0 0.0
    %8078 = vmatprep.subr.mxu0 0.0
    %8079 = vmatpush1.msra.mxu0 0.0
    %8080 = vmatprep.subr.mxu0 0.0
    %8081 = vmatpush1.msra.mxu0 0.0
    %8082 = vmatprep.subr.mxu0 0.0
    %8083 = vmatpush1.msra.mxu0 0.0
    %8084 = vmatprep.subr.mxu0 0.0
    %8085 = vmatpush1.msra.mxu0 0.0
    %8086 = vmatprep.subr.mxu0 0.0
    %8087 = vmatpush1.msra.mxu0 0.0
    %8088 = vmatprep.subr.mxu0 0.0
    %8089 = vmatpush1.msra.mxu0 0.0
    %8090 = vmatprep.subr.mxu0 0.0
    %8091 = vmatpush1.msra.mxu0 0.0
    %8092 = vmatprep.subr.mxu0 0.0
    %8093 = vmatpush1.msra.mxu0 0.0
    %8094 = vmatprep.subr.mxu0 0.0
    %8095 = vmatpush1.msra.mxu0 0.0
    %8096 = vmatprep.subr.mxu0 0.0
    %8097 = vmatpush1.msra.mxu0 0.0
    %8098 = vmatprep.mubr.f32.mxu0 0.0
    %8099 = vmatmul.mubr.f32.gmra.mrb[0].mxu0 %v8029
    %v8100 = vpop.f32.mrb[0].mxu0
    %v8101 = vadd.f32 %v8026, %v8100
    %v8102 = vpop.f32.mrb[0].mxu0
    %8103 = vmatprep.mubr.f32.mxu0 0.0
    %8104 = vmatmul.mubr.f32.gmra.mrb[0].mxu0 %v8032
    %v8105 = vpop.f32.mrb[0].mxu0
    %v8106 = vadd.f32 %v8026, %v8105
    %v8107 = vpop.f32.mrb[0].mxu0
    %8108 = vdwg.mxu0
    %v8109 = vld [vmem:[#allocation9] sm:$0xff]
    %v8110 = vld [vmem:[#allocation9 + $0x8] sm:$0xff]
    %v8111 = vld [vmem:[#allocation9 + $0x10] sm:$0xff]
    %v8112 = vld [vmem:[#allocation9 + $0x18] sm:$0xff]
    %v8113 = vld [vmem:[#allocation9 + $0x20] sm:$0xff]
    %v8114 = vld [vmem:[#allocation9 + $0x28] sm:$0xff]
    %v8115 = vld [vmem:[#allocation9 + $0x30] sm:$0xff]
    %v8116 = vld [vmem:[#allocation9 + $0x38] sm:$0xff]
    %v8118 = vsel %vm2122, %v8109, 0
    %v8121 = vsel %vm2122, %v8110, 0
    %v8124 = vsel %vm2122, %v8111, 0
    %v8127 = vsel %vm2122, %v8112, 0
    %v8130 = vsel %vm2122, %v8113, 0
    %v8133 = vsel %vm2122, %v8114, 0
    %v8136 = vsel %vm2122, %v8115, 0
    %v8139 = vsel %vm2122, %v8116, 0
    %8141 = vmatprep.subr.mxu0 0.0
    %8142 = vmatpush1.msra.mxu0 %v8101
    %8143 = vmatprep.subr.mxu0 0.0
    %8144 = vmatpush1.msra.mxu0 %v8106
    %8145 = vmatprep.subr.mxu0 0.0
    %8146 = vmatpush1.msra.mxu0 0.0
    %8147 = vmatprep.subr.mxu0 0.0
    %8148 = vmatpush1.msra.mxu0 0.0
    %8149 = vmatprep.subr.mxu0 0.0
    %8150 = vmatpush1.msra.mxu0 0.0
    %8151 = vmatprep.subr.mxu0 0.0
    %8152 = vmatpush1.msra.mxu0 0.0
    %8153 = vmatprep.subr.mxu0 0.0
    %8154 = vmatpush1.msra.mxu0 0.0
    %8155 = vmatprep.subr.mxu0 0.0
    %8156 = vmatpush1.msra.mxu0 0.0
    %8157 = vmatprep.subr.mxu0 0.0
    %8158 = vmatpush1.msra.mxu0 0.0
    %8159 = vmatprep.subr.mxu0 0.0
    %8160 = vmatpush1.msra.mxu0 0.0
    %8161 = vmatprep.subr.mxu0 0.0
    %8162 = vmatpush1.msra.mxu0 0.0
    %8163 = vmatprep.subr.mxu0 0.0
    %8164 = vmatpush1.msra.mxu0 0.0
    %8165 = vmatprep.subr.mxu0 0.0
    %8166 = vmatpush1.msra.mxu0 0.0
    %8167 = vmatprep.subr.mxu0 0.0
    %8168 = vmatpush1.msra.mxu0 0.0
    %8169 = vmatprep.subr.mxu0 0.0
    %8170 = vmatpush1.msra.mxu0 0.0
    %8171 = vmatprep.subr.mxu0 0.0
    %8172 = vmatpush1.msra.mxu0 0.0
    %8173 = vmatprep.subr.mxu0 0.0
    %8174 = vmatpush1.msra.mxu0 0.0
    %8175 = vmatprep.subr.mxu0 0.0
    %8176 = vmatpush1.msra.mxu0 0.0
    %8177 = vmatprep.subr.mxu0 0.0
    %8178 = vmatpush1.msra.mxu0 0.0
    %8179 = vmatprep.subr.mxu0 0.0
    %8180 = vmatpush1.msra.mxu0 0.0
    %8181 = vmatprep.subr.mxu0 0.0
    %8182 = vmatpush1.msra.mxu0 0.0
    %8183 = vmatprep.subr.mxu0 0.0
    %8184 = vmatpush1.msra.mxu0 0.0
    %8185 = vmatprep.subr.mxu0 0.0
    %8186 = vmatpush1.msra.mxu0 0.0
    %8187 = vmatprep.subr.mxu0 0.0
    %8188 = vmatpush1.msra.mxu0 0.0
    %8189 = vmatprep.subr.mxu0 0.0
    %8190 = vmatpush1.msra.mxu0 0.0
    %8191 = vmatprep.subr.mxu0 0.0
    %8192 = vmatpush1.msra.mxu0 0.0
    %8193 = vmatprep.subr.mxu0 0.0
    %8194 = vmatpush1.msra.mxu0 0.0
    %8195 = vmatprep.subr.mxu0 0.0
    %8196 = vmatpush1.msra.mxu0 0.0
    %8197 = vmatprep.subr.mxu0 0.0
    %8198 = vmatpush1.msra.mxu0 0.0
    %8199 = vmatprep.subr.mxu0 0.0
    %8200 = vmatpush1.msra.mxu0 0.0
    %8201 = vmatprep.subr.mxu0 0.0
    %8202 = vmatpush1.msra.mxu0 0.0
    %8203 = vmatprep.subr.mxu0 0.0
    %8204 = vmatpush1.msra.mxu0 0.0
    %8205 = vmatprep.mubr.f32.mxu0 0.0
    %8206 = vmatmul.mubr.f32.gmra.mrb[0].mxu0 %v8118
    %v8207 = vpop.f32.mrb[0].mxu0
    %v8208 = vadd.f32 0.0, %v8207
    %v8209 = vpop.f32.mrb[0].mxu0
    %8210 = vmatprep.mubr.f32.mxu0 0.0
    %8211 = vmatmul.mubr.f32.gmra.mrb[0].mxu0 %v8121
    %v8212 = vpop.f32.mrb[0].mxu0
    %v8213 = vadd.f32 0.0, %v8212
    %v8214 = vpop.f32.mrb[0].mxu0
    %8215 = vmatprep.mubr.f32.mxu0 0.0
    %8216 = vmatmul.mubr.f32.gmra.mrb[0].mxu0 %v8124
    %v8217 = vpop.f32.mrb[0].mxu0
    %v8218 = vadd.f32 0.0, %v8217
    %v8219 = vpop.f32.mrb[0].mxu0
    %8220 = vmatprep.mubr.f32.mxu0 0.0
    %8221 = vmatmul.mubr.f32.gmra.mrb[0].mxu0 %v8127
    %v8222 = vpop.f32.mrb[0].mxu0
    %v8223 = vadd.f32 0.0, %v8222
    %v8224 = vpop.f32.mrb[0].mxu0
    %8225 = vmatprep.mubr.f32.mxu0 0.0
    %8226 = vmatmul.mubr.f32.gmra.mrb[0].mxu0 %v8130
    %v8227 = vpop.f32.mrb[0].mxu0
    %v8228 = vadd.f32 0.0, %v8227
    %v8229 = vpop.f32.mrb[0].mxu0
    %8230 = vmatprep.mubr.f32.mxu0 0.0
    %8231 = vmatmul.mubr.f32.gmra.mrb[0].mxu0 %v8133
    %v8232 = vpop.f32.mrb[0].mxu0
    %v8233 = vadd.f32 0.0, %v8232
    %v8234 = vpop.f32.mrb[0].mxu0
    %8235 = vmatprep.mubr.f32.mxu0 0.0
    %8236 = vmatmul.mubr.f32.gmra.mrb[0].mxu0 %v8136
    %v8237 = vpop.f32.mrb[0].mxu0
    %v8238 = vadd.f32 0.0, %v8237
    %v8239 = vpop.f32.mrb[0].mxu0
    %8240 = vmatprep.mubr.f32.mxu0 0.0
    %8241 = vmatmul.mubr.f32.gmra.mrb[0].mxu0 %v8139
    %v8242 = vpop.f32.mrb[0].mxu0
    %v8243 = vadd.f32 0.0, %v8242
    %v8244 = vpop.f32.mrb[0].mxu0
    %8245 = vdwg.mxu0
    %v8246 = vld [vmem:[#allocation42] sm:$0xff]
    %v8247 = vld [vmem:[#allocation42 + $0x8] sm:$0xff]
    %v8248 = vld [vmem:[#allocation42 + $0x10] sm:$0xff]
    %v8249 = vld [vmem:[#allocation42 + $0x18] sm:$0xff]
    %v8250 = vld [vmem:[#allocation42 + $0x20] sm:$0xff]
    %v8251 = vld [vmem:[#allocation42 + $0x28] sm:$0xff]
    %v8252 = vld [vmem:[#allocation42 + $0x30] sm:$0xff]
    %v8253 = vld [vmem:[#allocation42 + $0x38] sm:$0xff]
    %v8254 = vld [vmem:[#allocation43] sm:$0xff]
    %v8255 = vld [vmem:[#allocation43 + $0x8] sm:$0xff]
    %v8256 = vld [vmem:[#allocation43 + $0x10] sm:$0xff]
    %v8257 = vld [vmem:[#allocation43 + $0x18] sm:$0xff]
    %v8258 = vsel %vm5278, %v5948, 0
    %v8260 = vsel %vm5278, %v5955, 0
    %v8262 = vsel %vm5278, %v5962, 0
    %v8264 = vsel %vm5278, %v5969, 0
    %v8266 = vsel %vm5278, %v5976, 0
    %v8268 = vsel %vm5278, %v5983, 0
    %v8270 = vsel %vm5278, %v5990, 0
    %v8272 = vsel %vm5278, %v5997, 0
    %8274 = vmatprep.subr.mxu0 0.0
    %8275 = vmatpush1.msra.mxu0 %v8254
    %8276 = vmatprep.subr.mxu0 0.0
    %8277 = vmatpush1.msra.mxu0 %v8255
    %8278 = vmatprep.subr.mxu0 0.0
    %8279 = vmatpush1.msra.mxu0 %v8256
    %8280 = vmatprep.subr.mxu0 0.0
    %8281 = vmatpush1.msra.mxu0 %v8257
    %8282 = vmatprep.subr.mxu0 0.0
    %8283 = vmatpush1.msra.mxu0 0.0
    %8284 = vmatprep.subr.mxu0 0.0
    %8285 = vmatpush1.msra.mxu0 0.0
    %8286 = vmatprep.subr.mxu0 0.0
    %8287 = vmatpush1.msra.mxu0 0.0
    %8288 = vmatprep.subr.mxu0 0.0
    %8289 = vmatpush1.msra.mxu0 0.0
    %8290 = vmatprep.subr.mxu0 0.0
    %8291 = vmatpush1.msra.mxu0 0.0
    %8292 = vmatprep.subr.mxu0 0.0
    %8293 = vmatpush1.msra.mxu0 0.0
    %8294 = vmatprep.subr.mxu0 0.0
    %8295 = vmatpush1.msra.mxu0 0.0
    %8296 = vmatprep.subr.mxu0 0.0
    %8297 = vmatpush1.msra.mxu0 0.0
    %8298 = vmatprep.subr.mxu0 0.0
    %8299 = vmatpush1.msra.mxu0 0.0
    %8300 = vmatprep.subr.mxu0 0.0
    %8301 = vmatpush1.msra.mxu0 0.0
    %8302 = vmatprep.subr.mxu0 0.0
    %8303 = vmatpush1.msra.mxu0 0.0
    %8304 = vmatprep.subr.mxu0 0.0
    %8305 = vmatpush1.msra.mxu0 0.0
    %8306 = vmatprep.subr.mxu0 0.0
    %8307 = vmatpush1.msra.mxu0 0.0
    %8308 = vmatprep.subr.mxu0 0.0
    %8309 = vmatpush1.msra.mxu0 0.0
    %8310 = vmatprep.subr.mxu0 0.0
    %8311 = vmatpush1.msra.mxu0 0.0
    %8312 = vmatprep.subr.mxu0 0.0
    %8313 = vmatpush1.msra.mxu0 0.0
    %8314 = vmatprep.subr.mxu0 0.0
    %8315 = vmatpush1.msra.mxu0 0.0
    %8316 = vmatprep.subr.mxu0 0.0
    %8317 = vmatpush1.msra.mxu0 0.0
    %8318 = vmatprep.subr.mxu0 0.0
    %8319 = vmatpush1.msra.mxu0 0.0
    %8320 = vmatprep.subr.mxu0 0.0
    %8321 = vmatpush1.msra.mxu0 0.0
    %8322 = vmatprep.subr.mxu0 0.0
    %8323 = vmatpush1.msra.mxu0 0.0
    %8324 = vmatprep.subr.mxu0 0.0
    %8325 = vmatpush1.msra.mxu0 0.0
    %8326 = vmatprep.subr.mxu0 0.0
    %8327 = vmatpush1.msra.mxu0 0.0
    %8328 = vmatprep.subr.mxu0 0.0
    %8329 = vmatpush1.msra.mxu0 0.0
    %8330 = vmatprep.subr.mxu0 0.0
    %8331 = vmatpush1.msra.mxu0 0.0
    %8332 = vmatprep.subr.mxu0 0.0
    %8333 = vmatpush1.msra.mxu0 0.0
    %8334 = vmatprep.subr.mxu0 0.0
    %8335 = vmatpush1.msra.mxu0 0.0
    %8336 = vmatprep.subr.mxu0 0.0
    %8337 = vmatpush1.msra.mxu0 0.0
    %8338 = vmatprep.mubr.f32.mxu0 0.0
    %8339 = vmatmul.mubr.f32.gmra.mrb[0].mxu0 %v8258
    %v8340 = vpop.f32.mrb[0].mxu0
    %v8341 = vadd.f32 0.0, %v8340
    %v8342 = vpop.f32.mrb[0].mxu0
    %8343 = vmatprep.mubr.f32.mxu0 0.0
    %8344 = vmatmul.mubr.f32.gmra.mrb[0].mxu0 %v8260
    %v8345 = vpop.f32.mrb[0].mxu0
    %v8346 = vadd.f32 0.0, %v8345
    %v8347 = vpop.f32.mrb[0].mxu0
    %8348 = vmatprep.mubr.f32.mxu0 0.0
    %8349 = vmatmul.mubr.f32.gmra.mrb[0].mxu0 %v8262
    %v8350 = vpop.f32.mrb[0].mxu0
    %v8351 = vadd.f32 0.0, %v8350
    %v8352 = vpop.f32.mrb[0].mxu0
    %8353 = vmatprep.mubr.f32.mxu0 0.0
    %8354 = vmatmul.mubr.f32.gmra.mrb[0].mxu0 %v8264
    %v8355 = vpop.f32.mrb[0].mxu0
    %v8356 = vadd.f32 0.0, %v8355
    %v8357 = vpop.f32.mrb[0].mxu0
    %8358 = vmatprep.mubr.f32.mxu0 0.0
    %8359 = vmatmul.mubr.f32.gmra.mrb[0].mxu0 %v8266
    %v8360 = vpop.f32.mrb[0].mxu0
    %v8361 = vadd.f32 0.0, %v8360
    %v8362 = vpop.f32.mrb[0].mxu0
    %8363 = vmatprep.mubr.f32.mxu0 0.0
    %8364 = vmatmul.mubr.f32.gmra.mrb[0].mxu0 %v8268
    %v8365 = vpop.f32.mrb[0].mxu0
    %v8366 = vadd.f32 0.0, %v8365
    %v8367 = vpop.f32.mrb[0].mxu0
    %8368 = vmatprep.mubr.f32.mxu0 0.0
    %8369 = vmatmul.mubr.f32.gmra.mrb[0].mxu0 %v8270
    %v8370 = vpop.f32.mrb[0].mxu0
    %v8371 = vadd.f32 0.0, %v8370
    %v8372 = vpop.f32.mrb[0].mxu0
    %8373 = vmatprep.mubr.f32.mxu0 0.0
    %8374 = vmatmul.mubr.f32.gmra.mrb[0].mxu0 %v8272
    %v8375 = vpop.f32.mrb[0].mxu0
    %v8376 = vadd.f32 0.0, %v8375
    %v8377 = vpop.f32.mrb[0].mxu0
    %8378 = vdwg.mxu0
    %v8380 = vsel %vm6006, %v8208, 0
    %v8383 = vsel %vm6006, %v8213, 0
    %v8386 = vsel %vm6006, %v8218, 0
    %v8389 = vsel %vm6006, %v8223, 0
    %v8392 = vsel %vm6006, %v8228, 0
    %v8395 = vsel %vm6006, %v8233, 0
    %v8398 = vsel %vm6006, %v8238, 0
    %v8401 = vsel %vm6006, %v8243, 0
    %8403 = vmatprep.subr.mxu0 0.0
    %8404 = vmatpush1.msra.mxu0 %v8246
    %8405 = vmatprep.subr.mxu0 0.0
    %8406 = vmatpush1.msra.mxu0 %v8247
    %8407 = vmatprep.subr.mxu0 0.0
    %8408 = vmatpush1.msra.mxu0 %v8248
    %8409 = vmatprep.subr.mxu0 0.0
    %8410 = vmatpush1.msra.mxu0 %v8249
    %8411 = vmatprep.subr.mxu0 0.0
    %8412 = vmatpush1.msra.mxu0 %v8250
    %8413 = vmatprep.subr.mxu0 0.0
    %8414 = vmatpush1.msra.mxu0 %v8251
    %8415 = vmatprep.subr.mxu0 0.0
    %8416 = vmatpush1.msra.mxu0 %v8252
    %8417 = vmatprep.subr.mxu0 0.0
    %8418 = vmatpush1.msra.mxu0 %v8253
    %8419 = vmatprep.subr.mxu0 0.0
    %8420 = vmatpush1.msra.mxu0 0.0
    %8421 = vmatprep.subr.mxu0 0.0
    %8422 = vmatpush1.msra.mxu0 0.0
    %8423 = vmatprep.subr.mxu0 0.0
    %8424 = vmatpush1.msra.mxu0 0.0
    %8425 = vmatprep.subr.mxu0 0.0
    %8426 = vmatpush1.msra.mxu0 0.0
    %8427 = vmatprep.subr.mxu0 0.0
    %8428 = vmatpush1.msra.mxu0 0.0
    %8429 = vmatprep.subr.mxu0 0.0
    %8430 = vmatpush1.msra.mxu0 0.0
    %8431 = vmatprep.subr.mxu0 0.0
    %8432 = vmatpush1.msra.mxu0 0.0
    %8433 = vmatprep.subr.mxu0 0.0
    %8434 = vmatpush1.msra.mxu0 0.0
    %8435 = vmatprep.subr.mxu0 0.0
    %8436 = vmatpush1.msra.mxu0 0.0
    %8437 = vmatprep.subr.mxu0 0.0
    %8438 = vmatpush1.msra.mxu0 0.0
    %8439 = vmatprep.subr.mxu0 0.0
    %8440 = vmatpush1.msra.mxu0 0.0
    %8441 = vmatprep.subr.mxu0 0.0
    %8442 = vmatpush1.msra.mxu0 0.0
    %8443 = vmatprep.subr.mxu0 0.0
    %8444 = vmatpush1.msra.mxu0 0.0
    %8445 = vmatprep.subr.mxu0 0.0
    %8446 = vmatpush1.msra.mxu0 0.0
    %8447 = vmatprep.subr.mxu0 0.0
    %8448 = vmatpush1.msra.mxu0 0.0
    %8449 = vmatprep.subr.mxu0 0.0
    %8450 = vmatpush1.msra.mxu0 0.0
    %8451 = vmatprep.subr.mxu0 0.0
    %8452 = vmatpush1.msra.mxu0 0.0
    %8453 = vmatprep.subr.mxu0 0.0
    %8454 = vmatpush1.msra.mxu0 0.0
    %8455 = vmatprep.subr.mxu0 0.0
    %8456 = vmatpush1.msra.mxu0 0.0
    %8457 = vmatprep.subr.mxu0 0.0
    %8458 = vmatpush1.msra.mxu0 0.0
    %8459 = vmatprep.subr.mxu0 0.0
    %8460 = vmatpush1.msra.mxu0 0.0
    %8461 = vmatprep.subr.mxu0 0.0
    %8462 = vmatpush1.msra.mxu0 0.0
    %8463 = vmatprep.subr.mxu0 0.0
    %8464 = vmatpush1.msra.mxu0 0.0
    %8465 = vmatprep.subr.mxu0 0.0
    %8466 = vmatpush1.msra.mxu0 0.0
    %8467 = vmatprep.mubr.f32.mxu0 0.0
    %8468 = vmatmul.mubr.f32.gmra.mrb[0].mxu0 %v8380
    %v8469 = vpop.f32.mrb[0].mxu0
    %v8470 = vadd.f32 %v8341, %v8469
    %v8471 = vpop.f32.mrb[0].mxu0
    %8472 = vmatprep.mubr.f32.mxu0 0.0
    %8473 = vmatmul.mubr.f32.gmra.mrb[0].mxu0 %v8383
    %v8474 = vpop.f32.mrb[0].mxu0
    %v8475 = vadd.f32 %v8346, %v8474
    %v8476 = vpop.f32.mrb[0].mxu0
    %8477 = vmatprep.mubr.f32.mxu0 0.0
    %8478 = vmatmul.mubr.f32.gmra.mrb[0].mxu0 %v8386
    %v8479 = vpop.f32.mrb[0].mxu0
    %v8480 = vadd.f32 %v8351, %v8479
    %v8481 = vpop.f32.mrb[0].mxu0
    %8482 = vmatprep.mubr.f32.mxu0 0.0
    %8483 = vmatmul.mubr.f32.gmra.mrb[0].mxu0 %v8389
    %v8484 = vpop.f32.mrb[0].mxu0
    %v8485 = vadd.f32 %v8356, %v8484
    %v8486 = vpop.f32.mrb[0].mxu0
    %8487 = vmatprep.mubr.f32.mxu0 0.0
    %8488 = vmatmul.mubr.f32.gmra.mrb[0].mxu0 %v8392
    %v8489 = vpop.f32.mrb[0].mxu0
    %v8490 = vadd.f32 %v8361, %v8489
    %v8491 = vpop.f32.mrb[0].mxu0
    %8492 = vmatprep.mubr.f32.mxu0 0.0
    %8493 = vmatmul.mubr.f32.gmra.mrb[0].mxu0 %v8395
    %v8494 = vpop.f32.mrb[0].mxu0
    %v8495 = vadd.f32 %v8366, %v8494
    %v8496 = vpop.f32.mrb[0].mxu0
    %8497 = vmatprep.mubr.f32.mxu0 0.0
    %8498 = vmatmul.mubr.f32.gmra.mrb[0].mxu0 %v8398
    %v8499 = vpop.f32.mrb[0].mxu0
    %v8500 = vadd.f32 %v8371, %v8499
    %v8501 = vpop.f32.mrb[0].mxu0
    %8502 = vmatprep.mubr.f32.mxu0 0.0
    %8503 = vmatmul.mubr.f32.gmra.mrb[0].mxu0 %v8401
    %v8504 = vpop.f32.mrb[0].mxu0
    %v8505 = vadd.f32 %v8376, %v8504
    %v8506 = vpop.f32.mrb[0].mxu0
    %8507 = vdwg.mxu0
    %v8508 = vld [vmem:[#allocation45] sm:$0x1]
    %v8510 = vlaneseq
    %v8511 = vshrl.u32 %v8510, 7
    %v8512 = vsub.s32 0, %v8511
    %v8513 = vrot.slane %v8508, %v8512
    %v8515 = vadd.f32 %v8470, %v8513
    %v8516 = vadd.f32 %v8475, %v8513
    %v8517 = vadd.f32 %v8480, %v8513
    %v8518 = vadd.f32 %v8485, %v8513
    %v8519 = vadd.f32 %v8490, %v8513
    %v8520 = vadd.f32 %v8495, %v8513
    %v8521 = vadd.f32 %v8500, %v8513
    %v8522 = vadd.f32 %v8505, %v8513
    %v8523 = vmax.f32 %v8515, 0.0
    %v8524 = vmax.f32 %v8516, 0.0
    %v8525 = vmax.f32 %v8517, 0.0
    %v8526 = vmax.f32 %v8518, 0.0
    %v8527 = vmax.f32 %v8519, 0.0
    %v8528 = vmax.f32 %v8520, 0.0
    %v8529 = vmax.f32 %v8521, 0.0
    %v8530 = vmax.f32 %v8522, 0.0
    %v8531 = vld [vmem:[#allocation46] sm:$0xff]
    %v8532 = vld [vmem:[#allocation46 + $0x8] sm:$0xff]
    %v8533 = vld [vmem:[#allocation46 + $0x10] sm:$0xff]
    %v8534 = vld [vmem:[#allocation46 + $0x18] sm:$0xff]
    %v8535 = vld [vmem:[#allocation48] sm:$0x1]
    %v8537 = vlaneseq
    %v8538 = vshrl.u32 %v8537, 7
    %v8539 = vsub.s32 0, %v8538
    %v8540 = vrot.slane %v8535, %v8539
    %v8543 = vsel %vm5278, %v8523, 0
    %v8546 = vsel %vm5278, %v8524, 0
    %v8549 = vsel %vm5278, %v8525, 0
    %v8552 = vsel %vm5278, %v8526, 0
    %v8555 = vsel %vm5278, %v8527, 0
    %v8558 = vsel %vm5278, %v8528, 0
    %v8561 = vsel %vm5278, %v8529, 0
    %v8564 = vsel %vm5278, %v8530, 0
    %8566 = vmatprep.subr.mxu0 0.0
    %8567 = vmatpush1.msra.mxu0 %v8531
    %8568 = vmatprep.subr.mxu0 0.0
    %8569 = vmatpush1.msra.mxu0 %v8532
    %8570 = vmatprep.subr.mxu0 0.0
    %8571 = vmatpush1.msra.mxu0 %v8533
    %8572 = vmatprep.subr.mxu0 0.0
    %8573 = vmatpush1.msra.mxu0 %v8534
    %8574 = vmatprep.subr.mxu0 0.0
    %8575 = vmatpush1.msra.mxu0 0.0
    %8576 = vmatprep.subr.mxu0 0.0
    %8577 = vmatpush1.msra.mxu0 0.0
    %8578 = vmatprep.subr.mxu0 0.0
    %8579 = vmatpush1.msra.mxu0 0.0
    %8580 = vmatprep.subr.mxu0 0.0
    %8581 = vmatpush1.msra.mxu0 0.0
    %8582 = vmatprep.subr.mxu0 0.0
    %8583 = vmatpush1.msra.mxu0 0.0
    %8584 = vmatprep.subr.mxu0 0.0
    %8585 = vmatpush1.msra.mxu0 0.0
    %8586 = vmatprep.subr.mxu0 0.0
    %8587 = vmatpush1.msra.mxu0 0.0
    %8588 = vmatprep.subr.mxu0 0.0
    %8589 = vmatpush1.msra.mxu0 0.0
    %8590 = vmatprep.subr.mxu0 0.0
    %8591 = vmatpush1.msra.mxu0 0.0
    %8592 = vmatprep.subr.mxu0 0.0
    %8593 = vmatpush1.msra.mxu0 0.0
    %8594 = vmatprep.subr.mxu0 0.0
    %8595 = vmatpush1.msra.mxu0 0.0
    %8596 = vmatprep.subr.mxu0 0.0
    %8597 = vmatpush1.msra.mxu0 0.0
    %8598 = vmatprep.subr.mxu0 0.0
    %8599 = vmatpush1.msra.mxu0 0.0
    %8600 = vmatprep.subr.mxu0 0.0
    %8601 = vmatpush1.msra.mxu0 0.0
    %8602 = vmatprep.subr.mxu0 0.0
    %8603 = vmatpush1.msra.mxu0 0.0
    %8604 = vmatprep.subr.mxu0 0.0
    %8605 = vmatpush1.msra.mxu0 0.0
    %8606 = vmatprep.subr.mxu0 0.0
    %8607 = vmatpush1.msra.mxu0 0.0
    %8608 = vmatprep.subr.mxu0 0.0
    %8609 = vmatpush1.msra.mxu0 0.0
    %8610 = vmatprep.subr.mxu0 0.0
    %8611 = vmatpush1.msra.mxu0 0.0
    %8612 = vmatprep.subr.mxu0 0.0
    %8613 = vmatpush1.msra.mxu0 0.0
    %8614 = vmatprep.subr.mxu0 0.0
    %8615 = vmatpush1.msra.mxu0 0.0
    %8616 = vmatprep.subr.mxu0 0.0
    %8617 = vmatpush1.msra.mxu0 0.0
    %8618 = vmatprep.subr.mxu0 0.0
    %8619 = vmatpush1.msra.mxu0 0.0
    %8620 = vmatprep.subr.mxu0 0.0
    %8621 = vmatpush1.msra.mxu0 0.0
    %8622 = vmatprep.subr.mxu0 0.0
    %8623 = vmatpush1.msra.mxu0 0.0
    %8624 = vmatprep.subr.mxu0 0.0
    %8625 = vmatpush1.msra.mxu0 0.0
    %8626 = vmatprep.subr.mxu0 0.0
    %8627 = vmatpush1.msra.mxu0 0.0
    %8628 = vmatprep.subr.mxu0 0.0
    %8629 = vmatpush1.msra.mxu0 0.0
    %8630 = vmatprep.mubr.f32.mxu0 0.0
    %8631 = vmatmul.mubr.f32.gmra.mrb[0].mxu0 %v8543
    %v8632 = vpop.f32.mrb[0].mxu0
    %v8633 = vadd.f32 %v8540, %v8632
    %v8634 = vpop.f32.mrb[0].mxu0
    %8635 = vmatprep.mubr.f32.mxu0 0.0
    %8636 = vmatmul.mubr.f32.gmra.mrb[0].mxu0 %v8546
    %v8637 = vpop.f32.mrb[0].mxu0
    %v8638 = vadd.f32 %v8540, %v8637
    %v8639 = vpop.f32.mrb[0].mxu0
    %8640 = vmatprep.mubr.f32.mxu0 0.0
    %8641 = vmatmul.mubr.f32.gmra.mrb[0].mxu0 %v8549
    %v8642 = vpop.f32.mrb[0].mxu0
    %v8643 = vadd.f32 %v8540, %v8642
    %v8644 = vpop.f32.mrb[0].mxu0
    %8645 = vmatprep.mubr.f32.mxu0 0.0
    %8646 = vmatmul.mubr.f32.gmra.mrb[0].mxu0 %v8552
    %v8647 = vpop.f32.mrb[0].mxu0
    %v8648 = vadd.f32 %v8540, %v8647
    %v8649 = vpop.f32.mrb[0].mxu0
    %8650 = vmatprep.mubr.f32.mxu0 0.0
    %8651 = vmatmul.mubr.f32.gmra.mrb[0].mxu0 %v8555
    %v8652 = vpop.f32.mrb[0].mxu0
    %v8653 = vadd.f32 %v8540, %v8652
    %v8654 = vpop.f32.mrb[0].mxu0
    %8655 = vmatprep.mubr.f32.mxu0 0.0
    %8656 = vmatmul.mubr.f32.gmra.mrb[0].mxu0 %v8558
    %v8657 = vpop.f32.mrb[0].mxu0
    %v8658 = vadd.f32 %v8540, %v8657
    %v8659 = vpop.f32.mrb[0].mxu0
    %8660 = vmatprep.mubr.f32.mxu0 0.0
    %8661 = vmatmul.mubr.f32.gmra.mrb[0].mxu0 %v8561
    %v8662 = vpop.f32.mrb[0].mxu0
    %v8663 = vadd.f32 %v8540, %v8662
    %v8664 = vpop.f32.mrb[0].mxu0
    %8665 = vmatprep.mubr.f32.mxu0 0.0
    %8666 = vmatmul.mubr.f32.gmra.mrb[0].mxu0 %v8564
    %v8667 = vpop.f32.mrb[0].mxu0
    %v8668 = vadd.f32 %v8540, %v8667
    %v8669 = vpop.f32.mrb[0].mxu0
    %8670 = vdwg.mxu0
    %v8671 = vld [vmem:[%s17] sm:$0xff]
    %v8672 = vld [vmem:[%s17 + $0x8] sm:$0xff]
    %v8673 = vld [vmem:[%s17 + $0x10] sm:$0xff]
    %v8674 = vld [vmem:[%s17 + $0x18] sm:$0xff]
    %v8675 = vld [vmem:[%s17 + $0x20] sm:$0xff]
    %v8676 = vld [vmem:[%s17 + $0x28] sm:$0xff]
    %v8677 = vld [vmem:[%s17 + $0x30] sm:$0xff]
    %v8678 = vld [vmem:[%s17 + $0x38] sm:$0xff]
    %v8679 = vld [vmem:[%s17 + $0x40] sm:$0xff]
    %v8680 = vld [vmem:[%s17 + $0x48] sm:$0xff]
    %v8681 = vld [vmem:[%s17 + $0x50] sm:$0xff]
    %v8682 = vld [vmem:[%s17 + $0x58] sm:$0xff]
    %v8683 = vld [vmem:[%s17 + $0x60] sm:$0xff]
    %v8684 = vld [vmem:[%s17 + $0x68] sm:$0xff]
    %v8685 = vld [vmem:[%s17 + $0x70] sm:$0xff]
    %v8686 = vld [vmem:[%s17 + $0x78] sm:$0xff]
    %v8687 = vld [vmem:[%s17 + $0x80] sm:$0xff]
    %v8688 = vld [vmem:[%s17 + $0x88] sm:$0xff]
    %v8689 = vld [vmem:[%s17 + $0x90] sm:$0xff]
    %v8690 = vld [vmem:[%s17 + $0x98] sm:$0xff]
    %v8691 = vld [vmem:[%s17 + $0xa0] sm:$0xff]
    %v8692 = vld [vmem:[%s17 + $0xa8] sm:$0xff]
    %v8693 = vld [vmem:[%s17 + $0xb0] sm:$0xff]
    %v8694 = vld [vmem:[%s17 + $0xb8] sm:$0xff]
    %v8695 = vld [vmem:[%s17 + $0xc0] sm:$0xff]
    %v8696 = vld [vmem:[%s17 + $0xc8] sm:$0xff]
    %v8697 = vld [vmem:[%s17 + $0xd0] sm:$0xff]
    %v8698 = vld [vmem:[%s17 + $0xd8] sm:$0xff]
    %v8699 = vld [vmem:[%s17 + $0xe0] sm:$0xff]
    %v8700 = vld [vmem:[%s17 + $0xe8] sm:$0xff]
    %v8701 = vld [vmem:[%s17 + $0xf0] sm:$0xff]
    %v8702 = vld [vmem:[%s17 + $0xf8] sm:$0xff]
    %v8704 = vsel %vm6006, %v8671, 0
    %v8707 = vsel %vm6006, %v8672, 0
    %v8710 = vsel %vm6006, %v8673, 0
    %v8713 = vsel %vm6006, %v8674, 0
    %v8716 = vsel %vm6006, %v8675, 0
    %v8719 = vsel %vm6006, %v8676, 0
    %v8722 = vsel %vm6006, %v8677, 0
    %v8725 = vsel %vm6006, %v8678, 0
    %v8728 = vsel %vm6006, %v8679, 0
    %v8731 = vsel %vm6006, %v8680, 0
    %v8734 = vsel %vm6006, %v8681, 0
    %v8737 = vsel %vm6006, %v8682, 0
    %v8740 = vsel %vm6006, %v8683, 0
    %v8743 = vsel %vm6006, %v8684, 0
    %v8746 = vsel %vm6006, %v8685, 0
    %v8749 = vsel %vm6006, %v8686, 0
    %v8752 = vsel %vm6006, %v8687, 0
    %v8755 = vsel %vm6006, %v8688, 0
    %v8758 = vsel %vm6006, %v8689, 0
    %v8761 = vsel %vm6006, %v8690, 0
    %v8764 = vsel %vm6006, %v8691, 0
    %v8767 = vsel %vm6006, %v8692, 0
    %v8770 = vsel %vm6006, %v8693, 0
    %v8773 = vsel %vm6006, %v8694, 0
    %v8776 = vsel %vm6006, %v8695, 0
    %v8779 = vsel %vm6006, %v8696, 0
    %v8782 = vsel %vm6006, %v8697, 0
    %v8785 = vsel %vm6006, %v8698, 0
    %v8788 = vsel %vm6006, %v8699, 0
    %v8791 = vsel %vm6006, %v8700, 0
    %v8794 = vsel %vm6006, %v8701, 0
    %v8797 = vsel %vm6006, %v8702, 0
    %8799 = vmatprep.subr.mxu0 0.0
    %8800 = vmatpush1.msra.mxu0 %v8633
    %8801 = vmatprep.subr.mxu0 0.0
    %8802 = vmatpush1.msra.mxu0 %v8638
    %8803 = vmatprep.subr.mxu0 0.0
    %8804 = vmatpush1.msra.mxu0 %v8643
    %8805 = vmatprep.subr.mxu0 0.0
    %8806 = vmatpush1.msra.mxu0 %v8648
    %8807 = vmatprep.subr.mxu0 0.0
    %8808 = vmatpush1.msra.mxu0 %v8653
    %8809 = vmatprep.subr.mxu0 0.0
    %8810 = vmatpush1.msra.mxu0 %v8658
    %8811 = vmatprep.subr.mxu0 0.0
    %8812 = vmatpush1.msra.mxu0 %v8663
    %8813 = vmatprep.subr.mxu0 0.0
    %8814 = vmatpush1.msra.mxu0 %v8668
    %8815 = vmatprep.subr.mxu0 0.0
    %8816 = vmatpush1.msra.mxu0 0.0
    %8817 = vmatprep.subr.mxu0 0.0
    %8818 = vmatpush1.msra.mxu0 0.0
    %8819 = vmatprep.subr.mxu0 0.0
    %8820 = vmatpush1.msra.mxu0 0.0
    %8821 = vmatprep.subr.mxu0 0.0
    %8822 = vmatpush1.msra.mxu0 0.0
    %8823 = vmatprep.subr.mxu0 0.0
    %8824 = vmatpush1.msra.mxu0 0.0
    %8825 = vmatprep.subr.mxu0 0.0
    %8826 = vmatpush1.msra.mxu0 0.0
    %8827 = vmatprep.subr.mxu0 0.0
    %8828 = vmatpush1.msra.mxu0 0.0
    %8829 = vmatprep.subr.mxu0 0.0
    %8830 = vmatpush1.msra.mxu0 0.0
    %8831 = vmatprep.subr.mxu0 0.0
    %8832 = vmatpush1.msra.mxu0 0.0
    %8833 = vmatprep.subr.mxu0 0.0
    %8834 = vmatpush1.msra.mxu0 0.0
    %8835 = vmatprep.subr.mxu0 0.0
    %8836 = vmatpush1.msra.mxu0 0.0
    %8837 = vmatprep.subr.mxu0 0.0
    %8838 = vmatpush1.msra.mxu0 0.0
    %8839 = vmatprep.subr.mxu0 0.0
    %8840 = vmatpush1.msra.mxu0 0.0
    %8841 = vmatprep.subr.mxu0 0.0
    %8842 = vmatpush1.msra.mxu0 0.0
    %8843 = vmatprep.subr.mxu0 0.0
    %8844 = vmatpush1.msra.mxu0 0.0
    %8845 = vmatprep.subr.mxu0 0.0
    %8846 = vmatpush1.msra.mxu0 0.0
    %8847 = vmatprep.subr.mxu0 0.0
    %8848 = vmatpush1.msra.mxu0 0.0
    %8849 = vmatprep.subr.mxu0 0.0
    %8850 = vmatpush1.msra.mxu0 0.0
    %8851 = vmatprep.subr.mxu0 0.0
    %8852 = vmatpush1.msra.mxu0 0.0
    %8853 = vmatprep.subr.mxu0 0.0
    %8854 = vmatpush1.msra.mxu0 0.0
    %8855 = vmatprep.subr.mxu0 0.0
    %8856 = vmatpush1.msra.mxu0 0.0
    %8857 = vmatprep.subr.mxu0 0.0
    %8858 = vmatpush1.msra.mxu0 0.0
    %8859 = vmatprep.subr.mxu0 0.0
    %8860 = vmatpush1.msra.mxu0 0.0
    %8861 = vmatprep.subr.mxu0 0.0
    %8862 = vmatpush1.msra.mxu0 0.0
    %8863 = vmatprep.mubr.f32.mxu0 0.0
    %8864 = vmatmul.mubr.f32.gmra.mrb[0].mxu0 %v8704
    %v8865 = vpop.f32.mrb[0].mxu0
    %v8866 = vadd.f32 0.0, %v8865
    %v8867 = vpop.f32.mrb[0].mxu0
    %8868 = vmatprep.mubr.f32.mxu0 0.0
    %8869 = vmatmul.mubr.f32.gmra.mrb[0].mxu0 %v8707
    %v8870 = vpop.f32.mrb[0].mxu0
    %v8871 = vadd.f32 0.0, %v8870
    %v8872 = vpop.f32.mrb[0].mxu0
    %8873 = vmatprep.mubr.f32.mxu0 0.0
    %8874 = vmatmul.mubr.f32.gmra.mrb[0].mxu0 %v8710
    %v8875 = vpop.f32.mrb[0].mxu0
    %v8876 = vadd.f32 0.0, %v8875
    %v8877 = vpop.f32.mrb[0].mxu0
    %8878 = vmatprep.mubr.f32.mxu0 0.0
    %8879 = vmatmul.mubr.f32.gmra.mrb[0].mxu0 %v8713
    %v8880 = vpop.f32.mrb[0].mxu0
    %v8881 = vadd.f32 0.0, %v8880
    %v8882 = vpop.f32.mrb[0].mxu0
    %8883 = vmatprep.mubr.f32.mxu0 0.0
    %8884 = vmatmul.mubr.f32.gmra.mrb[0].mxu0 %v8716
    %v8885 = vpop.f32.mrb[0].mxu0
    %v8886 = vadd.f32 0.0, %v8885
    %v8887 = vpop.f32.mrb[0].mxu0
    %8888 = vmatprep.mubr.f32.mxu0 0.0
    %8889 = vmatmul.mubr.f32.gmra.mrb[0].mxu0 %v8719
    %v8890 = vpop.f32.mrb[0].mxu0
    %v8891 = vadd.f32 0.0, %v8890
    %v8892 = vpop.f32.mrb[0].mxu0
    %8893 = vmatprep.mubr.f32.mxu0 0.0
    %8894 = vmatmul.mubr.f32.gmra.mrb[0].mxu0 %v8722
    %v8895 = vpop.f32.mrb[0].mxu0
    %v8896 = vadd.f32 0.0, %v8895
    %v8897 = vpop.f32.mrb[0].mxu0
    %8898 = vmatprep.mubr.f32.mxu0 0.0
    %8899 = vmatmul.mubr.f32.gmra.mrb[0].mxu0 %v8725
    %v8900 = vpop.f32.mrb[0].mxu0
    %v8901 = vadd.f32 0.0, %v8900
    %v8902 = vpop.f32.mrb[0].mxu0
    %8903 = vmatprep.mubr.f32.mxu0 0.0
    %8904 = vmatmul.mubr.f32.gmra.mrb[0].mxu0 %v8728
    %v8905 = vpop.f32.mrb[0].mxu0
    %v8906 = vadd.f32 0.0, %v8905
    %v8907 = vpop.f32.mrb[0].mxu0
    %8908 = vmatprep.mubr.f32.mxu0 0.0
    %8909 = vmatmul.mubr.f32.gmra.mrb[0].mxu0 %v8731
    %v8910 = vpop.f32.mrb[0].mxu0
    %v8911 = vadd.f32 0.0, %v8910
    %v8912 = vpop.f32.mrb[0].mxu0
    %8913 = vmatprep.mubr.f32.mxu0 0.0
    %8914 = vmatmul.mubr.f32.gmra.mrb[0].mxu0 %v8734
    %v8915 = vpop.f32.mrb[0].mxu0
    %v8916 = vadd.f32 0.0, %v8915
    %v8917 = vpop.f32.mrb[0].mxu0
    %8918 = vmatprep.mubr.f32.mxu0 0.0
    %8919 = vmatmul.mubr.f32.gmra.mrb[0].mxu0 %v8737
    %v8920 = vpop.f32.mrb[0].mxu0
    %v8921 = vadd.f32 0.0, %v8920
    %v8922 = vpop.f32.mrb[0].mxu0
    %8923 = vmatprep.mubr.f32.mxu0 0.0
    %8924 = vmatmul.mubr.f32.gmra.mrb[0].mxu0 %v8740
    %v8925 = vpop.f32.mrb[0].mxu0
    %v8926 = vadd.f32 0.0, %v8925
    %v8927 = vpop.f32.mrb[0].mxu0
    %8928 = vmatprep.mubr.f32.mxu0 0.0
    %8929 = vmatmul.mubr.f32.gmra.mrb[0].mxu0 %v8743
    %v8930 = vpop.f32.mrb[0].mxu0
    %v8931 = vadd.f32 0.0, %v8930
    %v8932 = vpop.f32.mrb[0].mxu0
    %8933 = vmatprep.mubr.f32.mxu0 0.0
    %8934 = vmatmul.mubr.f32.gmra.mrb[0].mxu0 %v8746
    %v8935 = vpop.f32.mrb[0].mxu0
    %v8936 = vadd.f32 0.0, %v8935
    %v8937 = vpop.f32.mrb[0].mxu0
    %8938 = vmatprep.mubr.f32.mxu0 0.0
    %8939 = vmatmul.mubr.f32.gmra.mrb[0].mxu0 %v8749
    %v8940 = vpop.f32.mrb[0].mxu0
    %v8941 = vadd.f32 0.0, %v8940
    %v8942 = vpop.f32.mrb[0].mxu0
    %8943 = vmatprep.mubr.f32.mxu0 0.0
    %8944 = vmatmul.mubr.f32.gmra.mrb[0].mxu0 %v8752
    %v8945 = vpop.f32.mrb[0].mxu0
    %v8946 = vadd.f32 0.0, %v8945
    %v8947 = vpop.f32.mrb[0].mxu0
    %8948 = vmatprep.mubr.f32.mxu0 0.0
    %8949 = vmatmul.mubr.f32.gmra.mrb[0].mxu0 %v8755
    %v8950 = vpop.f32.mrb[0].mxu0
    %v8951 = vadd.f32 0.0, %v8950
    %v8952 = vpop.f32.mrb[0].mxu0
    %8953 = vmatprep.mubr.f32.mxu0 0.0
    %8954 = vmatmul.mubr.f32.gmra.mrb[0].mxu0 %v8758
    %v8955 = vpop.f32.mrb[0].mxu0
    %v8956 = vadd.f32 0.0, %v8955
    %v8957 = vpop.f32.mrb[0].mxu0
    %8958 = vmatprep.mubr.f32.mxu0 0.0
    %8959 = vmatmul.mubr.f32.gmra.mrb[0].mxu0 %v8761
    %v8960 = vpop.f32.mrb[0].mxu0
    %v8961 = vadd.f32 0.0, %v8960
    %v8962 = vpop.f32.mrb[0].mxu0
    %8963 = vmatprep.mubr.f32.mxu0 0.0
    %8964 = vmatmul.mubr.f32.gmra.mrb[0].mxu0 %v8764
    %v8965 = vpop.f32.mrb[0].mxu0
    %v8966 = vadd.f32 0.0, %v8965
    %v8967 = vpop.f32.mrb[0].mxu0
    %8968 = vmatprep.mubr.f32.mxu0 0.0
    %8969 = vmatmul.mubr.f32.gmra.mrb[0].mxu0 %v8767
    %v8970 = vpop.f32.mrb[0].mxu0
    %v8971 = vadd.f32 0.0, %v8970
    %v8972 = vpop.f32.mrb[0].mxu0
    %8973 = vmatprep.mubr.f32.mxu0 0.0
    %8974 = vmatmul.mubr.f32.gmra.mrb[0].mxu0 %v8770
    %v8975 = vpop.f32.mrb[0].mxu0
    %v8976 = vadd.f32 0.0, %v8975
    %v8977 = vpop.f32.mrb[0].mxu0
    %8978 = vmatprep.mubr.f32.mxu0 0.0
    %8979 = vmatmul.mubr.f32.gmra.mrb[0].mxu0 %v8773
    %v8980 = vpop.f32.mrb[0].mxu0
    %v8981 = vadd.f32 0.0, %v8980
    %v8982 = vpop.f32.mrb[0].mxu0
    %8983 = vmatprep.mubr.f32.mxu0 0.0
    %8984 = vmatmul.mubr.f32.gmra.mrb[0].mxu0 %v8776
    %v8985 = vpop.f32.mrb[0].mxu0
    %v8986 = vadd.f32 0.0, %v8985
    %v8987 = vpop.f32.mrb[0].mxu0
    %8988 = vmatprep.mubr.f32.mxu0 0.0
    %8989 = vmatmul.mubr.f32.gmra.mrb[0].mxu0 %v8779
    %v8990 = vpop.f32.mrb[0].mxu0
    %v8991 = vadd.f32 0.0, %v8990
    %v8992 = vpop.f32.mrb[0].mxu0
    %8993 = vmatprep.mubr.f32.mxu0 0.0
    %8994 = vmatmul.mubr.f32.gmra.mrb[0].mxu0 %v8782
    %v8995 = vpop.f32.mrb[0].mxu0
    %v8996 = vadd.f32 0.0, %v8995
    %v8997 = vpop.f32.mrb[0].mxu0
    %8998 = vmatprep.mubr.f32.mxu0 0.0
    %8999 = vmatmul.mubr.f32.gmra.mrb[0].mxu0 %v8785
    %v9000 = vpop.f32.mrb[0].mxu0
    %v9001 = vadd.f32 0.0, %v9000
    %v9002 = vpop.f32.mrb[0].mxu0
    %9003 = vmatprep.mubr.f32.mxu0 0.0
    %9004 = vmatmul.mubr.f32.gmra.mrb[0].mxu0 %v8788
    %v9005 = vpop.f32.mrb[0].mxu0
    %v9006 = vadd.f32 0.0, %v9005
    %v9007 = vpop.f32.mrb[0].mxu0
    %9008 = vmatprep.mubr.f32.mxu0 0.0
    %9009 = vmatmul.mubr.f32.gmra.mrb[0].mxu0 %v8791
    %v9010 = vpop.f32.mrb[0].mxu0
    %v9011 = vadd.f32 0.0, %v9010
    %v9012 = vpop.f32.mrb[0].mxu0
    %9013 = vmatprep.mubr.f32.mxu0 0.0
    %9014 = vmatmul.mubr.f32.gmra.mrb[0].mxu0 %v8794
    %v9015 = vpop.f32.mrb[0].mxu0
    %v9016 = vadd.f32 0.0, %v9015
    %v9017 = vpop.f32.mrb[0].mxu0
    %9018 = vmatprep.mubr.f32.mxu0 0.0
    %9019 = vmatmul.mubr.f32.gmra.mrb[0].mxu0 %v8797
    %v9020 = vpop.f32.mrb[0].mxu0
    %v9021 = vadd.f32 0.0, %v9020
    %v9022 = vpop.f32.mrb[0].mxu0
    %9023 = vdwg.mxu0
    %v9024 = vld [vmem:[#allocation49] sm:$0xff]
    %v9025 = vld [vmem:[#allocation49 + $0x8] sm:$0xff]
    %v9026 = vld [vmem:[#allocation49 + $0x10] sm:$0xff]
    %v9027 = vld [vmem:[#allocation49 + $0x18] sm:$0xff]
    %v9028 = vld [vmem:[#allocation51] sm:$0x1]
    %v9030 = vlaneseq
    %v9031 = vshrl.u32 %v9030, 7
    %v9032 = vsub.s32 0, %v9031
    %v9033 = vrot.slane %v9028, %v9032
    %v9036 = vsel %vm5278, %v8866, 0
    %v9039 = vsel %vm5278, %v8871, 0
    %v9042 = vsel %vm5278, %v8876, 0
    %v9045 = vsel %vm5278, %v8881, 0
    %v9048 = vsel %vm5278, %v8886, 0
    %v9051 = vsel %vm5278, %v8891, 0
    %v9054 = vsel %vm5278, %v8896, 0
    %v9057 = vsel %vm5278, %v8901, 0
    %v9060 = vsel %vm5278, %v8906, 0
    %v9063 = vsel %vm5278, %v8911, 0
    %v9066 = vsel %vm5278, %v8916, 0
    %v9069 = vsel %vm5278, %v8921, 0
    %v9072 = vsel %vm5278, %v8926, 0
    %v9075 = vsel %vm5278, %v8931, 0
    %v9078 = vsel %vm5278, %v8936, 0
    %v9081 = vsel %vm5278, %v8941, 0
    %v9084 = vsel %vm5278, %v8946, 0
    %v9087 = vsel %vm5278, %v8951, 0
    %v9090 = vsel %vm5278, %v8956, 0
    %v9093 = vsel %vm5278, %v8961, 0
    %v9096 = vsel %vm5278, %v8966, 0
    %v9099 = vsel %vm5278, %v8971, 0
    %v9102 = vsel %vm5278, %v8976, 0
    %v9105 = vsel %vm5278, %v8981, 0
    %v9108 = vsel %vm5278, %v8986, 0
    %v9111 = vsel %vm5278, %v8991, 0
    %v9114 = vsel %vm5278, %v8996, 0
    %v9117 = vsel %vm5278, %v9001, 0
    %v9120 = vsel %vm5278, %v9006, 0
    %v9123 = vsel %vm5278, %v9011, 0
    %v9126 = vsel %vm5278, %v9016, 0
    %v9129 = vsel %vm5278, %v9021, 0
    %9131 = vmatprep.subr.mxu0 0.0
    %9132 = vmatpush1.msra.mxu0 %v9024
    %9133 = vmatprep.subr.mxu0 0.0
    %9134 = vmatpush1.msra.mxu0 %v9025
    %9135 = vmatprep.subr.mxu0 0.0
    %9136 = vmatpush1.msra.mxu0 %v9026
    %9137 = vmatprep.subr.mxu0 0.0
    %9138 = vmatpush1.msra.mxu0 %v9027
    %9139 = vmatprep.subr.mxu0 0.0
    %9140 = vmatpush1.msra.mxu0 0.0
    %9141 = vmatprep.subr.mxu0 0.0
    %9142 = vmatpush1.msra.mxu0 0.0
    %9143 = vmatprep.subr.mxu0 0.0
    %9144 = vmatpush1.msra.mxu0 0.0
    %9145 = vmatprep.subr.mxu0 0.0
    %9146 = vmatpush1.msra.mxu0 0.0
    %9147 = vmatprep.subr.mxu0 0.0
    %9148 = vmatpush1.msra.mxu0 0.0
    %9149 = vmatprep.subr.mxu0 0.0
    %9150 = vmatpush1.msra.mxu0 0.0
    %9151 = vmatprep.subr.mxu0 0.0
    %9152 = vmatpush1.msra.mxu0 0.0
    %9153 = vmatprep.subr.mxu0 0.0
    %9154 = vmatpush1.msra.mxu0 0.0
    %9155 = vmatprep.subr.mxu0 0.0
    %9156 = vmatpush1.msra.mxu0 0.0
    %9157 = vmatprep.subr.mxu0 0.0
    %9158 = vmatpush1.msra.mxu0 0.0
    %9159 = vmatprep.subr.mxu0 0.0
    %9160 = vmatpush1.msra.mxu0 0.0
    %9161 = vmatprep.subr.mxu0 0.0
    %9162 = vmatpush1.msra.mxu0 0.0
    %9163 = vmatprep.subr.mxu0 0.0
    %9164 = vmatpush1.msra.mxu0 0.0
    %9165 = vmatprep.subr.mxu0 0.0
    %9166 = vmatpush1.msra.mxu0 0.0
    %9167 = vmatprep.subr.mxu0 0.0
    %9168 = vmatpush1.msra.mxu0 0.0
    %9169 = vmatprep.subr.mxu0 0.0
    %9170 = vmatpush1.msra.mxu0 0.0
    %9171 = vmatprep.subr.mxu0 0.0
    %9172 = vmatpush1.msra.mxu0 0.0
    %9173 = vmatprep.subr.mxu0 0.0
    %9174 = vmatpush1.msra.mxu0 0.0
    %9175 = vmatprep.subr.mxu0 0.0
    %9176 = vmatpush1.msra.mxu0 0.0
    %9177 = vmatprep.subr.mxu0 0.0
    %9178 = vmatpush1.msra.mxu0 0.0
    %9179 = vmatprep.subr.mxu0 0.0
    %9180 = vmatpush1.msra.mxu0 0.0
    %9181 = vmatprep.subr.mxu0 0.0
    %9182 = vmatpush1.msra.mxu0 0.0
    %9183 = vmatprep.subr.mxu0 0.0
    %9184 = vmatpush1.msra.mxu0 0.0
    %9185 = vmatprep.subr.mxu0 0.0
    %9186 = vmatpush1.msra.mxu0 0.0
    %9187 = vmatprep.subr.mxu0 0.0
    %9188 = vmatpush1.msra.mxu0 0.0
    %9189 = vmatprep.subr.mxu0 0.0
    %9190 = vmatpush1.msra.mxu0 0.0
    %9191 = vmatprep.subr.mxu0 0.0
    %9192 = vmatpush1.msra.mxu0 0.0
    %9193 = vmatprep.subr.mxu0 0.0
    %9194 = vmatpush1.msra.mxu0 0.0
    %9195 = vmatprep.mubr.f32.mxu0 0.0
    %9196 = vmatmul.mubr.f32.gmra.mrb[0].mxu0 %v9036
    %v9197 = vpop.f32.mrb[0].mxu0
    %v9198 = vadd.f32 %v9033, %v9197
    %v9199 = vpop.f32.mrb[0].mxu0
    %9200 = vmatprep.mubr.f32.mxu0 0.0
    %9201 = vmatmul.mubr.f32.gmra.mrb[0].mxu0 %v9039
    %v9202 = vpop.f32.mrb[0].mxu0
    %v9203 = vadd.f32 %v9033, %v9202
    %v9204 = vpop.f32.mrb[0].mxu0
    %9205 = vmatprep.mubr.f32.mxu0 0.0
    %9206 = vmatmul.mubr.f32.gmra.mrb[0].mxu0 %v9042
    %v9207 = vpop.f32.mrb[0].mxu0
    %v9208 = vadd.f32 %v9033, %v9207
    %v9209 = vpop.f32.mrb[0].mxu0
    %9210 = vmatprep.mubr.f32.mxu0 0.0
    %9211 = vmatmul.mubr.f32.gmra.mrb[0].mxu0 %v9045
    %v9212 = vpop.f32.mrb[0].mxu0
    %v9213 = vadd.f32 %v9033, %v9212
    %v9214 = vpop.f32.mrb[0].mxu0
    %9215 = vmatprep.mubr.f32.mxu0 0.0
    %9216 = vmatmul.mubr.f32.gmra.mrb[0].mxu0 %v9048
    %v9217 = vpop.f32.mrb[0].mxu0
    %v9218 = vadd.f32 %v9033, %v9217
    %v9219 = vpop.f32.mrb[0].mxu0
    %9220 = vmatprep.mubr.f32.mxu0 0.0
    %9221 = vmatmul.mubr.f32.gmra.mrb[0].mxu0 %v9051
    %v9222 = vpop.f32.mrb[0].mxu0
    %v9223 = vadd.f32 %v9033, %v9222
    %v9224 = vpop.f32.mrb[0].mxu0
    %9225 = vmatprep.mubr.f32.mxu0 0.0
    %9226 = vmatmul.mubr.f32.gmra.mrb[0].mxu0 %v9054
    %v9227 = vpop.f32.mrb[0].mxu0
    %v9228 = vadd.f32 %v9033, %v9227
    %v9229 = vpop.f32.mrb[0].mxu0
    %9230 = vmatprep.mubr.f32.mxu0 0.0
    %9231 = vmatmul.mubr.f32.gmra.mrb[0].mxu0 %v9057
    %v9232 = vpop.f32.mrb[0].mxu0
    %v9233 = vadd.f32 %v9033, %v9232
    %v9234 = vpop.f32.mrb[0].mxu0
    %9235 = vmatprep.mubr.f32.mxu0 0.0
    %9236 = vmatmul.mubr.f32.gmra.mrb[0].mxu0 %v9060
    %v9237 = vpop.f32.mrb[0].mxu0
    %v9238 = vadd.f32 %v9033, %v9237
    %v9239 = vpop.f32.mrb[0].mxu0
    %9240 = vmatprep.mubr.f32.mxu0 0.0
    %9241 = vmatmul.mubr.f32.gmra.mrb[0].mxu0 %v9063
    %v9242 = vpop.f32.mrb[0].mxu0
    %v9243 = vadd.f32 %v9033, %v9242
    %v9244 = vpop.f32.mrb[0].mxu0
    %9245 = vmatprep.mubr.f32.mxu0 0.0
    %9246 = vmatmul.mubr.f32.gmra.mrb[0].mxu0 %v9066
    %v9247 = vpop.f32.mrb[0].mxu0
    %v9248 = vadd.f32 %v9033, %v9247
    %v9249 = vpop.f32.mrb[0].mxu0
    %9250 = vmatprep.mubr.f32.mxu0 0.0
    %9251 = vmatmul.mubr.f32.gmra.mrb[0].mxu0 %v9069
    %v9252 = vpop.f32.mrb[0].mxu0
    %v9253 = vadd.f32 %v9033, %v9252
    %v9254 = vpop.f32.mrb[0].mxu0
    %9255 = vmatprep.mubr.f32.mxu0 0.0
    %9256 = vmatmul.mubr.f32.gmra.mrb[0].mxu0 %v9072
    %v9257 = vpop.f32.mrb[0].mxu0
    %v9258 = vadd.f32 %v9033, %v9257
    %v9259 = vpop.f32.mrb[0].mxu0
    %9260 = vmatprep.mubr.f32.mxu0 0.0
    %9261 = vmatmul.mubr.f32.gmra.mrb[0].mxu0 %v9075
    %v9262 = vpop.f32.mrb[0].mxu0
    %v9263 = vadd.f32 %v9033, %v9262
    %v9264 = vpop.f32.mrb[0].mxu0
    %9265 = vmatprep.mubr.f32.mxu0 0.0
    %9266 = vmatmul.mubr.f32.gmra.mrb[0].mxu0 %v9078
    %v9267 = vpop.f32.mrb[0].mxu0
    %v9268 = vadd.f32 %v9033, %v9267
    %v9269 = vpop.f32.mrb[0].mxu0
    %9270 = vmatprep.mubr.f32.mxu0 0.0
    %9271 = vmatmul.mubr.f32.gmra.mrb[0].mxu0 %v9081
    %v9272 = vpop.f32.mrb[0].mxu0
    %v9273 = vadd.f32 %v9033, %v9272
    %v9274 = vpop.f32.mrb[0].mxu0
    %9275 = vmatprep.mubr.f32.mxu0 0.0
    %9276 = vmatmul.mubr.f32.gmra.mrb[0].mxu0 %v9084
    %v9277 = vpop.f32.mrb[0].mxu0
    %v9278 = vadd.f32 %v9033, %v9277
    %v9279 = vpop.f32.mrb[0].mxu0
    %9280 = vmatprep.mubr.f32.mxu0 0.0
    %9281 = vmatmul.mubr.f32.gmra.mrb[0].mxu0 %v9087
    %v9282 = vpop.f32.mrb[0].mxu0
    %v9283 = vadd.f32 %v9033, %v9282
    %v9284 = vpop.f32.mrb[0].mxu0
    %9285 = vmatprep.mubr.f32.mxu0 0.0
    %9286 = vmatmul.mubr.f32.gmra.mrb[0].mxu0 %v9090
    %v9287 = vpop.f32.mrb[0].mxu0
    %v9288 = vadd.f32 %v9033, %v9287
    %v9289 = vpop.f32.mrb[0].mxu0
    %9290 = vmatprep.mubr.f32.mxu0 0.0
    %9291 = vmatmul.mubr.f32.gmra.mrb[0].mxu0 %v9093
    %v9292 = vpop.f32.mrb[0].mxu0
    %v9293 = vadd.f32 %v9033, %v9292
    %v9294 = vpop.f32.mrb[0].mxu0
    %9295 = vmatprep.mubr.f32.mxu0 0.0
    %9296 = vmatmul.mubr.f32.gmra.mrb[0].mxu0 %v9096
    %v9297 = vpop.f32.mrb[0].mxu0
    %v9298 = vadd.f32 %v9033, %v9297
    %v9299 = vpop.f32.mrb[0].mxu0
    %9300 = vmatprep.mubr.f32.mxu0 0.0
    %9301 = vmatmul.mubr.f32.gmra.mrb[0].mxu0 %v9099
    %v9302 = vpop.f32.mrb[0].mxu0
    %v9303 = vadd.f32 %v9033, %v9302
    %v9304 = vpop.f32.mrb[0].mxu0
    %9305 = vmatprep.mubr.f32.mxu0 0.0
    %9306 = vmatmul.mubr.f32.gmra.mrb[0].mxu0 %v9102
    %v9307 = vpop.f32.mrb[0].mxu0
    %v9308 = vadd.f32 %v9033, %v9307
    %v9309 = vpop.f32.mrb[0].mxu0
    %9310 = vmatprep.mubr.f32.mxu0 0.0
    %9311 = vmatmul.mubr.f32.gmra.mrb[0].mxu0 %v9105
    %v9312 = vpop.f32.mrb[0].mxu0
    %v9313 = vadd.f32 %v9033, %v9312
    %v9314 = vpop.f32.mrb[0].mxu0
    %9315 = vmatprep.mubr.f32.mxu0 0.0
    %9316 = vmatmul.mubr.f32.gmra.mrb[0].mxu0 %v9108
    %v9317 = vpop.f32.mrb[0].mxu0
    %v9318 = vadd.f32 %v9033, %v9317
    %v9319 = vpop.f32.mrb[0].mxu0
    %9320 = vmatprep.mubr.f32.mxu0 0.0
    %9321 = vmatmul.mubr.f32.gmra.mrb[0].mxu0 %v9111
    %v9322 = vpop.f32.mrb[0].mxu0
    %v9323 = vadd.f32 %v9033, %v9322
    %v9324 = vpop.f32.mrb[0].mxu0
    %9325 = vmatprep.mubr.f32.mxu0 0.0
    %9326 = vmatmul.mubr.f32.gmra.mrb[0].mxu0 %v9114
    %v9327 = vpop.f32.mrb[0].mxu0
    %v9328 = vadd.f32 %v9033, %v9327
    %v9329 = vpop.f32.mrb[0].mxu0
    %9330 = vmatprep.mubr.f32.mxu0 0.0
    %9331 = vmatmul.mubr.f32.gmra.mrb[0].mxu0 %v9117
    %v9332 = vpop.f32.mrb[0].mxu0
    %v9333 = vadd.f32 %v9033, %v9332
    %v9334 = vpop.f32.mrb[0].mxu0
    %9335 = vmatprep.mubr.f32.mxu0 0.0
    %9336 = vmatmul.mubr.f32.gmra.mrb[0].mxu0 %v9120
    %v9337 = vpop.f32.mrb[0].mxu0
    %v9338 = vadd.f32 %v9033, %v9337
    %v9339 = vpop.f32.mrb[0].mxu0
    %9340 = vmatprep.mubr.f32.mxu0 0.0
    %9341 = vmatmul.mubr.f32.gmra.mrb[0].mxu0 %v9123
    %v9342 = vpop.f32.mrb[0].mxu0
    %v9343 = vadd.f32 %v9033, %v9342
    %v9344 = vpop.f32.mrb[0].mxu0
    %9345 = vmatprep.mubr.f32.mxu0 0.0
    %9346 = vmatmul.mubr.f32.gmra.mrb[0].mxu0 %v9126
    %v9347 = vpop.f32.mrb[0].mxu0
    %v9348 = vadd.f32 %v9033, %v9347
    %v9349 = vpop.f32.mrb[0].mxu0
    %9350 = vmatprep.mubr.f32.mxu0 0.0
    %9351 = vmatmul.mubr.f32.gmra.mrb[0].mxu0 %v9129
    %v9352 = vpop.f32.mrb[0].mxu0
    %v9353 = vadd.f32 %v9033, %v9352
    %v9354 = vpop.f32.mrb[0].mxu0
    %9355 = vdwg.mxu0
    %v9356 = vmax.f32 %v9198, 0.0
    %v9357 = vmax.f32 %v9203, 0.0
    %v9358 = vmax.f32 %v9208, 0.0
    %v9359 = vmax.f32 %v9213, 0.0
    %v9360 = vmax.f32 %v9218, 0.0
    %v9361 = vmax.f32 %v9223, 0.0
    %v9362 = vmax.f32 %v9228, 0.0
    %v9363 = vmax.f32 %v9233, 0.0
    %v9364 = vmax.f32 %v9238, 0.0
    %v9365 = vmax.f32 %v9243, 0.0
    %v9366 = vmax.f32 %v9248, 0.0
    %v9367 = vmax.f32 %v9253, 0.0
    %v9368 = vmax.f32 %v9258, 0.0
    %v9369 = vmax.f32 %v9263, 0.0
    %v9370 = vmax.f32 %v9268, 0.0
    %v9371 = vmax.f32 %v9273, 0.0
    %v9372 = vmax.f32 %v9278, 0.0
    %v9373 = vmax.f32 %v9283, 0.0
    %v9374 = vmax.f32 %v9288, 0.0
    %v9375 = vmax.f32 %v9293, 0.0
    %v9376 = vmax.f32 %v9298, 0.0
    %v9377 = vmax.f32 %v9303, 0.0
    %v9378 = vmax.f32 %v9308, 0.0
    %v9379 = vmax.f32 %v9313, 0.0
    %v9380 = vmax.f32 %v9318, 0.0
    %v9381 = vmax.f32 %v9323, 0.0
    %v9382 = vmax.f32 %v9328, 0.0
    %v9383 = vmax.f32 %v9333, 0.0
    %v9384 = vmax.f32 %v9338, 0.0
    %v9385 = vmax.f32 %v9343, 0.0
    %v9386 = vmax.f32 %v9348, 0.0
    %v9387 = vmax.f32 %v9353, 0.0
    %v9388 = vld [vmem:[#allocation52] sm:$0xff]
    %v9389 = vld [vmem:[#allocation52 + $0x8] sm:$0xff]
    %v9390 = vld [vmem:[#allocation52 + $0x10] sm:$0xff]
    %v9391 = vld [vmem:[#allocation52 + $0x18] sm:$0xff]
    %v9392 = vld [vmem:[#allocation52 + $0x20] sm:$0xff]
    %v9393 = vld [vmem:[#allocation52 + $0x28] sm:$0xff]
    %v9394 = vld [vmem:[#allocation52 + $0x30] sm:$0xff]
    %v9395 = vld [vmem:[#allocation52 + $0x38] sm:$0xff]
    %v9396 = vld [vmem:[#allocation54] sm:$0x1]
    %v9398 = vlaneseq
    %v9399 = vshrl.u32 %v9398, 7
    %v9400 = vsub.s32 0, %v9399
    %v9401 = vrot.slane %v9396, %v9400
    %v9404 = vsel %vm6006, %v9356, 0
    %v9407 = vsel %vm6006, %v9357, 0
    %v9410 = vsel %vm6006, %v9358, 0
    %v9413 = vsel %vm6006, %v9359, 0
    %v9416 = vsel %vm6006, %v9360, 0
    %v9419 = vsel %vm6006, %v9361, 0
    %v9422 = vsel %vm6006, %v9362, 0
    %v9425 = vsel %vm6006, %v9363, 0
    %v9428 = vsel %vm6006, %v9364, 0
    %v9431 = vsel %vm6006, %v9365, 0
    %v9434 = vsel %vm6006, %v9366, 0
    %v9437 = vsel %vm6006, %v9367, 0
    %v9440 = vsel %vm6006, %v9368, 0
    %v9443 = vsel %vm6006, %v9369, 0
    %v9446 = vsel %vm6006, %v9370, 0
    %v9449 = vsel %vm6006, %v9371, 0
    %v9452 = vsel %vm6006, %v9372, 0
    %v9455 = vsel %vm6006, %v9373, 0
    %v9458 = vsel %vm6006, %v9374, 0
    %v9461 = vsel %vm6006, %v9375, 0
    %v9464 = vsel %vm6006, %v9376, 0
    %v9467 = vsel %vm6006, %v9377, 0
    %v9470 = vsel %vm6006, %v9378, 0
    %v9473 = vsel %vm6006, %v9379, 0
    %v9476 = vsel %vm6006, %v9380, 0
    %v9479 = vsel %vm6006, %v9381, 0
    %v9482 = vsel %vm6006, %v9382, 0
    %v9485 = vsel %vm6006, %v9383, 0
    %v9488 = vsel %vm6006, %v9384, 0
    %v9491 = vsel %vm6006, %v9385, 0
    %v9494 = vsel %vm6006, %v9386, 0
    %v9497 = vsel %vm6006, %v9387, 0
    %9499 = vmatprep.subr.mxu0 0.0
    %9500 = vmatpush1.msra.mxu0 %v9388
    %9501 = vmatprep.subr.mxu0 0.0
    %9502 = vmatpush1.msra.mxu0 %v9389
    %9503 = vmatprep.subr.mxu0 0.0
    %9504 = vmatpush1.msra.mxu0 %v9390
    %9505 = vmatprep.subr.mxu0 0.0
    %9506 = vmatpush1.msra.mxu0 %v9391
    %9507 = vmatprep.subr.mxu0 0.0
    %9508 = vmatpush1.msra.mxu0 %v9392
    %9509 = vmatprep.subr.mxu0 0.0
    %9510 = vmatpush1.msra.mxu0 %v9393
    %9511 = vmatprep.subr.mxu0 0.0
    %9512 = vmatpush1.msra.mxu0 %v9394
    %9513 = vmatprep.subr.mxu0 0.0
    %9514 = vmatpush1.msra.mxu0 %v9395
    %9515 = vmatprep.subr.mxu0 0.0
    %9516 = vmatpush1.msra.mxu0 0.0
    %9517 = vmatprep.subr.mxu0 0.0
    %9518 = vmatpush1.msra.mxu0 0.0
    %9519 = vmatprep.subr.mxu0 0.0
    %9520 = vmatpush1.msra.mxu0 0.0
    %9521 = vmatprep.subr.mxu0 0.0
    %9522 = vmatpush1.msra.mxu0 0.0
    %9523 = vmatprep.subr.mxu0 0.0
    %9524 = vmatpush1.msra.mxu0 0.0
    %9525 = vmatprep.subr.mxu0 0.0
    %9526 = vmatpush1.msra.mxu0 0.0
    %9527 = vmatprep.subr.mxu0 0.0
    %9528 = vmatpush1.msra.mxu0 0.0
    %9529 = vmatprep.subr.mxu0 0.0
    %9530 = vmatpush1.msra.mxu0 0.0
    %9531 = vmatprep.subr.mxu0 0.0
    %9532 = vmatpush1.msra.mxu0 0.0
    %9533 = vmatprep.subr.mxu0 0.0
    %9534 = vmatpush1.msra.mxu0 0.0
    %9535 = vmatprep.subr.mxu0 0.0
    %9536 = vmatpush1.msra.mxu0 0.0
    %9537 = vmatprep.subr.mxu0 0.0
    %9538 = vmatpush1.msra.mxu0 0.0
    %9539 = vmatprep.subr.mxu0 0.0
    %9540 = vmatpush1.msra.mxu0 0.0
    %9541 = vmatprep.subr.mxu0 0.0
    %9542 = vmatpush1.msra.mxu0 0.0
    %9543 = vmatprep.subr.mxu0 0.0
    %9544 = vmatpush1.msra.mxu0 0.0
    %9545 = vmatprep.subr.mxu0 0.0
    %9546 = vmatpush1.msra.mxu0 0.0
    %9547 = vmatprep.subr.mxu0 0.0
    %9548 = vmatpush1.msra.mxu0 0.0
    %9549 = vmatprep.subr.mxu0 0.0
    %9550 = vmatpush1.msra.mxu0 0.0
    %9551 = vmatprep.subr.mxu0 0.0
    %9552 = vmatpush1.msra.mxu0 0.0
    %9553 = vmatprep.subr.mxu0 0.0
    %9554 = vmatpush1.msra.mxu0 0.0
    %9555 = vmatprep.subr.mxu0 0.0
    %9556 = vmatpush1.msra.mxu0 0.0
    %9557 = vmatprep.subr.mxu0 0.0
    %9558 = vmatpush1.msra.mxu0 0.0
    %9559 = vmatprep.subr.mxu0 0.0
    %9560 = vmatpush1.msra.mxu0 0.0
    %9561 = vmatprep.subr.mxu0 0.0
    %9562 = vmatpush1.msra.mxu0 0.0
    %9563 = vmatprep.mubr.f32.mxu0 0.0
    %9564 = vmatmul.mubr.f32.gmra.mrb[0].mxu0 %v9404
    %v9565 = vpop.f32.mrb[0].mxu0
    %v9566 = vadd.f32 %v9401, %v9565
    %v9567 = vpop.f32.mrb[0].mxu0
    %9568 = vmatprep.mubr.f32.mxu0 0.0
    %9569 = vmatmul.mubr.f32.gmra.mrb[0].mxu0 %v9407
    %v9570 = vpop.f32.mrb[0].mxu0
    %v9571 = vadd.f32 %v9401, %v9570
    %v9572 = vpop.f32.mrb[0].mxu0
    %9573 = vmatprep.mubr.f32.mxu0 0.0
    %9574 = vmatmul.mubr.f32.gmra.mrb[0].mxu0 %v9410
    %v9575 = vpop.f32.mrb[0].mxu0
    %v9576 = vadd.f32 %v9401, %v9575
    %v9577 = vpop.f32.mrb[0].mxu0
    %9578 = vmatprep.mubr.f32.mxu0 0.0
    %9579 = vmatmul.mubr.f32.gmra.mrb[0].mxu0 %v9413
    %v9580 = vpop.f32.mrb[0].mxu0
    %v9581 = vadd.f32 %v9401, %v9580
    %v9582 = vpop.f32.mrb[0].mxu0
    %9583 = vmatprep.mubr.f32.mxu0 0.0
    %9584 = vmatmul.mubr.f32.gmra.mrb[0].mxu0 %v9416
    %v9585 = vpop.f32.mrb[0].mxu0
    %v9586 = vadd.f32 %v9401, %v9585
    %v9587 = vpop.f32.mrb[0].mxu0
    %9588 = vmatprep.mubr.f32.mxu0 0.0
    %9589 = vmatmul.mubr.f32.gmra.mrb[0].mxu0 %v9419
    %v9590 = vpop.f32.mrb[0].mxu0
    %v9591 = vadd.f32 %v9401, %v9590
    %v9592 = vpop.f32.mrb[0].mxu0
    %9593 = vmatprep.mubr.f32.mxu0 0.0
    %9594 = vmatmul.mubr.f32.gmra.mrb[0].mxu0 %v9422
    %v9595 = vpop.f32.mrb[0].mxu0
    %v9596 = vadd.f32 %v9401, %v9595
    %v9597 = vpop.f32.mrb[0].mxu0
    %9598 = vmatprep.mubr.f32.mxu0 0.0
    %9599 = vmatmul.mubr.f32.gmra.mrb[0].mxu0 %v9425
    %v9600 = vpop.f32.mrb[0].mxu0
    %v9601 = vadd.f32 %v9401, %v9600
    %v9602 = vpop.f32.mrb[0].mxu0
    %9603 = vmatprep.mubr.f32.mxu0 0.0
    %9604 = vmatmul.mubr.f32.gmra.mrb[0].mxu0 %v9428
    %v9605 = vpop.f32.mrb[0].mxu0
    %v9606 = vadd.f32 %v9401, %v9605
    %v9607 = vpop.f32.mrb[0].mxu0
    %9608 = vmatprep.mubr.f32.mxu0 0.0
    %9609 = vmatmul.mubr.f32.gmra.mrb[0].mxu0 %v9431
    %v9610 = vpop.f32.mrb[0].mxu0
    %v9611 = vadd.f32 %v9401, %v9610
    %v9612 = vpop.f32.mrb[0].mxu0
    %9613 = vmatprep.mubr.f32.mxu0 0.0
    %9614 = vmatmul.mubr.f32.gmra.mrb[0].mxu0 %v9434
    %v9615 = vpop.f32.mrb[0].mxu0
    %v9616 = vadd.f32 %v9401, %v9615
    %v9617 = vpop.f32.mrb[0].mxu0
    %9618 = vmatprep.mubr.f32.mxu0 0.0
    %9619 = vmatmul.mubr.f32.gmra.mrb[0].mxu0 %v9437
    %v9620 = vpop.f32.mrb[0].mxu0
    %v9621 = vadd.f32 %v9401, %v9620
    %v9622 = vpop.f32.mrb[0].mxu0
    %9623 = vmatprep.mubr.f32.mxu0 0.0
    %9624 = vmatmul.mubr.f32.gmra.mrb[0].mxu0 %v9440
    %v9625 = vpop.f32.mrb[0].mxu0
    %v9626 = vadd.f32 %v9401, %v9625
    %v9627 = vpop.f32.mrb[0].mxu0
    %9628 = vmatprep.mubr.f32.mxu0 0.0
    %9629 = vmatmul.mubr.f32.gmra.mrb[0].mxu0 %v9443
    %v9630 = vpop.f32.mrb[0].mxu0
    %v9631 = vadd.f32 %v9401, %v9630
    %v9632 = vpop.f32.mrb[0].mxu0
    %9633 = vmatprep.mubr.f32.mxu0 0.0
    %9634 = vmatmul.mubr.f32.gmra.mrb[0].mxu0 %v9446
    %v9635 = vpop.f32.mrb[0].mxu0
    %v9636 = vadd.f32 %v9401, %v9635
    %v9637 = vpop.f32.mrb[0].mxu0
    %9638 = vmatprep.mubr.f32.mxu0 0.0
    %9639 = vmatmul.mubr.f32.gmra.mrb[0].mxu0 %v9449
    %v9640 = vpop.f32.mrb[0].mxu0
    %v9641 = vadd.f32 %v9401, %v9640
    %v9642 = vpop.f32.mrb[0].mxu0
    %9643 = vmatprep.mubr.f32.mxu0 0.0
    %9644 = vmatmul.mubr.f32.gmra.mrb[0].mxu0 %v9452
    %v9645 = vpop.f32.mrb[0].mxu0
    %v9646 = vadd.f32 %v9401, %v9645
    %v9647 = vpop.f32.mrb[0].mxu0
    %9648 = vmatprep.mubr.f32.mxu0 0.0
    %9649 = vmatmul.mubr.f32.gmra.mrb[0].mxu0 %v9455
    %v9650 = vpop.f32.mrb[0].mxu0
    %v9651 = vadd.f32 %v9401, %v9650
    %v9652 = vpop.f32.mrb[0].mxu0
    %9653 = vmatprep.mubr.f32.mxu0 0.0
    %9654 = vmatmul.mubr.f32.gmra.mrb[0].mxu0 %v9458
    %v9655 = vpop.f32.mrb[0].mxu0
    %v9656 = vadd.f32 %v9401, %v9655
    %v9657 = vpop.f32.mrb[0].mxu0
    %9658 = vmatprep.mubr.f32.mxu0 0.0
    %9659 = vmatmul.mubr.f32.gmra.mrb[0].mxu0 %v9461
    %v9660 = vpop.f32.mrb[0].mxu0
    %v9661 = vadd.f32 %v9401, %v9660
    %v9662 = vpop.f32.mrb[0].mxu0
    %9663 = vmatprep.mubr.f32.mxu0 0.0
    %9664 = vmatmul.mubr.f32.gmra.mrb[0].mxu0 %v9464
    %v9665 = vpop.f32.mrb[0].mxu0
    %v9666 = vadd.f32 %v9401, %v9665
    %v9667 = vpop.f32.mrb[0].mxu0
    %9668 = vmatprep.mubr.f32.mxu0 0.0
    %9669 = vmatmul.mubr.f32.gmra.mrb[0].mxu0 %v9467
    %v9670 = vpop.f32.mrb[0].mxu0
    %v9671 = vadd.f32 %v9401, %v9670
    %v9672 = vpop.f32.mrb[0].mxu0
    %9673 = vmatprep.mubr.f32.mxu0 0.0
    %9674 = vmatmul.mubr.f32.gmra.mrb[0].mxu0 %v9470
    %v9675 = vpop.f32.mrb[0].mxu0
    %v9676 = vadd.f32 %v9401, %v9675
    %v9677 = vpop.f32.mrb[0].mxu0
    %9678 = vmatprep.mubr.f32.mxu0 0.0
    %9679 = vmatmul.mubr.f32.gmra.mrb[0].mxu0 %v9473
    %v9680 = vpop.f32.mrb[0].mxu0
    %v9681 = vadd.f32 %v9401, %v9680
    %v9682 = vpop.f32.mrb[0].mxu0
    %9683 = vmatprep.mubr.f32.mxu0 0.0
    %9684 = vmatmul.mubr.f32.gmra.mrb[0].mxu0 %v9476
    %v9685 = vpop.f32.mrb[0].mxu0
    %v9686 = vadd.f32 %v9401, %v9685
    %v9687 = vpop.f32.mrb[0].mxu0
    %9688 = vmatprep.mubr.f32.mxu0 0.0
    %9689 = vmatmul.mubr.f32.gmra.mrb[0].mxu0 %v9479
    %v9690 = vpop.f32.mrb[0].mxu0
    %v9691 = vadd.f32 %v9401, %v9690
    %v9692 = vpop.f32.mrb[0].mxu0
    %9693 = vmatprep.mubr.f32.mxu0 0.0
    %9694 = vmatmul.mubr.f32.gmra.mrb[0].mxu0 %v9482
    %v9695 = vpop.f32.mrb[0].mxu0
    %v9696 = vadd.f32 %v9401, %v9695
    %v9697 = vpop.f32.mrb[0].mxu0
    %9698 = vmatprep.mubr.f32.mxu0 0.0
    %9699 = vmatmul.mubr.f32.gmra.mrb[0].mxu0 %v9485
    %v9700 = vpop.f32.mrb[0].mxu0
    %v9701 = vadd.f32 %v9401, %v9700
    %v9702 = vpop.f32.mrb[0].mxu0
    %9703 = vmatprep.mubr.f32.mxu0 0.0
    %9704 = vmatmul.mubr.f32.gmra.mrb[0].mxu0 %v9488
    %v9705 = vpop.f32.mrb[0].mxu0
    %v9706 = vadd.f32 %v9401, %v9705
    %v9707 = vpop.f32.mrb[0].mxu0
    %9708 = vmatprep.mubr.f32.mxu0 0.0
    %9709 = vmatmul.mubr.f32.gmra.mrb[0].mxu0 %v9491
    %v9710 = vpop.f32.mrb[0].mxu0
    %v9711 = vadd.f32 %v9401, %v9710
    %v9712 = vpop.f32.mrb[0].mxu0
    %9713 = vmatprep.mubr.f32.mxu0 0.0
    %9714 = vmatmul.mubr.f32.gmra.mrb[0].mxu0 %v9494
    %v9715 = vpop.f32.mrb[0].mxu0
    %v9716 = vadd.f32 %v9401, %v9715
    %v9717 = vpop.f32.mrb[0].mxu0
    %9718 = vmatprep.mubr.f32.mxu0 0.0
    %9719 = vmatmul.mubr.f32.gmra.mrb[0].mxu0 %v9497
    %v9720 = vpop.f32.mrb[0].mxu0
    %v9721 = vadd.f32 %v9401, %v9720
    %v9722 = vpop.f32.mrb[0].mxu0
    %9723 = vdwg.mxu0
    %v9724 = vmax.f32 %v9566, 0.0
    %v9725 = vmax.f32 %v9571, 0.0
    %v9726 = vmax.f32 %v9576, 0.0
    %v9727 = vmax.f32 %v9581, 0.0
    %v9728 = vmax.f32 %v9586, 0.0
    %v9729 = vmax.f32 %v9591, 0.0
    %v9730 = vmax.f32 %v9596, 0.0
    %v9731 = vmax.f32 %v9601, 0.0
    %v9732 = vmax.f32 %v9606, 0.0
    %v9733 = vmax.f32 %v9611, 0.0
    %v9734 = vmax.f32 %v9616, 0.0
    %v9735 = vmax.f32 %v9621, 0.0
    %v9736 = vmax.f32 %v9626, 0.0
    %v9737 = vmax.f32 %v9631, 0.0
    %v9738 = vmax.f32 %v9636, 0.0
    %v9739 = vmax.f32 %v9641, 0.0
    %v9740 = vmax.f32 %v9646, 0.0
    %v9741 = vmax.f32 %v9651, 0.0
    %v9742 = vmax.f32 %v9656, 0.0
    %v9743 = vmax.f32 %v9661, 0.0
    %v9744 = vmax.f32 %v9666, 0.0
    %v9745 = vmax.f32 %v9671, 0.0
    %v9746 = vmax.f32 %v9676, 0.0
    %v9747 = vmax.f32 %v9681, 0.0
    %v9748 = vmax.f32 %v9686, 0.0
    %v9749 = vmax.f32 %v9691, 0.0
    %v9750 = vmax.f32 %v9696, 0.0
    %v9751 = vmax.f32 %v9701, 0.0
    %v9752 = vmax.f32 %v9706, 0.0
    %v9753 = vmax.f32 %v9711, 0.0
    %v9754 = vmax.f32 %v9716, 0.0
    %v9755 = vmax.f32 %v9721, 0.0
    %v9756 = vld [vmem:[#allocation55] sm:$0xff]
    %v9757 = vld [vmem:[#allocation55 + $0x8] sm:$0xff]
    %v9758 = vld [vmem:[#allocation55 + $0x10] sm:$0xff]
    %v9759 = vld [vmem:[#allocation55 + $0x18] sm:$0xff]
    %v9760 = vld [vmem:[#allocation57] sm:$0x1]
    %v9762 = vlaneseq
    %v9763 = vshrl.u32 %v9762, 7
    %v9764 = vsub.s32 0, %v9763
    %v9765 = vrot.slane %v9760, %v9764
    %v9768 = vsel %vm5278, %v9724, 0
    %v9771 = vsel %vm5278, %v9725, 0
    %v9774 = vsel %vm5278, %v9726, 0
    %v9777 = vsel %vm5278, %v9727, 0
    %v9780 = vsel %vm5278, %v9728, 0
    %v9783 = vsel %vm5278, %v9729, 0
    %v9786 = vsel %vm5278, %v9730, 0
    %v9789 = vsel %vm5278, %v9731, 0
    %v9792 = vsel %vm5278, %v9732, 0
    %v9795 = vsel %vm5278, %v9733, 0
    %v9798 = vsel %vm5278, %v9734, 0
    %v9801 = vsel %vm5278, %v9735, 0
    %v9804 = vsel %vm5278, %v9736, 0
    %v9807 = vsel %vm5278, %v9737, 0
    %v9810 = vsel %vm5278, %v9738, 0
    %v9813 = vsel %vm5278, %v9739, 0
    %v9816 = vsel %vm5278, %v9740, 0
    %v9819 = vsel %vm5278, %v9741, 0
    %v9822 = vsel %vm5278, %v9742, 0
    %v9825 = vsel %vm5278, %v9743, 0
    %v9828 = vsel %vm5278, %v9744, 0
    %v9831 = vsel %vm5278, %v9745, 0
    %v9834 = vsel %vm5278, %v9746, 0
    %v9837 = vsel %vm5278, %v9747, 0
    %v9840 = vsel %vm5278, %v9748, 0
    %v9843 = vsel %vm5278, %v9749, 0
    %v9846 = vsel %vm5278, %v9750, 0
    %v9849 = vsel %vm5278, %v9751, 0
    %v9852 = vsel %vm5278, %v9752, 0
    %v9855 = vsel %vm5278, %v9753, 0
    %v9858 = vsel %vm5278, %v9754, 0
    %v9861 = vsel %vm5278, %v9755, 0
    %9863 = vmatprep.subr.mxu0 0.0
    %9864 = vmatpush1.msra.mxu0 %v9756
    %9865 = vmatprep.subr.mxu0 0.0
    %9866 = vmatpush1.msra.mxu0 %v9757
    %9867 = vmatprep.subr.mxu0 0.0
    %9868 = vmatpush1.msra.mxu0 %v9758
    %9869 = vmatprep.subr.mxu0 0.0
    %9870 = vmatpush1.msra.mxu0 %v9759
    %9871 = vmatprep.subr.mxu0 0.0
    %9872 = vmatpush1.msra.mxu0 0.0
    %9873 = vmatprep.subr.mxu0 0.0
    %9874 = vmatpush1.msra.mxu0 0.0
    %9875 = vmatprep.subr.mxu0 0.0
    %9876 = vmatpush1.msra.mxu0 0.0
    %9877 = vmatprep.subr.mxu0 0.0
    %9878 = vmatpush1.msra.mxu0 0.0
    %9879 = vmatprep.subr.mxu0 0.0
    %9880 = vmatpush1.msra.mxu0 0.0
    %9881 = vmatprep.subr.mxu0 0.0
    %9882 = vmatpush1.msra.mxu0 0.0
    %9883 = vmatprep.subr.mxu0 0.0
    %9884 = vmatpush1.msra.mxu0 0.0
    %9885 = vmatprep.subr.mxu0 0.0
    %9886 = vmatpush1.msra.mxu0 0.0
    %9887 = vmatprep.subr.mxu0 0.0
    %9888 = vmatpush1.msra.mxu0 0.0
    %9889 = vmatprep.subr.mxu0 0.0
    %9890 = vmatpush1.msra.mxu0 0.0
    %9891 = vmatprep.subr.mxu0 0.0
    %9892 = vmatpush1.msra.mxu0 0.0
    %9893 = vmatprep.subr.mxu0 0.0
    %9894 = vmatpush1.msra.mxu0 0.0
    %9895 = vmatprep.subr.mxu0 0.0
    %9896 = vmatpush1.msra.mxu0 0.0
    %9897 = vmatprep.subr.mxu0 0.0
    %9898 = vmatpush1.msra.mxu0 0.0
    %9899 = vmatprep.subr.mxu0 0.0
    %9900 = vmatpush1.msra.mxu0 0.0
    %9901 = vmatprep.subr.mxu0 0.0
    %9902 = vmatpush1.msra.mxu0 0.0
    %9903 = vmatprep.subr.mxu0 0.0
    %9904 = vmatpush1.msra.mxu0 0.0
    %9905 = vmatprep.subr.mxu0 0.0
    %9906 = vmatpush1.msra.mxu0 0.0
    %9907 = vmatprep.subr.mxu0 0.0
    %9908 = vmatpush1.msra.mxu0 0.0
    %9909 = vmatprep.subr.mxu0 0.0
    %9910 = vmatpush1.msra.mxu0 0.0
    %9911 = vmatprep.subr.mxu0 0.0
    %9912 = vmatpush1.msra.mxu0 0.0
    %9913 = vmatprep.subr.mxu0 0.0
    %9914 = vmatpush1.msra.mxu0 0.0
    %9915 = vmatprep.subr.mxu0 0.0
    %9916 = vmatpush1.msra.mxu0 0.0
    %9917 = vmatprep.subr.mxu0 0.0
    %9918 = vmatpush1.msra.mxu0 0.0
    %9919 = vmatprep.subr.mxu0 0.0
    %9920 = vmatpush1.msra.mxu0 0.0
    %9921 = vmatprep.subr.mxu0 0.0
    %9922 = vmatpush1.msra.mxu0 0.0
    %9923 = vmatprep.subr.mxu0 0.0
    %9924 = vmatpush1.msra.mxu0 0.0
    %9925 = vmatprep.subr.mxu0 0.0
    %9926 = vmatpush1.msra.mxu0 0.0
    %9927 = vmatprep.mubr.f32.mxu0 0.0
    %9928 = vmatmul.mubr.f32.gmra.mrb[0].mxu0 %v9768
    %v9929 = vpop.f32.mrb[0].mxu0
    %v9930 = vadd.f32 %v9765, %v9929
    %v9931 = vpop.f32.mrb[0].mxu0
    %9932 = vmatprep.mubr.f32.mxu0 0.0
    %9933 = vmatmul.mubr.f32.gmra.mrb[0].mxu0 %v9771
    %v9934 = vpop.f32.mrb[0].mxu0
    %v9935 = vadd.f32 %v9765, %v9934
    %v9936 = vpop.f32.mrb[0].mxu0
    %9937 = vmatprep.mubr.f32.mxu0 0.0
    %9938 = vmatmul.mubr.f32.gmra.mrb[0].mxu0 %v9774
    %v9939 = vpop.f32.mrb[0].mxu0
    %v9940 = vadd.f32 %v9765, %v9939
    %v9941 = vpop.f32.mrb[0].mxu0
    %9942 = vmatprep.mubr.f32.mxu0 0.0
    %9943 = vmatmul.mubr.f32.gmra.mrb[0].mxu0 %v9777
    %v9944 = vpop.f32.mrb[0].mxu0
    %v9945 = vadd.f32 %v9765, %v9944
    %v9946 = vpop.f32.mrb[0].mxu0
    %9947 = vmatprep.mubr.f32.mxu0 0.0
    %9948 = vmatmul.mubr.f32.gmra.mrb[0].mxu0 %v9780
    %v9949 = vpop.f32.mrb[0].mxu0
    %v9950 = vadd.f32 %v9765, %v9949
    %v9951 = vpop.f32.mrb[0].mxu0
    %9952 = vmatprep.mubr.f32.mxu0 0.0
    %9953 = vmatmul.mubr.f32.gmra.mrb[0].mxu0 %v9783
    %v9954 = vpop.f32.mrb[0].mxu0
    %v9955 = vadd.f32 %v9765, %v9954
    %v9956 = vpop.f32.mrb[0].mxu0
    %9957 = vmatprep.mubr.f32.mxu0 0.0
    %9958 = vmatmul.mubr.f32.gmra.mrb[0].mxu0 %v9786
    %v9959 = vpop.f32.mrb[0].mxu0
    %v9960 = vadd.f32 %v9765, %v9959
    %v9961 = vpop.f32.mrb[0].mxu0
    %9962 = vmatprep.mubr.f32.mxu0 0.0
    %9963 = vmatmul.mubr.f32.gmra.mrb[0].mxu0 %v9789
    %v9964 = vpop.f32.mrb[0].mxu0
    %v9965 = vadd.f32 %v9765, %v9964
    %v9966 = vpop.f32.mrb[0].mxu0
    %9967 = vmatprep.mubr.f32.mxu0 0.0
    %9968 = vmatmul.mubr.f32.gmra.mrb[0].mxu0 %v9792
    %v9969 = vpop.f32.mrb[0].mxu0
    %v9970 = vadd.f32 %v9765, %v9969
    %v9971 = vpop.f32.mrb[0].mxu0
    %9972 = vmatprep.mubr.f32.mxu0 0.0
    %9973 = vmatmul.mubr.f32.gmra.mrb[0].mxu0 %v9795
    %v9974 = vpop.f32.mrb[0].mxu0
    %v9975 = vadd.f32 %v9765, %v9974
    %v9976 = vpop.f32.mrb[0].mxu0
    %9977 = vmatprep.mubr.f32.mxu0 0.0
    %9978 = vmatmul.mubr.f32.gmra.mrb[0].mxu0 %v9798
    %v9979 = vpop.f32.mrb[0].mxu0
    %v9980 = vadd.f32 %v9765, %v9979
    %v9981 = vpop.f32.mrb[0].mxu0
    %9982 = vmatprep.mubr.f32.mxu0 0.0
    %9983 = vmatmul.mubr.f32.gmra.mrb[0].mxu0 %v9801
    %v9984 = vpop.f32.mrb[0].mxu0
    %v9985 = vadd.f32 %v9765, %v9984
    %v9986 = vpop.f32.mrb[0].mxu0
    %9987 = vmatprep.mubr.f32.mxu0 0.0
    %9988 = vmatmul.mubr.f32.gmra.mrb[0].mxu0 %v9804
    %v9989 = vpop.f32.mrb[0].mxu0
    %v9990 = vadd.f32 %v9765, %v9989
    %v9991 = vpop.f32.mrb[0].mxu0
    %9992 = vmatprep.mubr.f32.mxu0 0.0
    %9993 = vmatmul.mubr.f32.gmra.mrb[0].mxu0 %v9807
    %v9994 = vpop.f32.mrb[0].mxu0
    %v9995 = vadd.f32 %v9765, %v9994
    %v9996 = vpop.f32.mrb[0].mxu0
    %9997 = vmatprep.mubr.f32.mxu0 0.0
    %9998 = vmatmul.mubr.f32.gmra.mrb[0].mxu0 %v9810
    %v9999 = vpop.f32.mrb[0].mxu0
    %v10000 = vadd.f32 %v9765, %v9999
    %v10001 = vpop.f32.mrb[0].mxu0
    %10002 = vmatprep.mubr.f32.mxu0 0.0
    %10003 = vmatmul.mubr.f32.gmra.mrb[0].mxu0 %v9813
    %v10004 = vpop.f32.mrb[0].mxu0
    %v10005 = vadd.f32 %v9765, %v10004
    %v10006 = vpop.f32.mrb[0].mxu0
    %10007 = vmatprep.mubr.f32.mxu0 0.0
    %10008 = vmatmul.mubr.f32.gmra.mrb[0].mxu0 %v9816
    %v10009 = vpop.f32.mrb[0].mxu0
    %v10010 = vadd.f32 %v9765, %v10009
    %v10011 = vpop.f32.mrb[0].mxu0
    %10012 = vmatprep.mubr.f32.mxu0 0.0
    %10013 = vmatmul.mubr.f32.gmra.mrb[0].mxu0 %v9819
    %v10014 = vpop.f32.mrb[0].mxu0
    %v10015 = vadd.f32 %v9765, %v10014
    %v10016 = vpop.f32.mrb[0].mxu0
    %10017 = vmatprep.mubr.f32.mxu0 0.0
    %10018 = vmatmul.mubr.f32.gmra.mrb[0].mxu0 %v9822
    %v10019 = vpop.f32.mrb[0].mxu0
    %v10020 = vadd.f32 %v9765, %v10019
    %v10021 = vpop.f32.mrb[0].mxu0
    %10022 = vmatprep.mubr.f32.mxu0 0.0
    %10023 = vmatmul.mubr.f32.gmra.mrb[0].mxu0 %v9825
    %v10024 = vpop.f32.mrb[0].mxu0
    %v10025 = vadd.f32 %v9765, %v10024
    %v10026 = vpop.f32.mrb[0].mxu0
    %10027 = vmatprep.mubr.f32.mxu0 0.0
    %10028 = vmatmul.mubr.f32.gmra.mrb[0].mxu0 %v9828
    %v10029 = vpop.f32.mrb[0].mxu0
    %v10030 = vadd.f32 %v9765, %v10029
    %v10031 = vpop.f32.mrb[0].mxu0
    %10032 = vmatprep.mubr.f32.mxu0 0.0
    %10033 = vmatmul.mubr.f32.gmra.mrb[0].mxu0 %v9831
    %v10034 = vpop.f32.mrb[0].mxu0
    %v10035 = vadd.f32 %v9765, %v10034
    %v10036 = vpop.f32.mrb[0].mxu0
    %10037 = vmatprep.mubr.f32.mxu0 0.0
    %10038 = vmatmul.mubr.f32.gmra.mrb[0].mxu0 %v9834
    %v10039 = vpop.f32.mrb[0].mxu0
    %v10040 = vadd.f32 %v9765, %v10039
    %v10041 = vpop.f32.mrb[0].mxu0
    %10042 = vmatprep.mubr.f32.mxu0 0.0
    %10043 = vmatmul.mubr.f32.gmra.mrb[0].mxu0 %v9837
    %v10044 = vpop.f32.mrb[0].mxu0
    %v10045 = vadd.f32 %v9765, %v10044
    %v10046 = vpop.f32.mrb[0].mxu0
    %10047 = vmatprep.mubr.f32.mxu0 0.0
    %10048 = vmatmul.mubr.f32.gmra.mrb[0].mxu0 %v9840
    %v10049 = vpop.f32.mrb[0].mxu0
    %v10050 = vadd.f32 %v9765, %v10049
    %v10051 = vpop.f32.mrb[0].mxu0
    %10052 = vmatprep.mubr.f32.mxu0 0.0
    %10053 = vmatmul.mubr.f32.gmra.mrb[0].mxu0 %v9843
    %v10054 = vpop.f32.mrb[0].mxu0
    %v10055 = vadd.f32 %v9765, %v10054
    %v10056 = vpop.f32.mrb[0].mxu0
    %10057 = vmatprep.mubr.f32.mxu0 0.0
    %10058 = vmatmul.mubr.f32.gmra.mrb[0].mxu0 %v9846
    %v10059 = vpop.f32.mrb[0].mxu0
    %v10060 = vadd.f32 %v9765, %v10059
    %v10061 = vpop.f32.mrb[0].mxu0
    %10062 = vmatprep.mubr.f32.mxu0 0.0
    %10063 = vmatmul.mubr.f32.gmra.mrb[0].mxu0 %v9849
    %v10064 = vpop.f32.mrb[0].mxu0
    %v10065 = vadd.f32 %v9765, %v10064
    %v10066 = vpop.f32.mrb[0].mxu0
    %10067 = vmatprep.mubr.f32.mxu0 0.0
    %10068 = vmatmul.mubr.f32.gmra.mrb[0].mxu0 %v9852
    %v10069 = vpop.f32.mrb[0].mxu0
    %v10070 = vadd.f32 %v9765, %v10069
    %v10071 = vpop.f32.mrb[0].mxu0
    %10072 = vmatprep.mubr.f32.mxu0 0.0
    %10073 = vmatmul.mubr.f32.gmra.mrb[0].mxu0 %v9855
    %v10074 = vpop.f32.mrb[0].mxu0
    %v10075 = vadd.f32 %v9765, %v10074
    %v10076 = vpop.f32.mrb[0].mxu0
    %10077 = vmatprep.mubr.f32.mxu0 0.0
    %10078 = vmatmul.mubr.f32.gmra.mrb[0].mxu0 %v9858
    %v10079 = vpop.f32.mrb[0].mxu0
    %v10080 = vadd.f32 %v9765, %v10079
    %v10081 = vpop.f32.mrb[0].mxu0
    %10082 = vmatprep.mubr.f32.mxu0 0.0
    %10083 = vmatmul.mubr.f32.gmra.mrb[0].mxu0 %v9861
    %v10084 = vpop.f32.mrb[0].mxu0
    %v10085 = vadd.f32 %v9765, %v10084
    %v10086 = vpop.f32.mrb[0].mxu0
    %10087 = vdwg.mxu0
    %v10088 = vld [vmem:[#allocation58] sm:$0xff]
    %v10089 = vld [vmem:[#allocation58 + $0x8] sm:$0xff]
    %v10090 = vld [vmem:[#allocation58 + $0x10] sm:$0xff]
    %v10091 = vld [vmem:[#allocation58 + $0x18] sm:$0xff]
    %v10092 = vld [vmem:[#allocation60] sm:$0x1]
    %v10094 = vlaneseq
    %v10095 = vshrl.u32 %v10094, 7
    %v10096 = vsub.s32 0, %v10095
    %v10097 = vrot.slane %v10092, %v10096
    %v10100 = vsel %vm5278, %v9930, 0
    %v10103 = vsel %vm5278, %v9935, 0
    %v10106 = vsel %vm5278, %v9940, 0
    %v10109 = vsel %vm5278, %v9945, 0
    %v10112 = vsel %vm5278, %v9950, 0
    %v10115 = vsel %vm5278, %v9955, 0
    %v10118 = vsel %vm5278, %v9960, 0
    %v10121 = vsel %vm5278, %v9965, 0
    %v10124 = vsel %vm5278, %v9970, 0
    %v10127 = vsel %vm5278, %v9975, 0
    %v10130 = vsel %vm5278, %v9980, 0
    %v10133 = vsel %vm5278, %v9985, 0
    %v10136 = vsel %vm5278, %v9990, 0
    %v10139 = vsel %vm5278, %v9995, 0
    %v10142 = vsel %vm5278, %v10000, 0
    %v10145 = vsel %vm5278, %v10005, 0
    %v10148 = vsel %vm5278, %v10010, 0
    %v10151 = vsel %vm5278, %v10015, 0
    %v10154 = vsel %vm5278, %v10020, 0
    %v10157 = vsel %vm5278, %v10025, 0
    %v10160 = vsel %vm5278, %v10030, 0
    %v10163 = vsel %vm5278, %v10035, 0
    %v10166 = vsel %vm5278, %v10040, 0
    %v10169 = vsel %vm5278, %v10045, 0
    %v10172 = vsel %vm5278, %v10050, 0
    %v10175 = vsel %vm5278, %v10055, 0
    %v10178 = vsel %vm5278, %v10060, 0
    %v10181 = vsel %vm5278, %v10065, 0
    %v10184 = vsel %vm5278, %v10070, 0
    %v10187 = vsel %vm5278, %v10075, 0
    %v10190 = vsel %vm5278, %v10080, 0
    %v10193 = vsel %vm5278, %v10085, 0
    %10195 = vmatprep.subr.mxu0 0.0
    %10196 = vmatpush1.msra.mxu0 %v10088
    %10197 = vmatprep.subr.mxu0 0.0
    %10198 = vmatpush1.msra.mxu0 %v10089
    %10199 = vmatprep.subr.mxu0 0.0
    %10200 = vmatpush1.msra.mxu0 %v10090
    %10201 = vmatprep.subr.mxu0 0.0
    %10202 = vmatpush1.msra.mxu0 %v10091
    %10203 = vmatprep.subr.mxu0 0.0
    %10204 = vmatpush1.msra.mxu0 0.0
    %10205 = vmatprep.subr.mxu0 0.0
    %10206 = vmatpush1.msra.mxu0 0.0
    %10207 = vmatprep.subr.mxu0 0.0
    %10208 = vmatpush1.msra.mxu0 0.0
    %10209 = vmatprep.subr.mxu0 0.0
    %10210 = vmatpush1.msra.mxu0 0.0
    %10211 = vmatprep.subr.mxu0 0.0
    %10212 = vmatpush1.msra.mxu0 0.0
    %10213 = vmatprep.subr.mxu0 0.0
    %10214 = vmatpush1.msra.mxu0 0.0
    %10215 = vmatprep.subr.mxu0 0.0
    %10216 = vmatpush1.msra.mxu0 0.0
    %10217 = vmatprep.subr.mxu0 0.0
    %10218 = vmatpush1.msra.mxu0 0.0
    %10219 = vmatprep.subr.mxu0 0.0
    %10220 = vmatpush1.msra.mxu0 0.0
    %10221 = vmatprep.subr.mxu0 0.0
    %10222 = vmatpush1.msra.mxu0 0.0
    %10223 = vmatprep.subr.mxu0 0.0
    %10224 = vmatpush1.msra.mxu0 0.0
    %10225 = vmatprep.subr.mxu0 0.0
    %10226 = vmatpush1.msra.mxu0 0.0
    %10227 = vmatprep.subr.mxu0 0.0
    %10228 = vmatpush1.msra.mxu0 0.0
    %10229 = vmatprep.subr.mxu0 0.0
    %10230 = vmatpush1.msra.mxu0 0.0
    %10231 = vmatprep.subr.mxu0 0.0
    %10232 = vmatpush1.msra.mxu0 0.0
    %10233 = vmatprep.subr.mxu0 0.0
    %10234 = vmatpush1.msra.mxu0 0.0
    %10235 = vmatprep.subr.mxu0 0.0
    %10236 = vmatpush1.msra.mxu0 0.0
    %10237 = vmatprep.subr.mxu0 0.0
    %10238 = vmatpush1.msra.mxu0 0.0
    %10239 = vmatprep.subr.mxu0 0.0
    %10240 = vmatpush1.msra.mxu0 0.0
    %10241 = vmatprep.subr.mxu0 0.0
    %10242 = vmatpush1.msra.mxu0 0.0
    %10243 = vmatprep.subr.mxu0 0.0
    %10244 = vmatpush1.msra.mxu0 0.0
    %10245 = vmatprep.subr.mxu0 0.0
    %10246 = vmatpush1.msra.mxu0 0.0
    %10247 = vmatprep.subr.mxu0 0.0
    %10248 = vmatpush1.msra.mxu0 0.0
    %10249 = vmatprep.subr.mxu0 0.0
    %10250 = vmatpush1.msra.mxu0 0.0
    %10251 = vmatprep.subr.mxu0 0.0
    %10252 = vmatpush1.msra.mxu0 0.0
    %10253 = vmatprep.subr.mxu0 0.0
    %10254 = vmatpush1.msra.mxu0 0.0
    %10255 = vmatprep.subr.mxu0 0.0
    %10256 = vmatpush1.msra.mxu0 0.0
    %10257 = vmatprep.subr.mxu0 0.0
    %10258 = vmatpush1.msra.mxu0 0.0
    %10259 = vmatprep.mubr.f32.mxu0 0.0
    %10260 = vmatmul.mubr.f32.gmra.mrb[0].mxu0 %v10100
    %v10261 = vpop.f32.mrb[0].mxu0
    %v10262 = vadd.f32 %v10097, %v10261
    %v10263 = vpop.f32.mrb[0].mxu0
    %10264 = vmatprep.mubr.f32.mxu0 0.0
    %10265 = vmatmul.mubr.f32.gmra.mrb[0].mxu0 %v10103
    %v10266 = vpop.f32.mrb[0].mxu0
    %v10267 = vadd.f32 %v10097, %v10266
    %v10268 = vpop.f32.mrb[0].mxu0
    %10269 = vmatprep.mubr.f32.mxu0 0.0
    %10270 = vmatmul.mubr.f32.gmra.mrb[0].mxu0 %v10106
    %v10271 = vpop.f32.mrb[0].mxu0
    %v10272 = vadd.f32 %v10097, %v10271
    %v10273 = vpop.f32.mrb[0].mxu0
    %10274 = vmatprep.mubr.f32.mxu0 0.0
    %10275 = vmatmul.mubr.f32.gmra.mrb[0].mxu0 %v10109
    %v10276 = vpop.f32.mrb[0].mxu0
    %v10277 = vadd.f32 %v10097, %v10276
    %v10278 = vpop.f32.mrb[0].mxu0
    %10279 = vmatprep.mubr.f32.mxu0 0.0
    %10280 = vmatmul.mubr.f32.gmra.mrb[0].mxu0 %v10112
    %v10281 = vpop.f32.mrb[0].mxu0
    %v10282 = vadd.f32 %v10097, %v10281
    %v10283 = vpop.f32.mrb[0].mxu0
    %10284 = vmatprep.mubr.f32.mxu0 0.0
    %10285 = vmatmul.mubr.f32.gmra.mrb[0].mxu0 %v10115
    %v10286 = vpop.f32.mrb[0].mxu0
    %v10287 = vadd.f32 %v10097, %v10286
    %v10288 = vpop.f32.mrb[0].mxu0
    %10289 = vmatprep.mubr.f32.mxu0 0.0
    %10290 = vmatmul.mubr.f32.gmra.mrb[0].mxu0 %v10118
    %v10291 = vpop.f32.mrb[0].mxu0
    %v10292 = vadd.f32 %v10097, %v10291
    %v10293 = vpop.f32.mrb[0].mxu0
    %10294 = vmatprep.mubr.f32.mxu0 0.0
    %10295 = vmatmul.mubr.f32.gmra.mrb[0].mxu0 %v10121
    %v10296 = vpop.f32.mrb[0].mxu0
    %v10297 = vadd.f32 %v10097, %v10296
    %v10298 = vpop.f32.mrb[0].mxu0
    %10299 = vmatprep.mubr.f32.mxu0 0.0
    %10300 = vmatmul.mubr.f32.gmra.mrb[0].mxu0 %v10124
    %v10301 = vpop.f32.mrb[0].mxu0
    %v10302 = vadd.f32 %v10097, %v10301
    %v10303 = vpop.f32.mrb[0].mxu0
    %10304 = vmatprep.mubr.f32.mxu0 0.0
    %10305 = vmatmul.mubr.f32.gmra.mrb[0].mxu0 %v10127
    %v10306 = vpop.f32.mrb[0].mxu0
    %v10307 = vadd.f32 %v10097, %v10306
    %v10308 = vpop.f32.mrb[0].mxu0
    %10309 = vmatprep.mubr.f32.mxu0 0.0
    %10310 = vmatmul.mubr.f32.gmra.mrb[0].mxu0 %v10130
    %v10311 = vpop.f32.mrb[0].mxu0
    %v10312 = vadd.f32 %v10097, %v10311
    %v10313 = vpop.f32.mrb[0].mxu0
    %10314 = vmatprep.mubr.f32.mxu0 0.0
    %10315 = vmatmul.mubr.f32.gmra.mrb[0].mxu0 %v10133
    %v10316 = vpop.f32.mrb[0].mxu0
    %v10317 = vadd.f32 %v10097, %v10316
    %v10318 = vpop.f32.mrb[0].mxu0
    %10319 = vmatprep.mubr.f32.mxu0 0.0
    %10320 = vmatmul.mubr.f32.gmra.mrb[0].mxu0 %v10136
    %v10321 = vpop.f32.mrb[0].mxu0
    %v10322 = vadd.f32 %v10097, %v10321
    %v10323 = vpop.f32.mrb[0].mxu0
    %10324 = vmatprep.mubr.f32.mxu0 0.0
    %10325 = vmatmul.mubr.f32.gmra.mrb[0].mxu0 %v10139
    %v10326 = vpop.f32.mrb[0].mxu0
    %v10327 = vadd.f32 %v10097, %v10326
    %v10328 = vpop.f32.mrb[0].mxu0
    %10329 = vmatprep.mubr.f32.mxu0 0.0
    %10330 = vmatmul.mubr.f32.gmra.mrb[0].mxu0 %v10142
    %v10331 = vpop.f32.mrb[0].mxu0
    %v10332 = vadd.f32 %v10097, %v10331
    %v10333 = vpop.f32.mrb[0].mxu0
    %10334 = vmatprep.mubr.f32.mxu0 0.0
    %10335 = vmatmul.mubr.f32.gmra.mrb[0].mxu0 %v10145
    %v10336 = vpop.f32.mrb[0].mxu0
    %v10337 = vadd.f32 %v10097, %v10336
    %v10338 = vpop.f32.mrb[0].mxu0
    %10339 = vmatprep.mubr.f32.mxu0 0.0
    %10340 = vmatmul.mubr.f32.gmra.mrb[0].mxu0 %v10148
    %v10341 = vpop.f32.mrb[0].mxu0
    %v10342 = vadd.f32 %v10097, %v10341
    %v10343 = vpop.f32.mrb[0].mxu0
    %10344 = vmatprep.mubr.f32.mxu0 0.0
    %10345 = vmatmul.mubr.f32.gmra.mrb[0].mxu0 %v10151
    %v10346 = vpop.f32.mrb[0].mxu0
    %v10347 = vadd.f32 %v10097, %v10346
    %v10348 = vpop.f32.mrb[0].mxu0
    %10349 = vmatprep.mubr.f32.mxu0 0.0
    %10350 = vmatmul.mubr.f32.gmra.mrb[0].mxu0 %v10154
    %v10351 = vpop.f32.mrb[0].mxu0
    %v10352 = vadd.f32 %v10097, %v10351
    %v10353 = vpop.f32.mrb[0].mxu0
    %10354 = vmatprep.mubr.f32.mxu0 0.0
    %10355 = vmatmul.mubr.f32.gmra.mrb[0].mxu0 %v10157
    %v10356 = vpop.f32.mrb[0].mxu0
    %v10357 = vadd.f32 %v10097, %v10356
    %v10358 = vpop.f32.mrb[0].mxu0
    %10359 = vmatprep.mubr.f32.mxu0 0.0
    %10360 = vmatmul.mubr.f32.gmra.mrb[0].mxu0 %v10160
    %v10361 = vpop.f32.mrb[0].mxu0
    %v10362 = vadd.f32 %v10097, %v10361
    %v10363 = vpop.f32.mrb[0].mxu0
    %10364 = vmatprep.mubr.f32.mxu0 0.0
    %10365 = vmatmul.mubr.f32.gmra.mrb[0].mxu0 %v10163
    %v10366 = vpop.f32.mrb[0].mxu0
    %v10367 = vadd.f32 %v10097, %v10366
    %v10368 = vpop.f32.mrb[0].mxu0
    %10369 = vmatprep.mubr.f32.mxu0 0.0
    %10370 = vmatmul.mubr.f32.gmra.mrb[0].mxu0 %v10166
    %v10371 = vpop.f32.mrb[0].mxu0
    %v10372 = vadd.f32 %v10097, %v10371
    %v10373 = vpop.f32.mrb[0].mxu0
    %10374 = vmatprep.mubr.f32.mxu0 0.0
    %10375 = vmatmul.mubr.f32.gmra.mrb[0].mxu0 %v10169
    %v10376 = vpop.f32.mrb[0].mxu0
    %v10377 = vadd.f32 %v10097, %v10376
    %v10378 = vpop.f32.mrb[0].mxu0
    %10379 = vmatprep.mubr.f32.mxu0 0.0
    %10380 = vmatmul.mubr.f32.gmra.mrb[0].mxu0 %v10172
    %v10381 = vpop.f32.mrb[0].mxu0
    %v10382 = vadd.f32 %v10097, %v10381
    %v10383 = vpop.f32.mrb[0].mxu0
    %10384 = vmatprep.mubr.f32.mxu0 0.0
    %10385 = vmatmul.mubr.f32.gmra.mrb[0].mxu0 %v10175
    %v10386 = vpop.f32.mrb[0].mxu0
    %v10387 = vadd.f32 %v10097, %v10386
    %v10388 = vpop.f32.mrb[0].mxu0
    %10389 = vmatprep.mubr.f32.mxu0 0.0
    %10390 = vmatmul.mubr.f32.gmra.mrb[0].mxu0 %v10178
    %v10391 = vpop.f32.mrb[0].mxu0
    %v10392 = vadd.f32 %v10097, %v10391
    %v10393 = vpop.f32.mrb[0].mxu0
    %10394 = vmatprep.mubr.f32.mxu0 0.0
    %10395 = vmatmul.mubr.f32.gmra.mrb[0].mxu0 %v10181
    %v10396 = vpop.f32.mrb[0].mxu0
    %v10397 = vadd.f32 %v10097, %v10396
    %v10398 = vpop.f32.mrb[0].mxu0
    %10399 = vmatprep.mubr.f32.mxu0 0.0
    %10400 = vmatmul.mubr.f32.gmra.mrb[0].mxu0 %v10184
    %v10401 = vpop.f32.mrb[0].mxu0
    %v10402 = vadd.f32 %v10097, %v10401
    %v10403 = vpop.f32.mrb[0].mxu0
    %10404 = vmatprep.mubr.f32.mxu0 0.0
    %10405 = vmatmul.mubr.f32.gmra.mrb[0].mxu0 %v10187
    %v10406 = vpop.f32.mrb[0].mxu0
    %v10407 = vadd.f32 %v10097, %v10406
    %v10408 = vpop.f32.mrb[0].mxu0
    %10409 = vmatprep.mubr.f32.mxu0 0.0
    %10410 = vmatmul.mubr.f32.gmra.mrb[0].mxu0 %v10190
    %v10411 = vpop.f32.mrb[0].mxu0
    %v10412 = vadd.f32 %v10097, %v10411
    %v10413 = vpop.f32.mrb[0].mxu0
    %10414 = vmatprep.mubr.f32.mxu0 0.0
    %10415 = vmatmul.mubr.f32.gmra.mrb[0].mxu0 %v10193
    %v10416 = vpop.f32.mrb[0].mxu0
    %v10417 = vadd.f32 %v10097, %v10416
    %v10418 = vpop.f32.mrb[0].mxu0
    %10419 = vdwg.mxu0
    %v10420 = vmax.f32 %v10262, 0.0
    %v10421 = vmax.f32 %v10267, 0.0
    %v10422 = vmax.f32 %v10272, 0.0
    %v10423 = vmax.f32 %v10277, 0.0
    %v10424 = vmax.f32 %v10282, 0.0
    %v10425 = vmax.f32 %v10287, 0.0
    %v10426 = vmax.f32 %v10292, 0.0
    %v10427 = vmax.f32 %v10297, 0.0
    %v10428 = vmax.f32 %v10302, 0.0
    %v10429 = vmax.f32 %v10307, 0.0
    %v10430 = vmax.f32 %v10312, 0.0
    %v10431 = vmax.f32 %v10317, 0.0
    %v10432 = vmax.f32 %v10322, 0.0
    %v10433 = vmax.f32 %v10327, 0.0
    %v10434 = vmax.f32 %v10332, 0.0
    %v10435 = vmax.f32 %v10337, 0.0
    %v10436 = vmax.f32 %v10342, 0.0
    %v10437 = vmax.f32 %v10347, 0.0
    %v10438 = vmax.f32 %v10352, 0.0
    %v10439 = vmax.f32 %v10357, 0.0
    %v10440 = vmax.f32 %v10362, 0.0
    %v10441 = vmax.f32 %v10367, 0.0
    %v10442 = vmax.f32 %v10372, 0.0
    %v10443 = vmax.f32 %v10377, 0.0
    %v10444 = vmax.f32 %v10382, 0.0
    %v10445 = vmax.f32 %v10387, 0.0
    %v10446 = vmax.f32 %v10392, 0.0
    %v10447 = vmax.f32 %v10397, 0.0
    %v10448 = vmax.f32 %v10402, 0.0
    %v10449 = vmax.f32 %v10407, 0.0
    %v10450 = vmax.f32 %v10412, 0.0
    %v10451 = vmax.f32 %v10417, 0.0
    %v10452 = vld [vmem:[#allocation61] sm:$0xff]
    %v10453 = vld [vmem:[#allocation61 + $0x8] sm:$0xff]
    %v10454 = vld [vmem:[#allocation61 + $0x10] sm:$0xff]
    %v10455 = vld [vmem:[#allocation61 + $0x18] sm:$0xff]
    %v10456 = vld [vmem:[#allocation63] sm:$0x1]
    %v10458 = vlaneseq
    %v10459 = vshrl.u32 %v10458, 7
    %v10460 = vsub.s32 0, %v10459
    %v10461 = vrot.slane %v10456, %v10460
    %v10464 = vsel %vm5278, %v10420, 0
    %v10467 = vsel %vm5278, %v10421, 0
    %v10470 = vsel %vm5278, %v10422, 0
    %v10473 = vsel %vm5278, %v10423, 0
    %v10476 = vsel %vm5278, %v10424, 0
    %v10479 = vsel %vm5278, %v10425, 0
    %v10482 = vsel %vm5278, %v10426, 0
    %v10485 = vsel %vm5278, %v10427, 0
    %v10488 = vsel %vm5278, %v10428, 0
    %v10491 = vsel %vm5278, %v10429, 0
    %v10494 = vsel %vm5278, %v10430, 0
    %v10497 = vsel %vm5278, %v10431, 0
    %v10500 = vsel %vm5278, %v10432, 0
    %v10503 = vsel %vm5278, %v10433, 0
    %v10506 = vsel %vm5278, %v10434, 0
    %v10509 = vsel %vm5278, %v10435, 0
    %v10512 = vsel %vm5278, %v10436, 0
    %v10515 = vsel %vm5278, %v10437, 0
    %v10518 = vsel %vm5278, %v10438, 0
    %v10521 = vsel %vm5278, %v10439, 0
    %v10524 = vsel %vm5278, %v10440, 0
    %v10527 = vsel %vm5278, %v10441, 0
    %v10530 = vsel %vm5278, %v10442, 0
    %v10533 = vsel %vm5278, %v10443, 0
    %v10536 = vsel %vm5278, %v10444, 0
    %v10539 = vsel %vm5278, %v10445, 0
    %v10542 = vsel %vm5278, %v10446, 0
    %v10545 = vsel %vm5278, %v10447, 0
    %v10548 = vsel %vm5278, %v10448, 0
    %v10551 = vsel %vm5278, %v10449, 0
    %v10554 = vsel %vm5278, %v10450, 0
    %v10557 = vsel %vm5278, %v10451, 0
    %10559 = vmatprep.subr.mxu0 0.0
    %10560 = vmatpush1.msra.mxu0 %v10452
    %10561 = vmatprep.subr.mxu0 0.0
    %10562 = vmatpush1.msra.mxu0 %v10453
    %10563 = vmatprep.subr.mxu0 0.0
    %10564 = vmatpush1.msra.mxu0 %v10454
    %10565 = vmatprep.subr.mxu0 0.0
    %10566 = vmatpush1.msra.mxu0 %v10455
    %10567 = vmatprep.subr.mxu0 0.0
    %10568 = vmatpush1.msra.mxu0 0.0
    %10569 = vmatprep.subr.mxu0 0.0
    %10570 = vmatpush1.msra.mxu0 0.0
    %10571 = vmatprep.subr.mxu0 0.0
    %10572 = vmatpush1.msra.mxu0 0.0
    %10573 = vmatprep.subr.mxu0 0.0
    %10574 = vmatpush1.msra.mxu0 0.0
    %10575 = vmatprep.subr.mxu0 0.0
    %10576 = vmatpush1.msra.mxu0 0.0
    %10577 = vmatprep.subr.mxu0 0.0
    %10578 = vmatpush1.msra.mxu0 0.0
    %10579 = vmatprep.subr.mxu0 0.0
    %10580 = vmatpush1.msra.mxu0 0.0
    %10581 = vmatprep.subr.mxu0 0.0
    %10582 = vmatpush1.msra.mxu0 0.0
    %10583 = vmatprep.subr.mxu0 0.0
    %10584 = vmatpush1.msra.mxu0 0.0
    %10585 = vmatprep.subr.mxu0 0.0
    %10586 = vmatpush1.msra.mxu0 0.0
    %10587 = vmatprep.subr.mxu0 0.0
    %10588 = vmatpush1.msra.mxu0 0.0
    %10589 = vmatprep.subr.mxu0 0.0
    %10590 = vmatpush1.msra.mxu0 0.0
    %10591 = vmatprep.subr.mxu0 0.0
    %10592 = vmatpush1.msra.mxu0 0.0
    %10593 = vmatprep.subr.mxu0 0.0
    %10594 = vmatpush1.msra.mxu0 0.0
    %10595 = vmatprep.subr.mxu0 0.0
    %10596 = vmatpush1.msra.mxu0 0.0
    %10597 = vmatprep.subr.mxu0 0.0
    %10598 = vmatpush1.msra.mxu0 0.0
    %10599 = vmatprep.subr.mxu0 0.0
    %10600 = vmatpush1.msra.mxu0 0.0
    %10601 = vmatprep.subr.mxu0 0.0
    %10602 = vmatpush1.msra.mxu0 0.0
    %10603 = vmatprep.subr.mxu0 0.0
    %10604 = vmatpush1.msra.mxu0 0.0
    %10605 = vmatprep.subr.mxu0 0.0
    %10606 = vmatpush1.msra.mxu0 0.0
    %10607 = vmatprep.subr.mxu0 0.0
    %10608 = vmatpush1.msra.mxu0 0.0
    %10609 = vmatprep.subr.mxu0 0.0
    %10610 = vmatpush1.msra.mxu0 0.0
    %10611 = vmatprep.subr.mxu0 0.0
    %10612 = vmatpush1.msra.mxu0 0.0
    %10613 = vmatprep.subr.mxu0 0.0
    %10614 = vmatpush1.msra.mxu0 0.0
    %10615 = vmatprep.subr.mxu0 0.0
    %10616 = vmatpush1.msra.mxu0 0.0
    %10617 = vmatprep.subr.mxu0 0.0
    %10618 = vmatpush1.msra.mxu0 0.0
    %10619 = vmatprep.subr.mxu0 0.0
    %10620 = vmatpush1.msra.mxu0 0.0
    %10621 = vmatprep.subr.mxu0 0.0
    %10622 = vmatpush1.msra.mxu0 0.0
    %10623 = vmatprep.mubr.f32.mxu0 0.0
    %10624 = vmatmul.mubr.f32.gmra.mrb[0].mxu0 %v10464
    %v10625 = vpop.f32.mrb[0].mxu0
    %v10626 = vadd.f32 %v10461, %v10625
    %v10627 = vpop.f32.mrb[0].mxu0
    %10628 = vmatprep.mubr.f32.mxu0 0.0
    %10629 = vmatmul.mubr.f32.gmra.mrb[0].mxu0 %v10467
    %v10630 = vpop.f32.mrb[0].mxu0
    %v10631 = vadd.f32 %v10461, %v10630
    %v10632 = vpop.f32.mrb[0].mxu0
    %10633 = vmatprep.mubr.f32.mxu0 0.0
    %10634 = vmatmul.mubr.f32.gmra.mrb[0].mxu0 %v10470
    %v10635 = vpop.f32.mrb[0].mxu0
    %v10636 = vadd.f32 %v10461, %v10635
    %v10637 = vpop.f32.mrb[0].mxu0
    %10638 = vmatprep.mubr.f32.mxu0 0.0
    %10639 = vmatmul.mubr.f32.gmra.mrb[0].mxu0 %v10473
    %v10640 = vpop.f32.mrb[0].mxu0
    %v10641 = vadd.f32 %v10461, %v10640
    %v10642 = vpop.f32.mrb[0].mxu0
    %10643 = vmatprep.mubr.f32.mxu0 0.0
    %10644 = vmatmul.mubr.f32.gmra.mrb[0].mxu0 %v10476
    %v10645 = vpop.f32.mrb[0].mxu0
    %v10646 = vadd.f32 %v10461, %v10645
    %v10647 = vpop.f32.mrb[0].mxu0
    %10648 = vmatprep.mubr.f32.mxu0 0.0
    %10649 = vmatmul.mubr.f32.gmra.mrb[0].mxu0 %v10479
    %v10650 = vpop.f32.mrb[0].mxu0
    %v10651 = vadd.f32 %v10461, %v10650
    %v10652 = vpop.f32.mrb[0].mxu0
    %10653 = vmatprep.mubr.f32.mxu0 0.0
    %10654 = vmatmul.mubr.f32.gmra.mrb[0].mxu0 %v10482
    %v10655 = vpop.f32.mrb[0].mxu0
    %v10656 = vadd.f32 %v10461, %v10655
    %v10657 = vpop.f32.mrb[0].mxu0
    %10658 = vmatprep.mubr.f32.mxu0 0.0
    %10659 = vmatmul.mubr.f32.gmra.mrb[0].mxu0 %v10485
    %v10660 = vpop.f32.mrb[0].mxu0
    %v10661 = vadd.f32 %v10461, %v10660
    %v10662 = vpop.f32.mrb[0].mxu0
    %10663 = vmatprep.mubr.f32.mxu0 0.0
    %10664 = vmatmul.mubr.f32.gmra.mrb[0].mxu0 %v10488
    %v10665 = vpop.f32.mrb[0].mxu0
    %v10666 = vadd.f32 %v10461, %v10665
    %v10667 = vpop.f32.mrb[0].mxu0
    %10668 = vmatprep.mubr.f32.mxu0 0.0
    %10669 = vmatmul.mubr.f32.gmra.mrb[0].mxu0 %v10491
    %v10670 = vpop.f32.mrb[0].mxu0
    %v10671 = vadd.f32 %v10461, %v10670
    %v10672 = vpop.f32.mrb[0].mxu0
    %10673 = vmatprep.mubr.f32.mxu0 0.0
    %10674 = vmatmul.mubr.f32.gmra.mrb[0].mxu0 %v10494
    %v10675 = vpop.f32.mrb[0].mxu0
    %v10676 = vadd.f32 %v10461, %v10675
    %v10677 = vpop.f32.mrb[0].mxu0
    %10678 = vmatprep.mubr.f32.mxu0 0.0
    %10679 = vmatmul.mubr.f32.gmra.mrb[0].mxu0 %v10497
    %v10680 = vpop.f32.mrb[0].mxu0
    %v10681 = vadd.f32 %v10461, %v10680
    %v10682 = vpop.f32.mrb[0].mxu0
    %10683 = vmatprep.mubr.f32.mxu0 0.0
    %10684 = vmatmul.mubr.f32.gmra.mrb[0].mxu0 %v10500
    %v10685 = vpop.f32.mrb[0].mxu0
    %v10686 = vadd.f32 %v10461, %v10685
    %v10687 = vpop.f32.mrb[0].mxu0
    %10688 = vmatprep.mubr.f32.mxu0 0.0
    %10689 = vmatmul.mubr.f32.gmra.mrb[0].mxu0 %v10503
    %v10690 = vpop.f32.mrb[0].mxu0
    %v10691 = vadd.f32 %v10461, %v10690
    %v10692 = vpop.f32.mrb[0].mxu0
    %10693 = vmatprep.mubr.f32.mxu0 0.0
    %10694 = vmatmul.mubr.f32.gmra.mrb[0].mxu0 %v10506
    %v10695 = vpop.f32.mrb[0].mxu0
    %v10696 = vadd.f32 %v10461, %v10695
    %v10697 = vpop.f32.mrb[0].mxu0
    %10698 = vmatprep.mubr.f32.mxu0 0.0
    %10699 = vmatmul.mubr.f32.gmra.mrb[0].mxu0 %v10509
    %v10700 = vpop.f32.mrb[0].mxu0
    %v10701 = vadd.f32 %v10461, %v10700
    %v10702 = vpop.f32.mrb[0].mxu0
    %10703 = vmatprep.mubr.f32.mxu0 0.0
    %10704 = vmatmul.mubr.f32.gmra.mrb[0].mxu0 %v10512
    %v10705 = vpop.f32.mrb[0].mxu0
    %v10706 = vadd.f32 %v10461, %v10705
    %v10707 = vpop.f32.mrb[0].mxu0
    %10708 = vmatprep.mubr.f32.mxu0 0.0
    %10709 = vmatmul.mubr.f32.gmra.mrb[0].mxu0 %v10515
    %v10710 = vpop.f32.mrb[0].mxu0
    %v10711 = vadd.f32 %v10461, %v10710
    %v10712 = vpop.f32.mrb[0].mxu0
    %10713 = vmatprep.mubr.f32.mxu0 0.0
    %10714 = vmatmul.mubr.f32.gmra.mrb[0].mxu0 %v10518
    %v10715 = vpop.f32.mrb[0].mxu0
    %v10716 = vadd.f32 %v10461, %v10715
    %v10717 = vpop.f32.mrb[0].mxu0
    %10718 = vmatprep.mubr.f32.mxu0 0.0
    %10719 = vmatmul.mubr.f32.gmra.mrb[0].mxu0 %v10521
    %v10720 = vpop.f32.mrb[0].mxu0
    %v10721 = vadd.f32 %v10461, %v10720
    %v10722 = vpop.f32.mrb[0].mxu0
    %10723 = vmatprep.mubr.f32.mxu0 0.0
    %10724 = vmatmul.mubr.f32.gmra.mrb[0].mxu0 %v10524
    %v10725 = vpop.f32.mrb[0].mxu0
    %v10726 = vadd.f32 %v10461, %v10725
    %v10727 = vpop.f32.mrb[0].mxu0
    %10728 = vmatprep.mubr.f32.mxu0 0.0
    %10729 = vmatmul.mubr.f32.gmra.mrb[0].mxu0 %v10527
    %v10730 = vpop.f32.mrb[0].mxu0
    %v10731 = vadd.f32 %v10461, %v10730
    %v10732 = vpop.f32.mrb[0].mxu0
    %10733 = vmatprep.mubr.f32.mxu0 0.0
    %10734 = vmatmul.mubr.f32.gmra.mrb[0].mxu0 %v10530
    %v10735 = vpop.f32.mrb[0].mxu0
    %v10736 = vadd.f32 %v10461, %v10735
    %v10737 = vpop.f32.mrb[0].mxu0
    %10738 = vmatprep.mubr.f32.mxu0 0.0
    %10739 = vmatmul.mubr.f32.gmra.mrb[0].mxu0 %v10533
    %v10740 = vpop.f32.mrb[0].mxu0
    %v10741 = vadd.f32 %v10461, %v10740
    %v10742 = vpop.f32.mrb[0].mxu0
    %10743 = vmatprep.mubr.f32.mxu0 0.0
    %10744 = vmatmul.mubr.f32.gmra.mrb[0].mxu0 %v10536
    %v10745 = vpop.f32.mrb[0].mxu0
    %v10746 = vadd.f32 %v10461, %v10745
    %v10747 = vpop.f32.mrb[0].mxu0
    %10748 = vmatprep.mubr.f32.mxu0 0.0
    %10749 = vmatmul.mubr.f32.gmra.mrb[0].mxu0 %v10539
    %v10750 = vpop.f32.mrb[0].mxu0
    %v10751 = vadd.f32 %v10461, %v10750
    %v10752 = vpop.f32.mrb[0].mxu0
    %10753 = vmatprep.mubr.f32.mxu0 0.0
    %10754 = vmatmul.mubr.f32.gmra.mrb[0].mxu0 %v10542
    %v10755 = vpop.f32.mrb[0].mxu0
    %v10756 = vadd.f32 %v10461, %v10755
    %v10757 = vpop.f32.mrb[0].mxu0
    %10758 = vmatprep.mubr.f32.mxu0 0.0
    %10759 = vmatmul.mubr.f32.gmra.mrb[0].mxu0 %v10545
    %v10760 = vpop.f32.mrb[0].mxu0
    %v10761 = vadd.f32 %v10461, %v10760
    %v10762 = vpop.f32.mrb[0].mxu0
    %10763 = vmatprep.mubr.f32.mxu0 0.0
    %10764 = vmatmul.mubr.f32.gmra.mrb[0].mxu0 %v10548
    %v10765 = vpop.f32.mrb[0].mxu0
    %v10766 = vadd.f32 %v10461, %v10765
    %v10767 = vpop.f32.mrb[0].mxu0
    %10768 = vmatprep.mubr.f32.mxu0 0.0
    %10769 = vmatmul.mubr.f32.gmra.mrb[0].mxu0 %v10551
    %v10770 = vpop.f32.mrb[0].mxu0
    %v10771 = vadd.f32 %v10461, %v10770
    %v10772 = vpop.f32.mrb[0].mxu0
    %10773 = vmatprep.mubr.f32.mxu0 0.0
    %10774 = vmatmul.mubr.f32.gmra.mrb[0].mxu0 %v10554
    %v10775 = vpop.f32.mrb[0].mxu0
    %v10776 = vadd.f32 %v10461, %v10775
    %v10777 = vpop.f32.mrb[0].mxu0
    %10778 = vmatprep.mubr.f32.mxu0 0.0
    %10779 = vmatmul.mubr.f32.gmra.mrb[0].mxu0 %v10557
    %v10780 = vpop.f32.mrb[0].mxu0
    %v10781 = vadd.f32 %v10461, %v10780
    %v10782 = vpop.f32.mrb[0].mxu0
    %10783 = vdwg.mxu0
    %v10784 = vmax.f32 %v10626, 0.0
    %v10785 = vmax.f32 %v10631, 0.0
    %v10786 = vmax.f32 %v10636, 0.0
    %v10787 = vmax.f32 %v10641, 0.0
    %v10788 = vmax.f32 %v10646, 0.0
    %v10789 = vmax.f32 %v10651, 0.0
    %v10790 = vmax.f32 %v10656, 0.0
    %v10791 = vmax.f32 %v10661, 0.0
    %v10792 = vmax.f32 %v10666, 0.0
    %v10793 = vmax.f32 %v10671, 0.0
    %v10794 = vmax.f32 %v10676, 0.0
    %v10795 = vmax.f32 %v10681, 0.0
    %v10796 = vmax.f32 %v10686, 0.0
    %v10797 = vmax.f32 %v10691, 0.0
    %v10798 = vmax.f32 %v10696, 0.0
    %v10799 = vmax.f32 %v10701, 0.0
    %v10800 = vmax.f32 %v10706, 0.0
    %v10801 = vmax.f32 %v10711, 0.0
    %v10802 = vmax.f32 %v10716, 0.0
    %v10803 = vmax.f32 %v10721, 0.0
    %v10804 = vmax.f32 %v10726, 0.0
    %v10805 = vmax.f32 %v10731, 0.0
    %v10806 = vmax.f32 %v10736, 0.0
    %v10807 = vmax.f32 %v10741, 0.0
    %v10808 = vmax.f32 %v10746, 0.0
    %v10809 = vmax.f32 %v10751, 0.0
    %v10810 = vmax.f32 %v10756, 0.0
    %v10811 = vmax.f32 %v10761, 0.0
    %v10812 = vmax.f32 %v10766, 0.0
    %v10813 = vmax.f32 %v10771, 0.0
    %v10814 = vmax.f32 %v10776, 0.0
    %v10815 = vmax.f32 %v10781, 0.0
    %v10816 = vld [vmem:[#allocation64] sm:$0xff]
    %v10817 = vld [vmem:[#allocation64 + $0x8] sm:$0xff]
    %v10818 = vld [vmem:[#allocation64 + $0x10] sm:$0xff]
    %v10819 = vld [vmem:[#allocation64 + $0x18] sm:$0xff]
    %v10820 = vld [vmem:[#allocation66] sm:$0x1]
    %v10822 = vlaneseq
    %v10823 = vshrl.u32 %v10822, 7
    %v10824 = vsub.s32 0, %v10823
    %v10825 = vrot.slane %v10820, %v10824
    %v10828 = vsel %vm5278, %v10784, 0
    %v10831 = vsel %vm5278, %v10785, 0
    %v10834 = vsel %vm5278, %v10786, 0
    %v10837 = vsel %vm5278, %v10787, 0
    %v10840 = vsel %vm5278, %v10788, 0
    %v10843 = vsel %vm5278, %v10789, 0
    %v10846 = vsel %vm5278, %v10790, 0
    %v10849 = vsel %vm5278, %v10791, 0
    %v10852 = vsel %vm5278, %v10792, 0
    %v10855 = vsel %vm5278, %v10793, 0
    %v10858 = vsel %vm5278, %v10794, 0
    %v10861 = vsel %vm5278, %v10795, 0
    %v10864 = vsel %vm5278, %v10796, 0
    %v10867 = vsel %vm5278, %v10797, 0
    %v10870 = vsel %vm5278, %v10798, 0
    %v10873 = vsel %vm5278, %v10799, 0
    %v10876 = vsel %vm5278, %v10800, 0
    %v10879 = vsel %vm5278, %v10801, 0
    %v10882 = vsel %vm5278, %v10802, 0
    %v10885 = vsel %vm5278, %v10803, 0
    %v10888 = vsel %vm5278, %v10804, 0
    %v10891 = vsel %vm5278, %v10805, 0
    %v10894 = vsel %vm5278, %v10806, 0
    %v10897 = vsel %vm5278, %v10807, 0
    %v10900 = vsel %vm5278, %v10808, 0
    %v10903 = vsel %vm5278, %v10809, 0
    %v10906 = vsel %vm5278, %v10810, 0
    %v10909 = vsel %vm5278, %v10811, 0
    %v10912 = vsel %vm5278, %v10812, 0
    %v10915 = vsel %vm5278, %v10813, 0
    %v10918 = vsel %vm5278, %v10814, 0
    %v10921 = vsel %vm5278, %v10815, 0
    %10923 = vmatprep.subr.mxu0 0.0
    %10924 = vmatpush1.msra.mxu0 %v10816
    %10925 = vmatprep.subr.mxu0 0.0
    %10926 = vmatpush1.msra.mxu0 %v10817
    %10927 = vmatprep.subr.mxu0 0.0
    %10928 = vmatpush1.msra.mxu0 %v10818
    %10929 = vmatprep.subr.mxu0 0.0
    %10930 = vmatpush1.msra.mxu0 %v10819
    %10931 = vmatprep.subr.mxu0 0.0
    %10932 = vmatpush1.msra.mxu0 0.0
    %10933 = vmatprep.subr.mxu0 0.0
    %10934 = vmatpush1.msra.mxu0 0.0
    %10935 = vmatprep.subr.mxu0 0.0
    %10936 = vmatpush1.msra.mxu0 0.0
    %10937 = vmatprep.subr.mxu0 0.0
    %10938 = vmatpush1.msra.mxu0 0.0
    %10939 = vmatprep.subr.mxu0 0.0
    %10940 = vmatpush1.msra.mxu0 0.0
    %10941 = vmatprep.subr.mxu0 0.0
    %10942 = vmatpush1.msra.mxu0 0.0
    %10943 = vmatprep.subr.mxu0 0.0
    %10944 = vmatpush1.msra.mxu0 0.0
    %10945 = vmatprep.subr.mxu0 0.0
    %10946 = vmatpush1.msra.mxu0 0.0
    %10947 = vmatprep.subr.mxu0 0.0
    %10948 = vmatpush1.msra.mxu0 0.0
    %10949 = vmatprep.subr.mxu0 0.0
    %10950 = vmatpush1.msra.mxu0 0.0
    %10951 = vmatprep.subr.mxu0 0.0
    %10952 = vmatpush1.msra.mxu0 0.0
    %10953 = vmatprep.subr.mxu0 0.0
    %10954 = vmatpush1.msra.mxu0 0.0
    %10955 = vmatprep.subr.mxu0 0.0
    %10956 = vmatpush1.msra.mxu0 0.0
    %10957 = vmatprep.subr.mxu0 0.0
    %10958 = vmatpush1.msra.mxu0 0.0
    %10959 = vmatprep.subr.mxu0 0.0
    %10960 = vmatpush1.msra.mxu0 0.0
    %10961 = vmatprep.subr.mxu0 0.0
    %10962 = vmatpush1.msra.mxu0 0.0
    %10963 = vmatprep.subr.mxu0 0.0
    %10964 = vmatpush1.msra.mxu0 0.0
    %10965 = vmatprep.subr.mxu0 0.0
    %10966 = vmatpush1.msra.mxu0 0.0
    %10967 = vmatprep.subr.mxu0 0.0
    %10968 = vmatpush1.msra.mxu0 0.0
    %10969 = vmatprep.subr.mxu0 0.0
    %10970 = vmatpush1.msra.mxu0 0.0
    %10971 = vmatprep.subr.mxu0 0.0
    %10972 = vmatpush1.msra.mxu0 0.0
    %10973 = vmatprep.subr.mxu0 0.0
    %10974 = vmatpush1.msra.mxu0 0.0
    %10975 = vmatprep.subr.mxu0 0.0
    %10976 = vmatpush1.msra.mxu0 0.0
    %10977 = vmatprep.subr.mxu0 0.0
    %10978 = vmatpush1.msra.mxu0 0.0
    %10979 = vmatprep.subr.mxu0 0.0
    %10980 = vmatpush1.msra.mxu0 0.0
    %10981 = vmatprep.subr.mxu0 0.0
    %10982 = vmatpush1.msra.mxu0 0.0
    %10983 = vmatprep.subr.mxu0 0.0
    %10984 = vmatpush1.msra.mxu0 0.0
    %10985 = vmatprep.subr.mxu0 0.0
    %10986 = vmatpush1.msra.mxu0 0.0
    %10987 = vmatprep.mubr.f32.mxu0 0.0
    %10988 = vmatmul.mubr.f32.gmra.mrb[0].mxu0 %v10828
    %v10989 = vpop.f32.mrb[0].mxu0
    %v10990 = vadd.f32 %v10825, %v10989
    %v10991 = vpop.f32.mrb[0].mxu0
    %10992 = vmatprep.mubr.f32.mxu0 0.0
    %10993 = vmatmul.mubr.f32.gmra.mrb[0].mxu0 %v10831
    %v10994 = vpop.f32.mrb[0].mxu0
    %v10995 = vadd.f32 %v10825, %v10994
    %v10996 = vpop.f32.mrb[0].mxu0
    %10997 = vmatprep.mubr.f32.mxu0 0.0
    %10998 = vmatmul.mubr.f32.gmra.mrb[0].mxu0 %v10834
    %v10999 = vpop.f32.mrb[0].mxu0
    %v11000 = vadd.f32 %v10825, %v10999
    %v11001 = vpop.f32.mrb[0].mxu0
    %11002 = vmatprep.mubr.f32.mxu0 0.0
    %11003 = vmatmul.mubr.f32.gmra.mrb[0].mxu0 %v10837
    %v11004 = vpop.f32.mrb[0].mxu0
    %v11005 = vadd.f32 %v10825, %v11004
    %v11006 = vpop.f32.mrb[0].mxu0
    %11007 = vmatprep.mubr.f32.mxu0 0.0
    %11008 = vmatmul.mubr.f32.gmra.mrb[0].mxu0 %v10840
    %v11009 = vpop.f32.mrb[0].mxu0
    %v11010 = vadd.f32 %v10825, %v11009
    %v11011 = vpop.f32.mrb[0].mxu0
    %11012 = vmatprep.mubr.f32.mxu0 0.0
    %11013 = vmatmul.mubr.f32.gmra.mrb[0].mxu0 %v10843
    %v11014 = vpop.f32.mrb[0].mxu0
    %v11015 = vadd.f32 %v10825, %v11014
    %v11016 = vpop.f32.mrb[0].mxu0
    %11017 = vmatprep.mubr.f32.mxu0 0.0
    %11018 = vmatmul.mubr.f32.gmra.mrb[0].mxu0 %v10846
    %v11019 = vpop.f32.mrb[0].mxu0
    %v11020 = vadd.f32 %v10825, %v11019
    %v11021 = vpop.f32.mrb[0].mxu0
    %11022 = vmatprep.mubr.f32.mxu0 0.0
    %11023 = vmatmul.mubr.f32.gmra.mrb[0].mxu0 %v10849
    %v11024 = vpop.f32.mrb[0].mxu0
    %v11025 = vadd.f32 %v10825, %v11024
    %v11026 = vpop.f32.mrb[0].mxu0
    %11027 = vmatprep.mubr.f32.mxu0 0.0
    %11028 = vmatmul.mubr.f32.gmra.mrb[0].mxu0 %v10852
    %v11029 = vpop.f32.mrb[0].mxu0
    %v11030 = vadd.f32 %v10825, %v11029
    %v11031 = vpop.f32.mrb[0].mxu0
    %11032 = vmatprep.mubr.f32.mxu0 0.0
    %11033 = vmatmul.mubr.f32.gmra.mrb[0].mxu0 %v10855
    %v11034 = vpop.f32.mrb[0].mxu0
    %v11035 = vadd.f32 %v10825, %v11034
    %v11036 = vpop.f32.mrb[0].mxu0
    %11037 = vmatprep.mubr.f32.mxu0 0.0
    %11038 = vmatmul.mubr.f32.gmra.mrb[0].mxu0 %v10858
    %v11039 = vpop.f32.mrb[0].mxu0
    %v11040 = vadd.f32 %v10825, %v11039
    %v11041 = vpop.f32.mrb[0].mxu0
    %11042 = vmatprep.mubr.f32.mxu0 0.0
    %11043 = vmatmul.mubr.f32.gmra.mrb[0].mxu0 %v10861
    %v11044 = vpop.f32.mrb[0].mxu0
    %v11045 = vadd.f32 %v10825, %v11044
    %v11046 = vpop.f32.mrb[0].mxu0
    %11047 = vmatprep.mubr.f32.mxu0 0.0
    %11048 = vmatmul.mubr.f32.gmra.mrb[0].mxu0 %v10864
    %v11049 = vpop.f32.mrb[0].mxu0
    %v11050 = vadd.f32 %v10825, %v11049
    %v11051 = vpop.f32.mrb[0].mxu0
    %11052 = vmatprep.mubr.f32.mxu0 0.0
    %11053 = vmatmul.mubr.f32.gmra.mrb[0].mxu0 %v10867
    %v11054 = vpop.f32.mrb[0].mxu0
    %v11055 = vadd.f32 %v10825, %v11054
    %v11056 = vpop.f32.mrb[0].mxu0
    %11057 = vmatprep.mubr.f32.mxu0 0.0
    %11058 = vmatmul.mubr.f32.gmra.mrb[0].mxu0 %v10870
    %v11059 = vpop.f32.mrb[0].mxu0
    %v11060 = vadd.f32 %v10825, %v11059
    %v11061 = vpop.f32.mrb[0].mxu0
    %11062 = vmatprep.mubr.f32.mxu0 0.0
    %11063 = vmatmul.mubr.f32.gmra.mrb[0].mxu0 %v10873
    %v11064 = vpop.f32.mrb[0].mxu0
    %v11065 = vadd.f32 %v10825, %v11064
    %v11066 = vpop.f32.mrb[0].mxu0
    %11067 = vmatprep.mubr.f32.mxu0 0.0
    %11068 = vmatmul.mubr.f32.gmra.mrb[0].mxu0 %v10876
    %v11069 = vpop.f32.mrb[0].mxu0
    %v11070 = vadd.f32 %v10825, %v11069
    %v11071 = vpop.f32.mrb[0].mxu0
    %11072 = vmatprep.mubr.f32.mxu0 0.0
    %11073 = vmatmul.mubr.f32.gmra.mrb[0].mxu0 %v10879
    %v11074 = vpop.f32.mrb[0].mxu0
    %v11075 = vadd.f32 %v10825, %v11074
    %v11076 = vpop.f32.mrb[0].mxu0
    %11077 = vmatprep.mubr.f32.mxu0 0.0
    %11078 = vmatmul.mubr.f32.gmra.mrb[0].mxu0 %v10882
    %v11079 = vpop.f32.mrb[0].mxu0
    %v11080 = vadd.f32 %v10825, %v11079
    %v11081 = vpop.f32.mrb[0].mxu0
    %11082 = vmatprep.mubr.f32.mxu0 0.0
    %11083 = vmatmul.mubr.f32.gmra.mrb[0].mxu0 %v10885
    %v11084 = vpop.f32.mrb[0].mxu0
    %v11085 = vadd.f32 %v10825, %v11084
    %v11086 = vpop.f32.mrb[0].mxu0
    %11087 = vmatprep.mubr.f32.mxu0 0.0
    %11088 = vmatmul.mubr.f32.gmra.mrb[0].mxu0 %v10888
    %v11089 = vpop.f32.mrb[0].mxu0
    %v11090 = vadd.f32 %v10825, %v11089
    %v11091 = vpop.f32.mrb[0].mxu0
    %11092 = vmatprep.mubr.f32.mxu0 0.0
    %11093 = vmatmul.mubr.f32.gmra.mrb[0].mxu0 %v10891
    %v11094 = vpop.f32.mrb[0].mxu0
    %v11095 = vadd.f32 %v10825, %v11094
    %v11096 = vpop.f32.mrb[0].mxu0
    %11097 = vmatprep.mubr.f32.mxu0 0.0
    %11098 = vmatmul.mubr.f32.gmra.mrb[0].mxu0 %v10894
    %v11099 = vpop.f32.mrb[0].mxu0
    %v11100 = vadd.f32 %v10825, %v11099
    %v11101 = vpop.f32.mrb[0].mxu0
    %11102 = vmatprep.mubr.f32.mxu0 0.0
    %11103 = vmatmul.mubr.f32.gmra.mrb[0].mxu0 %v10897
    %v11104 = vpop.f32.mrb[0].mxu0
    %v11105 = vadd.f32 %v10825, %v11104
    %v11106 = vpop.f32.mrb[0].mxu0
    %11107 = vmatprep.mubr.f32.mxu0 0.0
    %11108 = vmatmul.mubr.f32.gmra.mrb[0].mxu0 %v10900
    %v11109 = vpop.f32.mrb[0].mxu0
    %v11110 = vadd.f32 %v10825, %v11109
    %v11111 = vpop.f32.mrb[0].mxu0
    %11112 = vmatprep.mubr.f32.mxu0 0.0
    %11113 = vmatmul.mubr.f32.gmra.mrb[0].mxu0 %v10903
    %v11114 = vpop.f32.mrb[0].mxu0
    %v11115 = vadd.f32 %v10825, %v11114
    %v11116 = vpop.f32.mrb[0].mxu0
    %11117 = vmatprep.mubr.f32.mxu0 0.0
    %11118 = vmatmul.mubr.f32.gmra.mrb[0].mxu0 %v10906
    %v11119 = vpop.f32.mrb[0].mxu0
    %v11120 = vadd.f32 %v10825, %v11119
    %v11121 = vpop.f32.mrb[0].mxu0
    %11122 = vmatprep.mubr.f32.mxu0 0.0
    %11123 = vmatmul.mubr.f32.gmra.mrb[0].mxu0 %v10909
    %v11124 = vpop.f32.mrb[0].mxu0
    %v11125 = vadd.f32 %v10825, %v11124
    %v11126 = vpop.f32.mrb[0].mxu0
    %11127 = vmatprep.mubr.f32.mxu0 0.0
    %11128 = vmatmul.mubr.f32.gmra.mrb[0].mxu0 %v10912
    %v11129 = vpop.f32.mrb[0].mxu0
    %v11130 = vadd.f32 %v10825, %v11129
    %v11131 = vpop.f32.mrb[0].mxu0
    %11132 = vmatprep.mubr.f32.mxu0 0.0
    %11133 = vmatmul.mubr.f32.gmra.mrb[0].mxu0 %v10915
    %v11134 = vpop.f32.mrb[0].mxu0
    %v11135 = vadd.f32 %v10825, %v11134
    %v11136 = vpop.f32.mrb[0].mxu0
    %11137 = vmatprep.mubr.f32.mxu0 0.0
    %11138 = vmatmul.mubr.f32.gmra.mrb[0].mxu0 %v10918
    %v11139 = vpop.f32.mrb[0].mxu0
    %v11140 = vadd.f32 %v10825, %v11139
    %v11141 = vpop.f32.mrb[0].mxu0
    %11142 = vmatprep.mubr.f32.mxu0 0.0
    %11143 = vmatmul.mubr.f32.gmra.mrb[0].mxu0 %v10921
    %v11144 = vpop.f32.mrb[0].mxu0
    %v11145 = vadd.f32 %v10825, %v11144
    %v11146 = vpop.f32.mrb[0].mxu0
    %11147 = vdwg.mxu0
    %11148 = vst.msk [vmem:[%s103] sm:$0xff] %vm891, %v10990
    %11149 = vst.msk [vmem:[%s103 + $0x8] sm:$0xff] %vm891, %v10995
    %11150 = vst.msk [vmem:[%s103 + $0x10] sm:$0xff] %vm891, %v11000
    %11151 = vst.msk [vmem:[%s103 + $0x18] sm:$0xff] %vm891, %v11005
    %11152 = vst.msk [vmem:[%s103 + $0x20] sm:$0xff] %vm891, %v11010
    %11153 = vst.msk [vmem:[%s103 + $0x28] sm:$0xff] %vm891, %v11015
    %11154 = vst.msk [vmem:[%s103 + $0x30] sm:$0xff] %vm891, %v11020
    %11155 = vst.msk [vmem:[%s103 + $0x38] sm:$0xff] %vm891, %v11025
    %11156 = vst.msk [vmem:[%s103 + $0x40] sm:$0xff] %vm891, %v11030
    %11157 = vst.msk [vmem:[%s103 + $0x48] sm:$0xff] %vm891, %v11035
    %11158 = vst.msk [vmem:[%s103 + $0x50] sm:$0xff] %vm891, %v11040
    %11159 = vst.msk [vmem:[%s103 + $0x58] sm:$0xff] %vm891, %v11045
    %11160 = vst.msk [vmem:[%s103 + $0x60] sm:$0xff] %vm891, %v11050
    %11161 = vst.msk [vmem:[%s103 + $0x68] sm:$0xff] %vm891, %v11055
    %11162 = vst.msk [vmem:[%s103 + $0x70] sm:$0xff] %vm891, %v11060
    %11163 = vst.msk [vmem:[%s103 + $0x78] sm:$0xff] %vm891, %v11065
    %11164 = vst.msk [vmem:[%s103 + $0x80] sm:$0xff] %vm891, %v11070
    %11165 = vst.msk [vmem:[%s103 + $0x88] sm:$0xff] %vm891, %v11075
    %11166 = vst.msk [vmem:[%s103 + $0x90] sm:$0xff] %vm891, %v11080
    %11167 = vst.msk [vmem:[%s103 + $0x98] sm:$0xff] %vm891, %v11085
    %11168 = vst.msk [vmem:[%s103 + $0xa0] sm:$0xff] %vm891, %v11090
    %11169 = vst.msk [vmem:[%s103 + $0xa8] sm:$0xff] %vm891, %v11095
    %11170 = vst.msk [vmem:[%s103 + $0xb0] sm:$0xff] %vm891, %v11100
    %11171 = vst.msk [vmem:[%s103 + $0xb8] sm:$0xff] %vm891, %v11105
    %11172 = vst.msk [vmem:[%s103 + $0xc0] sm:$0xff] %vm891, %v11110
    %11173 = vst.msk [vmem:[%s103 + $0xc8] sm:$0xff] %vm891, %v11115
    %11174 = vst.msk [vmem:[%s103 + $0xd0] sm:$0xff] %vm891, %v11120
    %11175 = vst.msk [vmem:[%s103 + $0xd8] sm:$0xff] %vm891, %v11125
    %11176 = vst.msk [vmem:[%s103 + $0xe0] sm:$0xff] %vm891, %v11130
    %11177 = vst.msk [vmem:[%s103 + $0xe8] sm:$0xff] %vm891, %v11135
    %11178 = vst.msk [vmem:[%s103 + $0xf0] sm:$0xff] %vm891, %v11140
    %11179 = vst.msk [vmem:[%s103 + $0xf8] sm:$0xff] %vm891, %v11145
    // Predicated region
    $region378: #{_lambda_.1} parent=1 // pred_check
      _
    $region379: #{_lambda_.1} parent=1 // pred_check_branch
      %11181 = sbr.rel (0) target = $region381
    $region380: #{_lambda_.1} parent=1 // pred_region
      _
    $region381: #{_lambda_.1} parent=1 // pred_fallthru
      _
    // Predicated region
    $region382: #{_lambda_.1} parent=1 // pred_check
      _
    $region383: #{_lambda_.1} parent=1 // pred_check_branch
      %11183 = sbr.rel (0) target = $region385
    $region384: #{_lambda_.1} parent=1 // pred_region
      _
    $region385: #{_lambda_.1} parent=1 // pred_fallthru
      _
    %11184 = vsyncpa [#allocation3], 1
    %11185 = vsyncpa [#allocation5], 1
    %11186 = vsyncpa [#allocation8], 1
    %11187 = vsyncpa [#allocation11], 1
    %11188 = vsyncpa [#allocation14], 1
    %11189 = vsyncpa [#allocation17], 1
    %11190 = vsyncpa [#allocation20], 1
    %11191 = vsyncpa [#allocation23], 1
    %11192 = vsyncpa [#allocation26], 1
    %11193 = vsyncpa [#allocation29], 1
    %11194 = vsyncpa [#allocation32], 1
    %11195 = vsyncpa [#allocation35], 1
    %11196 = vsyncpa [#allocation38], 1
    %11197 = vsyncpa [#allocation41], 1
    %11198 = vsyncpa [#allocation44], 1
    %11199 = vsyncpa [#allocation47], 1
    %11200 = vsyncpa [#allocation50], 1
    %11201 = vsyncpa [#allocation53], 1
    %11202 = vsyncpa [#allocation56], 1
    %11203 = vsyncpa [#allocation59], 1
    %11204 = vsyncpa [#allocation62], 1
    %11205 = vsyncpa [#allocation65], 1

</llo_original>
